<compile_context>
chip_gen: v7x
topology: tpu7x:2x2x1
jax: 0.10.0
libtpu: 0.0.40
codegen_flags: <defaults>
</compile_context>

<pallas_src>
import jax
import jax.numpy as jnp
from jax import lax
from jax.experimental import pallas as pl
from jax.experimental.pallas import tpu as pltpu

# ----- module spec sizes -----
HIDDEN_SIZE = 64
INPUT_SIZE = 130
NUM_LAYERS = 2
OUTPUT_SIZE = 7
BATCH = 20          # fixed by h0 = zeros(num_layers, 20, hidden_size) in the module
SEQ_LEN = 8

# ----- TPU-friendly padded sizes (zero padding, exactness preserved) -----
H_PAD = 128         # hidden lanes: each gate = exactly one 128-lane block
D_PAD = 256         # layer-0 contraction depth 130 -> 256 (one clean MXU pass)
B_PAD = 8           # single real batch row padded to one 8-sublane group
O_PAD = 128         # FC output lanes 7 -> 128 (unmasked lane-dense store)
G_PAD = 4 * H_PAD   # 512 gate lanes
K1_PAD = 2 * H_PAD  # fused layer-1 contraction depth: [h0 | h1] = 256


# ---------------------------------------------------------------------------
# Fused Pallas kernel: layer-0 LSTM + layer-1 LSTM interleaved, then FC.
# ---------------------------------------------------------------------------
def _fused_lstm_fc_kernel(x_ref, wih0_ref, whh0_ref, b0_ref,
                          w1_ref, b1_ref, wfc_ref, bfc_ref,
                          out_ref,
                          xp_scr, last_scr):
    T = last_scr.shape[0]
    Bp, Hp = B_PAD, H_PAD

    def sigmoid(z):
        # sigmoid(x) == 0.5 * tanh(0.5 * x) + 0.5 : single EUP op on the serial path.
        return 0.5 * jnp.tanh(0.5 * z) + 0.5

    def cell(gates, c_prev):
        i_g = sigmoid(gates[:, 0 * Hp:1 * Hp])
        f_g = sigmoid(gates[:, 1 * Hp:2 * Hp])
        g_g = jnp.tanh(gates[:, 2 * Hp:3 * Hp])
        o_g = sigmoid(gates[:, 3 * Hp:4 * Hp])
        c_new = f_g * c_prev + i_g * g_g
        h_new = o_g * jnp.tanh(c_new)
        return h_new, c_new

    # ---- layer 0: hoisted batched input projection (T*Bp, Dp) x (Dp, 4Hp) ----
    xp_scr[...] = jnp.dot(x_ref[...], wih0_ref[...],
                          preferred_element_type=jnp.float32) + b0_ref[...]

    # Hoist the layer-1 bias broadcast out of the time loop (no CSE of broadcasts).
    b1_full = jnp.broadcast_to(b1_ref[...], (Bp, G_PAD))

    def step(t, carry):
        h0, c0, h1, c1 = carry
        row = pl.multiple_of(t * Bp, 8)                   # 8-aligned sublane offset

        # layer 0: precomputed input proj + recurrent (Bp,128)x(128,512) matmul
        gates0 = xp_scr[pl.ds(row, Bp), :] + jnp.dot(
            h0, whh0_ref[...], preferred_element_type=jnp.float32)
        h0, c0 = cell(gates0, c0)

        # layer 1: fused 256-deep contraction [x1_t | h1_{t-1}] @ [wih1 ; whh1]
        lhs1 = jnp.concatenate([h0, h1], axis=1)          # (Bp, 256), lane-aligned
        gates1 = b1_full + jnp.dot(lhs1, w1_ref[...],
                                   preferred_element_type=jnp.float32)
        h1, c1 = cell(gates1, c1)

        # Only sublane 0 (the real batch row) is consumed by the FC.
        last_scr[pl.ds(t, 1), :] = h1[0:1, :]
        return h0, c0, h1, c1

    z = jnp.zeros((Bp, Hp), jnp.float32)
    lax.fori_loop(0, T, step, (z, z, z, z), unroll=True)

    # ---- FC on h1[:, last_batch_row, :] over all time steps: (T, Hp) x (Hp, Op) ----
    out_ref[...] = jnp.dot(last_scr[...], wfc_ref[...],
                           preferred_element_type=jnp.float32) + bfc_ref[...]


# ---------------------------------------------------------------------------
# Wrapper: slice the single consumed batch row, zero-pad, call the kernel once.
# ---------------------------------------------------------------------------
@jax.jit
def lstm_model_forward(x, padded):
    """x: (T, B, input_size) float32 -> (T, output_size) float32."""
    T, B, D = x.shape
    # Only batch row B-1 reaches fc(out[:, -1, :]); LSTM rows are independent,
    # so run the recurrence on that single row (padded to one 8-sublane group).
    x_last = x[:, B - 1, :]                                   # (T, D)
    x_p = jnp.zeros((T, B_PAD, D_PAD), jnp.float32).at[:, 0, :D].set(x_last)
    x_flat = x_p.reshape(T * B_PAD, D_PAD)                    # sublane-aligned

    out = pl.pallas_call(
        _fused_lstm_fc_kernel,
        out_shape=jax.ShapeDtypeStruct((T, O_PAD), jnp.float32),
        in_specs=[pl.BlockSpec(memory_space=pltpu.MemorySpace.VMEM)] * 8,
        out_specs=pl.BlockSpec(memory_space=pltpu.MemorySpace.VMEM),
        scratch_shapes=[
            pltpu.VMEM((T * B_PAD, G_PAD), jnp.float32),   # hoisted layer-0 input proj
            pltpu.VMEM((T, H_PAD), jnp.float32),           # h1[t, last_row, :] over time
        ],
    )(x_flat,
      padded["wih0"], padded["whh0"], padded["b0"],
      padded["w1"], padded["b1"],
      padded["wfc"], padded["bfc"])
    return out[:, :OUTPUT_SIZE]


# ---------------------------------------------------------------------------
# Parameter init (PyTorch-style uniform) + zero-padded layout plumbing.
# ---------------------------------------------------------------------------
def init_params(key):
    """Raw PyTorch-layout parameters: w_ih (4H, d_in), w_hh (4H, H), b_ih/b_hh (4H,)."""
    bound = 1.0 / jnp.sqrt(jnp.float32(HIDDEN_SIZE))
    params = {}
    for layer in range(NUM_LAYERS):
        d_in = INPUT_SIZE if layer == 0 else HIDDEN_SIZE
        key, k1, k2, k3, k4 = jax.random.split(key, 5)
        params[f"layer{layer}"] = {
            "w_ih": jax.random.uniform(k1, (4 * HIDDEN_SIZE, d_in), jnp.float32, -bound, bound),
            "w_hh": jax.random.uniform(k2, (4 * HIDDEN_SIZE, HIDDEN_SIZE), jnp.float32, -bound, bound),
            "b_ih": jax.random.uniform(k3, (4 * HIDDEN_SIZE,), jnp.float32, -bound, bound),
            "b_hh": jax.random.uniform(k4, (4 * HIDDEN_SIZE,), jnp.float32, -bound, bound),
        }
    key, k5, k6 = jax.random.split(key, 3)
    params["fc"] = {
        "w": jax.random.uniform(k5, (OUTPUT_SIZE, HIDDEN_SIZE), jnp.float32, -bound, bound),
        "b": jax.random.uniform(k6, (OUTPUT_SIZE,), jnp.float32, -bound, bound),
    }
    return params


def _pad_lstm_layer(w_ih, w_hh, b_ih, b_hh, d_in_pad):
    """Transpose + per-gate zero-pad to (d_in_pad, 4*H_PAD), (H_PAD, 4*H_PAD), (1, 4*H_PAD).

    Zero-padding of weight rows past the real hidden size guarantees padded
    hidden/input lanes never contaminate real lanes."""
    H = w_hh.shape[1]
    d_in = w_ih.shape[1]
    b = b_ih + b_hh
    w_ih_t = jnp.zeros((d_in_pad, G_PAD), jnp.float32)
    w_hh_t = jnp.zeros((H_PAD, G_PAD), jnp.float32)
    bias = jnp.zeros((1, G_PAD), jnp.float32)
    for k in range(4):
        w_ih_t = w_ih_t.at[:d_in, k * H_PAD:k * H_PAD + H].set(w_ih[k * H:(k + 1) * H, :].T)
        w_hh_t = w_hh_t.at[:H, k * H_PAD:k * H_PAD + H].set(w_hh[k * H:(k + 1) * H, :].T)
        bias = bias.at[0, k * H_PAD:k * H_PAD + H].set(b[k * H:(k + 1) * H])
    return w_ih_t, w_hh_t, bias


def prepare_padded_params(raw):
    p0 = raw["layer0"]
    p1 = raw["layer1"]
    wih0, whh0, b0 = _pad_lstm_layer(p0["w_ih"], p0["w_hh"], p0["b_ih"], p0["b_hh"], D_PAD)
    wih1, whh1, b1 = _pad_lstm_layer(p1["w_ih"], p1["w_hh"], p1["b_ih"], p1["b_hh"], H_PAD)
    # Fused layer-1 weight: rows 0:128 multiply h0_t (layer-1 input), rows 128:256
    # multiply h1_{t-1} (layer-1 recurrence) -> (256, 512).
    w1 = jnp.concatenate([wih1, whh1], axis=0)
    wfc = jnp.zeros((H_PAD, O_PAD), jnp.float32).at[:HIDDEN_SIZE, :OUTPUT_SIZE].set(raw["fc"]["w"].T)
    bfc = jnp.zeros((1, O_PAD), jnp.float32).at[0, :OUTPUT_SIZE].set(raw["fc"]["b"])
    return {"wih0": wih0, "whh0": whh0, "b0": b0,
            "w1": w1, "b1": b1,
            "wfc": wfc, "bfc": bfc}


# ---------------------------------------------------------------------------
# Pure-JAX reference (unpadded, full batch) for verification.
# ---------------------------------------------------------------------------
def reference_forward(x, raw):
    T, B, _ = x.shape
    H = HIDDEN_SIZE
    h_seq = x
    for layer in range(NUM_LAYERS):
        p = raw[f"layer{layer}"]
        w_ih_t = p["w_ih"].T
        w_hh_t = p["w_hh"].T
        bias = (p["b_ih"] + p["b_hh"])[None, :]
        h = jnp.zeros((B, H), jnp.float32)
        c = jnp.zeros((B, H), jnp.float32)
        outs = []
        for t in range(T):
            gates = h_seq[t] @ w_ih_t + h @ w_hh_t + bias
            i_g = jax.nn.sigmoid(gates[:, 0 * H:1 * H])
            f_g = jax.nn.sigmoid(gates[:, 1 * H:2 * H])
            g_g = jnp.tanh(gates[:, 2 * H:3 * H])
            o_g = jax.nn.sigmoid(gates[:, 3 * H:4 * H])
            c = f_g * c + i_g * g_g
            h = o_g * jnp.tanh(c)
            outs.append(h)
        h_seq = jnp.stack(outs, axis=0)
    last_batch = h_seq[:, -1, :]            # batch_first=False: out[:, -1, :] = batch row 19
    return last_batch @ raw["fc"]["w"].T + raw["fc"]["b"][None, :]


if __name__ == "__main__":
    key = jax.random.PRNGKey(0)
    key, pkey, xkey = jax.random.split(key, 3)
    raw_params = init_params(pkey)
    padded_params = prepare_padded_params(raw_params)

    # x: (seq_len, batch, input_size) — batch fixed to 20 by the module's h0/c0.
    x = jax.random.normal(xkey, (SEQ_LEN, BATCH, INPUT_SIZE), dtype=jnp.float32)

    out = lstm_model_forward(x, padded_params)
    out = jax.block_until_ready(out)
    assert out.shape == (SEQ_LEN, OUTPUT_SIZE), out.shape

    ref = jax.block_until_ready(reference_forward(x, raw_params))
    assert jnp.allclose(out, ref, atol=2e-4, rtol=2e-4), float(jnp.max(jnp.abs(out - ref)))

    print("KERNEL_OK")
</pallas_src>

<mosaic_0001>
module attributes {stable_mosaic.version = 11 : i64} {
  func.func @_fused_lstm_fc_kernel(%arg0: memref<64x256xf32, #tpu.memory_space<vmem>>, %arg1: memref<256x512xf32, #tpu.memory_space<vmem>>, %arg2: memref<128x512xf32, #tpu.memory_space<vmem>>, %arg3: memref<1x512xf32, #tpu.memory_space<vmem>>, %arg4: memref<256x512xf32, #tpu.memory_space<vmem>>, %arg5: memref<1x512xf32, #tpu.memory_space<vmem>>, %arg6: memref<128x128xf32, #tpu.memory_space<vmem>>, %arg7: memref<1x128xf32, #tpu.memory_space<vmem>>, %arg8: memref<8x128xf32, #tpu.memory_space<vmem>>, %arg9: memref<64x512xf32, #tpu.memory_space<vmem>>, %arg10: memref<8x128xf32, #tpu.memory_space<vmem>>) attributes {dimension_semantics = [], scalar_prefetch = 0 : i64, scratch_operands = 2 : i64, tpu.core_type = #tpu.core_type<tc>} {
    %c0 = arith.constant 0 : index
    %c0_0 = arith.constant 0 : index
    %0 = vector.load %arg0[%c0, %c0_0] : memref<64x256xf32, #tpu.memory_space<vmem>>, vector<64x256xf32>
    %c0_1 = arith.constant 0 : index
    %c0_2 = arith.constant 0 : index
    %1 = vector.load %arg1[%c0_1, %c0_2] : memref<256x512xf32, #tpu.memory_space<vmem>>, vector<256x512xf32>
    %cst = arith.constant dense<0.000000e+00> : vector<64x512xf32>
    %2 = tpu.matmul %0, %1, %cst {dimension_numbers = #tpu.dot_dimension_numbers<[1], [0], [0], [1], [0, 0, 1, 1], [], []>} : vector<64x256xf32>, vector<256x512xf32>, vector<64x512xf32> -> vector<64x512xf32>
    %c0_3 = arith.constant 0 : index
    %c0_4 = arith.constant 0 : index
    %3 = vector.load %arg3[%c0_3, %c0_4] : memref<1x512xf32, #tpu.memory_space<vmem>>, vector<1x512xf32>
    %4 = vector.broadcast %3 : vector<1x512xf32> to vector<64x512xf32>
    %5 = arith.addf %2, %4 : vector<64x512xf32>
    %c0_5 = arith.constant 0 : index
    %c0_6 = arith.constant 0 : index
    %6 = vector.load %arg9[%c0_5, %c0_6] : memref<64x512xf32, #tpu.memory_space<vmem>>, vector<64x512xf32>
    tpu.vector_store %arg9[%c0_5, %c0_6], %5 {strides = array<i32>} : memref<64x512xf32, #tpu.memory_space<vmem>>, vector<64x512xf32>,
    %c0_7 = arith.constant 0 : index
    %c0_8 = arith.constant 0 : index
    %7 = vector.load %arg5[%c0_7, %c0_8] : memref<1x512xf32, #tpu.memory_space<vmem>>, vector<1x512xf32>
    %8 = vector.shape_cast %7 : vector<1x512xf32> to vector<1x512xf32>
    %9 = vector.broadcast %8 : vector<1x512xf32> to vector<8x512xf32>
    %cst_9 = arith.constant 0.000000e+00 : f32
    %10 = vector.broadcast %cst_9 : f32 to vector<8x128xf32>
    %c0_i32 = arith.constant 0 : i32
    %c8_i32 = arith.constant 8 : i32
    %11 = arith.muli %c0_i32, %c8_i32 : i32
    %12 = tpu.assume_multiple %11, 8 : i32
    %13 = arith.index_cast %12 : i32 to index
    %c0_10 = arith.constant 0 : index
    %14 = vector.load %arg9[%13, %c0_10] : memref<64x512xf32, #tpu.memory_space<vmem>>, vector<8x512xf32>
    %c0_11 = arith.constant 0 : index
    %c0_12 = arith.constant 0 : index
    %15 = vector.load %arg2[%c0_11, %c0_12] : memref<128x512xf32, #tpu.memory_space<vmem>>, vector<128x512xf32>
    %cst_13 = arith.constant dense<0.000000e+00> : vector<8x512xf32>
    %16 = tpu.matmul %10, %15, %cst_13 {dimension_numbers = #tpu.dot_dimension_numbers<[1], [0], [0], [1], [0, 0, 1, 1], [], []>} : vector<8x128xf32>, vector<128x512xf32>, vector<8x512xf32> -> vector<8x512xf32>
    %17 = arith.addf %14, %16 : vector<8x512xf32>
    %18 = vector.extract_strided_slice %17 {offsets = [0, 0], sizes = [8, 128], strides = [1, 1]} : vector<8x512xf32> to vector<8x128xf32>
    %cst_14 = arith.constant 5.000000e-01 : f32
    %19 = vector.broadcast %cst_14 : f32 to vector<8x128xf32>
    %20 = arith.mulf %19, %18 : vector<8x128xf32>
    %21 = math.tanh %20 : vector<8x128xf32>
    %cst_15 = arith.constant 5.000000e-01 : f32
    %22 = vector.broadcast %cst_15 : f32 to vector<8x128xf32>
    %23 = arith.mulf %22, %21 : vector<8x128xf32>
    %cst_16 = arith.constant 5.000000e-01 : f32
    %24 = vector.broadcast %cst_16 : f32 to vector<8x128xf32>
    %25 = arith.addf %23, %24 : vector<8x128xf32>
    %26 = vector.extract_strided_slice %17 {offsets = [0, 128], sizes = [8, 128], strides = [1, 1]} : vector<8x512xf32> to vector<8x128xf32>
    %cst_17 = arith.constant 5.000000e-01 : f32
    %27 = vector.broadcast %cst_17 : f32 to vector<8x128xf32>
    %28 = arith.mulf %27, %26 : vector<8x128xf32>
    %29 = math.tanh %28 : vector<8x128xf32>
    %cst_18 = arith.constant 5.000000e-01 : f32
    %30 = vector.broadcast %cst_18 : f32 to vector<8x128xf32>
    %31 = arith.mulf %30, %29 : vector<8x128xf32>
    %cst_19 = arith.constant 5.000000e-01 : f32
    %32 = vector.broadcast %cst_19 : f32 to vector<8x128xf32>
    %33 = arith.addf %31, %32 : vector<8x128xf32>
    %34 = vector.extract_strided_slice %17 {offsets = [0, 256], sizes = [8, 128], strides = [1, 1]} : vector<8x512xf32> to vector<8x128xf32>
    %35 = math.tanh %34 : vector<8x128xf32>
    %36 = vector.extract_strided_slice %17 {offsets = [0, 384], sizes = [8, 128], strides = [1, 1]} : vector<8x512xf32> to vector<8x128xf32>
    %cst_20 = arith.constant 5.000000e-01 : f32
    %37 = vector.broadcast %cst_20 : f32 to vector<8x128xf32>
    %38 = arith.mulf %37, %36 : vector<8x128xf32>
    %39 = math.tanh %38 : vector<8x128xf32>
    %cst_21 = arith.constant 5.000000e-01 : f32
    %40 = vector.broadcast %cst_21 : f32 to vector<8x128xf32>
    %41 = arith.mulf %40, %39 : vector<8x128xf32>
    %cst_22 = arith.constant 5.000000e-01 : f32
    %42 = vector.broadcast %cst_22 : f32 to vector<8x128xf32>
    %43 = arith.addf %41, %42 : vector<8x128xf32>
    %44 = arith.mulf %33, %10 : vector<8x128xf32>
    %45 = arith.mulf %25, %35 : vector<8x128xf32>
    %46 = arith.addf %44, %45 : vector<8x128xf32>
    %47 = math.tanh %46 : vector<8x128xf32>
    %48 = arith.mulf %43, %47 : vector<8x128xf32>
    %49 = tpu.concatenate %48, %10 in 1 : vector<8x128xf32>, vector<8x128xf32> -> vector<8x256xf32>
    %c0_23 = arith.constant 0 : index
    %c0_24 = arith.constant 0 : index
    %50 = vector.load %arg4[%c0_23, %c0_24] : memref<256x512xf32, #tpu.memory_space<vmem>>, vector<256x512xf32>
    %cst_25 = arith.constant dense<0.000000e+00> : vector<8x512xf32>
    %51 = tpu.matmul %49, %50, %cst_25 {dimension_numbers = #tpu.dot_dimension_numbers<[1], [0], [0], [1], [0, 0, 1, 1], [], []>} : vector<8x256xf32>, vector<256x512xf32>, vector<8x512xf32> -> vector<8x512xf32>
    %52 = arith.addf %9, %51 : vector<8x512xf32>
    %53 = vector.extract_strided_slice %52 {offsets = [0, 0], sizes = [8, 128], strides = [1, 1]} : vector<8x512xf32> to vector<8x128xf32>
    %cst_26 = arith.constant 5.000000e-01 : f32
    %54 = vector.broadcast %cst_26 : f32 to vector<8x128xf32>
    %55 = arith.mulf %54, %53 : vector<8x128xf32>
    %56 = math.tanh %55 : vector<8x128xf32>
    %cst_27 = arith.constant 5.000000e-01 : f32
    %57 = vector.broadcast %cst_27 : f32 to vector<8x128xf32>
    %58 = arith.mulf %57, %56 : vector<8x128xf32>
    %cst_28 = arith.constant 5.000000e-01 : f32
    %59 = vector.broadcast %cst_28 : f32 to vector<8x128xf32>
    %60 = arith.addf %58, %59 : vector<8x128xf32>
    %61 = vector.extract_strided_slice %52 {offsets = [0, 128], sizes = [8, 128], strides = [1, 1]} : vector<8x512xf32> to vector<8x128xf32>
    %cst_29 = arith.constant 5.000000e-01 : f32
    %62 = vector.broadcast %cst_29 : f32 to vector<8x128xf32>
    %63 = arith.mulf %62, %61 : vector<8x128xf32>
    %64 = math.tanh %63 : vector<8x128xf32>
    %cst_30 = arith.constant 5.000000e-01 : f32
    %65 = vector.broadcast %cst_30 : f32 to vector<8x128xf32>
    %66 = arith.mulf %65, %64 : vector<8x128xf32>
    %cst_31 = arith.constant 5.000000e-01 : f32
    %67 = vector.broadcast %cst_31 : f32 to vector<8x128xf32>
    %68 = arith.addf %66, %67 : vector<8x128xf32>
    %69 = vector.extract_strided_slice %52 {offsets = [0, 256], sizes = [8, 128], strides = [1, 1]} : vector<8x512xf32> to vector<8x128xf32>
    %70 = math.tanh %69 : vector<8x128xf32>
    %71 = vector.extract_strided_slice %52 {offsets = [0, 384], sizes = [8, 128], strides = [1, 1]} : vector<8x512xf32> to vector<8x128xf32>
    %cst_32 = arith.constant 5.000000e-01 : f32
    %72 = vector.broadcast %cst_32 : f32 to vector<8x128xf32>
    %73 = arith.mulf %72, %71 : vector<8x128xf32>
    %74 = math.tanh %73 : vector<8x128xf32>
    %cst_33 = arith.constant 5.000000e-01 : f32
    %75 = vector.broadcast %cst_33 : f32 to vector<8x128xf32>
    %76 = arith.mulf %75, %74 : vector<8x128xf32>
    %cst_34 = arith.constant 5.000000e-01 : f32
    %77 = vector.broadcast %cst_34 : f32 to vector<8x128xf32>
    %78 = arith.addf %76, %77 : vector<8x128xf32>
    %79 = arith.mulf %68, %10 : vector<8x128xf32>
    %80 = arith.mulf %60, %70 : vector<8x128xf32>
    %81 = arith.addf %79, %80 : vector<8x128xf32>
    %82 = math.tanh %81 : vector<8x128xf32>
    %83 = arith.mulf %78, %82 : vector<8x128xf32>
    %84 = vector.extract_strided_slice %83 {offsets = [0, 0], sizes = [1, 128], strides = [1, 1]} : vector<8x128xf32> to vector<1x128xf32>
    %85 = arith.index_cast %c0_i32 : i32 to index
    %c0_35 = arith.constant 0 : index
    %86 = vector.load %arg10[%85, %c0_35] : memref<8x128xf32, #tpu.memory_space<vmem>>, vector<1x128xf32>
    tpu.vector_store %arg10[%85, %c0_35], %84 {strides = array<i32>} : memref<8x128xf32, #tpu.memory_space<vmem>>, vector<1x128xf32>,
    %c1_i32 = arith.constant 1 : i32
    %c8_i32_36 = arith.constant 8 : i32
    %87 = arith.muli %c1_i32, %c8_i32_36 : i32
    %88 = tpu.assume_multiple %87, 8 : i32
    %89 = arith.index_cast %88 : i32 to index
    %c0_37 = arith.constant 0 : index
    %90 = vector.load %arg9[%89, %c0_37] : memref<64x512xf32, #tpu.memory_space<vmem>>, vector<8x512xf32>
    %c0_38 = arith.constant 0 : index
    %c0_39 = arith.constant 0 : index
    %91 = vector.load %arg2[%c0_38, %c0_39] : memref<128x512xf32, #tpu.memory_space<vmem>>, vector<128x512xf32>
    %cst_40 = arith.constant dense<0.000000e+00> : vector<8x512xf32>
    %92 = tpu.matmul %48, %91, %cst_40 {dimension_numbers = #tpu.dot_dimension_numbers<[1], [0], [0], [1], [0, 0, 1, 1], [], []>} : vector<8x128xf32>, vector<128x512xf32>, vector<8x512xf32> -> vector<8x512xf32>
    %93 = arith.addf %90, %92 : vector<8x512xf32>
    %94 = vector.extract_strided_slice %93 {offsets = [0, 0], sizes = [8, 128], strides = [1, 1]} : vector<8x512xf32> to vector<8x128xf32>
    %cst_41 = arith.constant 5.000000e-01 : f32
    %95 = vector.broadcast %cst_41 : f32 to vector<8x128xf32>
    %96 = arith.mulf %95, %94 : vector<8x128xf32>
    %97 = math.tanh %96 : vector<8x128xf32>
    %cst_42 = arith.constant 5.000000e-01 : f32
    %98 = vector.broadcast %cst_42 : f32 to vector<8x128xf32>
    %99 = arith.mulf %98, %97 : vector<8x128xf32>
    %cst_43 = arith.constant 5.000000e-01 : f32
    %100 = vector.broadcast %cst_43 : f32 to vector<8x128xf32>
    %101 = arith.addf %99, %100 : vector<8x128xf32>
    %102 = vector.extract_strided_slice %93 {offsets = [0, 128], sizes = [8, 128], strides = [1, 1]} : vector<8x512xf32> to vector<8x128xf32>
    %cst_44 = arith.constant 5.000000e-01 : f32
    %103 = vector.broadcast %cst_44 : f32 to vector<8x128xf32>
    %104 = arith.mulf %103, %102 : vector<8x128xf32>
    %105 = math.tanh %104 : vector<8x128xf32>
    %cst_45 = arith.constant 5.000000e-01 : f32
    %106 = vector.broadcast %cst_45 : f32 to vector<8x128xf32>
    %107 = arith.mulf %106, %105 : vector<8x128xf32>
    %cst_46 = arith.constant 5.000000e-01 : f32
    %108 = vector.broadcast %cst_46 : f32 to vector<8x128xf32>
    %109 = arith.addf %107, %108 : vector<8x128xf32>
    %110 = vector.extract_strided_slice %93 {offsets = [0, 256], sizes = [8, 128], strides = [1, 1]} : vector<8x512xf32> to vector<8x128xf32>
    %111 = math.tanh %110 : vector<8x128xf32>
    %112 = vector.extract_strided_slice %93 {offsets = [0, 384], sizes = [8, 128], strides = [1, 1]} : vector<8x512xf32> to vector<8x128xf32>
    %cst_47 = arith.constant 5.000000e-01 : f32
    %113 = vector.broadcast %cst_47 : f32 to vector<8x128xf32>
    %114 = arith.mulf %113, %112 : vector<8x128xf32>
    %115 = math.tanh %114 : vector<8x128xf32>
    %cst_48 = arith.constant 5.000000e-01 : f32
    %116 = vector.broadcast %cst_48 : f32 to vector<8x128xf32>
    %117 = arith.mulf %116, %115 : vector<8x128xf32>
    %cst_49 = arith.constant 5.000000e-01 : f32
    %118 = vector.broadcast %cst_49 : f32 to vector<8x128xf32>
    %119 = arith.addf %117, %118 : vector<8x128xf32>
    %120 = arith.mulf %109, %46 : vector<8x128xf32>
    %121 = arith.mulf %101, %111 : vector<8x128xf32>
    %122 = arith.addf %120, %121 : vector<8x128xf32>
    %123 = math.tanh %122 : vector<8x128xf32>
    %124 = arith.mulf %119, %123 : vector<8x128xf32>
    %125 = tpu.concatenate %124, %83 in 1 : vector<8x128xf32>, vector<8x128xf32> -> vector<8x256xf32>
    %c0_50 = arith.constant 0 : index
    %c0_51 = arith.constant 0 : index
    %126 = vector.load %arg4[%c0_50, %c0_51] : memref<256x512xf32, #tpu.memory_space<vmem>>, vector<256x512xf32>
    %cst_52 = arith.constant dense<0.000000e+00> : vector<8x512xf32>
    %127 = tpu.matmul %125, %126, %cst_52 {dimension_numbers = #tpu.dot_dimension_numbers<[1], [0], [0], [1], [0, 0, 1, 1], [], []>} : vector<8x256xf32>, vector<256x512xf32>, vector<8x512xf32> -> vector<8x512xf32>
    %128 = arith.addf %9, %127 : vector<8x512xf32>
    %129 = vector.extract_strided_slice %128 {offsets = [0, 0], sizes = [8, 128], strides = [1, 1]} : vector<8x512xf32> to vector<8x128xf32>
    %cst_53 = arith.constant 5.000000e-01 : f32
    %130 = vector.broadcast %cst_53 : f32 to vector<8x128xf32>
    %131 = arith.mulf %130, %129 : vector<8x128xf32>
    %132 = math.tanh %131 : vector<8x128xf32>
    %cst_54 = arith.constant 5.000000e-01 : f32
    %133 = vector.broadcast %cst_54 : f32 to vector<8x128xf32>
    %134 = arith.mulf %133, %132 : vector<8x128xf32>
    %cst_55 = arith.constant 5.000000e-01 : f32
    %135 = vector.broadcast %cst_55 : f32 to vector<8x128xf32>
    %136 = arith.addf %134, %135 : vector<8x128xf32>
    %137 = vector.extract_strided_slice %128 {offsets = [0, 128], sizes = [8, 128], strides = [1, 1]} : vector<8x512xf32> to vector<8x128xf32>
    %cst_56 = arith.constant 5.000000e-01 : f32
    %138 = vector.broadcast %cst_56 : f32 to vector<8x128xf32>
    %139 = arith.mulf %138, %137 : vector<8x128xf32>
    %140 = math.tanh %139 : vector<8x128xf32>
    %cst_57 = arith.constant 5.000000e-01 : f32
    %141 = vector.broadcast %cst_57 : f32 to vector<8x128xf32>
    %142 = arith.mulf %141, %140 : vector<8x128xf32>
    %cst_58 = arith.constant 5.000000e-01 : f32
    %143 = vector.broadcast %cst_58 : f32 to vector<8x128xf32>
    %144 = arith.addf %142, %143 : vector<8x128xf32>
    %145 = vector.extract_strided_slice %128 {offsets = [0, 256], sizes = [8, 128], strides = [1, 1]} : vector<8x512xf32> to vector<8x128xf32>
    %146 = math.tanh %145 : vector<8x128xf32>
    %147 = vector.extract_strided_slice %128 {offsets = [0, 384], sizes = [8, 128], strides = [1, 1]} : vector<8x512xf32> to vector<8x128xf32>
    %cst_59 = arith.constant 5.000000e-01 : f32
    %148 = vector.broadcast %cst_59 : f32 to vector<8x128xf32>
    %149 = arith.mulf %148, %147 : vector<8x128xf32>
    %150 = math.tanh %149 : vector<8x128xf32>
    %cst_60 = arith.constant 5.000000e-01 : f32
    %151 = vector.broadcast %cst_60 : f32 to vector<8x128xf32>
    %152 = arith.mulf %151, %150 : vector<8x128xf32>
    %cst_61 = arith.constant 5.000000e-01 : f32
    %153 = vector.broadcast %cst_61 : f32 to vector<8x128xf32>
    %154 = arith.addf %152, %153 : vector<8x128xf32>
    %155 = arith.mulf %144, %81 : vector<8x128xf32>
    %156 = arith.mulf %136, %146 : vector<8x128xf32>
    %157 = arith.addf %155, %156 : vector<8x128xf32>
    %158 = math.tanh %157 : vector<8x128xf32>
    %159 = arith.mulf %154, %158 : vector<8x128xf32>
    %160 = vector.extract_strided_slice %159 {offsets = [0, 0], sizes = [1, 128], strides = [1, 1]} : vector<8x128xf32> to vector<1x128xf32>
    %161 = arith.index_cast %c1_i32 : i32 to index
    %c0_62 = arith.constant 0 : index
    %162 = vector.load %arg10[%161, %c0_62] : memref<8x128xf32, #tpu.memory_space<vmem>>, vector<1x128xf32>
    tpu.vector_store %arg10[%161, %c0_62], %160 {strides = array<i32>} : memref<8x128xf32, #tpu.memory_space<vmem>>, vector<1x128xf32>,
    %c2_i32 = arith.constant 2 : i32
    %c8_i32_63 = arith.constant 8 : i32
    %163 = arith.muli %c2_i32, %c8_i32_63 : i32
    %164 = tpu.assume_multiple %163, 8 : i32
    %165 = arith.index_cast %164 : i32 to index
    %c0_64 = arith.constant 0 : index
    %166 = vector.load %arg9[%165, %c0_64] : memref<64x512xf32, #tpu.memory_space<vmem>>, vector<8x512xf32>
    %c0_65 = arith.constant 0 : index
    %c0_66 = arith.constant 0 : index
    %167 = vector.load %arg2[%c0_65, %c0_66] : memref<128x512xf32, #tpu.memory_space<vmem>>, vector<128x512xf32>
    %cst_67 = arith.constant dense<0.000000e+00> : vector<8x512xf32>
    %168 = tpu.matmul %124, %167, %cst_67 {dimension_numbers = #tpu.dot_dimension_numbers<[1], [0], [0], [1], [0, 0, 1, 1], [], []>} : vector<8x128xf32>, vector<128x512xf32>, vector<8x512xf32> -> vector<8x512xf32>
    %169 = arith.addf %166, %168 : vector<8x512xf32>
    %170 = vector.extract_strided_slice %169 {offsets = [0, 0], sizes = [8, 128], strides = [1, 1]} : vector<8x512xf32> to vector<8x128xf32>
    %cst_68 = arith.constant 5.000000e-01 : f32
    %171 = vector.broadcast %cst_68 : f32 to vector<8x128xf32>
    %172 = arith.mulf %171, %170 : vector<8x128xf32>
    %173 = math.tanh %172 : vector<8x128xf32>
    %cst_69 = arith.constant 5.000000e-01 : f32
    %174 = vector.broadcast %cst_69 : f32 to vector<8x128xf32>
    %175 = arith.mulf %174, %173 : vector<8x128xf32>
    %cst_70 = arith.constant 5.000000e-01 : f32
    %176 = vector.broadcast %cst_70 : f32 to vector<8x128xf32>
    %177 = arith.addf %175, %176 : vector<8x128xf32>
    %178 = vector.extract_strided_slice %169 {offsets = [0, 128], sizes = [8, 128], strides = [1, 1]} : vector<8x512xf32> to vector<8x128xf32>
    %cst_71 = arith.constant 5.000000e-01 : f32
    %179 = vector.broadcast %cst_71 : f32 to vector<8x128xf32>
    %180 = arith.mulf %179, %178 : vector<8x128xf32>
    %181 = math.tanh %180 : vector<8x128xf32>
    %cst_72 = arith.constant 5.000000e-01 : f32
    %182 = vector.broadcast %cst_72 : f32 to vector<8x128xf32>
    %183 = arith.mulf %182, %181 : vector<8x128xf32>
    %cst_73 = arith.constant 5.000000e-01 : f32
    %184 = vector.broadcast %cst_73 : f32 to vector<8x128xf32>
    %185 = arith.addf %183, %184 : vector<8x128xf32>
    %186 = vector.extract_strided_slice %169 {offsets = [0, 256], sizes = [8, 128], strides = [1, 1]} : vector<8x512xf32> to vector<8x128xf32>
    %187 = math.tanh %186 : vector<8x128xf32>
    %188 = vector.extract_strided_slice %169 {offsets = [0, 384], sizes = [8, 128], strides = [1, 1]} : vector<8x512xf32> to vector<8x128xf32>
    %cst_74 = arith.constant 5.000000e-01 : f32
    %189 = vector.broadcast %cst_74 : f32 to vector<8x128xf32>
    %190 = arith.mulf %189, %188 : vector<8x128xf32>
    %191 = math.tanh %190 : vector<8x128xf32>
    %cst_75 = arith.constant 5.000000e-01 : f32
    %192 = vector.broadcast %cst_75 : f32 to vector<8x128xf32>
    %193 = arith.mulf %192, %191 : vector<8x128xf32>
    %cst_76 = arith.constant 5.000000e-01 : f32
    %194 = vector.broadcast %cst_76 : f32 to vector<8x128xf32>
    %195 = arith.addf %193, %194 : vector<8x128xf32>
    %196 = arith.mulf %185, %122 : vector<8x128xf32>
    %197 = arith.mulf %177, %187 : vector<8x128xf32>
    %198 = arith.addf %196, %197 : vector<8x128xf32>
    %199 = math.tanh %198 : vector<8x128xf32>
    %200 = arith.mulf %195, %199 : vector<8x128xf32>
    %201 = tpu.concatenate %200, %159 in 1 : vector<8x128xf32>, vector<8x128xf32> -> vector<8x256xf32>
    %c0_77 = arith.constant 0 : index
    %c0_78 = arith.constant 0 : index
    %202 = vector.load %arg4[%c0_77, %c0_78] : memref<256x512xf32, #tpu.memory_space<vmem>>, vector<256x512xf32>
    %cst_79 = arith.constant dense<0.000000e+00> : vector<8x512xf32>
    %203 = tpu.matmul %201, %202, %cst_79 {dimension_numbers = #tpu.dot_dimension_numbers<[1], [0], [0], [1], [0, 0, 1, 1], [], []>} : vector<8x256xf32>, vector<256x512xf32>, vector<8x512xf32> -> vector<8x512xf32>
    %204 = arith.addf %9, %203 : vector<8x512xf32>
    %205 = vector.extract_strided_slice %204 {offsets = [0, 0], sizes = [8, 128], strides = [1, 1]} : vector<8x512xf32> to vector<8x128xf32>
    %cst_80 = arith.constant 5.000000e-01 : f32
    %206 = vector.broadcast %cst_80 : f32 to vector<8x128xf32>
    %207 = arith.mulf %206, %205 : vector<8x128xf32>
    %208 = math.tanh %207 : vector<8x128xf32>
    %cst_81 = arith.constant 5.000000e-01 : f32
    %209 = vector.broadcast %cst_81 : f32 to vector<8x128xf32>
    %210 = arith.mulf %209, %208 : vector<8x128xf32>
    %cst_82 = arith.constant 5.000000e-01 : f32
    %211 = vector.broadcast %cst_82 : f32 to vector<8x128xf32>
    %212 = arith.addf %210, %211 : vector<8x128xf32>
    %213 = vector.extract_strided_slice %204 {offsets = [0, 128], sizes = [8, 128], strides = [1, 1]} : vector<8x512xf32> to vector<8x128xf32>
    %cst_83 = arith.constant 5.000000e-01 : f32
    %214 = vector.broadcast %cst_83 : f32 to vector<8x128xf32>
    %215 = arith.mulf %214, %213 : vector<8x128xf32>
    %216 = math.tanh %215 : vector<8x128xf32>
    %cst_84 = arith.constant 5.000000e-01 : f32
    %217 = vector.broadcast %cst_84 : f32 to vector<8x128xf32>
    %218 = arith.mulf %217, %216 : vector<8x128xf32>
    %cst_85 = arith.constant 5.000000e-01 : f32
    %219 = vector.broadcast %cst_85 : f32 to vector<8x128xf32>
    %220 = arith.addf %218, %219 : vector<8x128xf32>
    %221 = vector.extract_strided_slice %204 {offsets = [0, 256], sizes = [8, 128], strides = [1, 1]} : vector<8x512xf32> to vector<8x128xf32>
    %222 = math.tanh %221 : vector<8x128xf32>
    %223 = vector.extract_strided_slice %204 {offsets = [0, 384], sizes = [8, 128], strides = [1, 1]} : vector<8x512xf32> to vector<8x128xf32>
    %cst_86 = arith.constant 5.000000e-01 : f32
    %224 = vector.broadcast %cst_86 : f32 to vector<8x128xf32>
    %225 = arith.mulf %224, %223 : vector<8x128xf32>
    %226 = math.tanh %225 : vector<8x128xf32>
    %cst_87 = arith.constant 5.000000e-01 : f32
    %227 = vector.broadcast %cst_87 : f32 to vector<8x128xf32>
    %228 = arith.mulf %227, %226 : vector<8x128xf32>
    %cst_88 = arith.constant 5.000000e-01 : f32
    %229 = vector.broadcast %cst_88 : f32 to vector<8x128xf32>
    %230 = arith.addf %228, %229 : vector<8x128xf32>
    %231 = arith.mulf %220, %157 : vector<8x128xf32>
    %232 = arith.mulf %212, %222 : vector<8x128xf32>
    %233 = arith.addf %231, %232 : vector<8x128xf32>
    %234 = math.tanh %233 : vector<8x128xf32>
    %235 = arith.mulf %230, %234 : vector<8x128xf32>
    %236 = vector.extract_strided_slice %235 {offsets = [0, 0], sizes = [1, 128], strides = [1, 1]} : vector<8x128xf32> to vector<1x128xf32>
    %237 = arith.index_cast %c2_i32 : i32 to index
    %c0_89 = arith.constant 0 : index
    %238 = vector.load %arg10[%237, %c0_89] : memref<8x128xf32, #tpu.memory_space<vmem>>, vector<1x128xf32>
    tpu.vector_store %arg10[%237, %c0_89], %236 {strides = array<i32>} : memref<8x128xf32, #tpu.memory_space<vmem>>, vector<1x128xf32>,
    %c3_i32 = arith.constant 3 : i32
    %c8_i32_90 = arith.constant 8 : i32
    %239 = arith.muli %c3_i32, %c8_i32_90 : i32
    %240 = tpu.assume_multiple %239, 8 : i32
    %241 = arith.index_cast %240 : i32 to index
    %c0_91 = arith.constant 0 : index
    %242 = vector.load %arg9[%241, %c0_91] : memref<64x512xf32, #tpu.memory_space<vmem>>, vector<8x512xf32>
    %c0_92 = arith.constant 0 : index
    %c0_93 = arith.constant 0 : index
    %243 = vector.load %arg2[%c0_92, %c0_93] : memref<128x512xf32, #tpu.memory_space<vmem>>, vector<128x512xf32>
    %cst_94 = arith.constant dense<0.000000e+00> : vector<8x512xf32>
    %244 = tpu.matmul %200, %243, %cst_94 {dimension_numbers = #tpu.dot_dimension_numbers<[1], [0], [0], [1], [0, 0, 1, 1], [], []>} : vector<8x128xf32>, vector<128x512xf32>, vector<8x512xf32> -> vector<8x512xf32>
    %245 = arith.addf %242, %244 : vector<8x512xf32>
    %246 = vector.extract_strided_slice %245 {offsets = [0, 0], sizes = [8, 128], strides = [1, 1]} : vector<8x512xf32> to vector<8x128xf32>
    %cst_95 = arith.constant 5.000000e-01 : f32
    %247 = vector.broadcast %cst_95 : f32 to vector<8x128xf32>
    %248 = arith.mulf %247, %246 : vector<8x128xf32>
    %249 = math.tanh %248 : vector<8x128xf32>
    %cst_96 = arith.constant 5.000000e-01 : f32
    %250 = vector.broadcast %cst_96 : f32 to vector<8x128xf32>
    %251 = arith.mulf %250, %249 : vector<8x128xf32>
    %cst_97 = arith.constant 5.000000e-01 : f32
    %252 = vector.broadcast %cst_97 : f32 to vector<8x128xf32>
    %253 = arith.addf %251, %252 : vector<8x128xf32>
    %254 = vector.extract_strided_slice %245 {offsets = [0, 128], sizes = [8, 128], strides = [1, 1]} : vector<8x512xf32> to vector<8x128xf32>
    %cst_98 = arith.constant 5.000000e-01 : f32
    %255 = vector.broadcast %cst_98 : f32 to vector<8x128xf32>
    %256 = arith.mulf %255, %254 : vector<8x128xf32>
    %257 = math.tanh %256 : vector<8x128xf32>
    %cst_99 = arith.constant 5.000000e-01 : f32
    %258 = vector.broadcast %cst_99 : f32 to vector<8x128xf32>
    %259 = arith.mulf %258, %257 : vector<8x128xf32>
    %cst_100 = arith.constant 5.000000e-01 : f32
    %260 = vector.broadcast %cst_100 : f32 to vector<8x128xf32>
    %261 = arith.addf %259, %260 : vector<8x128xf32>
    %262 = vector.extract_strided_slice %245 {offsets = [0, 256], sizes = [8, 128], strides = [1, 1]} : vector<8x512xf32> to vector<8x128xf32>
    %263 = math.tanh %262 : vector<8x128xf32>
    %264 = vector.extract_strided_slice %245 {offsets = [0, 384], sizes = [8, 128], strides = [1, 1]} : vector<8x512xf32> to vector<8x128xf32>
    %cst_101 = arith.constant 5.000000e-01 : f32
    %265 = vector.broadcast %cst_101 : f32 to vector<8x128xf32>
    %266 = arith.mulf %265, %264 : vector<8x128xf32>
    %267 = math.tanh %266 : vector<8x128xf32>
    %cst_102 = arith.constant 5.000000e-01 : f32
    %268 = vector.broadcast %cst_102 : f32 to vector<8x128xf32>
    %269 = arith.mulf %268, %267 : vector<8x128xf32>
    %cst_103 = arith.constant 5.000000e-01 : f32
    %270 = vector.broadcast %cst_103 : f32 to vector<8x128xf32>
    %271 = arith.addf %269, %270 : vector<8x128xf32>
    %272 = arith.mulf %261, %198 : vector<8x128xf32>
    %273 = arith.mulf %253, %263 : vector<8x128xf32>
    %274 = arith.addf %272, %273 : vector<8x128xf32>
    %275 = math.tanh %274 : vector<8x128xf32>
    %276 = arith.mulf %271, %275 : vector<8x128xf32>
    %277 = tpu.concatenate %276, %235 in 1 : vector<8x128xf32>, vector<8x128xf32> -> vector<8x256xf32>
    %c0_104 = arith.constant 0 : index
    %c0_105 = arith.constant 0 : index
    %278 = vector.load %arg4[%c0_104, %c0_105] : memref<256x512xf32, #tpu.memory_space<vmem>>, vector<256x512xf32>
    %cst_106 = arith.constant dense<0.000000e+00> : vector<8x512xf32>
    %279 = tpu.matmul %277, %278, %cst_106 {dimension_numbers = #tpu.dot_dimension_numbers<[1], [0], [0], [1], [0, 0, 1, 1], [], []>} : vector<8x256xf32>, vector<256x512xf32>, vector<8x512xf32> -> vector<8x512xf32>
    %280 = arith.addf %9, %279 : vector<8x512xf32>
    %281 = vector.extract_strided_slice %280 {offsets = [0, 0], sizes = [8, 128], strides = [1, 1]} : vector<8x512xf32> to vector<8x128xf32>
    %cst_107 = arith.constant 5.000000e-01 : f32
    %282 = vector.broadcast %cst_107 : f32 to vector<8x128xf32>
    %283 = arith.mulf %282, %281 : vector<8x128xf32>
    %284 = math.tanh %283 : vector<8x128xf32>
    %cst_108 = arith.constant 5.000000e-01 : f32
    %285 = vector.broadcast %cst_108 : f32 to vector<8x128xf32>
    %286 = arith.mulf %285, %284 : vector<8x128xf32>
    %cst_109 = arith.constant 5.000000e-01 : f32
    %287 = vector.broadcast %cst_109 : f32 to vector<8x128xf32>
    %288 = arith.addf %286, %287 : vector<8x128xf32>
    %289 = vector.extract_strided_slice %280 {offsets = [0, 128], sizes = [8, 128], strides = [1, 1]} : vector<8x512xf32> to vector<8x128xf32>
    %cst_110 = arith.constant 5.000000e-01 : f32
    %290 = vector.broadcast %cst_110 : f32 to vector<8x128xf32>
    %291 = arith.mulf %290, %289 : vector<8x128xf32>
    %292 = math.tanh %291 : vector<8x128xf32>
    %cst_111 = arith.constant 5.000000e-01 : f32
    %293 = vector.broadcast %cst_111 : f32 to vector<8x128xf32>
    %294 = arith.mulf %293, %292 : vector<8x128xf32>
    %cst_112 = arith.constant 5.000000e-01 : f32
    %295 = vector.broadcast %cst_112 : f32 to vector<8x128xf32>
    %296 = arith.addf %294, %295 : vector<8x128xf32>
    %297 = vector.extract_strided_slice %280 {offsets = [0, 256], sizes = [8, 128], strides = [1, 1]} : vector<8x512xf32> to vector<8x128xf32>
    %298 = math.tanh %297 : vector<8x128xf32>
    %299 = vector.extract_strided_slice %280 {offsets = [0, 384], sizes = [8, 128], strides = [1, 1]} : vector<8x512xf32> to vector<8x128xf32>
    %cst_113 = arith.constant 5.000000e-01 : f32
    %300 = vector.broadcast %cst_113 : f32 to vector<8x128xf32>
    %301 = arith.mulf %300, %299 : vector<8x128xf32>
    %302 = math.tanh %301 : vector<8x128xf32>
    %cst_114 = arith.constant 5.000000e-01 : f32
    %303 = vector.broadcast %cst_114 : f32 to vector<8x128xf32>
    %304 = arith.mulf %303, %302 : vector<8x128xf32>
    %cst_115 = arith.constant 5.000000e-01 : f32
    %305 = vector.broadcast %cst_115 : f32 to vector<8x128xf32>
    %306 = arith.addf %304, %305 : vector<8x128xf32>
    %307 = arith.mulf %296, %233 : vector<8x128xf32>
    %308 = arith.mulf %288, %298 : vector<8x128xf32>
    %309 = arith.addf %307, %308 : vector<8x128xf32>
    %310 = math.tanh %309 : vector<8x128xf32>
    %311 = arith.mulf %306, %310 : vector<8x128xf32>
    %312 = vector.extract_strided_slice %311 {offsets = [0, 0], sizes = [1, 128], strides = [1, 1]} : vector<8x128xf32> to vector<1x128xf32>
    %313 = arith.index_cast %c3_i32 : i32 to index
    %c0_116 = arith.constant 0 : index
    %314 = vector.load %arg10[%313, %c0_116] : memref<8x128xf32, #tpu.memory_space<vmem>>, vector<1x128xf32>
    tpu.vector_store %arg10[%313, %c0_116], %312 {strides = array<i32>} : memref<8x128xf32, #tpu.memory_space<vmem>>, vector<1x128xf32>,
    %c4_i32 = arith.constant 4 : i32
    %c8_i32_117 = arith.constant 8 : i32
    %315 = arith.muli %c4_i32, %c8_i32_117 : i32
    %316 = tpu.assume_multiple %315, 8 : i32
    %317 = arith.index_cast %316 : i32 to index
    %c0_118 = arith.constant 0 : index
    %318 = vector.load %arg9[%317, %c0_118] : memref<64x512xf32, #tpu.memory_space<vmem>>, vector<8x512xf32>
    %c0_119 = arith.constant 0 : index
    %c0_120 = arith.constant 0 : index
    %319 = vector.load %arg2[%c0_119, %c0_120] : memref<128x512xf32, #tpu.memory_space<vmem>>, vector<128x512xf32>
    %cst_121 = arith.constant dense<0.000000e+00> : vector<8x512xf32>
    %320 = tpu.matmul %276, %319, %cst_121 {dimension_numbers = #tpu.dot_dimension_numbers<[1], [0], [0], [1], [0, 0, 1, 1], [], []>} : vector<8x128xf32>, vector<128x512xf32>, vector<8x512xf32> -> vector<8x512xf32>
    %321 = arith.addf %318, %320 : vector<8x512xf32>
    %322 = vector.extract_strided_slice %321 {offsets = [0, 0], sizes = [8, 128], strides = [1, 1]} : vector<8x512xf32> to vector<8x128xf32>
    %cst_122 = arith.constant 5.000000e-01 : f32
    %323 = vector.broadcast %cst_122 : f32 to vector<8x128xf32>
    %324 = arith.mulf %323, %322 : vector<8x128xf32>
    %325 = math.tanh %324 : vector<8x128xf32>
    %cst_123 = arith.constant 5.000000e-01 : f32
    %326 = vector.broadcast %cst_123 : f32 to vector<8x128xf32>
    %327 = arith.mulf %326, %325 : vector<8x128xf32>
    %cst_124 = arith.constant 5.000000e-01 : f32
    %328 = vector.broadcast %cst_124 : f32 to vector<8x128xf32>
    %329 = arith.addf %327, %328 : vector<8x128xf32>
    %330 = vector.extract_strided_slice %321 {offsets = [0, 128], sizes = [8, 128], strides = [1, 1]} : vector<8x512xf32> to vector<8x128xf32>
    %cst_125 = arith.constant 5.000000e-01 : f32
    %331 = vector.broadcast %cst_125 : f32 to vector<8x128xf32>
    %332 = arith.mulf %331, %330 : vector<8x128xf32>
    %333 = math.tanh %332 : vector<8x128xf32>
    %cst_126 = arith.constant 5.000000e-01 : f32
    %334 = vector.broadcast %cst_126 : f32 to vector<8x128xf32>
    %335 = arith.mulf %334, %333 : vector<8x128xf32>
    %cst_127 = arith.constant 5.000000e-01 : f32
    %336 = vector.broadcast %cst_127 : f32 to vector<8x128xf32>
    %337 = arith.addf %335, %336 : vector<8x128xf32>
    %338 = vector.extract_strided_slice %321 {offsets = [0, 256], sizes = [8, 128], strides = [1, 1]} : vector<8x512xf32> to vector<8x128xf32>
    %339 = math.tanh %338 : vector<8x128xf32>
    %340 = vector.extract_strided_slice %321 {offsets = [0, 384], sizes = [8, 128], strides = [1, 1]} : vector<8x512xf32> to vector<8x128xf32>
    %cst_128 = arith.constant 5.000000e-01 : f32
    %341 = vector.broadcast %cst_128 : f32 to vector<8x128xf32>
    %342 = arith.mulf %341, %340 : vector<8x128xf32>
    %343 = math.tanh %342 : vector<8x128xf32>
    %cst_129 = arith.constant 5.000000e-01 : f32
    %344 = vector.broadcast %cst_129 : f32 to vector<8x128xf32>
    %345 = arith.mulf %344, %343 : vector<8x128xf32>
    %cst_130 = arith.constant 5.000000e-01 : f32
    %346 = vector.broadcast %cst_130 : f32 to vector<8x128xf32>
    %347 = arith.addf %345, %346 : vector<8x128xf32>
    %348 = arith.mulf %337, %274 : vector<8x128xf32>
    %349 = arith.mulf %329, %339 : vector<8x128xf32>
    %350 = arith.addf %348, %349 : vector<8x128xf32>
    %351 = math.tanh %350 : vector<8x128xf32>
    %352 = arith.mulf %347, %351 : vector<8x128xf32>
    %353 = tpu.concatenate %352, %311 in 1 : vector<8x128xf32>, vector<8x128xf32> -> vector<8x256xf32>
    %c0_131 = arith.constant 0 : index
    %c0_132 = arith.constant 0 : index
    %354 = vector.load %arg4[%c0_131, %c0_132] : memref<256x512xf32, #tpu.memory_space<vmem>>, vector<256x512xf32>
    %cst_133 = arith.constant dense<0.000000e+00> : vector<8x512xf32>
    %355 = tpu.matmul %353, %354, %cst_133 {dimension_numbers = #tpu.dot_dimension_numbers<[1], [0], [0], [1], [0, 0, 1, 1], [], []>} : vector<8x256xf32>, vector<256x512xf32>, vector<8x512xf32> -> vector<8x512xf32>
    %356 = arith.addf %9, %355 : vector<8x512xf32>
    %357 = vector.extract_strided_slice %356 {offsets = [0, 0], sizes = [8, 128], strides = [1, 1]} : vector<8x512xf32> to vector<8x128xf32>
    %cst_134 = arith.constant 5.000000e-01 : f32
    %358 = vector.broadcast %cst_134 : f32 to vector<8x128xf32>
    %359 = arith.mulf %358, %357 : vector<8x128xf32>
    %360 = math.tanh %359 : vector<8x128xf32>
    %cst_135 = arith.constant 5.000000e-01 : f32
    %361 = vector.broadcast %cst_135 : f32 to vector<8x128xf32>
    %362 = arith.mulf %361, %360 : vector<8x128xf32>
    %cst_136 = arith.constant 5.000000e-01 : f32
    %363 = vector.broadcast %cst_136 : f32 to vector<8x128xf32>
    %364 = arith.addf %362, %363 : vector<8x128xf32>
    %365 = vector.extract_strided_slice %356 {offsets = [0, 128], sizes = [8, 128], strides = [1, 1]} : vector<8x512xf32> to vector<8x128xf32>
    %cst_137 = arith.constant 5.000000e-01 : f32
    %366 = vector.broadcast %cst_137 : f32 to vector<8x128xf32>
    %367 = arith.mulf %366, %365 : vector<8x128xf32>
    %368 = math.tanh %367 : vector<8x128xf32>
    %cst_138 = arith.constant 5.000000e-01 : f32
    %369 = vector.broadcast %cst_138 : f32 to vector<8x128xf32>
    %370 = arith.mulf %369, %368 : vector<8x128xf32>
    %cst_139 = arith.constant 5.000000e-01 : f32
    %371 = vector.broadcast %cst_139 : f32 to vector<8x128xf32>
    %372 = arith.addf %370, %371 : vector<8x128xf32>
    %373 = vector.extract_strided_slice %356 {offsets = [0, 256], sizes = [8, 128], strides = [1, 1]} : vector<8x512xf32> to vector<8x128xf32>
    %374 = math.tanh %373 : vector<8x128xf32>
    %375 = vector.extract_strided_slice %356 {offsets = [0, 384], sizes = [8, 128], strides = [1, 1]} : vector<8x512xf32> to vector<8x128xf32>
    %cst_140 = arith.constant 5.000000e-01 : f32
    %376 = vector.broadcast %cst_140 : f32 to vector<8x128xf32>
    %377 = arith.mulf %376, %375 : vector<8x128xf32>
    %378 = math.tanh %377 : vector<8x128xf32>
    %cst_141 = arith.constant 5.000000e-01 : f32
    %379 = vector.broadcast %cst_141 : f32 to vector<8x128xf32>
    %380 = arith.mulf %379, %378 : vector<8x128xf32>
    %cst_142 = arith.constant 5.000000e-01 : f32
    %381 = vector.broadcast %cst_142 : f32 to vector<8x128xf32>
    %382 = arith.addf %380, %381 : vector<8x128xf32>
    %383 = arith.mulf %372, %309 : vector<8x128xf32>
    %384 = arith.mulf %364, %374 : vector<8x128xf32>
    %385 = arith.addf %383, %384 : vector<8x128xf32>
    %386 = math.tanh %385 : vector<8x128xf32>
    %387 = arith.mulf %382, %386 : vector<8x128xf32>
    %388 = vector.extract_strided_slice %387 {offsets = [0, 0], sizes = [1, 128], strides = [1, 1]} : vector<8x128xf32> to vector<1x128xf32>
    %389 = arith.index_cast %c4_i32 : i32 to index
    %c0_143 = arith.constant 0 : index
    %390 = vector.load %arg10[%389, %c0_143] : memref<8x128xf32, #tpu.memory_space<vmem>>, vector<1x128xf32>
    tpu.vector_store %arg10[%389, %c0_143], %388 {strides = array<i32>} : memref<8x128xf32, #tpu.memory_space<vmem>>, vector<1x128xf32>,
    %c5_i32 = arith.constant 5 : i32
    %c8_i32_144 = arith.constant 8 : i32
    %391 = arith.muli %c5_i32, %c8_i32_144 : i32
    %392 = tpu.assume_multiple %391, 8 : i32
    %393 = arith.index_cast %392 : i32 to index
    %c0_145 = arith.constant 0 : index
    %394 = vector.load %arg9[%393, %c0_145] : memref<64x512xf32, #tpu.memory_space<vmem>>, vector<8x512xf32>
    %c0_146 = arith.constant 0 : index
    %c0_147 = arith.constant 0 : index
    %395 = vector.load %arg2[%c0_146, %c0_147] : memref<128x512xf32, #tpu.memory_space<vmem>>, vector<128x512xf32>
    %cst_148 = arith.constant dense<0.000000e+00> : vector<8x512xf32>
    %396 = tpu.matmul %352, %395, %cst_148 {dimension_numbers = #tpu.dot_dimension_numbers<[1], [0], [0], [1], [0, 0, 1, 1], [], []>} : vector<8x128xf32>, vector<128x512xf32>, vector<8x512xf32> -> vector<8x512xf32>
    %397 = arith.addf %394, %396 : vector<8x512xf32>
    %398 = vector.extract_strided_slice %397 {offsets = [0, 0], sizes = [8, 128], strides = [1, 1]} : vector<8x512xf32> to vector<8x128xf32>
    %cst_149 = arith.constant 5.000000e-01 : f32
    %399 = vector.broadcast %cst_149 : f32 to vector<8x128xf32>
    %400 = arith.mulf %399, %398 : vector<8x128xf32>
    %401 = math.tanh %400 : vector<8x128xf32>
    %cst_150 = arith.constant 5.000000e-01 : f32
    %402 = vector.broadcast %cst_150 : f32 to vector<8x128xf32>
    %403 = arith.mulf %402, %401 : vector<8x128xf32>
    %cst_151 = arith.constant 5.000000e-01 : f32
    %404 = vector.broadcast %cst_151 : f32 to vector<8x128xf32>
    %405 = arith.addf %403, %404 : vector<8x128xf32>
    %406 = vector.extract_strided_slice %397 {offsets = [0, 128], sizes = [8, 128], strides = [1, 1]} : vector<8x512xf32> to vector<8x128xf32>
    %cst_152 = arith.constant 5.000000e-01 : f32
    %407 = vector.broadcast %cst_152 : f32 to vector<8x128xf32>
    %408 = arith.mulf %407, %406 : vector<8x128xf32>
    %409 = math.tanh %408 : vector<8x128xf32>
    %cst_153 = arith.constant 5.000000e-01 : f32
    %410 = vector.broadcast %cst_153 : f32 to vector<8x128xf32>
    %411 = arith.mulf %410, %409 : vector<8x128xf32>
    %cst_154 = arith.constant 5.000000e-01 : f32
    %412 = vector.broadcast %cst_154 : f32 to vector<8x128xf32>
    %413 = arith.addf %411, %412 : vector<8x128xf32>
    %414 = vector.extract_strided_slice %397 {offsets = [0, 256], sizes = [8, 128], strides = [1, 1]} : vector<8x512xf32> to vector<8x128xf32>
    %415 = math.tanh %414 : vector<8x128xf32>
    %416 = vector.extract_strided_slice %397 {offsets = [0, 384], sizes = [8, 128], strides = [1, 1]} : vector<8x512xf32> to vector<8x128xf32>
    %cst_155 = arith.constant 5.000000e-01 : f32
    %417 = vector.broadcast %cst_155 : f32 to vector<8x128xf32>
    %418 = arith.mulf %417, %416 : vector<8x128xf32>
    %419 = math.tanh %418 : vector<8x128xf32>
    %cst_156 = arith.constant 5.000000e-01 : f32
    %420 = vector.broadcast %cst_156 : f32 to vector<8x128xf32>
    %421 = arith.mulf %420, %419 : vector<8x128xf32>
    %cst_157 = arith.constant 5.000000e-01 : f32
    %422 = vector.broadcast %cst_157 : f32 to vector<8x128xf32>
    %423 = arith.addf %421, %422 : vector<8x128xf32>
    %424 = arith.mulf %413, %350 : vector<8x128xf32>
    %425 = arith.mulf %405, %415 : vector<8x128xf32>
    %426 = arith.addf %424, %425 : vector<8x128xf32>
    %427 = math.tanh %426 : vector<8x128xf32>
    %428 = arith.mulf %423, %427 : vector<8x128xf32>
    %429 = tpu.concatenate %428, %387 in 1 : vector<8x128xf32>, vector<8x128xf32> -> vector<8x256xf32>
    %c0_158 = arith.constant 0 : index
    %c0_159 = arith.constant 0 : index
    %430 = vector.load %arg4[%c0_158, %c0_159] : memref<256x512xf32, #tpu.memory_space<vmem>>, vector<256x512xf32>
    %cst_160 = arith.constant dense<0.000000e+00> : vector<8x512xf32>
    %431 = tpu.matmul %429, %430, %cst_160 {dimension_numbers = #tpu.dot_dimension_numbers<[1], [0], [0], [1], [0, 0, 1, 1], [], []>} : vector<8x256xf32>, vector<256x512xf32>, vector<8x512xf32> -> vector<8x512xf32>
    %432 = arith.addf %9, %431 : vector<8x512xf32>
    %433 = vector.extract_strided_slice %432 {offsets = [0, 0], sizes = [8, 128], strides = [1, 1]} : vector<8x512xf32> to vector<8x128xf32>
    %cst_161 = arith.constant 5.000000e-01 : f32
    %434 = vector.broadcast %cst_161 : f32 to vector<8x128xf32>
    %435 = arith.mulf %434, %433 : vector<8x128xf32>
    %436 = math.tanh %435 : vector<8x128xf32>
    %cst_162 = arith.constant 5.000000e-01 : f32
    %437 = vector.broadcast %cst_162 : f32 to vector<8x128xf32>
    %438 = arith.mulf %437, %436 : vector<8x128xf32>
    %cst_163 = arith.constant 5.000000e-01 : f32
    %439 = vector.broadcast %cst_163 : f32 to vector<8x128xf32>
    %440 = arith.addf %438, %439 : vector<8x128xf32>
    %441 = vector.extract_strided_slice %432 {offsets = [0, 128], sizes = [8, 128], strides = [1, 1]} : vector<8x512xf32> to vector<8x128xf32>
    %cst_164 = arith.constant 5.000000e-01 : f32
    %442 = vector.broadcast %cst_164 : f32 to vector<8x128xf32>
    %443 = arith.mulf %442, %441 : vector<8x128xf32>
    %444 = math.tanh %443 : vector<8x128xf32>
    %cst_165 = arith.constant 5.000000e-01 : f32
    %445 = vector.broadcast %cst_165 : f32 to vector<8x128xf32>
    %446 = arith.mulf %445, %444 : vector<8x128xf32>
    %cst_166 = arith.constant 5.000000e-01 : f32
    %447 = vector.broadcast %cst_166 : f32 to vector<8x128xf32>
    %448 = arith.addf %446, %447 : vector<8x128xf32>
    %449 = vector.extract_strided_slice %432 {offsets = [0, 256], sizes = [8, 128], strides = [1, 1]} : vector<8x512xf32> to vector<8x128xf32>
    %450 = math.tanh %449 : vector<8x128xf32>
    %451 = vector.extract_strided_slice %432 {offsets = [0, 384], sizes = [8, 128], strides = [1, 1]} : vector<8x512xf32> to vector<8x128xf32>
    %cst_167 = arith.constant 5.000000e-01 : f32
    %452 = vector.broadcast %cst_167 : f32 to vector<8x128xf32>
    %453 = arith.mulf %452, %451 : vector<8x128xf32>
    %454 = math.tanh %453 : vector<8x128xf32>
    %cst_168 = arith.constant 5.000000e-01 : f32
    %455 = vector.broadcast %cst_168 : f32 to vector<8x128xf32>
    %456 = arith.mulf %455, %454 : vector<8x128xf32>
    %cst_169 = arith.constant 5.000000e-01 : f32
    %457 = vector.broadcast %cst_169 : f32 to vector<8x128xf32>
    %458 = arith.addf %456, %457 : vector<8x128xf32>
    %459 = arith.mulf %448, %385 : vector<8x128xf32>
    %460 = arith.mulf %440, %450 : vector<8x128xf32>
    %461 = arith.addf %459, %460 : vector<8x128xf32>
    %462 = math.tanh %461 : vector<8x128xf32>
    %463 = arith.mulf %458, %462 : vector<8x128xf32>
    %464 = vector.extract_strided_slice %463 {offsets = [0, 0], sizes = [1, 128], strides = [1, 1]} : vector<8x128xf32> to vector<1x128xf32>
    %465 = arith.index_cast %c5_i32 : i32 to index
    %c0_170 = arith.constant 0 : index
    %466 = vector.load %arg10[%465, %c0_170] : memref<8x128xf32, #tpu.memory_space<vmem>>, vector<1x128xf32>
    tpu.vector_store %arg10[%465, %c0_170], %464 {strides = array<i32>} : memref<8x128xf32, #tpu.memory_space<vmem>>, vector<1x128xf32>,
    %c6_i32 = arith.constant 6 : i32
    %c8_i32_171 = arith.constant 8 : i32
    %467 = arith.muli %c6_i32, %c8_i32_171 : i32
    %468 = tpu.assume_multiple %467, 8 : i32
    %469 = arith.index_cast %468 : i32 to index
    %c0_172 = arith.constant 0 : index
    %470 = vector.load %arg9[%469, %c0_172] : memref<64x512xf32, #tpu.memory_space<vmem>>, vector<8x512xf32>
    %c0_173 = arith.constant 0 : index
    %c0_174 = arith.constant 0 : index
    %471 = vector.load %arg2[%c0_173, %c0_174] : memref<128x512xf32, #tpu.memory_space<vmem>>, vector<128x512xf32>
    %cst_175 = arith.constant dense<0.000000e+00> : vector<8x512xf32>
    %472 = tpu.matmul %428, %471, %cst_175 {dimension_numbers = #tpu.dot_dimension_numbers<[1], [0], [0], [1], [0, 0, 1, 1], [], []>} : vector<8x128xf32>, vector<128x512xf32>, vector<8x512xf32> -> vector<8x512xf32>
    %473 = arith.addf %470, %472 : vector<8x512xf32>
    %474 = vector.extract_strided_slice %473 {offsets = [0, 0], sizes = [8, 128], strides = [1, 1]} : vector<8x512xf32> to vector<8x128xf32>
    %cst_176 = arith.constant 5.000000e-01 : f32
    %475 = vector.broadcast %cst_176 : f32 to vector<8x128xf32>
    %476 = arith.mulf %475, %474 : vector<8x128xf32>
    %477 = math.tanh %476 : vector<8x128xf32>
    %cst_177 = arith.constant 5.000000e-01 : f32
    %478 = vector.broadcast %cst_177 : f32 to vector<8x128xf32>
    %479 = arith.mulf %478, %477 : vector<8x128xf32>
    %cst_178 = arith.constant 5.000000e-01 : f32
    %480 = vector.broadcast %cst_178 : f32 to vector<8x128xf32>
    %481 = arith.addf %479, %480 : vector<8x128xf32>
    %482 = vector.extract_strided_slice %473 {offsets = [0, 128], sizes = [8, 128], strides = [1, 1]} : vector<8x512xf32> to vector<8x128xf32>
    %cst_179 = arith.constant 5.000000e-01 : f32
    %483 = vector.broadcast %cst_179 : f32 to vector<8x128xf32>
    %484 = arith.mulf %483, %482 : vector<8x128xf32>
    %485 = math.tanh %484 : vector<8x128xf32>
    %cst_180 = arith.constant 5.000000e-01 : f32
    %486 = vector.broadcast %cst_180 : f32 to vector<8x128xf32>
    %487 = arith.mulf %486, %485 : vector<8x128xf32>
    %cst_181 = arith.constant 5.000000e-01 : f32
    %488 = vector.broadcast %cst_181 : f32 to vector<8x128xf32>
    %489 = arith.addf %487, %488 : vector<8x128xf32>
    %490 = vector.extract_strided_slice %473 {offsets = [0, 256], sizes = [8, 128], strides = [1, 1]} : vector<8x512xf32> to vector<8x128xf32>
    %491 = math.tanh %490 : vector<8x128xf32>
    %492 = vector.extract_strided_slice %473 {offsets = [0, 384], sizes = [8, 128], strides = [1, 1]} : vector<8x512xf32> to vector<8x128xf32>
    %cst_182 = arith.constant 5.000000e-01 : f32
    %493 = vector.broadcast %cst_182 : f32 to vector<8x128xf32>
    %494 = arith.mulf %493, %492 : vector<8x128xf32>
    %495 = math.tanh %494 : vector<8x128xf32>
    %cst_183 = arith.constant 5.000000e-01 : f32
    %496 = vector.broadcast %cst_183 : f32 to vector<8x128xf32>
    %497 = arith.mulf %496, %495 : vector<8x128xf32>
    %cst_184 = arith.constant 5.000000e-01 : f32
    %498 = vector.broadcast %cst_184 : f32 to vector<8x128xf32>
    %499 = arith.addf %497, %498 : vector<8x128xf32>
    %500 = arith.mulf %489, %426 : vector<8x128xf32>
    %501 = arith.mulf %481, %491 : vector<8x128xf32>
    %502 = arith.addf %500, %501 : vector<8x128xf32>
    %503 = math.tanh %502 : vector<8x128xf32>
    %504 = arith.mulf %499, %503 : vector<8x128xf32>
    %505 = tpu.concatenate %504, %463 in 1 : vector<8x128xf32>, vector<8x128xf32> -> vector<8x256xf32>
    %c0_185 = arith.constant 0 : index
    %c0_186 = arith.constant 0 : index
    %506 = vector.load %arg4[%c0_185, %c0_186] : memref<256x512xf32, #tpu.memory_space<vmem>>, vector<256x512xf32>
    %cst_187 = arith.constant dense<0.000000e+00> : vector<8x512xf32>
    %507 = tpu.matmul %505, %506, %cst_187 {dimension_numbers = #tpu.dot_dimension_numbers<[1], [0], [0], [1], [0, 0, 1, 1], [], []>} : vector<8x256xf32>, vector<256x512xf32>, vector<8x512xf32> -> vector<8x512xf32>
    %508 = arith.addf %9, %507 : vector<8x512xf32>
    %509 = vector.extract_strided_slice %508 {offsets = [0, 0], sizes = [8, 128], strides = [1, 1]} : vector<8x512xf32> to vector<8x128xf32>
    %cst_188 = arith.constant 5.000000e-01 : f32
    %510 = vector.broadcast %cst_188 : f32 to vector<8x128xf32>
    %511 = arith.mulf %510, %509 : vector<8x128xf32>
    %512 = math.tanh %511 : vector<8x128xf32>
    %cst_189 = arith.constant 5.000000e-01 : f32
    %513 = vector.broadcast %cst_189 : f32 to vector<8x128xf32>
    %514 = arith.mulf %513, %512 : vector<8x128xf32>
    %cst_190 = arith.constant 5.000000e-01 : f32
    %515 = vector.broadcast %cst_190 : f32 to vector<8x128xf32>
    %516 = arith.addf %514, %515 : vector<8x128xf32>
    %517 = vector.extract_strided_slice %508 {offsets = [0, 128], sizes = [8, 128], strides = [1, 1]} : vector<8x512xf32> to vector<8x128xf32>
    %cst_191 = arith.constant 5.000000e-01 : f32
    %518 = vector.broadcast %cst_191 : f32 to vector<8x128xf32>
    %519 = arith.mulf %518, %517 : vector<8x128xf32>
    %520 = math.tanh %519 : vector<8x128xf32>
    %cst_192 = arith.constant 5.000000e-01 : f32
    %521 = vector.broadcast %cst_192 : f32 to vector<8x128xf32>
    %522 = arith.mulf %521, %520 : vector<8x128xf32>
    %cst_193 = arith.constant 5.000000e-01 : f32
    %523 = vector.broadcast %cst_193 : f32 to vector<8x128xf32>
    %524 = arith.addf %522, %523 : vector<8x128xf32>
    %525 = vector.extract_strided_slice %508 {offsets = [0, 256], sizes = [8, 128], strides = [1, 1]} : vector<8x512xf32> to vector<8x128xf32>
    %526 = math.tanh %525 : vector<8x128xf32>
    %527 = vector.extract_strided_slice %508 {offsets = [0, 384], sizes = [8, 128], strides = [1, 1]} : vector<8x512xf32> to vector<8x128xf32>
    %cst_194 = arith.constant 5.000000e-01 : f32
    %528 = vector.broadcast %cst_194 : f32 to vector<8x128xf32>
    %529 = arith.mulf %528, %527 : vector<8x128xf32>
    %530 = math.tanh %529 : vector<8x128xf32>
    %cst_195 = arith.constant 5.000000e-01 : f32
    %531 = vector.broadcast %cst_195 : f32 to vector<8x128xf32>
    %532 = arith.mulf %531, %530 : vector<8x128xf32>
    %cst_196 = arith.constant 5.000000e-01 : f32
    %533 = vector.broadcast %cst_196 : f32 to vector<8x128xf32>
    %534 = arith.addf %532, %533 : vector<8x128xf32>
    %535 = arith.mulf %524, %461 : vector<8x128xf32>
    %536 = arith.mulf %516, %526 : vector<8x128xf32>
    %537 = arith.addf %535, %536 : vector<8x128xf32>
    %538 = math.tanh %537 : vector<8x128xf32>
    %539 = arith.mulf %534, %538 : vector<8x128xf32>
    %540 = vector.extract_strided_slice %539 {offsets = [0, 0], sizes = [1, 128], strides = [1, 1]} : vector<8x128xf32> to vector<1x128xf32>
    %541 = arith.index_cast %c6_i32 : i32 to index
    %c0_197 = arith.constant 0 : index
    %542 = vector.load %arg10[%541, %c0_197] : memref<8x128xf32, #tpu.memory_space<vmem>>, vector<1x128xf32>
    tpu.vector_store %arg10[%541, %c0_197], %540 {strides = array<i32>} : memref<8x128xf32, #tpu.memory_space<vmem>>, vector<1x128xf32>,
    %c7_i32 = arith.constant 7 : i32
    %c8_i32_198 = arith.constant 8 : i32
    %543 = arith.muli %c7_i32, %c8_i32_198 : i32
    %544 = tpu.assume_multiple %543, 8 : i32
    %545 = arith.index_cast %544 : i32 to index
    %c0_199 = arith.constant 0 : index
    %546 = vector.load %arg9[%545, %c0_199] : memref<64x512xf32, #tpu.memory_space<vmem>>, vector<8x512xf32>
    %c0_200 = arith.constant 0 : index
    %c0_201 = arith.constant 0 : index
    %547 = vector.load %arg2[%c0_200, %c0_201] : memref<128x512xf32, #tpu.memory_space<vmem>>, vector<128x512xf32>
    %cst_202 = arith.constant dense<0.000000e+00> : vector<8x512xf32>
    %548 = tpu.matmul %504, %547, %cst_202 {dimension_numbers = #tpu.dot_dimension_numbers<[1], [0], [0], [1], [0, 0, 1, 1], [], []>} : vector<8x128xf32>, vector<128x512xf32>, vector<8x512xf32> -> vector<8x512xf32>
    %549 = arith.addf %546, %548 : vector<8x512xf32>
    %550 = vector.extract_strided_slice %549 {offsets = [0, 0], sizes = [8, 128], strides = [1, 1]} : vector<8x512xf32> to vector<8x128xf32>
    %cst_203 = arith.constant 5.000000e-01 : f32
    %551 = vector.broadcast %cst_203 : f32 to vector<8x128xf32>
    %552 = arith.mulf %551, %550 : vector<8x128xf32>
    %553 = math.tanh %552 : vector<8x128xf32>
    %cst_204 = arith.constant 5.000000e-01 : f32
    %554 = vector.broadcast %cst_204 : f32 to vector<8x128xf32>
    %555 = arith.mulf %554, %553 : vector<8x128xf32>
    %cst_205 = arith.constant 5.000000e-01 : f32
    %556 = vector.broadcast %cst_205 : f32 to vector<8x128xf32>
    %557 = arith.addf %555, %556 : vector<8x128xf32>
    %558 = vector.extract_strided_slice %549 {offsets = [0, 128], sizes = [8, 128], strides = [1, 1]} : vector<8x512xf32> to vector<8x128xf32>
    %cst_206 = arith.constant 5.000000e-01 : f32
    %559 = vector.broadcast %cst_206 : f32 to vector<8x128xf32>
    %560 = arith.mulf %559, %558 : vector<8x128xf32>
    %561 = math.tanh %560 : vector<8x128xf32>
    %cst_207 = arith.constant 5.000000e-01 : f32
    %562 = vector.broadcast %cst_207 : f32 to vector<8x128xf32>
    %563 = arith.mulf %562, %561 : vector<8x128xf32>
    %cst_208 = arith.constant 5.000000e-01 : f32
    %564 = vector.broadcast %cst_208 : f32 to vector<8x128xf32>
    %565 = arith.addf %563, %564 : vector<8x128xf32>
    %566 = vector.extract_strided_slice %549 {offsets = [0, 256], sizes = [8, 128], strides = [1, 1]} : vector<8x512xf32> to vector<8x128xf32>
    %567 = math.tanh %566 : vector<8x128xf32>
    %568 = vector.extract_strided_slice %549 {offsets = [0, 384], sizes = [8, 128], strides = [1, 1]} : vector<8x512xf32> to vector<8x128xf32>
    %cst_209 = arith.constant 5.000000e-01 : f32
    %569 = vector.broadcast %cst_209 : f32 to vector<8x128xf32>
    %570 = arith.mulf %569, %568 : vector<8x128xf32>
    %571 = math.tanh %570 : vector<8x128xf32>
    %cst_210 = arith.constant 5.000000e-01 : f32
    %572 = vector.broadcast %cst_210 : f32 to vector<8x128xf32>
    %573 = arith.mulf %572, %571 : vector<8x128xf32>
    %cst_211 = arith.constant 5.000000e-01 : f32
    %574 = vector.broadcast %cst_211 : f32 to vector<8x128xf32>
    %575 = arith.addf %573, %574 : vector<8x128xf32>
    %576 = arith.mulf %565, %502 : vector<8x128xf32>
    %577 = arith.mulf %557, %567 : vector<8x128xf32>
    %578 = arith.addf %576, %577 : vector<8x128xf32>
    %579 = math.tanh %578 : vector<8x128xf32>
    %580 = arith.mulf %575, %579 : vector<8x128xf32>
    %581 = tpu.concatenate %580, %539 in 1 : vector<8x128xf32>, vector<8x128xf32> -> vector<8x256xf32>
    %c0_212 = arith.constant 0 : index
    %c0_213 = arith.constant 0 : index
    %582 = vector.load %arg4[%c0_212, %c0_213] : memref<256x512xf32, #tpu.memory_space<vmem>>, vector<256x512xf32>
    %cst_214 = arith.constant dense<0.000000e+00> : vector<8x512xf32>
    %583 = tpu.matmul %581, %582, %cst_214 {dimension_numbers = #tpu.dot_dimension_numbers<[1], [0], [0], [1], [0, 0, 1, 1], [], []>} : vector<8x256xf32>, vector<256x512xf32>, vector<8x512xf32> -> vector<8x512xf32>
    %584 = arith.addf %9, %583 : vector<8x512xf32>
    %585 = vector.extract_strided_slice %584 {offsets = [0, 0], sizes = [8, 128], strides = [1, 1]} : vector<8x512xf32> to vector<8x128xf32>
    %cst_215 = arith.constant 5.000000e-01 : f32
    %586 = vector.broadcast %cst_215 : f32 to vector<8x128xf32>
    %587 = arith.mulf %586, %585 : vector<8x128xf32>
    %588 = math.tanh %587 : vector<8x128xf32>
    %cst_216 = arith.constant 5.000000e-01 : f32
    %589 = vector.broadcast %cst_216 : f32 to vector<8x128xf32>
    %590 = arith.mulf %589, %588 : vector<8x128xf32>
    %cst_217 = arith.constant 5.000000e-01 : f32
    %591 = vector.broadcast %cst_217 : f32 to vector<8x128xf32>
    %592 = arith.addf %590, %591 : vector<8x128xf32>
    %593 = vector.extract_strided_slice %584 {offsets = [0, 128], sizes = [8, 128], strides = [1, 1]} : vector<8x512xf32> to vector<8x128xf32>
    %cst_218 = arith.constant 5.000000e-01 : f32
    %594 = vector.broadcast %cst_218 : f32 to vector<8x128xf32>
    %595 = arith.mulf %594, %593 : vector<8x128xf32>
    %596 = math.tanh %595 : vector<8x128xf32>
    %cst_219 = arith.constant 5.000000e-01 : f32
    %597 = vector.broadcast %cst_219 : f32 to vector<8x128xf32>
    %598 = arith.mulf %597, %596 : vector<8x128xf32>
    %cst_220 = arith.constant 5.000000e-01 : f32
    %599 = vector.broadcast %cst_220 : f32 to vector<8x128xf32>
    %600 = arith.addf %598, %599 : vector<8x128xf32>
    %601 = vector.extract_strided_slice %584 {offsets = [0, 256], sizes = [8, 128], strides = [1, 1]} : vector<8x512xf32> to vector<8x128xf32>
    %602 = math.tanh %601 : vector<8x128xf32>
    %603 = vector.extract_strided_slice %584 {offsets = [0, 384], sizes = [8, 128], strides = [1, 1]} : vector<8x512xf32> to vector<8x128xf32>
    %cst_221 = arith.constant 5.000000e-01 : f32
    %604 = vector.broadcast %cst_221 : f32 to vector<8x128xf32>
    %605 = arith.mulf %604, %603 : vector<8x128xf32>
    %606 = math.tanh %605 : vector<8x128xf32>
    %cst_222 = arith.constant 5.000000e-01 : f32
    %607 = vector.broadcast %cst_222 : f32 to vector<8x128xf32>
    %608 = arith.mulf %607, %606 : vector<8x128xf32>
    %cst_223 = arith.constant 5.000000e-01 : f32
    %609 = vector.broadcast %cst_223 : f32 to vector<8x128xf32>
    %610 = arith.addf %608, %609 : vector<8x128xf32>
    %611 = arith.mulf %600, %537 : vector<8x128xf32>
    %612 = arith.mulf %592, %602 : vector<8x128xf32>
    %613 = arith.addf %611, %612 : vector<8x128xf32>
    %614 = math.tanh %613 : vector<8x128xf32>
    %615 = arith.mulf %610, %614 : vector<8x128xf32>
    %616 = vector.extract_strided_slice %615 {offsets = [0, 0], sizes = [1, 128], strides = [1, 1]} : vector<8x128xf32> to vector<1x128xf32>
    %617 = arith.index_cast %c7_i32 : i32 to index
    %c0_224 = arith.constant 0 : index
    %618 = vector.load %arg10[%617, %c0_224] : memref<8x128xf32, #tpu.memory_space<vmem>>, vector<1x128xf32>
    tpu.vector_store %arg10[%617, %c0_224], %616 {strides = array<i32>} : memref<8x128xf32, #tpu.memory_space<vmem>>, vector<1x128xf32>,
    %c8_i32_225 = arith.constant 8 : i32
    %c0_226 = arith.constant 0 : index
    %c0_227 = arith.constant 0 : index
    %619 = vector.load %arg10[%c0_226, %c0_227] : memref<8x128xf32, #tpu.memory_space<vmem>>, vector<8x128xf32>
    %c0_228 = arith.constant 0 : index
    %c0_229 = arith.constant 0 : index
    %620 = vector.load %arg6[%c0_228, %c0_229] : memref<128x128xf32, #tpu.memory_space<vmem>>, vector<128x128xf32>
    %cst_230 = arith.constant dense<0.000000e+00> : vector<8x128xf32>
    %621 = tpu.matmul %619, %620, %cst_230 {dimension_numbers = #tpu.dot_dimension_numbers<[1], [0], [0], [1], [0, 0, 1, 1], [], []>} : vector<8x128xf32>, vector<128x128xf32>, vector<8x128xf32> -> vector<8x128xf32>
    %c0_231 = arith.constant 0 : index
    %c0_232 = arith.constant 0 : index
    %622 = vector.load %arg7[%c0_231, %c0_232] : memref<1x128xf32, #tpu.memory_space<vmem>>, vector<1x128xf32>
    %623 = vector.broadcast %622 : vector<1x128xf32> to vector<8x128xf32>
    %624 = arith.addf %621, %623 : vector<8x128xf32>
    %c0_233 = arith.constant 0 : index
    %c0_234 = arith.constant 0 : index
    %625 = vector.load %arg8[%c0_233, %c0_234] : memref<8x128xf32, #tpu.memory_space<vmem>>, vector<8x128xf32>
    tpu.vector_store %arg8[%c0_233, %c0_234], %624 {strides = array<i32>} : memref<8x128xf32, #tpu.memory_space<vmem>>, vector<8x128xf32>,
    return
  }
}

</mosaic_0001>

<llo_original>
// kernel: lstm_model_forward.1
$region0: #{lstm_model_forward.1}
  #allocation0 [shape = 'u32[]', space=smem, size = 0x4, offset = 0x4, fixed_abs, tag = 'smem constant byte address 0x4 - core index']
  #allocation1 [shape = 'u32[144,128]{1,0:T(1,128)}', space=vmem, size = 0x12000, scoped, tag = 'internal scratch']
  #allocation2 [shape = 'f32[64,512]{1,0:T(8,128)}', space=vmem, size = 0x20000, scoped, tag = 'scratch operand']
  #allocation3 [shape = 'f32[8,128]{1,0:T(8,128)}', space=vmem, size = 0x1000, scoped, tag = 'scratch operand']
  %s0 = inlined_call_operand.vmem [shape: f32[64,256], index: 0, kind: input, shape index: {}]
  %s1 = inlined_call_operand.hbm [shape: f32[256,512], index: 1, kind: input, shape index: {}]
  %s2 = inlined_call_operand.hbm [shape: f32[128,512], index: 2, kind: input, shape index: {}]
  %s3 = inlined_call_operand.vmem [shape: f32[1,512], index: 3, kind: input, shape index: {}]
  %s4 = inlined_call_operand.hbm [shape: f32[256,512], index: 4, kind: input, shape index: {}]
  %s5 = inlined_call_operand.vmem [shape: f32[1,512], index: 5, kind: input, shape index: {}]
  %s6 = inlined_call_operand.vmem [shape: f32[128,128], index: 6, kind: input, shape index: {}]
  %s7 = inlined_call_operand.vmem [shape: f32[1,128], index: 7, kind: input, shape index: {}]
  %s8 = inlined_call_operand.hbm [shape: f32[8,128], index: 8, kind: output, shape index: {}]
  %s9 = sld [smem:[#allocation0]]
  $region54: #{lstm_model_forward.1} parent=0
    _
  %s11 = ssub.s32 1, %s9
  %s12 = scalar_select 0, %s11, %s9
  $region1: #{lstm_model_forward.1} parent=0
    #allocation4 [shape = 'u8[524288]{0}', space=vmem, size = 0x80000, scoped, tag = 'input window, operand 1, single buffered']
    #allocation5 [shape = 's32[1]{0}', space=sflag, size = 0x4, scoped, tag = 'scoped memory for lstm_model_forward.1']
    #allocation6 [shape = 's32[1]{0}', space=sflag, size = 0x4, scoped, tag = 'scoped memory for lstm_model_forward.1']
    #allocation7 [shape = 'u8[262144]{0}', space=vmem, size = 0x40000, scoped, tag = 'input window, operand 2, single buffered']
    #allocation8 [shape = 's32[1]{0}', space=sflag, size = 0x4, scoped, tag = 'scoped memory for lstm_model_forward.1']
    #allocation9 [shape = 'u8[524288]{0}', space=vmem, size = 0x80000, scoped, tag = 'input window, operand 4, single buffered']
    #allocation10 [shape = 'u8[4096]{0}', space=vmem, size = 0x1000, scoped, tag = 'output window, operand 0, single buffered']
    %13 = vsyncpa [#allocation5], 0
    %14 = vsyncpa [#allocation8], 0
    %15 = vsyncpa [#allocation6], 0
    // Predicated region
    $region2: #{lstm_model_forward.1} parent=1 // pred_check
      _
    $region3: #{lstm_model_forward.1} parent=1 // pred_check_branch
      %17 = sbr.rel (0) target = $region5
    $region4: #{lstm_model_forward.1} parent=1 // pred_region
      _
    $region5: #{lstm_model_forward.1} parent=1 // pred_fallthru
      _
    // Predicated region
    $region6: #{lstm_model_forward.1} parent=1 // pred_check
      _
    $region7: #{lstm_model_forward.1} parent=1 // pred_check_branch
      %19 = sbr.rel (0) target = $region9
    $region8: #{lstm_model_forward.1} parent=1 // pred_region
      %s21 = ssub.s32 16384, 16384
      %22 = vsyncadd [#allocation5], %s21
      %s23 = sshll.u32 [#allocation4], 4
      %s24 = int_to_ptr.vmem [resolvable:$true] %s23
      %29 = dma.hbm_to_vmem [thread:$0]  %s1, 16384, %s24, [#allocation5], 512, 512, 32
    $region9: #{lstm_model_forward.1} parent=1 // pred_fallthru
      _
    // Predicated region
    $region10: #{lstm_model_forward.1} parent=1 // pred_check
      _
    $region11: #{lstm_model_forward.1} parent=1 // pred_check_branch
      %31 = sbr.rel (0) target = $region13
    $region12: #{lstm_model_forward.1} parent=1 // pred_region
      %s33 = ssub.s32 8192, 8192
      %34 = vsyncadd [#allocation8], %s33
      %s35 = sshll.u32 [#allocation7], 4
      %s36 = int_to_ptr.vmem [resolvable:$true] %s35
      %41 = dma.hbm_to_vmem [thread:$0]  %s2, 8192, %s36, [#allocation8], 512, 512, 32
    $region13: #{lstm_model_forward.1} parent=1 // pred_fallthru
      _
    // Predicated region
    $region14: #{lstm_model_forward.1} parent=1 // pred_check
      _
    $region15: #{lstm_model_forward.1} parent=1 // pred_check_branch
      %43 = sbr.rel (0) target = $region17
    $region16: #{lstm_model_forward.1} parent=1 // pred_region
      _
    $region17: #{lstm_model_forward.1} parent=1 // pred_fallthru
      _
    // Predicated region
    $region18: #{lstm_model_forward.1} parent=1 // pred_check
      _
    $region19: #{lstm_model_forward.1} parent=1 // pred_check_branch
      %45 = sbr.rel (0) target = $region21
    $region20: #{lstm_model_forward.1} parent=1 // pred_region
      %s47 = ssub.s32 16384, 16384
      %48 = vsyncadd [#allocation8], %s47
      %s49 = sshll.u32 [#allocation9], 4
      %s50 = int_to_ptr.vmem [resolvable:$true] %s49
      %55 = dma.hbm_to_vmem [thread:$0]  %s4, 16384, %s50, [#allocation8], 512, 512, 32
    $region21: #{lstm_model_forward.1} parent=1 // pred_fallthru
      _
    // Predicated region
    $region22: #{lstm_model_forward.1} parent=1 // pred_check
      _
    $region23: #{lstm_model_forward.1} parent=1 // pred_check_branch
      %57 = sbr.rel (0) target = $region25
    $region24: #{lstm_model_forward.1} parent=1 // pred_region
      _
    $region25: #{lstm_model_forward.1} parent=1 // pred_fallthru
      _
    // Predicated region
    $region26: #{lstm_model_forward.1} parent=1 // pred_check
      _
    $region27: #{lstm_model_forward.1} parent=1 // pred_check_branch
      %59 = sbr.rel (0) target = $region29
    $region28: #{lstm_model_forward.1} parent=1 // pred_region
      _
    $region29: #{lstm_model_forward.1} parent=1 // pred_fallthru
      _
    // Predicated region
    $region30: #{lstm_model_forward.1} parent=1 // pred_check
      _
    $region31: #{lstm_model_forward.1} parent=1 // pred_check_branch
      %61 = sbr.rel (0) target = $region33
    $region32: #{lstm_model_forward.1} parent=1 // pred_region
      _
    $region33: #{lstm_model_forward.1} parent=1 // pred_fallthru
      _
    // Predicated region
    $region34: #{lstm_model_forward.1} parent=1 // pred_check
      _
    $region35: #{lstm_model_forward.1} parent=1 // pred_check_branch
      %63 = sbr.rel (0) target = $region37
    $region36: #{lstm_model_forward.1} parent=1 // pred_region
      %64 = dma.done [#allocation5], 16384
    $region37: #{lstm_model_forward.1} parent=1 // pred_fallthru
      _
    // Predicated region
    $region38: #{lstm_model_forward.1} parent=1 // pred_check
      _
    $region39: #{lstm_model_forward.1} parent=1 // pred_check_branch
      %66 = sbr.rel (0) target = $region41
    $region40: #{lstm_model_forward.1} parent=1 // pred_region
      %67 = dma.done [#allocation8], 8192
    $region41: #{lstm_model_forward.1} parent=1 // pred_fallthru
      _
    // Predicated region
    $region42: #{lstm_model_forward.1} parent=1 // pred_check
      _
    $region43: #{lstm_model_forward.1} parent=1 // pred_check_branch
      %69 = sbr.rel (0) target = $region45
    $region44: #{lstm_model_forward.1} parent=1 // pred_region
      %70 = dma.done [#allocation8], 16384
    $region45: #{lstm_model_forward.1} parent=1 // pred_fallthru
      _
    %v71 = vld [vmem:[%s0] sm:$0xff]
    %v72 = vld [vmem:[%s0 + $0x8] sm:$0xff]
    %v73 = vld [vmem:[%s0 + $0x10] sm:$0xff]
    %v74 = vld [vmem:[%s0 + $0x18] sm:$0xff]
    %v75 = vld [vmem:[%s0 + $0x20] sm:$0xff]
    %v76 = vld [vmem:[%s0 + $0x28] sm:$0xff]
    %v77 = vld [vmem:[%s0 + $0x30] sm:$0xff]
    %v78 = vld [vmem:[%s0 + $0x38] sm:$0xff]
    %v79 = vld [vmem:[%s0 + $0x40] sm:$0xff]
    %v80 = vld [vmem:[%s0 + $0x48] sm:$0xff]
    %v81 = vld [vmem:[%s0 + $0x50] sm:$0xff]
    %v82 = vld [vmem:[%s0 + $0x58] sm:$0xff]
    %v83 = vld [vmem:[%s0 + $0x60] sm:$0xff]
    %v84 = vld [vmem:[%s0 + $0x68] sm:$0xff]
    %v85 = vld [vmem:[%s0 + $0x70] sm:$0xff]
    %v86 = vld [vmem:[%s0 + $0x78] sm:$0xff]
    %v87 = vld [vmem:[#allocation4] sm:$0xff]
    %v88 = vld [vmem:[#allocation4 + $0x8] sm:$0xff]
    %v89 = vld [vmem:[#allocation4 + $0x10] sm:$0xff]
    %v90 = vld [vmem:[#allocation4 + $0x18] sm:$0xff]
    %v91 = vld [vmem:[#allocation4 + $0x20] sm:$0xff]
    %v92 = vld [vmem:[#allocation4 + $0x28] sm:$0xff]
    %v93 = vld [vmem:[#allocation4 + $0x30] sm:$0xff]
    %v94 = vld [vmem:[#allocation4 + $0x38] sm:$0xff]
    %v95 = vld [vmem:[#allocation4 + $0x40] sm:$0xff]
    %v96 = vld [vmem:[#allocation4 + $0x48] sm:$0xff]
    %v97 = vld [vmem:[#allocation4 + $0x50] sm:$0xff]
    %v98 = vld [vmem:[#allocation4 + $0x58] sm:$0xff]
    %v99 = vld [vmem:[#allocation4 + $0x60] sm:$0xff]
    %v100 = vld [vmem:[#allocation4 + $0x68] sm:$0xff]
    %v101 = vld [vmem:[#allocation4 + $0x70] sm:$0xff]
    %v102 = vld [vmem:[#allocation4 + $0x78] sm:$0xff]
    %v103 = vld [vmem:[#allocation4 + $0x80] sm:$0xff]
    %v104 = vld [vmem:[#allocation4 + $0x88] sm:$0xff]
    %v105 = vld [vmem:[#allocation4 + $0x90] sm:$0xff]
    %v106 = vld [vmem:[#allocation4 + $0x98] sm:$0xff]
    %v107 = vld [vmem:[#allocation4 + $0xa0] sm:$0xff]
    %v108 = vld [vmem:[#allocation4 + $0xa8] sm:$0xff]
    %v109 = vld [vmem:[#allocation4 + $0xb0] sm:$0xff]
    %v110 = vld [vmem:[#allocation4 + $0xb8] sm:$0xff]
    %v111 = vld [vmem:[#allocation4 + $0xc0] sm:$0xff]
    %v112 = vld [vmem:[#allocation4 + $0xc8] sm:$0xff]
    %v113 = vld [vmem:[#allocation4 + $0xd0] sm:$0xff]
    %v114 = vld [vmem:[#allocation4 + $0xd8] sm:$0xff]
    %v115 = vld [vmem:[#allocation4 + $0xe0] sm:$0xff]
    %v116 = vld [vmem:[#allocation4 + $0xe8] sm:$0xff]
    %v117 = vld [vmem:[#allocation4 + $0xf0] sm:$0xff]
    %v118 = vld [vmem:[#allocation4 + $0xf8] sm:$0xff]
    %v119 = vld [vmem:[#allocation4 + $0x100] sm:$0xff]
    %v120 = vld [vmem:[#allocation4 + $0x108] sm:$0xff]
    %v121 = vld [vmem:[#allocation4 + $0x110] sm:$0xff]
    %v122 = vld [vmem:[#allocation4 + $0x118] sm:$0xff]
    %v123 = vld [vmem:[#allocation4 + $0x120] sm:$0xff]
    %v124 = vld [vmem:[#allocation4 + $0x128] sm:$0xff]
    %v125 = vld [vmem:[#allocation4 + $0x130] sm:$0xff]
    %v126 = vld [vmem:[#allocation4 + $0x138] sm:$0xff]
    %v127 = vld [vmem:[#allocation4 + $0x140] sm:$0xff]
    %v128 = vld [vmem:[#allocation4 + $0x148] sm:$0xff]
    %v129 = vld [vmem:[#allocation4 + $0x150] sm:$0xff]
    %v130 = vld [vmem:[#allocation4 + $0x158] sm:$0xff]
    %v131 = vld [vmem:[#allocation4 + $0x160] sm:$0xff]
    %v132 = vld [vmem:[#allocation4 + $0x168] sm:$0xff]
    %v133 = vld [vmem:[#allocation4 + $0x170] sm:$0xff]
    %v134 = vld [vmem:[#allocation4 + $0x178] sm:$0xff]
    %v135 = vld [vmem:[#allocation4 + $0x180] sm:$0xff]
    %v136 = vld [vmem:[#allocation4 + $0x188] sm:$0xff]
    %v137 = vld [vmem:[#allocation4 + $0x190] sm:$0xff]
    %v138 = vld [vmem:[#allocation4 + $0x198] sm:$0xff]
    %v139 = vld [vmem:[#allocation4 + $0x1a0] sm:$0xff]
    %v140 = vld [vmem:[#allocation4 + $0x1a8] sm:$0xff]
    %v141 = vld [vmem:[#allocation4 + $0x1b0] sm:$0xff]
    %v142 = vld [vmem:[#allocation4 + $0x1b8] sm:$0xff]
    %v143 = vld [vmem:[#allocation4 + $0x1c0] sm:$0xff]
    %v144 = vld [vmem:[#allocation4 + $0x1c8] sm:$0xff]
    %v145 = vld [vmem:[#allocation4 + $0x1d0] sm:$0xff]
    %v146 = vld [vmem:[#allocation4 + $0x1d8] sm:$0xff]
    %v147 = vld [vmem:[#allocation4 + $0x1e0] sm:$0xff]
    %v148 = vld [vmem:[#allocation4 + $0x1e8] sm:$0xff]
    %v149 = vld [vmem:[#allocation4 + $0x1f0] sm:$0xff]
    %v150 = vld [vmem:[#allocation4 + $0x1f8] sm:$0xff]
    %v151 = vld [vmem:[#allocation4 + $0x200] sm:$0xff]
    %v152 = vld [vmem:[#allocation4 + $0x208] sm:$0xff]
    %v153 = vld [vmem:[#allocation4 + $0x210] sm:$0xff]
    %v154 = vld [vmem:[#allocation4 + $0x218] sm:$0xff]
    %v155 = vld [vmem:[#allocation4 + $0x220] sm:$0xff]
    %v156 = vld [vmem:[#allocation4 + $0x228] sm:$0xff]
    %v157 = vld [vmem:[#allocation4 + $0x230] sm:$0xff]
    %v158 = vld [vmem:[#allocation4 + $0x238] sm:$0xff]
    %v159 = vld [vmem:[#allocation4 + $0x240] sm:$0xff]
    %v160 = vld [vmem:[#allocation4 + $0x248] sm:$0xff]
    %v161 = vld [vmem:[#allocation4 + $0x250] sm:$0xff]
    %v162 = vld [vmem:[#allocation4 + $0x258] sm:$0xff]
    %v163 = vld [vmem:[#allocation4 + $0x260] sm:$0xff]
    %v164 = vld [vmem:[#allocation4 + $0x268] sm:$0xff]
    %v165 = vld [vmem:[#allocation4 + $0x270] sm:$0xff]
    %v166 = vld [vmem:[#allocation4 + $0x278] sm:$0xff]
    %v167 = vld [vmem:[#allocation4 + $0x280] sm:$0xff]
    %v168 = vld [vmem:[#allocation4 + $0x288] sm:$0xff]
    %v169 = vld [vmem:[#allocation4 + $0x290] sm:$0xff]
    %v170 = vld [vmem:[#allocation4 + $0x298] sm:$0xff]
    %v171 = vld [vmem:[#allocation4 + $0x2a0] sm:$0xff]
    %v172 = vld [vmem:[#allocation4 + $0x2a8] sm:$0xff]
    %v173 = vld [vmem:[#allocation4 + $0x2b0] sm:$0xff]
    %v174 = vld [vmem:[#allocation4 + $0x2b8] sm:$0xff]
    %v175 = vld [vmem:[#allocation4 + $0x2c0] sm:$0xff]
    %v176 = vld [vmem:[#allocation4 + $0x2c8] sm:$0xff]
    %v177 = vld [vmem:[#allocation4 + $0x2d0] sm:$0xff]
    %v178 = vld [vmem:[#allocation4 + $0x2d8] sm:$0xff]
    %v179 = vld [vmem:[#allocation4 + $0x2e0] sm:$0xff]
    %v180 = vld [vmem:[#allocation4 + $0x2e8] sm:$0xff]
    %v181 = vld [vmem:[#allocation4 + $0x2f0] sm:$0xff]
    %v182 = vld [vmem:[#allocation4 + $0x2f8] sm:$0xff]
    %v183 = vld [vmem:[#allocation4 + $0x300] sm:$0xff]
    %v184 = vld [vmem:[#allocation4 + $0x308] sm:$0xff]
    %v185 = vld [vmem:[#allocation4 + $0x310] sm:$0xff]
    %v186 = vld [vmem:[#allocation4 + $0x318] sm:$0xff]
    %v187 = vld [vmem:[#allocation4 + $0x320] sm:$0xff]
    %v188 = vld [vmem:[#allocation4 + $0x328] sm:$0xff]
    %v189 = vld [vmem:[#allocation4 + $0x330] sm:$0xff]
    %v190 = vld [vmem:[#allocation4 + $0x338] sm:$0xff]
    %v191 = vld [vmem:[#allocation4 + $0x340] sm:$0xff]
    %v192 = vld [vmem:[#allocation4 + $0x348] sm:$0xff]
    %v193 = vld [vmem:[#allocation4 + $0x350] sm:$0xff]
    %v194 = vld [vmem:[#allocation4 + $0x358] sm:$0xff]
    %v195 = vld [vmem:[#allocation4 + $0x360] sm:$0xff]
    %v196 = vld [vmem:[#allocation4 + $0x368] sm:$0xff]
    %v197 = vld [vmem:[#allocation4 + $0x370] sm:$0xff]
    %v198 = vld [vmem:[#allocation4 + $0x378] sm:$0xff]
    %v199 = vld [vmem:[#allocation4 + $0x380] sm:$0xff]
    %v200 = vld [vmem:[#allocation4 + $0x388] sm:$0xff]
    %v201 = vld [vmem:[#allocation4 + $0x390] sm:$0xff]
    %v202 = vld [vmem:[#allocation4 + $0x398] sm:$0xff]
    %v203 = vld [vmem:[#allocation4 + $0x3a0] sm:$0xff]
    %v204 = vld [vmem:[#allocation4 + $0x3a8] sm:$0xff]
    %v205 = vld [vmem:[#allocation4 + $0x3b0] sm:$0xff]
    %v206 = vld [vmem:[#allocation4 + $0x3b8] sm:$0xff]
    %v207 = vld [vmem:[#allocation4 + $0x3c0] sm:$0xff]
    %v208 = vld [vmem:[#allocation4 + $0x3c8] sm:$0xff]
    %v209 = vld [vmem:[#allocation4 + $0x3d0] sm:$0xff]
    %v210 = vld [vmem:[#allocation4 + $0x3d8] sm:$0xff]
    %v211 = vld [vmem:[#allocation4 + $0x3e0] sm:$0xff]
    %v212 = vld [vmem:[#allocation4 + $0x3e8] sm:$0xff]
    %v213 = vld [vmem:[#allocation4 + $0x3f0] sm:$0xff]
    %v214 = vld [vmem:[#allocation4 + $0x3f8] sm:$0xff]
    %v215 = vld [vmem:[%s3] sm:$0xf]
    %v217 = vlaneseq
    %v218 = vshrl.u32 %v217, 7
    %v219 = vsub.s32 0, %v218
    %v220 = vrot.slane %v215, %v219
    %v221 = vlaneseq
    %v222 = vshrl.u32 %v221, 7
    %v223 = vsub.s32 1, %v222
    %v224 = vrot.slane %v215, %v223
    %v225 = vlaneseq
    %v226 = vshrl.u32 %v225, 7
    %v227 = vsub.s32 2, %v226
    %v228 = vrot.slane %v215, %v227
    %v229 = vlaneseq
    %v230 = vshrl.u32 %v229, 7
    %v231 = vsub.s32 3, %v230
    %v232 = vrot.slane %v215, %v231
    %237 = vmatprep.subr.mxu0 %v88
    %238 = vmatpush1.msra.mxu0 %v87
    %239 = vmatprep.subr.mxu0 %v92
    %240 = vmatpush1.msra.mxu0 %v91
    %241 = vmatprep.subr.mxu0 %v96
    %242 = vmatpush1.msra.mxu0 %v95
    %243 = vmatprep.subr.mxu0 %v100
    %244 = vmatpush1.msra.mxu0 %v99
    %245 = vmatprep.subr.mxu0 %v104
    %246 = vmatpush1.msra.mxu0 %v103
    %247 = vmatprep.subr.mxu0 %v108
    %248 = vmatpush1.msra.mxu0 %v107
    %249 = vmatprep.subr.mxu0 %v112
    %250 = vmatpush1.msra.mxu0 %v111
    %251 = vmatprep.subr.mxu0 %v116
    %252 = vmatpush1.msra.mxu0 %v115
    %253 = vmatprep.subr.mxu0 %v120
    %254 = vmatpush1.msra.mxu0 %v119
    %255 = vmatprep.subr.mxu0 %v124
    %256 = vmatpush1.msra.mxu0 %v123
    %257 = vmatprep.subr.mxu0 %v128
    %258 = vmatpush1.msra.mxu0 %v127
    %259 = vmatprep.subr.mxu0 %v132
    %260 = vmatpush1.msra.mxu0 %v131
    %261 = vmatprep.subr.mxu0 %v136
    %262 = vmatpush1.msra.mxu0 %v135
    %263 = vmatprep.subr.mxu0 %v140
    %264 = vmatpush1.msra.mxu0 %v139
    %265 = vmatprep.subr.mxu0 %v144
    %266 = vmatpush1.msra.mxu0 %v143
    %267 = vmatprep.subr.mxu0 %v148
    %268 = vmatpush1.msra.mxu0 %v147
    %269 = vmatprep.subr.mxu0 %v152
    %270 = vmatpush1.msra.mxu0 %v151
    %271 = vmatprep.subr.mxu0 %v156
    %272 = vmatpush1.msra.mxu0 %v155
    %273 = vmatprep.subr.mxu0 %v160
    %274 = vmatpush1.msra.mxu0 %v159
    %275 = vmatprep.subr.mxu0 %v164
    %276 = vmatpush1.msra.mxu0 %v163
    %277 = vmatprep.subr.mxu0 %v168
    %278 = vmatpush1.msra.mxu0 %v167
    %279 = vmatprep.subr.mxu0 %v172
    %280 = vmatpush1.msra.mxu0 %v171
    %281 = vmatprep.subr.mxu0 %v176
    %282 = vmatpush1.msra.mxu0 %v175
    %283 = vmatprep.subr.mxu0 %v180
    %284 = vmatpush1.msra.mxu0 %v179
    %285 = vmatprep.subr.mxu0 %v184
    %286 = vmatpush1.msra.mxu0 %v183
    %287 = vmatprep.subr.mxu0 %v188
    %288 = vmatpush1.msra.mxu0 %v187
    %289 = vmatprep.subr.mxu0 %v192
    %290 = vmatpush1.msra.mxu0 %v191
    %291 = vmatprep.subr.mxu0 %v196
    %292 = vmatpush1.msra.mxu0 %v195
    %293 = vmatprep.subr.mxu0 %v200
    %294 = vmatpush1.msra.mxu0 %v199
    %295 = vmatprep.subr.mxu0 %v204
    %296 = vmatpush1.msra.mxu0 %v203
    %297 = vmatprep.subr.mxu0 %v208
    %298 = vmatpush1.msra.mxu0 %v207
    %299 = vmatprep.subr.mxu0 %v212
    %300 = vmatpush1.msra.mxu0 %v211
    %301 = vmatprep.mubr.f32.mxu0 %v72
    %302 = vmatmul.mubr.f32.gmra.mrb[0].mxu0 %v71
    %v303 = vpop.f32.mrb[0].mxu0
    %v304 = vadd.f32 %v220, %v303
    %v305 = vpop.f32.mrb[0].mxu0
    %v306 = vadd.f32 %v224, %v305
    %307 = vmatprep.mubr.f32.mxu0 %v74
    %308 = vmatmul.mubr.f32.gmra.mrb[0].mxu0 %v73
    %v309 = vpop.f32.mrb[0].mxu0
    %v310 = vadd.f32 %v220, %v309
    %v311 = vpop.f32.mrb[0].mxu0
    %v312 = vadd.f32 %v224, %v311
    %313 = vmatprep.mubr.f32.mxu0 %v76
    %314 = vmatmul.mubr.f32.gmra.mrb[0].mxu0 %v75
    %v315 = vpop.f32.mrb[0].mxu0
    %v316 = vadd.f32 %v220, %v315
    %v317 = vpop.f32.mrb[0].mxu0
    %v318 = vadd.f32 %v224, %v317
    %319 = vmatprep.mubr.f32.mxu0 %v78
    %320 = vmatmul.mubr.f32.gmra.mrb[0].mxu0 %v77
    %v321 = vpop.f32.mrb[0].mxu0
    %v322 = vadd.f32 %v220, %v321
    %v323 = vpop.f32.mrb[0].mxu0
    %v324 = vadd.f32 %v224, %v323
    %325 = vmatprep.mubr.f32.mxu0 %v80
    %326 = vmatmul.mubr.f32.gmra.mrb[0].mxu0 %v79
    %v327 = vpop.f32.mrb[0].mxu0
    %v328 = vadd.f32 %v220, %v327
    %v329 = vpop.f32.mrb[0].mxu0
    %v330 = vadd.f32 %v224, %v329
    %331 = vmatprep.mubr.f32.mxu0 %v82
    %332 = vmatmul.mubr.f32.gmra.mrb[0].mxu0 %v81
    %v333 = vpop.f32.mrb[0].mxu0
    %v334 = vadd.f32 %v220, %v333
    %v335 = vpop.f32.mrb[0].mxu0
    %v336 = vadd.f32 %v224, %v335
    %337 = vmatprep.mubr.f32.mxu0 %v84
    %338 = vmatmul.mubr.f32.gmra.mrb[0].mxu0 %v83
    %v339 = vpop.f32.mrb[0].mxu0
    %v340 = vadd.f32 %v220, %v339
    %v341 = vpop.f32.mrb[0].mxu0
    %v342 = vadd.f32 %v224, %v341
    %343 = vmatprep.mubr.f32.mxu0 %v86
    %344 = vmatmul.mubr.f32.gmra.mrb[0].mxu0 %v85
    %v345 = vpop.f32.mrb[0].mxu0
    %v346 = vadd.f32 %v220, %v345
    %v347 = vpop.f32.mrb[0].mxu0
    %v348 = vadd.f32 %v224, %v347
    %349 = vdwg.mxu0
    %350 = vmatprep.subr.mxu0 %v90
    %351 = vmatpush1.msra.mxu0 %v89
    %352 = vmatprep.subr.mxu0 %v94
    %353 = vmatpush1.msra.mxu0 %v93
    %354 = vmatprep.subr.mxu0 %v98
    %355 = vmatpush1.msra.mxu0 %v97
    %356 = vmatprep.subr.mxu0 %v102
    %357 = vmatpush1.msra.mxu0 %v101
    %358 = vmatprep.subr.mxu0 %v106
    %359 = vmatpush1.msra.mxu0 %v105
    %360 = vmatprep.subr.mxu0 %v110
    %361 = vmatpush1.msra.mxu0 %v109
    %362 = vmatprep.subr.mxu0 %v114
    %363 = vmatpush1.msra.mxu0 %v113
    %364 = vmatprep.subr.mxu0 %v118
    %365 = vmatpush1.msra.mxu0 %v117
    %366 = vmatprep.subr.mxu0 %v122
    %367 = vmatpush1.msra.mxu0 %v121
    %368 = vmatprep.subr.mxu0 %v126
    %369 = vmatpush1.msra.mxu0 %v125
    %370 = vmatprep.subr.mxu0 %v130
    %371 = vmatpush1.msra.mxu0 %v129
    %372 = vmatprep.subr.mxu0 %v134
    %373 = vmatpush1.msra.mxu0 %v133
    %374 = vmatprep.subr.mxu0 %v138
    %375 = vmatpush1.msra.mxu0 %v137
    %376 = vmatprep.subr.mxu0 %v142
    %377 = vmatpush1.msra.mxu0 %v141
    %378 = vmatprep.subr.mxu0 %v146
    %379 = vmatpush1.msra.mxu0 %v145
    %380 = vmatprep.subr.mxu0 %v150
    %381 = vmatpush1.msra.mxu0 %v149
    %382 = vmatprep.subr.mxu0 %v154
    %383 = vmatpush1.msra.mxu0 %v153
    %384 = vmatprep.subr.mxu0 %v158
    %385 = vmatpush1.msra.mxu0 %v157
    %386 = vmatprep.subr.mxu0 %v162
    %387 = vmatpush1.msra.mxu0 %v161
    %388 = vmatprep.subr.mxu0 %v166
    %389 = vmatpush1.msra.mxu0 %v165
    %390 = vmatprep.subr.mxu0 %v170
    %391 = vmatpush1.msra.mxu0 %v169
    %392 = vmatprep.subr.mxu0 %v174
    %393 = vmatpush1.msra.mxu0 %v173
    %394 = vmatprep.subr.mxu0 %v178
    %395 = vmatpush1.msra.mxu0 %v177
    %396 = vmatprep.subr.mxu0 %v182
    %397 = vmatpush1.msra.mxu0 %v181
    %398 = vmatprep.subr.mxu0 %v186
    %399 = vmatpush1.msra.mxu0 %v185
    %400 = vmatprep.subr.mxu0 %v190
    %401 = vmatpush1.msra.mxu0 %v189
    %402 = vmatprep.subr.mxu0 %v194
    %403 = vmatpush1.msra.mxu0 %v193
    %404 = vmatprep.subr.mxu0 %v198
    %405 = vmatpush1.msra.mxu0 %v197
    %406 = vmatprep.subr.mxu0 %v202
    %407 = vmatpush1.msra.mxu0 %v201
    %408 = vmatprep.subr.mxu0 %v206
    %409 = vmatpush1.msra.mxu0 %v205
    %410 = vmatprep.subr.mxu0 %v210
    %411 = vmatpush1.msra.mxu0 %v209
    %412 = vmatprep.subr.mxu0 %v214
    %413 = vmatpush1.msra.mxu0 %v213
    %414 = vmatprep.mubr.f32.mxu0 %v72
    %415 = vmatmul.mubr.f32.gmra.mrb[0].mxu0 %v71
    %v416 = vpop.f32.mrb[0].mxu0
    %v417 = vadd.f32 %v228, %v416
    %v418 = vpop.f32.mrb[0].mxu0
    %v419 = vadd.f32 %v232, %v418
    %420 = vmatprep.mubr.f32.mxu0 %v74
    %421 = vmatmul.mubr.f32.gmra.mrb[0].mxu0 %v73
    %v422 = vpop.f32.mrb[0].mxu0
    %v423 = vadd.f32 %v228, %v422
    %v424 = vpop.f32.mrb[0].mxu0
    %v425 = vadd.f32 %v232, %v424
    %426 = vmatprep.mubr.f32.mxu0 %v76
    %427 = vmatmul.mubr.f32.gmra.mrb[0].mxu0 %v75
    %v428 = vpop.f32.mrb[0].mxu0
    %v429 = vadd.f32 %v228, %v428
    %v430 = vpop.f32.mrb[0].mxu0
    %v431 = vadd.f32 %v232, %v430
    %432 = vmatprep.mubr.f32.mxu0 %v78
    %433 = vmatmul.mubr.f32.gmra.mrb[0].mxu0 %v77
    %v434 = vpop.f32.mrb[0].mxu0
    %v435 = vadd.f32 %v228, %v434
    %v436 = vpop.f32.mrb[0].mxu0
    %v437 = vadd.f32 %v232, %v436
    %438 = vmatprep.mubr.f32.mxu0 %v80
    %439 = vmatmul.mubr.f32.gmra.mrb[0].mxu0 %v79
    %v440 = vpop.f32.mrb[0].mxu0
    %v441 = vadd.f32 %v228, %v440
    %v442 = vpop.f32.mrb[0].mxu0
    %v443 = vadd.f32 %v232, %v442
    %444 = vmatprep.mubr.f32.mxu0 %v82
    %445 = vmatmul.mubr.f32.gmra.mrb[0].mxu0 %v81
    %v446 = vpop.f32.mrb[0].mxu0
    %v447 = vadd.f32 %v228, %v446
    %v448 = vpop.f32.mrb[0].mxu0
    %v449 = vadd.f32 %v232, %v448
    %450 = vmatprep.mubr.f32.mxu0 %v84
    %451 = vmatmul.mubr.f32.gmra.mrb[0].mxu0 %v83
    %v452 = vpop.f32.mrb[0].mxu0
    %v453 = vadd.f32 %v228, %v452
    %v454 = vpop.f32.mrb[0].mxu0
    %v455 = vadd.f32 %v232, %v454
    %456 = vmatprep.mubr.f32.mxu0 %v86
    %457 = vmatmul.mubr.f32.gmra.mrb[0].mxu0 %v85
    %v458 = vpop.f32.mrb[0].mxu0
    %v459 = vadd.f32 %v228, %v458
    %v460 = vpop.f32.mrb[0].mxu0
    %v461 = vadd.f32 %v232, %v460
    %462 = vdwg.mxu0
    %463 = vst [vmem:[#allocation2] sm:$0xff] %v304
    %464 = vst [vmem:[#allocation2 + $0x8] sm:$0xff] %v306
    %465 = vst [vmem:[#allocation2 + $0x10] sm:$0xff] %v417
    %466 = vst [vmem:[#allocation2 + $0x18] sm:$0xff] %v419
    %467 = vst [vmem:[#allocation2 + $0x20] sm:$0xff] %v310
    %468 = vst [vmem:[#allocation2 + $0x28] sm:$0xff] %v312
    %469 = vst [vmem:[#allocation2 + $0x30] sm:$0xff] %v423
    %470 = vst [vmem:[#allocation2 + $0x38] sm:$0xff] %v425
    %471 = vst [vmem:[#allocation2 + $0x40] sm:$0xff] %v316
    %472 = vst [vmem:[#allocation2 + $0x48] sm:$0xff] %v318
    %473 = vst [vmem:[#allocation2 + $0x50] sm:$0xff] %v429
    %474 = vst [vmem:[#allocation2 + $0x58] sm:$0xff] %v431
    %475 = vst [vmem:[#allocation2 + $0x60] sm:$0xff] %v322
    %476 = vst [vmem:[#allocation2 + $0x68] sm:$0xff] %v324
    %477 = vst [vmem:[#allocation2 + $0x70] sm:$0xff] %v435
    %478 = vst [vmem:[#allocation2 + $0x78] sm:$0xff] %v437
    %479 = vst [vmem:[#allocation2 + $0x80] sm:$0xff] %v328
    %480 = vst [vmem:[#allocation2 + $0x88] sm:$0xff] %v330
    %481 = vst [vmem:[#allocation2 + $0x90] sm:$0xff] %v441
    %482 = vst [vmem:[#allocation2 + $0x98] sm:$0xff] %v443
    %483 = vst [vmem:[#allocation2 + $0xa0] sm:$0xff] %v334
    %484 = vst [vmem:[#allocation2 + $0xa8] sm:$0xff] %v336
    %485 = vst [vmem:[#allocation2 + $0xb0] sm:$0xff] %v447
    %486 = vst [vmem:[#allocation2 + $0xb8] sm:$0xff] %v449
    %487 = vst [vmem:[#allocation2 + $0xc0] sm:$0xff] %v340
    %488 = vst [vmem:[#allocation2 + $0xc8] sm:$0xff] %v342
    %489 = vst [vmem:[#allocation2 + $0xd0] sm:$0xff] %v453
    %490 = vst [vmem:[#allocation2 + $0xd8] sm:$0xff] %v455
    %491 = vst [vmem:[#allocation2 + $0xe0] sm:$0xff] %v346
    %492 = vst [vmem:[#allocation2 + $0xe8] sm:$0xff] %v348
    %493 = vst [vmem:[#allocation2 + $0xf0] sm:$0xff] %v459
    %494 = vst [vmem:[#allocation2 + $0xf8] sm:$0xff] %v461
    %v495 = vld [vmem:[%s5] sm:$0xf]
    %v497 = vlaneseq
    %v498 = vshrl.u32 %v497, 7
    %v499 = vsub.s32 0, %v498
    %v500 = vrot.slane %v495, %v499
    %v501 = vlaneseq
    %v502 = vshrl.u32 %v501, 7
    %v503 = vsub.s32 1, %v502
    %v504 = vrot.slane %v495, %v503
    %v505 = vlaneseq
    %v506 = vshrl.u32 %v505, 7
    %v507 = vsub.s32 2, %v506
    %v508 = vrot.slane %v495, %v507
    %v509 = vlaneseq
    %v510 = vshrl.u32 %v509, 7
    %v511 = vsub.s32 3, %v510
    %v512 = vrot.slane %v495, %v511
    %s517 = smul.u32 0, 4
    %s518 = smul.addr %s517, 8
    %s519 = scalar_lea.vmem [#allocation2], %s518
    %v520 = vld [vmem:[%s519] sm:$0xff]
    %v521 = vld [vmem:[%s519 + $0x8] sm:$0xff]
    %v522 = vld [vmem:[%s519 + $0x10] sm:$0xff]
    %v523 = vld [vmem:[%s519 + $0x18] sm:$0xff]
    %v524 = vld [vmem:[#allocation7] sm:$0xff]
    %v525 = vld [vmem:[#allocation7 + $0x8] sm:$0xff]
    %v526 = vld [vmem:[#allocation7 + $0x10] sm:$0xff]
    %v527 = vld [vmem:[#allocation7 + $0x18] sm:$0xff]
    %v528 = vld [vmem:[#allocation7 + $0x20] sm:$0xff]
    %v529 = vld [vmem:[#allocation7 + $0x28] sm:$0xff]
    %v530 = vld [vmem:[#allocation7 + $0x30] sm:$0xff]
    %v531 = vld [vmem:[#allocation7 + $0x38] sm:$0xff]
    %v532 = vld [vmem:[#allocation7 + $0x40] sm:$0xff]
    %v533 = vld [vmem:[#allocation7 + $0x48] sm:$0xff]
    %v534 = vld [vmem:[#allocation7 + $0x50] sm:$0xff]
    %v535 = vld [vmem:[#allocation7 + $0x58] sm:$0xff]
    %v536 = vld [vmem:[#allocation7 + $0x60] sm:$0xff]
    %v537 = vld [vmem:[#allocation7 + $0x68] sm:$0xff]
    %v538 = vld [vmem:[#allocation7 + $0x70] sm:$0xff]
    %v539 = vld [vmem:[#allocation7 + $0x78] sm:$0xff]
    %v540 = vld [vmem:[#allocation7 + $0x80] sm:$0xff]
    %v541 = vld [vmem:[#allocation7 + $0x88] sm:$0xff]
    %v542 = vld [vmem:[#allocation7 + $0x90] sm:$0xff]
    %v543 = vld [vmem:[#allocation7 + $0x98] sm:$0xff]
    %v544 = vld [vmem:[#allocation7 + $0xa0] sm:$0xff]
    %v545 = vld [vmem:[#allocation7 + $0xa8] sm:$0xff]
    %v546 = vld [vmem:[#allocation7 + $0xb0] sm:$0xff]
    %v547 = vld [vmem:[#allocation7 + $0xb8] sm:$0xff]
    %v548 = vld [vmem:[#allocation7 + $0xc0] sm:$0xff]
    %v549 = vld [vmem:[#allocation7 + $0xc8] sm:$0xff]
    %v550 = vld [vmem:[#allocation7 + $0xd0] sm:$0xff]
    %v551 = vld [vmem:[#allocation7 + $0xd8] sm:$0xff]
    %v552 = vld [vmem:[#allocation7 + $0xe0] sm:$0xff]
    %v553 = vld [vmem:[#allocation7 + $0xe8] sm:$0xff]
    %v554 = vld [vmem:[#allocation7 + $0xf0] sm:$0xff]
    %v555 = vld [vmem:[#allocation7 + $0xf8] sm:$0xff]
    %v556 = vld [vmem:[#allocation7 + $0x100] sm:$0xff]
    %v557 = vld [vmem:[#allocation7 + $0x108] sm:$0xff]
    %v558 = vld [vmem:[#allocation7 + $0x110] sm:$0xff]
    %v559 = vld [vmem:[#allocation7 + $0x118] sm:$0xff]
    %v560 = vld [vmem:[#allocation7 + $0x120] sm:$0xff]
    %v561 = vld [vmem:[#allocation7 + $0x128] sm:$0xff]
    %v562 = vld [vmem:[#allocation7 + $0x130] sm:$0xff]
    %v563 = vld [vmem:[#allocation7 + $0x138] sm:$0xff]
    %v564 = vld [vmem:[#allocation7 + $0x140] sm:$0xff]
    %v565 = vld [vmem:[#allocation7 + $0x148] sm:$0xff]
    %v566 = vld [vmem:[#allocation7 + $0x150] sm:$0xff]
    %v567 = vld [vmem:[#allocation7 + $0x158] sm:$0xff]
    %v568 = vld [vmem:[#allocation7 + $0x160] sm:$0xff]
    %v569 = vld [vmem:[#allocation7 + $0x168] sm:$0xff]
    %v570 = vld [vmem:[#allocation7 + $0x170] sm:$0xff]
    %v571 = vld [vmem:[#allocation7 + $0x178] sm:$0xff]
    %v572 = vld [vmem:[#allocation7 + $0x180] sm:$0xff]
    %v573 = vld [vmem:[#allocation7 + $0x188] sm:$0xff]
    %v574 = vld [vmem:[#allocation7 + $0x190] sm:$0xff]
    %v575 = vld [vmem:[#allocation7 + $0x198] sm:$0xff]
    %v576 = vld [vmem:[#allocation7 + $0x1a0] sm:$0xff]
    %v577 = vld [vmem:[#allocation7 + $0x1a8] sm:$0xff]
    %v578 = vld [vmem:[#allocation7 + $0x1b0] sm:$0xff]
    %v579 = vld [vmem:[#allocation7 + $0x1b8] sm:$0xff]
    %v580 = vld [vmem:[#allocation7 + $0x1c0] sm:$0xff]
    %v581 = vld [vmem:[#allocation7 + $0x1c8] sm:$0xff]
    %v582 = vld [vmem:[#allocation7 + $0x1d0] sm:$0xff]
    %v583 = vld [vmem:[#allocation7 + $0x1d8] sm:$0xff]
    %v584 = vld [vmem:[#allocation7 + $0x1e0] sm:$0xff]
    %v585 = vld [vmem:[#allocation7 + $0x1e8] sm:$0xff]
    %v586 = vld [vmem:[#allocation7 + $0x1f0] sm:$0xff]
    %v587 = vld [vmem:[#allocation7 + $0x1f8] sm:$0xff]
    %588 = vmatprep.subr.mxu0 %v525
    %589 = vmatpush1.msra.mxu0 %v524
    %590 = vmatprep.subr.mxu0 %v529
    %591 = vmatpush1.msra.mxu0 %v528
    %592 = vmatprep.subr.mxu0 %v533
    %593 = vmatpush1.msra.mxu0 %v532
    %594 = vmatprep.subr.mxu0 %v537
    %595 = vmatpush1.msra.mxu0 %v536
    %596 = vmatprep.subr.mxu0 %v541
    %597 = vmatpush1.msra.mxu0 %v540
    %598 = vmatprep.subr.mxu0 %v545
    %599 = vmatpush1.msra.mxu0 %v544
    %600 = vmatprep.subr.mxu0 %v549
    %601 = vmatpush1.msra.mxu0 %v548
    %602 = vmatprep.subr.mxu0 %v553
    %603 = vmatpush1.msra.mxu0 %v552
    %604 = vmatprep.subr.mxu0 %v557
    %605 = vmatpush1.msra.mxu0 %v556
    %606 = vmatprep.subr.mxu0 %v561
    %607 = vmatpush1.msra.mxu0 %v560
    %608 = vmatprep.subr.mxu0 %v565
    %609 = vmatpush1.msra.mxu0 %v564
    %610 = vmatprep.subr.mxu0 %v569
    %611 = vmatpush1.msra.mxu0 %v568
    %612 = vmatprep.subr.mxu0 %v573
    %613 = vmatpush1.msra.mxu0 %v572
    %614 = vmatprep.subr.mxu0 %v577
    %615 = vmatpush1.msra.mxu0 %v576
    %616 = vmatprep.subr.mxu0 %v581
    %617 = vmatpush1.msra.mxu0 %v580
    %618 = vmatprep.subr.mxu0 %v585
    %619 = vmatpush1.msra.mxu0 %v584
    %620 = vmatprep.subr.mxu0 0.0
    %621 = vmatpush1.msra.mxu0 0.0
    %622 = vmatprep.subr.mxu0 0.0
    %623 = vmatpush1.msra.mxu0 0.0
    %624 = vmatprep.subr.mxu0 0.0
    %625 = vmatpush1.msra.mxu0 0.0
    %626 = vmatprep.subr.mxu0 0.0
    %627 = vmatpush1.msra.mxu0 0.0
    %628 = vmatprep.subr.mxu0 0.0
    %629 = vmatpush1.msra.mxu0 0.0
    %630 = vmatprep.subr.mxu0 0.0
    %631 = vmatpush1.msra.mxu0 0.0
    %632 = vmatprep.subr.mxu0 0.0
    %633 = vmatpush1.msra.mxu0 0.0
    %634 = vmatprep.subr.mxu0 0.0
    %635 = vmatpush1.msra.mxu0 0.0
    %636 = vmatprep.subr.mxu0 0.0
    %637 = vmatpush1.msra.mxu0 0.0
    %638 = vmatprep.subr.mxu0 0.0
    %639 = vmatpush1.msra.mxu0 0.0
    %640 = vmatprep.subr.mxu0 0.0
    %641 = vmatpush1.msra.mxu0 0.0
    %642 = vmatprep.subr.mxu0 0.0
    %643 = vmatpush1.msra.mxu0 0.0
    %644 = vmatprep.subr.mxu0 0.0
    %645 = vmatpush1.msra.mxu0 0.0
    %646 = vmatprep.subr.mxu0 0.0
    %647 = vmatpush1.msra.mxu0 0.0
    %648 = vmatprep.subr.mxu0 0.0
    %649 = vmatpush1.msra.mxu0 0.0
    %650 = vmatprep.subr.mxu0 0.0
    %651 = vmatpush1.msra.mxu0 0.0
    %652 = vmatprep.mubr.f32.mxu0 0.0
    %653 = vmatmul.mubr.f32.gmra.mrb[0].mxu0 0.0
    %v654 = vpop.f32.mrb[0].mxu0
    %v655 = vadd.f32 0.0, %v654
    %v656 = vpop.f32.mrb[0].mxu0
    %v657 = vadd.f32 0.0, %v656
    %658 = vdwg.mxu0
    %659 = vmatprep.subr.mxu0 %v527
    %660 = vmatpush1.msra.mxu0 %v526
    %661 = vmatprep.subr.mxu0 %v531
    %662 = vmatpush1.msra.mxu0 %v530
    %663 = vmatprep.subr.mxu0 %v535
    %664 = vmatpush1.msra.mxu0 %v534
    %665 = vmatprep.subr.mxu0 %v539
    %666 = vmatpush1.msra.mxu0 %v538
    %667 = vmatprep.subr.mxu0 %v543
    %668 = vmatpush1.msra.mxu0 %v542
    %669 = vmatprep.subr.mxu0 %v547
    %670 = vmatpush1.msra.mxu0 %v546
    %671 = vmatprep.subr.mxu0 %v551
    %672 = vmatpush1.msra.mxu0 %v550
    %673 = vmatprep.subr.mxu0 %v555
    %674 = vmatpush1.msra.mxu0 %v554
    %675 = vmatprep.subr.mxu0 %v559
    %676 = vmatpush1.msra.mxu0 %v558
    %677 = vmatprep.subr.mxu0 %v563
    %678 = vmatpush1.msra.mxu0 %v562
    %679 = vmatprep.subr.mxu0 %v567
    %680 = vmatpush1.msra.mxu0 %v566
    %681 = vmatprep.subr.mxu0 %v571
    %682 = vmatpush1.msra.mxu0 %v570
    %683 = vmatprep.subr.mxu0 %v575
    %684 = vmatpush1.msra.mxu0 %v574
    %685 = vmatprep.subr.mxu0 %v579
    %686 = vmatpush1.msra.mxu0 %v578
    %687 = vmatprep.subr.mxu0 %v583
    %688 = vmatpush1.msra.mxu0 %v582
    %689 = vmatprep.subr.mxu0 %v587
    %690 = vmatpush1.msra.mxu0 %v586
    %691 = vmatprep.subr.mxu0 0.0
    %692 = vmatpush1.msra.mxu0 0.0
    %693 = vmatprep.subr.mxu0 0.0
    %694 = vmatpush1.msra.mxu0 0.0
    %695 = vmatprep.subr.mxu0 0.0
    %696 = vmatpush1.msra.mxu0 0.0
    %697 = vmatprep.subr.mxu0 0.0
    %698 = vmatpush1.msra.mxu0 0.0
    %699 = vmatprep.subr.mxu0 0.0
    %700 = vmatpush1.msra.mxu0 0.0
    %701 = vmatprep.subr.mxu0 0.0
    %702 = vmatpush1.msra.mxu0 0.0
    %703 = vmatprep.subr.mxu0 0.0
    %704 = vmatpush1.msra.mxu0 0.0
    %705 = vmatprep.subr.mxu0 0.0
    %706 = vmatpush1.msra.mxu0 0.0
    %707 = vmatprep.subr.mxu0 0.0
    %708 = vmatpush1.msra.mxu0 0.0
    %709 = vmatprep.subr.mxu0 0.0
    %710 = vmatpush1.msra.mxu0 0.0
    %711 = vmatprep.subr.mxu0 0.0
    %712 = vmatpush1.msra.mxu0 0.0
    %713 = vmatprep.subr.mxu0 0.0
    %714 = vmatpush1.msra.mxu0 0.0
    %715 = vmatprep.subr.mxu0 0.0
    %716 = vmatpush1.msra.mxu0 0.0
    %717 = vmatprep.subr.mxu0 0.0
    %718 = vmatpush1.msra.mxu0 0.0
    %719 = vmatprep.subr.mxu0 0.0
    %720 = vmatpush1.msra.mxu0 0.0
    %721 = vmatprep.subr.mxu0 0.0
    %722 = vmatpush1.msra.mxu0 0.0
    %723 = vmatprep.mubr.f32.mxu0 0.0
    %724 = vmatmul.mubr.f32.gmra.mrb[0].mxu0 0.0
    %v725 = vpop.f32.mrb[0].mxu0
    %v726 = vadd.f32 0.0, %v725
    %v727 = vpop.f32.mrb[0].mxu0
    %v728 = vadd.f32 0.0, %v727
    %729 = vdwg.mxu0
    %v730 = vadd.f32 %v520, %v655
    %v731 = vadd.f32 %v521, %v657
    %v732 = vadd.f32 %v522, %v726
    %v733 = vadd.f32 %v523, %v728
    %v734 = vmul.f32 %v730, 0.5
    %v735 = vtanh.pop %v734
    %v736 = vmul.f32 %v735, 0.5
    %v737 = vadd.f32 %v736, 0.5
    %v738 = vmul.f32 %v731, 0.5
    %v739 = vtanh.pop %v738
    %v740 = vmul.f32 %v739, 0.5
    %v741 = vadd.f32 %v740, 0.5
    %v742 = vtanh.pop %v732
    %v743 = vmul.f32 %v733, 0.5
    %v744 = vtanh.pop %v743
    %v745 = vmul.f32 %v744, 0.5
    %v746 = vadd.f32 %v745, 0.5
    %v747 = vmul.f32 %v741, 0.0
    %v748 = vmul.f32 %v737, %v742
    %v749 = vadd.f32 %v747, %v748
    %v750 = vtanh.pop %v749
    %v751 = vmul.f32 %v746, %v750
    %v752 = vld [vmem:[#allocation9] sm:$0xff]
    %v753 = vld [vmem:[#allocation9 + $0x8] sm:$0xff]
    %v754 = vld [vmem:[#allocation9 + $0x10] sm:$0xff]
    %v755 = vld [vmem:[#allocation9 + $0x18] sm:$0xff]
    %v756 = vld [vmem:[#allocation9 + $0x20] sm:$0xff]
    %v757 = vld [vmem:[#allocation9 + $0x28] sm:$0xff]
    %v758 = vld [vmem:[#allocation9 + $0x30] sm:$0xff]
    %v759 = vld [vmem:[#allocation9 + $0x38] sm:$0xff]
    %v760 = vld [vmem:[#allocation9 + $0x40] sm:$0xff]
    %v761 = vld [vmem:[#allocation9 + $0x48] sm:$0xff]
    %v762 = vld [vmem:[#allocation9 + $0x50] sm:$0xff]
    %v763 = vld [vmem:[#allocation9 + $0x58] sm:$0xff]
    %v764 = vld [vmem:[#allocation9 + $0x60] sm:$0xff]
    %v765 = vld [vmem:[#allocation9 + $0x68] sm:$0xff]
    %v766 = vld [vmem:[#allocation9 + $0x70] sm:$0xff]
    %v767 = vld [vmem:[#allocation9 + $0x78] sm:$0xff]
    %v768 = vld [vmem:[#allocation9 + $0x80] sm:$0xff]
    %v769 = vld [vmem:[#allocation9 + $0x88] sm:$0xff]
    %v770 = vld [vmem:[#allocation9 + $0x90] sm:$0xff]
    %v771 = vld [vmem:[#allocation9 + $0x98] sm:$0xff]
    %v772 = vld [vmem:[#allocation9 + $0xa0] sm:$0xff]
    %v773 = vld [vmem:[#allocation9 + $0xa8] sm:$0xff]
    %v774 = vld [vmem:[#allocation9 + $0xb0] sm:$0xff]
    %v775 = vld [vmem:[#allocation9 + $0xb8] sm:$0xff]
    %v776 = vld [vmem:[#allocation9 + $0xc0] sm:$0xff]
    %v777 = vld [vmem:[#allocation9 + $0xc8] sm:$0xff]
    %v778 = vld [vmem:[#allocation9 + $0xd0] sm:$0xff]
    %v779 = vld [vmem:[#allocation9 + $0xd8] sm:$0xff]
    %v780 = vld [vmem:[#allocation9 + $0xe0] sm:$0xff]
    %v781 = vld [vmem:[#allocation9 + $0xe8] sm:$0xff]
    %v782 = vld [vmem:[#allocation9 + $0xf0] sm:$0xff]
    %v783 = vld [vmem:[#allocation9 + $0xf8] sm:$0xff]
    %v784 = vld [vmem:[#allocation9 + $0x100] sm:$0xff]
    %v785 = vld [vmem:[#allocation9 + $0x108] sm:$0xff]
    %v786 = vld [vmem:[#allocation9 + $0x110] sm:$0xff]
    %v787 = vld [vmem:[#allocation9 + $0x118] sm:$0xff]
    %v788 = vld [vmem:[#allocation9 + $0x120] sm:$0xff]
    %v789 = vld [vmem:[#allocation9 + $0x128] sm:$0xff]
    %v790 = vld [vmem:[#allocation9 + $0x130] sm:$0xff]
    %v791 = vld [vmem:[#allocation9 + $0x138] sm:$0xff]
    %v792 = vld [vmem:[#allocation9 + $0x140] sm:$0xff]
    %v793 = vld [vmem:[#allocation9 + $0x148] sm:$0xff]
    %v794 = vld [vmem:[#allocation9 + $0x150] sm:$0xff]
    %v795 = vld [vmem:[#allocation9 + $0x158] sm:$0xff]
    %v796 = vld [vmem:[#allocation9 + $0x160] sm:$0xff]
    %v797 = vld [vmem:[#allocation9 + $0x168] sm:$0xff]
    %v798 = vld [vmem:[#allocation9 + $0x170] sm:$0xff]
    %v799 = vld [vmem:[#allocation9 + $0x178] sm:$0xff]
    %v800 = vld [vmem:[#allocation9 + $0x180] sm:$0xff]
    %v801 = vld [vmem:[#allocation9 + $0x188] sm:$0xff]
    %v802 = vld [vmem:[#allocation9 + $0x190] sm:$0xff]
    %v803 = vld [vmem:[#allocation9 + $0x198] sm:$0xff]
    %v804 = vld [vmem:[#allocation9 + $0x1a0] sm:$0xff]
    %v805 = vld [vmem:[#allocation9 + $0x1a8] sm:$0xff]
    %v806 = vld [vmem:[#allocation9 + $0x1b0] sm:$0xff]
    %v807 = vld [vmem:[#allocation9 + $0x1b8] sm:$0xff]
    %v808 = vld [vmem:[#allocation9 + $0x1c0] sm:$0xff]
    %v809 = vld [vmem:[#allocation9 + $0x1c8] sm:$0xff]
    %v810 = vld [vmem:[#allocation9 + $0x1d0] sm:$0xff]
    %v811 = vld [vmem:[#allocation9 + $0x1d8] sm:$0xff]
    %v812 = vld [vmem:[#allocation9 + $0x1e0] sm:$0xff]
    %v813 = vld [vmem:[#allocation9 + $0x1e8] sm:$0xff]
    %v814 = vld [vmem:[#allocation9 + $0x1f0] sm:$0xff]
    %v815 = vld [vmem:[#allocation9 + $0x1f8] sm:$0xff]
    %v816 = vld [vmem:[#allocation9 + $0x200] sm:$0xff]
    %v817 = vld [vmem:[#allocation9 + $0x208] sm:$0xff]
    %v818 = vld [vmem:[#allocation9 + $0x210] sm:$0xff]
    %v819 = vld [vmem:[#allocation9 + $0x218] sm:$0xff]
    %v820 = vld [vmem:[#allocation9 + $0x220] sm:$0xff]
    %v821 = vld [vmem:[#allocation9 + $0x228] sm:$0xff]
    %v822 = vld [vmem:[#allocation9 + $0x230] sm:$0xff]
    %v823 = vld [vmem:[#allocation9 + $0x238] sm:$0xff]
    %v824 = vld [vmem:[#allocation9 + $0x240] sm:$0xff]
    %v825 = vld [vmem:[#allocation9 + $0x248] sm:$0xff]
    %v826 = vld [vmem:[#allocation9 + $0x250] sm:$0xff]
    %v827 = vld [vmem:[#allocation9 + $0x258] sm:$0xff]
    %v828 = vld [vmem:[#allocation9 + $0x260] sm:$0xff]
    %v829 = vld [vmem:[#allocation9 + $0x268] sm:$0xff]
    %v830 = vld [vmem:[#allocation9 + $0x270] sm:$0xff]
    %v831 = vld [vmem:[#allocation9 + $0x278] sm:$0xff]
    %v832 = vld [vmem:[#allocation9 + $0x280] sm:$0xff]
    %v833 = vld [vmem:[#allocation9 + $0x288] sm:$0xff]
    %v834 = vld [vmem:[#allocation9 + $0x290] sm:$0xff]
    %v835 = vld [vmem:[#allocation9 + $0x298] sm:$0xff]
    %v836 = vld [vmem:[#allocation9 + $0x2a0] sm:$0xff]
    %v837 = vld [vmem:[#allocation9 + $0x2a8] sm:$0xff]
    %v838 = vld [vmem:[#allocation9 + $0x2b0] sm:$0xff]
    %v839 = vld [vmem:[#allocation9 + $0x2b8] sm:$0xff]
    %v840 = vld [vmem:[#allocation9 + $0x2c0] sm:$0xff]
    %v841 = vld [vmem:[#allocation9 + $0x2c8] sm:$0xff]
    %v842 = vld [vmem:[#allocation9 + $0x2d0] sm:$0xff]
    %v843 = vld [vmem:[#allocation9 + $0x2d8] sm:$0xff]
    %v844 = vld [vmem:[#allocation9 + $0x2e0] sm:$0xff]
    %v845 = vld [vmem:[#allocation9 + $0x2e8] sm:$0xff]
    %v846 = vld [vmem:[#allocation9 + $0x2f0] sm:$0xff]
    %v847 = vld [vmem:[#allocation9 + $0x2f8] sm:$0xff]
    %v848 = vld [vmem:[#allocation9 + $0x300] sm:$0xff]
    %v849 = vld [vmem:[#allocation9 + $0x308] sm:$0xff]
    %v850 = vld [vmem:[#allocation9 + $0x310] sm:$0xff]
    %v851 = vld [vmem:[#allocation9 + $0x318] sm:$0xff]
    %v852 = vld [vmem:[#allocation9 + $0x320] sm:$0xff]
    %v853 = vld [vmem:[#allocation9 + $0x328] sm:$0xff]
    %v854 = vld [vmem:[#allocation9 + $0x330] sm:$0xff]
    %v855 = vld [vmem:[#allocation9 + $0x338] sm:$0xff]
    %v856 = vld [vmem:[#allocation9 + $0x340] sm:$0xff]
    %v857 = vld [vmem:[#allocation9 + $0x348] sm:$0xff]
    %v858 = vld [vmem:[#allocation9 + $0x350] sm:$0xff]
    %v859 = vld [vmem:[#allocation9 + $0x358] sm:$0xff]
    %v860 = vld [vmem:[#allocation9 + $0x360] sm:$0xff]
    %v861 = vld [vmem:[#allocation9 + $0x368] sm:$0xff]
    %v862 = vld [vmem:[#allocation9 + $0x370] sm:$0xff]
    %v863 = vld [vmem:[#allocation9 + $0x378] sm:$0xff]
    %v864 = vld [vmem:[#allocation9 + $0x380] sm:$0xff]
    %v865 = vld [vmem:[#allocation9 + $0x388] sm:$0xff]
    %v866 = vld [vmem:[#allocation9 + $0x390] sm:$0xff]
    %v867 = vld [vmem:[#allocation9 + $0x398] sm:$0xff]
    %v868 = vld [vmem:[#allocation9 + $0x3a0] sm:$0xff]
    %v869 = vld [vmem:[#allocation9 + $0x3a8] sm:$0xff]
    %v870 = vld [vmem:[#allocation9 + $0x3b0] sm:$0xff]
    %v871 = vld [vmem:[#allocation9 + $0x3b8] sm:$0xff]
    %v872 = vld [vmem:[#allocation9 + $0x3c0] sm:$0xff]
    %v873 = vld [vmem:[#allocation9 + $0x3c8] sm:$0xff]
    %v874 = vld [vmem:[#allocation9 + $0x3d0] sm:$0xff]
    %v875 = vld [vmem:[#allocation9 + $0x3d8] sm:$0xff]
    %v876 = vld [vmem:[#allocation9 + $0x3e0] sm:$0xff]
    %v877 = vld [vmem:[#allocation9 + $0x3e8] sm:$0xff]
    %v878 = vld [vmem:[#allocation9 + $0x3f0] sm:$0xff]
    %v879 = vld [vmem:[#allocation9 + $0x3f8] sm:$0xff]
    %880 = vmatprep.subr.mxu0 %v753
    %881 = vmatpush1.msra.mxu0 %v752
    %882 = vmatprep.subr.mxu0 %v757
    %883 = vmatpush1.msra.mxu0 %v756
    %884 = vmatprep.subr.mxu0 %v761
    %885 = vmatpush1.msra.mxu0 %v760
    %886 = vmatprep.subr.mxu0 %v765
    %887 = vmatpush1.msra.mxu0 %v764
    %888 = vmatprep.subr.mxu0 %v769
    %889 = vmatpush1.msra.mxu0 %v768
    %890 = vmatprep.subr.mxu0 %v773
    %891 = vmatpush1.msra.mxu0 %v772
    %892 = vmatprep.subr.mxu0 %v777
    %893 = vmatpush1.msra.mxu0 %v776
    %894 = vmatprep.subr.mxu0 %v781
    %895 = vmatpush1.msra.mxu0 %v780
    %896 = vmatprep.subr.mxu0 %v785
    %897 = vmatpush1.msra.mxu0 %v784
    %898 = vmatprep.subr.mxu0 %v789
    %899 = vmatpush1.msra.mxu0 %v788
    %900 = vmatprep.subr.mxu0 %v793
    %901 = vmatpush1.msra.mxu0 %v792
    %902 = vmatprep.subr.mxu0 %v797
    %903 = vmatpush1.msra.mxu0 %v796
    %904 = vmatprep.subr.mxu0 %v801
    %905 = vmatpush1.msra.mxu0 %v800
    %906 = vmatprep.subr.mxu0 %v805
    %907 = vmatpush1.msra.mxu0 %v804
    %908 = vmatprep.subr.mxu0 %v809
    %909 = vmatpush1.msra.mxu0 %v808
    %910 = vmatprep.subr.mxu0 %v813
    %911 = vmatpush1.msra.mxu0 %v812
    %912 = vmatprep.subr.mxu0 %v817
    %913 = vmatpush1.msra.mxu0 %v816
    %914 = vmatprep.subr.mxu0 %v821
    %915 = vmatpush1.msra.mxu0 %v820
    %916 = vmatprep.subr.mxu0 %v825
    %917 = vmatpush1.msra.mxu0 %v824
    %918 = vmatprep.subr.mxu0 %v829
    %919 = vmatpush1.msra.mxu0 %v828
    %920 = vmatprep.subr.mxu0 %v833
    %921 = vmatpush1.msra.mxu0 %v832
    %922 = vmatprep.subr.mxu0 %v837
    %923 = vmatpush1.msra.mxu0 %v836
    %924 = vmatprep.subr.mxu0 %v841
    %925 = vmatpush1.msra.mxu0 %v840
    %926 = vmatprep.subr.mxu0 %v845
    %927 = vmatpush1.msra.mxu0 %v844
    %928 = vmatprep.subr.mxu0 %v849
    %929 = vmatpush1.msra.mxu0 %v848
    %930 = vmatprep.subr.mxu0 %v853
    %931 = vmatpush1.msra.mxu0 %v852
    %932 = vmatprep.subr.mxu0 %v857
    %933 = vmatpush1.msra.mxu0 %v856
    %934 = vmatprep.subr.mxu0 %v861
    %935 = vmatpush1.msra.mxu0 %v860
    %936 = vmatprep.subr.mxu0 %v865
    %937 = vmatpush1.msra.mxu0 %v864
    %938 = vmatprep.subr.mxu0 %v869
    %939 = vmatpush1.msra.mxu0 %v868
    %940 = vmatprep.subr.mxu0 %v873
    %941 = vmatpush1.msra.mxu0 %v872
    %942 = vmatprep.subr.mxu0 %v877
    %943 = vmatpush1.msra.mxu0 %v876
    %944 = vmatprep.mubr.f32.mxu0 0.0
    %945 = vmatmul.mubr.f32.gmra.mrb[0].mxu0 %v751
    %v946 = vpop.f32.mrb[0].mxu0
    %v947 = vadd.f32 0.0, %v946
    %v948 = vpop.f32.mrb[0].mxu0
    %v949 = vadd.f32 0.0, %v948
    %950 = vdwg.mxu0
    %951 = vmatprep.subr.mxu0 %v755
    %952 = vmatpush1.msra.mxu0 %v754
    %953 = vmatprep.subr.mxu0 %v759
    %954 = vmatpush1.msra.mxu0 %v758
    %955 = vmatprep.subr.mxu0 %v763
    %956 = vmatpush1.msra.mxu0 %v762
    %957 = vmatprep.subr.mxu0 %v767
    %958 = vmatpush1.msra.mxu0 %v766
    %959 = vmatprep.subr.mxu0 %v771
    %960 = vmatpush1.msra.mxu0 %v770
    %961 = vmatprep.subr.mxu0 %v775
    %962 = vmatpush1.msra.mxu0 %v774
    %963 = vmatprep.subr.mxu0 %v779
    %964 = vmatpush1.msra.mxu0 %v778
    %965 = vmatprep.subr.mxu0 %v783
    %966 = vmatpush1.msra.mxu0 %v782
    %967 = vmatprep.subr.mxu0 %v787
    %968 = vmatpush1.msra.mxu0 %v786
    %969 = vmatprep.subr.mxu0 %v791
    %970 = vmatpush1.msra.mxu0 %v790
    %971 = vmatprep.subr.mxu0 %v795
    %972 = vmatpush1.msra.mxu0 %v794
    %973 = vmatprep.subr.mxu0 %v799
    %974 = vmatpush1.msra.mxu0 %v798
    %975 = vmatprep.subr.mxu0 %v803
    %976 = vmatpush1.msra.mxu0 %v802
    %977 = vmatprep.subr.mxu0 %v807
    %978 = vmatpush1.msra.mxu0 %v806
    %979 = vmatprep.subr.mxu0 %v811
    %980 = vmatpush1.msra.mxu0 %v810
    %981 = vmatprep.subr.mxu0 %v815
    %982 = vmatpush1.msra.mxu0 %v814
    %983 = vmatprep.subr.mxu0 %v819
    %984 = vmatpush1.msra.mxu0 %v818
    %985 = vmatprep.subr.mxu0 %v823
    %986 = vmatpush1.msra.mxu0 %v822
    %987 = vmatprep.subr.mxu0 %v827
    %988 = vmatpush1.msra.mxu0 %v826
    %989 = vmatprep.subr.mxu0 %v831
    %990 = vmatpush1.msra.mxu0 %v830
    %991 = vmatprep.subr.mxu0 %v835
    %992 = vmatpush1.msra.mxu0 %v834
    %993 = vmatprep.subr.mxu0 %v839
    %994 = vmatpush1.msra.mxu0 %v838
    %995 = vmatprep.subr.mxu0 %v843
    %996 = vmatpush1.msra.mxu0 %v842
    %997 = vmatprep.subr.mxu0 %v847
    %998 = vmatpush1.msra.mxu0 %v846
    %999 = vmatprep.subr.mxu0 %v851
    %1000 = vmatpush1.msra.mxu0 %v850
    %1001 = vmatprep.subr.mxu0 %v855
    %1002 = vmatpush1.msra.mxu0 %v854
    %1003 = vmatprep.subr.mxu0 %v859
    %1004 = vmatpush1.msra.mxu0 %v858
    %1005 = vmatprep.subr.mxu0 %v863
    %1006 = vmatpush1.msra.mxu0 %v862
    %1007 = vmatprep.subr.mxu0 %v867
    %1008 = vmatpush1.msra.mxu0 %v866
    %1009 = vmatprep.subr.mxu0 %v871
    %1010 = vmatpush1.msra.mxu0 %v870
    %1011 = vmatprep.subr.mxu0 %v875
    %1012 = vmatpush1.msra.mxu0 %v874
    %1013 = vmatprep.subr.mxu0 %v879
    %1014 = vmatpush1.msra.mxu0 %v878
    %1015 = vmatprep.mubr.f32.mxu0 0.0
    %1016 = vmatmul.mubr.f32.gmra.mrb[0].mxu0 %v751
    %v1017 = vpop.f32.mrb[0].mxu0
    %v1018 = vadd.f32 0.0, %v1017
    %v1019 = vpop.f32.mrb[0].mxu0
    %v1020 = vadd.f32 0.0, %v1019
    %1021 = vdwg.mxu0
    %v1022 = vadd.f32 %v500, %v947
    %v1023 = vadd.f32 %v504, %v949
    %v1024 = vadd.f32 %v508, %v1018
    %v1025 = vadd.f32 %v512, %v1020
    %v1026 = vmul.f32 %v1022, 0.5
    %v1027 = vtanh.pop %v1026
    %v1028 = vmul.f32 %v1027, 0.5
    %v1029 = vadd.f32 %v1028, 0.5
    %v1030 = vmul.f32 %v1023, 0.5
    %v1031 = vtanh.pop %v1030
    %v1032 = vmul.f32 %v1031, 0.5
    %v1033 = vadd.f32 %v1032, 0.5
    %v1034 = vtanh.pop %v1024
    %v1035 = vmul.f32 %v1025, 0.5
    %v1036 = vtanh.pop %v1035
    %v1037 = vmul.f32 %v1036, 0.5
    %v1038 = vadd.f32 %v1037, 0.5
    %v1039 = vmul.f32 %v1033, 0.0
    %v1040 = vmul.f32 %v1029, %v1034
    %v1041 = vadd.f32 %v1039, %v1040
    %v1042 = vtanh.pop %v1041
    %v1043 = vmul.f32 %v1038, %v1042
    %1044 = vst [vmem:[#allocation3] sm:$0x1] %v1043
    %s1045 = smul.u32 1, 4
    %s1046 = smul.addr %s1045, 8
    %s1047 = scalar_lea.vmem [#allocation2], %s1046
    %v1048 = vld [vmem:[%s1047] sm:$0xff]
    %v1049 = vld [vmem:[%s1047 + $0x8] sm:$0xff]
    %v1050 = vld [vmem:[%s1047 + $0x10] sm:$0xff]
    %v1051 = vld [vmem:[%s1047 + $0x18] sm:$0xff]
    %v1052 = vld [vmem:[#allocation7] sm:$0xff]
    %v1053 = vld [vmem:[#allocation7 + $0x8] sm:$0xff]
    %v1054 = vld [vmem:[#allocation7 + $0x10] sm:$0xff]
    %v1055 = vld [vmem:[#allocation7 + $0x18] sm:$0xff]
    %v1056 = vld [vmem:[#allocation7 + $0x20] sm:$0xff]
    %v1057 = vld [vmem:[#allocation7 + $0x28] sm:$0xff]
    %v1058 = vld [vmem:[#allocation7 + $0x30] sm:$0xff]
    %v1059 = vld [vmem:[#allocation7 + $0x38] sm:$0xff]
    %v1060 = vld [vmem:[#allocation7 + $0x40] sm:$0xff]
    %v1061 = vld [vmem:[#allocation7 + $0x48] sm:$0xff]
    %v1062 = vld [vmem:[#allocation7 + $0x50] sm:$0xff]
    %v1063 = vld [vmem:[#allocation7 + $0x58] sm:$0xff]
    %v1064 = vld [vmem:[#allocation7 + $0x60] sm:$0xff]
    %v1065 = vld [vmem:[#allocation7 + $0x68] sm:$0xff]
    %v1066 = vld [vmem:[#allocation7 + $0x70] sm:$0xff]
    %v1067 = vld [vmem:[#allocation7 + $0x78] sm:$0xff]
    %v1068 = vld [vmem:[#allocation7 + $0x80] sm:$0xff]
    %v1069 = vld [vmem:[#allocation7 + $0x88] sm:$0xff]
    %v1070 = vld [vmem:[#allocation7 + $0x90] sm:$0xff]
    %v1071 = vld [vmem:[#allocation7 + $0x98] sm:$0xff]
    %v1072 = vld [vmem:[#allocation7 + $0xa0] sm:$0xff]
    %v1073 = vld [vmem:[#allocation7 + $0xa8] sm:$0xff]
    %v1074 = vld [vmem:[#allocation7 + $0xb0] sm:$0xff]
    %v1075 = vld [vmem:[#allocation7 + $0xb8] sm:$0xff]
    %v1076 = vld [vmem:[#allocation7 + $0xc0] sm:$0xff]
    %v1077 = vld [vmem:[#allocation7 + $0xc8] sm:$0xff]
    %v1078 = vld [vmem:[#allocation7 + $0xd0] sm:$0xff]
    %v1079 = vld [vmem:[#allocation7 + $0xd8] sm:$0xff]
    %v1080 = vld [vmem:[#allocation7 + $0xe0] sm:$0xff]
    %v1081 = vld [vmem:[#allocation7 + $0xe8] sm:$0xff]
    %v1082 = vld [vmem:[#allocation7 + $0xf0] sm:$0xff]
    %v1083 = vld [vmem:[#allocation7 + $0xf8] sm:$0xff]
    %v1084 = vld [vmem:[#allocation7 + $0x100] sm:$0xff]
    %v1085 = vld [vmem:[#allocation7 + $0x108] sm:$0xff]
    %v1086 = vld [vmem:[#allocation7 + $0x110] sm:$0xff]
    %v1087 = vld [vmem:[#allocation7 + $0x118] sm:$0xff]
    %v1088 = vld [vmem:[#allocation7 + $0x120] sm:$0xff]
    %v1089 = vld [vmem:[#allocation7 + $0x128] sm:$0xff]
    %v1090 = vld [vmem:[#allocation7 + $0x130] sm:$0xff]
    %v1091 = vld [vmem:[#allocation7 + $0x138] sm:$0xff]
    %v1092 = vld [vmem:[#allocation7 + $0x140] sm:$0xff]
    %v1093 = vld [vmem:[#allocation7 + $0x148] sm:$0xff]
    %v1094 = vld [vmem:[#allocation7 + $0x150] sm:$0xff]
    %v1095 = vld [vmem:[#allocation7 + $0x158] sm:$0xff]
    %v1096 = vld [vmem:[#allocation7 + $0x160] sm:$0xff]
    %v1097 = vld [vmem:[#allocation7 + $0x168] sm:$0xff]
    %v1098 = vld [vmem:[#allocation7 + $0x170] sm:$0xff]
    %v1099 = vld [vmem:[#allocation7 + $0x178] sm:$0xff]
    %v1100 = vld [vmem:[#allocation7 + $0x180] sm:$0xff]
    %v1101 = vld [vmem:[#allocation7 + $0x188] sm:$0xff]
    %v1102 = vld [vmem:[#allocation7 + $0x190] sm:$0xff]
    %v1103 = vld [vmem:[#allocation7 + $0x198] sm:$0xff]
    %v1104 = vld [vmem:[#allocation7 + $0x1a0] sm:$0xff]
    %v1105 = vld [vmem:[#allocation7 + $0x1a8] sm:$0xff]
    %v1106 = vld [vmem:[#allocation7 + $0x1b0] sm:$0xff]
    %v1107 = vld [vmem:[#allocation7 + $0x1b8] sm:$0xff]
    %v1108 = vld [vmem:[#allocation7 + $0x1c0] sm:$0xff]
    %v1109 = vld [vmem:[#allocation7 + $0x1c8] sm:$0xff]
    %v1110 = vld [vmem:[#allocation7 + $0x1d0] sm:$0xff]
    %v1111 = vld [vmem:[#allocation7 + $0x1d8] sm:$0xff]
    %v1112 = vld [vmem:[#allocation7 + $0x1e0] sm:$0xff]
    %v1113 = vld [vmem:[#allocation7 + $0x1e8] sm:$0xff]
    %v1114 = vld [vmem:[#allocation7 + $0x1f0] sm:$0xff]
    %v1115 = vld [vmem:[#allocation7 + $0x1f8] sm:$0xff]
    %1116 = vmatprep.subr.mxu0 %v1053
    %1117 = vmatpush1.msra.mxu0 %v1052
    %1118 = vmatprep.subr.mxu0 %v1057
    %1119 = vmatpush1.msra.mxu0 %v1056
    %1120 = vmatprep.subr.mxu0 %v1061
    %1121 = vmatpush1.msra.mxu0 %v1060
    %1122 = vmatprep.subr.mxu0 %v1065
    %1123 = vmatpush1.msra.mxu0 %v1064
    %1124 = vmatprep.subr.mxu0 %v1069
    %1125 = vmatpush1.msra.mxu0 %v1068
    %1126 = vmatprep.subr.mxu0 %v1073
    %1127 = vmatpush1.msra.mxu0 %v1072
    %1128 = vmatprep.subr.mxu0 %v1077
    %1129 = vmatpush1.msra.mxu0 %v1076
    %1130 = vmatprep.subr.mxu0 %v1081
    %1131 = vmatpush1.msra.mxu0 %v1080
    %1132 = vmatprep.subr.mxu0 %v1085
    %1133 = vmatpush1.msra.mxu0 %v1084
    %1134 = vmatprep.subr.mxu0 %v1089
    %1135 = vmatpush1.msra.mxu0 %v1088
    %1136 = vmatprep.subr.mxu0 %v1093
    %1137 = vmatpush1.msra.mxu0 %v1092
    %1138 = vmatprep.subr.mxu0 %v1097
    %1139 = vmatpush1.msra.mxu0 %v1096
    %1140 = vmatprep.subr.mxu0 %v1101
    %1141 = vmatpush1.msra.mxu0 %v1100
    %1142 = vmatprep.subr.mxu0 %v1105
    %1143 = vmatpush1.msra.mxu0 %v1104
    %1144 = vmatprep.subr.mxu0 %v1109
    %1145 = vmatpush1.msra.mxu0 %v1108
    %1146 = vmatprep.subr.mxu0 %v1113
    %1147 = vmatpush1.msra.mxu0 %v1112
    %1148 = vmatprep.subr.mxu0 0.0
    %1149 = vmatpush1.msra.mxu0 0.0
    %1150 = vmatprep.subr.mxu0 0.0
    %1151 = vmatpush1.msra.mxu0 0.0
    %1152 = vmatprep.subr.mxu0 0.0
    %1153 = vmatpush1.msra.mxu0 0.0
    %1154 = vmatprep.subr.mxu0 0.0
    %1155 = vmatpush1.msra.mxu0 0.0
    %1156 = vmatprep.subr.mxu0 0.0
    %1157 = vmatpush1.msra.mxu0 0.0
    %1158 = vmatprep.subr.mxu0 0.0
    %1159 = vmatpush1.msra.mxu0 0.0
    %1160 = vmatprep.subr.mxu0 0.0
    %1161 = vmatpush1.msra.mxu0 0.0
    %1162 = vmatprep.subr.mxu0 0.0
    %1163 = vmatpush1.msra.mxu0 0.0
    %1164 = vmatprep.subr.mxu0 0.0
    %1165 = vmatpush1.msra.mxu0 0.0
    %1166 = vmatprep.subr.mxu0 0.0
    %1167 = vmatpush1.msra.mxu0 0.0
    %1168 = vmatprep.subr.mxu0 0.0
    %1169 = vmatpush1.msra.mxu0 0.0
    %1170 = vmatprep.subr.mxu0 0.0
    %1171 = vmatpush1.msra.mxu0 0.0
    %1172 = vmatprep.subr.mxu0 0.0
    %1173 = vmatpush1.msra.mxu0 0.0
    %1174 = vmatprep.subr.mxu0 0.0
    %1175 = vmatpush1.msra.mxu0 0.0
    %1176 = vmatprep.subr.mxu0 0.0
    %1177 = vmatpush1.msra.mxu0 0.0
    %1178 = vmatprep.subr.mxu0 0.0
    %1179 = vmatpush1.msra.mxu0 0.0
    %1180 = vmatprep.mubr.f32.mxu0 0.0
    %1181 = vmatmul.mubr.f32.gmra.mrb[0].mxu0 %v751
    %v1182 = vpop.f32.mrb[0].mxu0
    %v1183 = vadd.f32 0.0, %v1182
    %v1184 = vpop.f32.mrb[0].mxu0
    %v1185 = vadd.f32 0.0, %v1184
    %1186 = vdwg.mxu0
    %1187 = vmatprep.subr.mxu0 %v1055
    %1188 = vmatpush1.msra.mxu0 %v1054
    %1189 = vmatprep.subr.mxu0 %v1059
    %1190 = vmatpush1.msra.mxu0 %v1058
    %1191 = vmatprep.subr.mxu0 %v1063
    %1192 = vmatpush1.msra.mxu0 %v1062
    %1193 = vmatprep.subr.mxu0 %v1067
    %1194 = vmatpush1.msra.mxu0 %v1066
    %1195 = vmatprep.subr.mxu0 %v1071
    %1196 = vmatpush1.msra.mxu0 %v1070
    %1197 = vmatprep.subr.mxu0 %v1075
    %1198 = vmatpush1.msra.mxu0 %v1074
    %1199 = vmatprep.subr.mxu0 %v1079
    %1200 = vmatpush1.msra.mxu0 %v1078
    %1201 = vmatprep.subr.mxu0 %v1083
    %1202 = vmatpush1.msra.mxu0 %v1082
    %1203 = vmatprep.subr.mxu0 %v1087
    %1204 = vmatpush1.msra.mxu0 %v1086
    %1205 = vmatprep.subr.mxu0 %v1091
    %1206 = vmatpush1.msra.mxu0 %v1090
    %1207 = vmatprep.subr.mxu0 %v1095
    %1208 = vmatpush1.msra.mxu0 %v1094
    %1209 = vmatprep.subr.mxu0 %v1099
    %1210 = vmatpush1.msra.mxu0 %v1098
    %1211 = vmatprep.subr.mxu0 %v1103
    %1212 = vmatpush1.msra.mxu0 %v1102
    %1213 = vmatprep.subr.mxu0 %v1107
    %1214 = vmatpush1.msra.mxu0 %v1106
    %1215 = vmatprep.subr.mxu0 %v1111
    %1216 = vmatpush1.msra.mxu0 %v1110
    %1217 = vmatprep.subr.mxu0 %v1115
    %1218 = vmatpush1.msra.mxu0 %v1114
    %1219 = vmatprep.subr.mxu0 0.0
    %1220 = vmatpush1.msra.mxu0 0.0
    %1221 = vmatprep.subr.mxu0 0.0
    %1222 = vmatpush1.msra.mxu0 0.0
    %1223 = vmatprep.subr.mxu0 0.0
    %1224 = vmatpush1.msra.mxu0 0.0
    %1225 = vmatprep.subr.mxu0 0.0
    %1226 = vmatpush1.msra.mxu0 0.0
    %1227 = vmatprep.subr.mxu0 0.0
    %1228 = vmatpush1.msra.mxu0 0.0
    %1229 = vmatprep.subr.mxu0 0.0
    %1230 = vmatpush1.msra.mxu0 0.0
    %1231 = vmatprep.subr.mxu0 0.0
    %1232 = vmatpush1.msra.mxu0 0.0
    %1233 = vmatprep.subr.mxu0 0.0
    %1234 = vmatpush1.msra.mxu0 0.0
    %1235 = vmatprep.subr.mxu0 0.0
    %1236 = vmatpush1.msra.mxu0 0.0
    %1237 = vmatprep.subr.mxu0 0.0
    %1238 = vmatpush1.msra.mxu0 0.0
    %1239 = vmatprep.subr.mxu0 0.0
    %1240 = vmatpush1.msra.mxu0 0.0
    %1241 = vmatprep.subr.mxu0 0.0
    %1242 = vmatpush1.msra.mxu0 0.0
    %1243 = vmatprep.subr.mxu0 0.0
    %1244 = vmatpush1.msra.mxu0 0.0
    %1245 = vmatprep.subr.mxu0 0.0
    %1246 = vmatpush1.msra.mxu0 0.0
    %1247 = vmatprep.subr.mxu0 0.0
    %1248 = vmatpush1.msra.mxu0 0.0
    %1249 = vmatprep.subr.mxu0 0.0
    %1250 = vmatpush1.msra.mxu0 0.0
    %1251 = vmatprep.mubr.f32.mxu0 0.0
    %1252 = vmatmul.mubr.f32.gmra.mrb[0].mxu0 %v751
    %v1253 = vpop.f32.mrb[0].mxu0
    %v1254 = vadd.f32 0.0, %v1253
    %v1255 = vpop.f32.mrb[0].mxu0
    %v1256 = vadd.f32 0.0, %v1255
    %1257 = vdwg.mxu0
    %v1258 = vadd.f32 %v1048, %v1183
    %v1259 = vadd.f32 %v1049, %v1185
    %v1260 = vadd.f32 %v1050, %v1254
    %v1261 = vadd.f32 %v1051, %v1256
    %v1262 = vmul.f32 %v1258, 0.5
    %v1263 = vtanh.pop %v1262
    %v1264 = vmul.f32 %v1263, 0.5
    %v1265 = vadd.f32 %v1264, 0.5
    %v1266 = vmul.f32 %v1259, 0.5
    %v1267 = vtanh.pop %v1266
    %v1268 = vmul.f32 %v1267, 0.5
    %v1269 = vadd.f32 %v1268, 0.5
    %v1270 = vtanh.pop %v1260
    %v1271 = vmul.f32 %v1261, 0.5
    %v1272 = vtanh.pop %v1271
    %v1273 = vmul.f32 %v1272, 0.5
    %v1274 = vadd.f32 %v1273, 0.5
    %v1275 = vmul.f32 %v1269, %v749
    %v1276 = vmul.f32 %v1265, %v1270
    %v1277 = vadd.f32 %v1275, %v1276
    %v1278 = vtanh.pop %v1277
    %v1279 = vmul.f32 %v1274, %v1278
    %v1280 = vld [vmem:[#allocation9] sm:$0xff]
    %v1281 = vld [vmem:[#allocation9 + $0x8] sm:$0xff]
    %v1282 = vld [vmem:[#allocation9 + $0x10] sm:$0xff]
    %v1283 = vld [vmem:[#allocation9 + $0x18] sm:$0xff]
    %v1284 = vld [vmem:[#allocation9 + $0x20] sm:$0xff]
    %v1285 = vld [vmem:[#allocation9 + $0x28] sm:$0xff]
    %v1286 = vld [vmem:[#allocation9 + $0x30] sm:$0xff]
    %v1287 = vld [vmem:[#allocation9 + $0x38] sm:$0xff]
    %v1288 = vld [vmem:[#allocation9 + $0x40] sm:$0xff]
    %v1289 = vld [vmem:[#allocation9 + $0x48] sm:$0xff]
    %v1290 = vld [vmem:[#allocation9 + $0x50] sm:$0xff]
    %v1291 = vld [vmem:[#allocation9 + $0x58] sm:$0xff]
    %v1292 = vld [vmem:[#allocation9 + $0x60] sm:$0xff]
    %v1293 = vld [vmem:[#allocation9 + $0x68] sm:$0xff]
    %v1294 = vld [vmem:[#allocation9 + $0x70] sm:$0xff]
    %v1295 = vld [vmem:[#allocation9 + $0x78] sm:$0xff]
    %v1296 = vld [vmem:[#allocation9 + $0x80] sm:$0xff]
    %v1297 = vld [vmem:[#allocation9 + $0x88] sm:$0xff]
    %v1298 = vld [vmem:[#allocation9 + $0x90] sm:$0xff]
    %v1299 = vld [vmem:[#allocation9 + $0x98] sm:$0xff]
    %v1300 = vld [vmem:[#allocation9 + $0xa0] sm:$0xff]
    %v1301 = vld [vmem:[#allocation9 + $0xa8] sm:$0xff]
    %v1302 = vld [vmem:[#allocation9 + $0xb0] sm:$0xff]
    %v1303 = vld [vmem:[#allocation9 + $0xb8] sm:$0xff]
    %v1304 = vld [vmem:[#allocation9 + $0xc0] sm:$0xff]
    %v1305 = vld [vmem:[#allocation9 + $0xc8] sm:$0xff]
    %v1306 = vld [vmem:[#allocation9 + $0xd0] sm:$0xff]
    %v1307 = vld [vmem:[#allocation9 + $0xd8] sm:$0xff]
    %v1308 = vld [vmem:[#allocation9 + $0xe0] sm:$0xff]
    %v1309 = vld [vmem:[#allocation9 + $0xe8] sm:$0xff]
    %v1310 = vld [vmem:[#allocation9 + $0xf0] sm:$0xff]
    %v1311 = vld [vmem:[#allocation9 + $0xf8] sm:$0xff]
    %v1312 = vld [vmem:[#allocation9 + $0x100] sm:$0xff]
    %v1313 = vld [vmem:[#allocation9 + $0x108] sm:$0xff]
    %v1314 = vld [vmem:[#allocation9 + $0x110] sm:$0xff]
    %v1315 = vld [vmem:[#allocation9 + $0x118] sm:$0xff]
    %v1316 = vld [vmem:[#allocation9 + $0x120] sm:$0xff]
    %v1317 = vld [vmem:[#allocation9 + $0x128] sm:$0xff]
    %v1318 = vld [vmem:[#allocation9 + $0x130] sm:$0xff]
    %v1319 = vld [vmem:[#allocation9 + $0x138] sm:$0xff]
    %v1320 = vld [vmem:[#allocation9 + $0x140] sm:$0xff]
    %v1321 = vld [vmem:[#allocation9 + $0x148] sm:$0xff]
    %v1322 = vld [vmem:[#allocation9 + $0x150] sm:$0xff]
    %v1323 = vld [vmem:[#allocation9 + $0x158] sm:$0xff]
    %v1324 = vld [vmem:[#allocation9 + $0x160] sm:$0xff]
    %v1325 = vld [vmem:[#allocation9 + $0x168] sm:$0xff]
    %v1326 = vld [vmem:[#allocation9 + $0x170] sm:$0xff]
    %v1327 = vld [vmem:[#allocation9 + $0x178] sm:$0xff]
    %v1328 = vld [vmem:[#allocation9 + $0x180] sm:$0xff]
    %v1329 = vld [vmem:[#allocation9 + $0x188] sm:$0xff]
    %v1330 = vld [vmem:[#allocation9 + $0x190] sm:$0xff]
    %v1331 = vld [vmem:[#allocation9 + $0x198] sm:$0xff]
    %v1332 = vld [vmem:[#allocation9 + $0x1a0] sm:$0xff]
    %v1333 = vld [vmem:[#allocation9 + $0x1a8] sm:$0xff]
    %v1334 = vld [vmem:[#allocation9 + $0x1b0] sm:$0xff]
    %v1335 = vld [vmem:[#allocation9 + $0x1b8] sm:$0xff]
    %v1336 = vld [vmem:[#allocation9 + $0x1c0] sm:$0xff]
    %v1337 = vld [vmem:[#allocation9 + $0x1c8] sm:$0xff]
    %v1338 = vld [vmem:[#allocation9 + $0x1d0] sm:$0xff]
    %v1339 = vld [vmem:[#allocation9 + $0x1d8] sm:$0xff]
    %v1340 = vld [vmem:[#allocation9 + $0x1e0] sm:$0xff]
    %v1341 = vld [vmem:[#allocation9 + $0x1e8] sm:$0xff]
    %v1342 = vld [vmem:[#allocation9 + $0x1f0] sm:$0xff]
    %v1343 = vld [vmem:[#allocation9 + $0x1f8] sm:$0xff]
    %v1344 = vld [vmem:[#allocation9 + $0x200] sm:$0xff]
    %v1345 = vld [vmem:[#allocation9 + $0x208] sm:$0xff]
    %v1346 = vld [vmem:[#allocation9 + $0x210] sm:$0xff]
    %v1347 = vld [vmem:[#allocation9 + $0x218] sm:$0xff]
    %v1348 = vld [vmem:[#allocation9 + $0x220] sm:$0xff]
    %v1349 = vld [vmem:[#allocation9 + $0x228] sm:$0xff]
    %v1350 = vld [vmem:[#allocation9 + $0x230] sm:$0xff]
    %v1351 = vld [vmem:[#allocation9 + $0x238] sm:$0xff]
    %v1352 = vld [vmem:[#allocation9 + $0x240] sm:$0xff]
    %v1353 = vld [vmem:[#allocation9 + $0x248] sm:$0xff]
    %v1354 = vld [vmem:[#allocation9 + $0x250] sm:$0xff]
    %v1355 = vld [vmem:[#allocation9 + $0x258] sm:$0xff]
    %v1356 = vld [vmem:[#allocation9 + $0x260] sm:$0xff]
    %v1357 = vld [vmem:[#allocation9 + $0x268] sm:$0xff]
    %v1358 = vld [vmem:[#allocation9 + $0x270] sm:$0xff]
    %v1359 = vld [vmem:[#allocation9 + $0x278] sm:$0xff]
    %v1360 = vld [vmem:[#allocation9 + $0x280] sm:$0xff]
    %v1361 = vld [vmem:[#allocation9 + $0x288] sm:$0xff]
    %v1362 = vld [vmem:[#allocation9 + $0x290] sm:$0xff]
    %v1363 = vld [vmem:[#allocation9 + $0x298] sm:$0xff]
    %v1364 = vld [vmem:[#allocation9 + $0x2a0] sm:$0xff]
    %v1365 = vld [vmem:[#allocation9 + $0x2a8] sm:$0xff]
    %v1366 = vld [vmem:[#allocation9 + $0x2b0] sm:$0xff]
    %v1367 = vld [vmem:[#allocation9 + $0x2b8] sm:$0xff]
    %v1368 = vld [vmem:[#allocation9 + $0x2c0] sm:$0xff]
    %v1369 = vld [vmem:[#allocation9 + $0x2c8] sm:$0xff]
    %v1370 = vld [vmem:[#allocation9 + $0x2d0] sm:$0xff]
    %v1371 = vld [vmem:[#allocation9 + $0x2d8] sm:$0xff]
    %v1372 = vld [vmem:[#allocation9 + $0x2e0] sm:$0xff]
    %v1373 = vld [vmem:[#allocation9 + $0x2e8] sm:$0xff]
    %v1374 = vld [vmem:[#allocation9 + $0x2f0] sm:$0xff]
    %v1375 = vld [vmem:[#allocation9 + $0x2f8] sm:$0xff]
    %v1376 = vld [vmem:[#allocation9 + $0x300] sm:$0xff]
    %v1377 = vld [vmem:[#allocation9 + $0x308] sm:$0xff]
    %v1378 = vld [vmem:[#allocation9 + $0x310] sm:$0xff]
    %v1379 = vld [vmem:[#allocation9 + $0x318] sm:$0xff]
    %v1380 = vld [vmem:[#allocation9 + $0x320] sm:$0xff]
    %v1381 = vld [vmem:[#allocation9 + $0x328] sm:$0xff]
    %v1382 = vld [vmem:[#allocation9 + $0x330] sm:$0xff]
    %v1383 = vld [vmem:[#allocation9 + $0x338] sm:$0xff]
    %v1384 = vld [vmem:[#allocation9 + $0x340] sm:$0xff]
    %v1385 = vld [vmem:[#allocation9 + $0x348] sm:$0xff]
    %v1386 = vld [vmem:[#allocation9 + $0x350] sm:$0xff]
    %v1387 = vld [vmem:[#allocation9 + $0x358] sm:$0xff]
    %v1388 = vld [vmem:[#allocation9 + $0x360] sm:$0xff]
    %v1389 = vld [vmem:[#allocation9 + $0x368] sm:$0xff]
    %v1390 = vld [vmem:[#allocation9 + $0x370] sm:$0xff]
    %v1391 = vld [vmem:[#allocation9 + $0x378] sm:$0xff]
    %v1392 = vld [vmem:[#allocation9 + $0x380] sm:$0xff]
    %v1393 = vld [vmem:[#allocation9 + $0x388] sm:$0xff]
    %v1394 = vld [vmem:[#allocation9 + $0x390] sm:$0xff]
    %v1395 = vld [vmem:[#allocation9 + $0x398] sm:$0xff]
    %v1396 = vld [vmem:[#allocation9 + $0x3a0] sm:$0xff]
    %v1397 = vld [vmem:[#allocation9 + $0x3a8] sm:$0xff]
    %v1398 = vld [vmem:[#allocation9 + $0x3b0] sm:$0xff]
    %v1399 = vld [vmem:[#allocation9 + $0x3b8] sm:$0xff]
    %v1400 = vld [vmem:[#allocation9 + $0x3c0] sm:$0xff]
    %v1401 = vld [vmem:[#allocation9 + $0x3c8] sm:$0xff]
    %v1402 = vld [vmem:[#allocation9 + $0x3d0] sm:$0xff]
    %v1403 = vld [vmem:[#allocation9 + $0x3d8] sm:$0xff]
    %v1404 = vld [vmem:[#allocation9 + $0x3e0] sm:$0xff]
    %v1405 = vld [vmem:[#allocation9 + $0x3e8] sm:$0xff]
    %v1406 = vld [vmem:[#allocation9 + $0x3f0] sm:$0xff]
    %v1407 = vld [vmem:[#allocation9 + $0x3f8] sm:$0xff]
    %1408 = vmatprep.subr.mxu0 %v1281
    %1409 = vmatpush1.msra.mxu0 %v1280
    %1410 = vmatprep.subr.mxu0 %v1285
    %1411 = vmatpush1.msra.mxu0 %v1284
    %1412 = vmatprep.subr.mxu0 %v1289
    %1413 = vmatpush1.msra.mxu0 %v1288
    %1414 = vmatprep.subr.mxu0 %v1293
    %1415 = vmatpush1.msra.mxu0 %v1292
    %1416 = vmatprep.subr.mxu0 %v1297
    %1417 = vmatpush1.msra.mxu0 %v1296
    %1418 = vmatprep.subr.mxu0 %v1301
    %1419 = vmatpush1.msra.mxu0 %v1300
    %1420 = vmatprep.subr.mxu0 %v1305
    %1421 = vmatpush1.msra.mxu0 %v1304
    %1422 = vmatprep.subr.mxu0 %v1309
    %1423 = vmatpush1.msra.mxu0 %v1308
    %1424 = vmatprep.subr.mxu0 %v1313
    %1425 = vmatpush1.msra.mxu0 %v1312
    %1426 = vmatprep.subr.mxu0 %v1317
    %1427 = vmatpush1.msra.mxu0 %v1316
    %1428 = vmatprep.subr.mxu0 %v1321
    %1429 = vmatpush1.msra.mxu0 %v1320
    %1430 = vmatprep.subr.mxu0 %v1325
    %1431 = vmatpush1.msra.mxu0 %v1324
    %1432 = vmatprep.subr.mxu0 %v1329
    %1433 = vmatpush1.msra.mxu0 %v1328
    %1434 = vmatprep.subr.mxu0 %v1333
    %1435 = vmatpush1.msra.mxu0 %v1332
    %1436 = vmatprep.subr.mxu0 %v1337
    %1437 = vmatpush1.msra.mxu0 %v1336
    %1438 = vmatprep.subr.mxu0 %v1341
    %1439 = vmatpush1.msra.mxu0 %v1340
    %1440 = vmatprep.subr.mxu0 %v1345
    %1441 = vmatpush1.msra.mxu0 %v1344
    %1442 = vmatprep.subr.mxu0 %v1349
    %1443 = vmatpush1.msra.mxu0 %v1348
    %1444 = vmatprep.subr.mxu0 %v1353
    %1445 = vmatpush1.msra.mxu0 %v1352
    %1446 = vmatprep.subr.mxu0 %v1357
    %1447 = vmatpush1.msra.mxu0 %v1356
    %1448 = vmatprep.subr.mxu0 %v1361
    %1449 = vmatpush1.msra.mxu0 %v1360
    %1450 = vmatprep.subr.mxu0 %v1365
    %1451 = vmatpush1.msra.mxu0 %v1364
    %1452 = vmatprep.subr.mxu0 %v1369
    %1453 = vmatpush1.msra.mxu0 %v1368
    %1454 = vmatprep.subr.mxu0 %v1373
    %1455 = vmatpush1.msra.mxu0 %v1372
    %1456 = vmatprep.subr.mxu0 %v1377
    %1457 = vmatpush1.msra.mxu0 %v1376
    %1458 = vmatprep.subr.mxu0 %v1381
    %1459 = vmatpush1.msra.mxu0 %v1380
    %1460 = vmatprep.subr.mxu0 %v1385
    %1461 = vmatpush1.msra.mxu0 %v1384
    %1462 = vmatprep.subr.mxu0 %v1389
    %1463 = vmatpush1.msra.mxu0 %v1388
    %1464 = vmatprep.subr.mxu0 %v1393
    %1465 = vmatpush1.msra.mxu0 %v1392
    %1466 = vmatprep.subr.mxu0 %v1397
    %1467 = vmatpush1.msra.mxu0 %v1396
    %1468 = vmatprep.subr.mxu0 %v1401
    %1469 = vmatpush1.msra.mxu0 %v1400
    %1470 = vmatprep.subr.mxu0 %v1405
    %1471 = vmatpush1.msra.mxu0 %v1404
    %1472 = vmatprep.mubr.f32.mxu0 %v1043
    %1473 = vmatmul.mubr.f32.gmra.mrb[0].mxu0 %v1279
    %v1474 = vpop.f32.mrb[0].mxu0
    %v1475 = vadd.f32 0.0, %v1474
    %v1476 = vpop.f32.mrb[0].mxu0
    %v1477 = vadd.f32 0.0, %v1476
    %1478 = vdwg.mxu0
    %1479 = vmatprep.subr.mxu0 %v1283
    %1480 = vmatpush1.msra.mxu0 %v1282
    %1481 = vmatprep.subr.mxu0 %v1287
    %1482 = vmatpush1.msra.mxu0 %v1286
    %1483 = vmatprep.subr.mxu0 %v1291
    %1484 = vmatpush1.msra.mxu0 %v1290
    %1485 = vmatprep.subr.mxu0 %v1295
    %1486 = vmatpush1.msra.mxu0 %v1294
    %1487 = vmatprep.subr.mxu0 %v1299
    %1488 = vmatpush1.msra.mxu0 %v1298
    %1489 = vmatprep.subr.mxu0 %v1303
    %1490 = vmatpush1.msra.mxu0 %v1302
    %1491 = vmatprep.subr.mxu0 %v1307
    %1492 = vmatpush1.msra.mxu0 %v1306
    %1493 = vmatprep.subr.mxu0 %v1311
    %1494 = vmatpush1.msra.mxu0 %v1310
    %1495 = vmatprep.subr.mxu0 %v1315
    %1496 = vmatpush1.msra.mxu0 %v1314
    %1497 = vmatprep.subr.mxu0 %v1319
    %1498 = vmatpush1.msra.mxu0 %v1318
    %1499 = vmatprep.subr.mxu0 %v1323
    %1500 = vmatpush1.msra.mxu0 %v1322
    %1501 = vmatprep.subr.mxu0 %v1327
    %1502 = vmatpush1.msra.mxu0 %v1326
    %1503 = vmatprep.subr.mxu0 %v1331
    %1504 = vmatpush1.msra.mxu0 %v1330
    %1505 = vmatprep.subr.mxu0 %v1335
    %1506 = vmatpush1.msra.mxu0 %v1334
    %1507 = vmatprep.subr.mxu0 %v1339
    %1508 = vmatpush1.msra.mxu0 %v1338
    %1509 = vmatprep.subr.mxu0 %v1343
    %1510 = vmatpush1.msra.mxu0 %v1342
    %1511 = vmatprep.subr.mxu0 %v1347
    %1512 = vmatpush1.msra.mxu0 %v1346
    %1513 = vmatprep.subr.mxu0 %v1351
    %1514 = vmatpush1.msra.mxu0 %v1350
    %1515 = vmatprep.subr.mxu0 %v1355
    %1516 = vmatpush1.msra.mxu0 %v1354
    %1517 = vmatprep.subr.mxu0 %v1359
    %1518 = vmatpush1.msra.mxu0 %v1358
    %1519 = vmatprep.subr.mxu0 %v1363
    %1520 = vmatpush1.msra.mxu0 %v1362
    %1521 = vmatprep.subr.mxu0 %v1367
    %1522 = vmatpush1.msra.mxu0 %v1366
    %1523 = vmatprep.subr.mxu0 %v1371
    %1524 = vmatpush1.msra.mxu0 %v1370
    %1525 = vmatprep.subr.mxu0 %v1375
    %1526 = vmatpush1.msra.mxu0 %v1374
    %1527 = vmatprep.subr.mxu0 %v1379
    %1528 = vmatpush1.msra.mxu0 %v1378
    %1529 = vmatprep.subr.mxu0 %v1383
    %1530 = vmatpush1.msra.mxu0 %v1382
    %1531 = vmatprep.subr.mxu0 %v1387
    %1532 = vmatpush1.msra.mxu0 %v1386
    %1533 = vmatprep.subr.mxu0 %v1391
    %1534 = vmatpush1.msra.mxu0 %v1390
    %1535 = vmatprep.subr.mxu0 %v1395
    %1536 = vmatpush1.msra.mxu0 %v1394
    %1537 = vmatprep.subr.mxu0 %v1399
    %1538 = vmatpush1.msra.mxu0 %v1398
    %1539 = vmatprep.subr.mxu0 %v1403
    %1540 = vmatpush1.msra.mxu0 %v1402
    %1541 = vmatprep.subr.mxu0 %v1407
    %1542 = vmatpush1.msra.mxu0 %v1406
    %1543 = vmatprep.mubr.f32.mxu0 %v1043
    %1544 = vmatmul.mubr.f32.gmra.mrb[0].mxu0 %v1279
    %v1545 = vpop.f32.mrb[0].mxu0
    %v1546 = vadd.f32 0.0, %v1545
    %v1547 = vpop.f32.mrb[0].mxu0
    %v1548 = vadd.f32 0.0, %v1547
    %1549 = vdwg.mxu0
    %v1550 = vadd.f32 %v500, %v1475
    %v1551 = vadd.f32 %v504, %v1477
    %v1552 = vadd.f32 %v508, %v1546
    %v1553 = vadd.f32 %v512, %v1548
    %v1554 = vmul.f32 %v1550, 0.5
    %v1555 = vtanh.pop %v1554
    %v1556 = vmul.f32 %v1555, 0.5
    %v1557 = vadd.f32 %v1556, 0.5
    %v1558 = vmul.f32 %v1551, 0.5
    %v1559 = vtanh.pop %v1558
    %v1560 = vmul.f32 %v1559, 0.5
    %v1561 = vadd.f32 %v1560, 0.5
    %v1562 = vtanh.pop %v1552
    %v1563 = vmul.f32 %v1553, 0.5
    %v1564 = vtanh.pop %v1563
    %v1565 = vmul.f32 %v1564, 0.5
    %v1566 = vadd.f32 %v1565, 0.5
    %v1567 = vmul.f32 %v1561, %v1041
    %v1568 = vmul.f32 %v1557, %v1562
    %v1569 = vadd.f32 %v1567, %v1568
    %v1570 = vtanh.pop %v1569
    %v1571 = vmul.f32 %v1566, %v1570
    %1572 = vst [vmem:[#allocation3 + $0x1] sm:$0x1] %v1571
    %s1573 = smul.u32 2, 4
    %s1574 = smul.addr %s1573, 8
    %s1575 = scalar_lea.vmem [#allocation2], %s1574
    %v1576 = vld [vmem:[%s1575] sm:$0xff]
    %v1577 = vld [vmem:[%s1575 + $0x8] sm:$0xff]
    %v1578 = vld [vmem:[%s1575 + $0x10] sm:$0xff]
    %v1579 = vld [vmem:[%s1575 + $0x18] sm:$0xff]
    %v1580 = vld [vmem:[#allocation7] sm:$0xff]
    %v1581 = vld [vmem:[#allocation7 + $0x8] sm:$0xff]
    %v1582 = vld [vmem:[#allocation7 + $0x10] sm:$0xff]
    %v1583 = vld [vmem:[#allocation7 + $0x18] sm:$0xff]
    %v1584 = vld [vmem:[#allocation7 + $0x20] sm:$0xff]
    %v1585 = vld [vmem:[#allocation7 + $0x28] sm:$0xff]
    %v1586 = vld [vmem:[#allocation7 + $0x30] sm:$0xff]
    %v1587 = vld [vmem:[#allocation7 + $0x38] sm:$0xff]
    %v1588 = vld [vmem:[#allocation7 + $0x40] sm:$0xff]
    %v1589 = vld [vmem:[#allocation7 + $0x48] sm:$0xff]
    %v1590 = vld [vmem:[#allocation7 + $0x50] sm:$0xff]
    %v1591 = vld [vmem:[#allocation7 + $0x58] sm:$0xff]
    %v1592 = vld [vmem:[#allocation7 + $0x60] sm:$0xff]
    %v1593 = vld [vmem:[#allocation7 + $0x68] sm:$0xff]
    %v1594 = vld [vmem:[#allocation7 + $0x70] sm:$0xff]
    %v1595 = vld [vmem:[#allocation7 + $0x78] sm:$0xff]
    %v1596 = vld [vmem:[#allocation7 + $0x80] sm:$0xff]
    %v1597 = vld [vmem:[#allocation7 + $0x88] sm:$0xff]
    %v1598 = vld [vmem:[#allocation7 + $0x90] sm:$0xff]
    %v1599 = vld [vmem:[#allocation7 + $0x98] sm:$0xff]
    %v1600 = vld [vmem:[#allocation7 + $0xa0] sm:$0xff]
    %v1601 = vld [vmem:[#allocation7 + $0xa8] sm:$0xff]
    %v1602 = vld [vmem:[#allocation7 + $0xb0] sm:$0xff]
    %v1603 = vld [vmem:[#allocation7 + $0xb8] sm:$0xff]
    %v1604 = vld [vmem:[#allocation7 + $0xc0] sm:$0xff]
    %v1605 = vld [vmem:[#allocation7 + $0xc8] sm:$0xff]
    %v1606 = vld [vmem:[#allocation7 + $0xd0] sm:$0xff]
    %v1607 = vld [vmem:[#allocation7 + $0xd8] sm:$0xff]
    %v1608 = vld [vmem:[#allocation7 + $0xe0] sm:$0xff]
    %v1609 = vld [vmem:[#allocation7 + $0xe8] sm:$0xff]
    %v1610 = vld [vmem:[#allocation7 + $0xf0] sm:$0xff]
    %v1611 = vld [vmem:[#allocation7 + $0xf8] sm:$0xff]
    %v1612 = vld [vmem:[#allocation7 + $0x100] sm:$0xff]
    %v1613 = vld [vmem:[#allocation7 + $0x108] sm:$0xff]
    %v1614 = vld [vmem:[#allocation7 + $0x110] sm:$0xff]
    %v1615 = vld [vmem:[#allocation7 + $0x118] sm:$0xff]
    %v1616 = vld [vmem:[#allocation7 + $0x120] sm:$0xff]
    %v1617 = vld [vmem:[#allocation7 + $0x128] sm:$0xff]
    %v1618 = vld [vmem:[#allocation7 + $0x130] sm:$0xff]
    %v1619 = vld [vmem:[#allocation7 + $0x138] sm:$0xff]
    %v1620 = vld [vmem:[#allocation7 + $0x140] sm:$0xff]
    %v1621 = vld [vmem:[#allocation7 + $0x148] sm:$0xff]
    %v1622 = vld [vmem:[#allocation7 + $0x150] sm:$0xff]
    %v1623 = vld [vmem:[#allocation7 + $0x158] sm:$0xff]
    %v1624 = vld [vmem:[#allocation7 + $0x160] sm:$0xff]
    %v1625 = vld [vmem:[#allocation7 + $0x168] sm:$0xff]
    %v1626 = vld [vmem:[#allocation7 + $0x170] sm:$0xff]
    %v1627 = vld [vmem:[#allocation7 + $0x178] sm:$0xff]
    %v1628 = vld [vmem:[#allocation7 + $0x180] sm:$0xff]
    %v1629 = vld [vmem:[#allocation7 + $0x188] sm:$0xff]
    %v1630 = vld [vmem:[#allocation7 + $0x190] sm:$0xff]
    %v1631 = vld [vmem:[#allocation7 + $0x198] sm:$0xff]
    %v1632 = vld [vmem:[#allocation7 + $0x1a0] sm:$0xff]
    %v1633 = vld [vmem:[#allocation7 + $0x1a8] sm:$0xff]
    %v1634 = vld [vmem:[#allocation7 + $0x1b0] sm:$0xff]
    %v1635 = vld [vmem:[#allocation7 + $0x1b8] sm:$0xff]
    %v1636 = vld [vmem:[#allocation7 + $0x1c0] sm:$0xff]
    %v1637 = vld [vmem:[#allocation7 + $0x1c8] sm:$0xff]
    %v1638 = vld [vmem:[#allocation7 + $0x1d0] sm:$0xff]
    %v1639 = vld [vmem:[#allocation7 + $0x1d8] sm:$0xff]
    %v1640 = vld [vmem:[#allocation7 + $0x1e0] sm:$0xff]
    %v1641 = vld [vmem:[#allocation7 + $0x1e8] sm:$0xff]
    %v1642 = vld [vmem:[#allocation7 + $0x1f0] sm:$0xff]
    %v1643 = vld [vmem:[#allocation7 + $0x1f8] sm:$0xff]
    %1644 = vmatprep.subr.mxu0 %v1581
    %1645 = vmatpush1.msra.mxu0 %v1580
    %1646 = vmatprep.subr.mxu0 %v1585
    %1647 = vmatpush1.msra.mxu0 %v1584
    %1648 = vmatprep.subr.mxu0 %v1589
    %1649 = vmatpush1.msra.mxu0 %v1588
    %1650 = vmatprep.subr.mxu0 %v1593
    %1651 = vmatpush1.msra.mxu0 %v1592
    %1652 = vmatprep.subr.mxu0 %v1597
    %1653 = vmatpush1.msra.mxu0 %v1596
    %1654 = vmatprep.subr.mxu0 %v1601
    %1655 = vmatpush1.msra.mxu0 %v1600
    %1656 = vmatprep.subr.mxu0 %v1605
    %1657 = vmatpush1.msra.mxu0 %v1604
    %1658 = vmatprep.subr.mxu0 %v1609
    %1659 = vmatpush1.msra.mxu0 %v1608
    %1660 = vmatprep.subr.mxu0 %v1613
    %1661 = vmatpush1.msra.mxu0 %v1612
    %1662 = vmatprep.subr.mxu0 %v1617
    %1663 = vmatpush1.msra.mxu0 %v1616
    %1664 = vmatprep.subr.mxu0 %v1621
    %1665 = vmatpush1.msra.mxu0 %v1620
    %1666 = vmatprep.subr.mxu0 %v1625
    %1667 = vmatpush1.msra.mxu0 %v1624
    %1668 = vmatprep.subr.mxu0 %v1629
    %1669 = vmatpush1.msra.mxu0 %v1628
    %1670 = vmatprep.subr.mxu0 %v1633
    %1671 = vmatpush1.msra.mxu0 %v1632
    %1672 = vmatprep.subr.mxu0 %v1637
    %1673 = vmatpush1.msra.mxu0 %v1636
    %1674 = vmatprep.subr.mxu0 %v1641
    %1675 = vmatpush1.msra.mxu0 %v1640
    %1676 = vmatprep.subr.mxu0 0.0
    %1677 = vmatpush1.msra.mxu0 0.0
    %1678 = vmatprep.subr.mxu0 0.0
    %1679 = vmatpush1.msra.mxu0 0.0
    %1680 = vmatprep.subr.mxu0 0.0
    %1681 = vmatpush1.msra.mxu0 0.0
    %1682 = vmatprep.subr.mxu0 0.0
    %1683 = vmatpush1.msra.mxu0 0.0
    %1684 = vmatprep.subr.mxu0 0.0
    %1685 = vmatpush1.msra.mxu0 0.0
    %1686 = vmatprep.subr.mxu0 0.0
    %1687 = vmatpush1.msra.mxu0 0.0
    %1688 = vmatprep.subr.mxu0 0.0
    %1689 = vmatpush1.msra.mxu0 0.0
    %1690 = vmatprep.subr.mxu0 0.0
    %1691 = vmatpush1.msra.mxu0 0.0
    %1692 = vmatprep.subr.mxu0 0.0
    %1693 = vmatpush1.msra.mxu0 0.0
    %1694 = vmatprep.subr.mxu0 0.0
    %1695 = vmatpush1.msra.mxu0 0.0
    %1696 = vmatprep.subr.mxu0 0.0
    %1697 = vmatpush1.msra.mxu0 0.0
    %1698 = vmatprep.subr.mxu0 0.0
    %1699 = vmatpush1.msra.mxu0 0.0
    %1700 = vmatprep.subr.mxu0 0.0
    %1701 = vmatpush1.msra.mxu0 0.0
    %1702 = vmatprep.subr.mxu0 0.0
    %1703 = vmatpush1.msra.mxu0 0.0
    %1704 = vmatprep.subr.mxu0 0.0
    %1705 = vmatpush1.msra.mxu0 0.0
    %1706 = vmatprep.subr.mxu0 0.0
    %1707 = vmatpush1.msra.mxu0 0.0
    %1708 = vmatprep.mubr.f32.mxu0 0.0
    %1709 = vmatmul.mubr.f32.gmra.mrb[0].mxu0 %v1279
    %v1710 = vpop.f32.mrb[0].mxu0
    %v1711 = vadd.f32 0.0, %v1710
    %v1712 = vpop.f32.mrb[0].mxu0
    %v1713 = vadd.f32 0.0, %v1712
    %1714 = vdwg.mxu0
    %1715 = vmatprep.subr.mxu0 %v1583
    %1716 = vmatpush1.msra.mxu0 %v1582
    %1717 = vmatprep.subr.mxu0 %v1587
    %1718 = vmatpush1.msra.mxu0 %v1586
    %1719 = vmatprep.subr.mxu0 %v1591
    %1720 = vmatpush1.msra.mxu0 %v1590
    %1721 = vmatprep.subr.mxu0 %v1595
    %1722 = vmatpush1.msra.mxu0 %v1594
    %1723 = vmatprep.subr.mxu0 %v1599
    %1724 = vmatpush1.msra.mxu0 %v1598
    %1725 = vmatprep.subr.mxu0 %v1603
    %1726 = vmatpush1.msra.mxu0 %v1602
    %1727 = vmatprep.subr.mxu0 %v1607
    %1728 = vmatpush1.msra.mxu0 %v1606
    %1729 = vmatprep.subr.mxu0 %v1611
    %1730 = vmatpush1.msra.mxu0 %v1610
    %1731 = vmatprep.subr.mxu0 %v1615
    %1732 = vmatpush1.msra.mxu0 %v1614
    %1733 = vmatprep.subr.mxu0 %v1619
    %1734 = vmatpush1.msra.mxu0 %v1618
    %1735 = vmatprep.subr.mxu0 %v1623
    %1736 = vmatpush1.msra.mxu0 %v1622
    %1737 = vmatprep.subr.mxu0 %v1627
    %1738 = vmatpush1.msra.mxu0 %v1626
    %1739 = vmatprep.subr.mxu0 %v1631
    %1740 = vmatpush1.msra.mxu0 %v1630
    %1741 = vmatprep.subr.mxu0 %v1635
    %1742 = vmatpush1.msra.mxu0 %v1634
    %1743 = vmatprep.subr.mxu0 %v1639
    %1744 = vmatpush1.msra.mxu0 %v1638
    %1745 = vmatprep.subr.mxu0 %v1643
    %1746 = vmatpush1.msra.mxu0 %v1642
    %1747 = vmatprep.subr.mxu0 0.0
    %1748 = vmatpush1.msra.mxu0 0.0
    %1749 = vmatprep.subr.mxu0 0.0
    %1750 = vmatpush1.msra.mxu0 0.0
    %1751 = vmatprep.subr.mxu0 0.0
    %1752 = vmatpush1.msra.mxu0 0.0
    %1753 = vmatprep.subr.mxu0 0.0
    %1754 = vmatpush1.msra.mxu0 0.0
    %1755 = vmatprep.subr.mxu0 0.0
    %1756 = vmatpush1.msra.mxu0 0.0
    %1757 = vmatprep.subr.mxu0 0.0
    %1758 = vmatpush1.msra.mxu0 0.0
    %1759 = vmatprep.subr.mxu0 0.0
    %1760 = vmatpush1.msra.mxu0 0.0
    %1761 = vmatprep.subr.mxu0 0.0
    %1762 = vmatpush1.msra.mxu0 0.0
    %1763 = vmatprep.subr.mxu0 0.0
    %1764 = vmatpush1.msra.mxu0 0.0
    %1765 = vmatprep.subr.mxu0 0.0
    %1766 = vmatpush1.msra.mxu0 0.0
    %1767 = vmatprep.subr.mxu0 0.0
    %1768 = vmatpush1.msra.mxu0 0.0
    %1769 = vmatprep.subr.mxu0 0.0
    %1770 = vmatpush1.msra.mxu0 0.0
    %1771 = vmatprep.subr.mxu0 0.0
    %1772 = vmatpush1.msra.mxu0 0.0
    %1773 = vmatprep.subr.mxu0 0.0
    %1774 = vmatpush1.msra.mxu0 0.0
    %1775 = vmatprep.subr.mxu0 0.0
    %1776 = vmatpush1.msra.mxu0 0.0
    %1777 = vmatprep.subr.mxu0 0.0
    %1778 = vmatpush1.msra.mxu0 0.0
    %1779 = vmatprep.mubr.f32.mxu0 0.0
    %1780 = vmatmul.mubr.f32.gmra.mrb[0].mxu0 %v1279
    %v1781 = vpop.f32.mrb[0].mxu0
    %v1782 = vadd.f32 0.0, %v1781
    %v1783 = vpop.f32.mrb[0].mxu0
    %v1784 = vadd.f32 0.0, %v1783
    %1785 = vdwg.mxu0
    %v1786 = vadd.f32 %v1576, %v1711
    %v1787 = vadd.f32 %v1577, %v1713
    %v1788 = vadd.f32 %v1578, %v1782
    %v1789 = vadd.f32 %v1579, %v1784
    %v1790 = vmul.f32 %v1786, 0.5
    %v1791 = vtanh.pop %v1790
    %v1792 = vmul.f32 %v1791, 0.5
    %v1793 = vadd.f32 %v1792, 0.5
    %v1794 = vmul.f32 %v1787, 0.5
    %v1795 = vtanh.pop %v1794
    %v1796 = vmul.f32 %v1795, 0.5
    %v1797 = vadd.f32 %v1796, 0.5
    %v1798 = vtanh.pop %v1788
    %v1799 = vmul.f32 %v1789, 0.5
    %v1800 = vtanh.pop %v1799
    %v1801 = vmul.f32 %v1800, 0.5
    %v1802 = vadd.f32 %v1801, 0.5
    %v1803 = vmul.f32 %v1797, %v1277
    %v1804 = vmul.f32 %v1793, %v1798
    %v1805 = vadd.f32 %v1803, %v1804
    %v1806 = vtanh.pop %v1805
    %v1807 = vmul.f32 %v1802, %v1806
    %v1808 = vld [vmem:[#allocation9] sm:$0xff]
    %v1809 = vld [vmem:[#allocation9 + $0x8] sm:$0xff]
    %v1810 = vld [vmem:[#allocation9 + $0x10] sm:$0xff]
    %v1811 = vld [vmem:[#allocation9 + $0x18] sm:$0xff]
    %v1812 = vld [vmem:[#allocation9 + $0x20] sm:$0xff]
    %v1813 = vld [vmem:[#allocation9 + $0x28] sm:$0xff]
    %v1814 = vld [vmem:[#allocation9 + $0x30] sm:$0xff]
    %v1815 = vld [vmem:[#allocation9 + $0x38] sm:$0xff]
    %v1816 = vld [vmem:[#allocation9 + $0x40] sm:$0xff]
    %v1817 = vld [vmem:[#allocation9 + $0x48] sm:$0xff]
    %v1818 = vld [vmem:[#allocation9 + $0x50] sm:$0xff]
    %v1819 = vld [vmem:[#allocation9 + $0x58] sm:$0xff]
    %v1820 = vld [vmem:[#allocation9 + $0x60] sm:$0xff]
    %v1821 = vld [vmem:[#allocation9 + $0x68] sm:$0xff]
    %v1822 = vld [vmem:[#allocation9 + $0x70] sm:$0xff]
    %v1823 = vld [vmem:[#allocation9 + $0x78] sm:$0xff]
    %v1824 = vld [vmem:[#allocation9 + $0x80] sm:$0xff]
    %v1825 = vld [vmem:[#allocation9 + $0x88] sm:$0xff]
    %v1826 = vld [vmem:[#allocation9 + $0x90] sm:$0xff]
    %v1827 = vld [vmem:[#allocation9 + $0x98] sm:$0xff]
    %v1828 = vld [vmem:[#allocation9 + $0xa0] sm:$0xff]
    %v1829 = vld [vmem:[#allocation9 + $0xa8] sm:$0xff]
    %v1830 = vld [vmem:[#allocation9 + $0xb0] sm:$0xff]
    %v1831 = vld [vmem:[#allocation9 + $0xb8] sm:$0xff]
    %v1832 = vld [vmem:[#allocation9 + $0xc0] sm:$0xff]
    %v1833 = vld [vmem:[#allocation9 + $0xc8] sm:$0xff]
    %v1834 = vld [vmem:[#allocation9 + $0xd0] sm:$0xff]
    %v1835 = vld [vmem:[#allocation9 + $0xd8] sm:$0xff]
    %v1836 = vld [vmem:[#allocation9 + $0xe0] sm:$0xff]
    %v1837 = vld [vmem:[#allocation9 + $0xe8] sm:$0xff]
    %v1838 = vld [vmem:[#allocation9 + $0xf0] sm:$0xff]
    %v1839 = vld [vmem:[#allocation9 + $0xf8] sm:$0xff]
    %v1840 = vld [vmem:[#allocation9 + $0x100] sm:$0xff]
    %v1841 = vld [vmem:[#allocation9 + $0x108] sm:$0xff]
    %v1842 = vld [vmem:[#allocation9 + $0x110] sm:$0xff]
    %v1843 = vld [vmem:[#allocation9 + $0x118] sm:$0xff]
    %v1844 = vld [vmem:[#allocation9 + $0x120] sm:$0xff]
    %v1845 = vld [vmem:[#allocation9 + $0x128] sm:$0xff]
    %v1846 = vld [vmem:[#allocation9 + $0x130] sm:$0xff]
    %v1847 = vld [vmem:[#allocation9 + $0x138] sm:$0xff]
    %v1848 = vld [vmem:[#allocation9 + $0x140] sm:$0xff]
    %v1849 = vld [vmem:[#allocation9 + $0x148] sm:$0xff]
    %v1850 = vld [vmem:[#allocation9 + $0x150] sm:$0xff]
    %v1851 = vld [vmem:[#allocation9 + $0x158] sm:$0xff]
    %v1852 = vld [vmem:[#allocation9 + $0x160] sm:$0xff]
    %v1853 = vld [vmem:[#allocation9 + $0x168] sm:$0xff]
    %v1854 = vld [vmem:[#allocation9 + $0x170] sm:$0xff]
    %v1855 = vld [vmem:[#allocation9 + $0x178] sm:$0xff]
    %v1856 = vld [vmem:[#allocation9 + $0x180] sm:$0xff]
    %v1857 = vld [vmem:[#allocation9 + $0x188] sm:$0xff]
    %v1858 = vld [vmem:[#allocation9 + $0x190] sm:$0xff]
    %v1859 = vld [vmem:[#allocation9 + $0x198] sm:$0xff]
    %v1860 = vld [vmem:[#allocation9 + $0x1a0] sm:$0xff]
    %v1861 = vld [vmem:[#allocation9 + $0x1a8] sm:$0xff]
    %v1862 = vld [vmem:[#allocation9 + $0x1b0] sm:$0xff]
    %v1863 = vld [vmem:[#allocation9 + $0x1b8] sm:$0xff]
    %v1864 = vld [vmem:[#allocation9 + $0x1c0] sm:$0xff]
    %v1865 = vld [vmem:[#allocation9 + $0x1c8] sm:$0xff]
    %v1866 = vld [vmem:[#allocation9 + $0x1d0] sm:$0xff]
    %v1867 = vld [vmem:[#allocation9 + $0x1d8] sm:$0xff]
    %v1868 = vld [vmem:[#allocation9 + $0x1e0] sm:$0xff]
    %v1869 = vld [vmem:[#allocation9 + $0x1e8] sm:$0xff]
    %v1870 = vld [vmem:[#allocation9 + $0x1f0] sm:$0xff]
    %v1871 = vld [vmem:[#allocation9 + $0x1f8] sm:$0xff]
    %v1872 = vld [vmem:[#allocation9 + $0x200] sm:$0xff]
    %v1873 = vld [vmem:[#allocation9 + $0x208] sm:$0xff]
    %v1874 = vld [vmem:[#allocation9 + $0x210] sm:$0xff]
    %v1875 = vld [vmem:[#allocation9 + $0x218] sm:$0xff]
    %v1876 = vld [vmem:[#allocation9 + $0x220] sm:$0xff]
    %v1877 = vld [vmem:[#allocation9 + $0x228] sm:$0xff]
    %v1878 = vld [vmem:[#allocation9 + $0x230] sm:$0xff]
    %v1879 = vld [vmem:[#allocation9 + $0x238] sm:$0xff]
    %v1880 = vld [vmem:[#allocation9 + $0x240] sm:$0xff]
    %v1881 = vld [vmem:[#allocation9 + $0x248] sm:$0xff]
    %v1882 = vld [vmem:[#allocation9 + $0x250] sm:$0xff]
    %v1883 = vld [vmem:[#allocation9 + $0x258] sm:$0xff]
    %v1884 = vld [vmem:[#allocation9 + $0x260] sm:$0xff]
    %v1885 = vld [vmem:[#allocation9 + $0x268] sm:$0xff]
    %v1886 = vld [vmem:[#allocation9 + $0x270] sm:$0xff]
    %v1887 = vld [vmem:[#allocation9 + $0x278] sm:$0xff]
    %v1888 = vld [vmem:[#allocation9 + $0x280] sm:$0xff]
    %v1889 = vld [vmem:[#allocation9 + $0x288] sm:$0xff]
    %v1890 = vld [vmem:[#allocation9 + $0x290] sm:$0xff]
    %v1891 = vld [vmem:[#allocation9 + $0x298] sm:$0xff]
    %v1892 = vld [vmem:[#allocation9 + $0x2a0] sm:$0xff]
    %v1893 = vld [vmem:[#allocation9 + $0x2a8] sm:$0xff]
    %v1894 = vld [vmem:[#allocation9 + $0x2b0] sm:$0xff]
    %v1895 = vld [vmem:[#allocation9 + $0x2b8] sm:$0xff]
    %v1896 = vld [vmem:[#allocation9 + $0x2c0] sm:$0xff]
    %v1897 = vld [vmem:[#allocation9 + $0x2c8] sm:$0xff]
    %v1898 = vld [vmem:[#allocation9 + $0x2d0] sm:$0xff]
    %v1899 = vld [vmem:[#allocation9 + $0x2d8] sm:$0xff]
    %v1900 = vld [vmem:[#allocation9 + $0x2e0] sm:$0xff]
    %v1901 = vld [vmem:[#allocation9 + $0x2e8] sm:$0xff]
    %v1902 = vld [vmem:[#allocation9 + $0x2f0] sm:$0xff]
    %v1903 = vld [vmem:[#allocation9 + $0x2f8] sm:$0xff]
    %v1904 = vld [vmem:[#allocation9 + $0x300] sm:$0xff]
    %v1905 = vld [vmem:[#allocation9 + $0x308] sm:$0xff]
    %v1906 = vld [vmem:[#allocation9 + $0x310] sm:$0xff]
    %v1907 = vld [vmem:[#allocation9 + $0x318] sm:$0xff]
    %v1908 = vld [vmem:[#allocation9 + $0x320] sm:$0xff]
    %v1909 = vld [vmem:[#allocation9 + $0x328] sm:$0xff]
    %v1910 = vld [vmem:[#allocation9 + $0x330] sm:$0xff]
    %v1911 = vld [vmem:[#allocation9 + $0x338] sm:$0xff]
    %v1912 = vld [vmem:[#allocation9 + $0x340] sm:$0xff]
    %v1913 = vld [vmem:[#allocation9 + $0x348] sm:$0xff]
    %v1914 = vld [vmem:[#allocation9 + $0x350] sm:$0xff]
    %v1915 = vld [vmem:[#allocation9 + $0x358] sm:$0xff]
    %v1916 = vld [vmem:[#allocation9 + $0x360] sm:$0xff]
    %v1917 = vld [vmem:[#allocation9 + $0x368] sm:$0xff]
    %v1918 = vld [vmem:[#allocation9 + $0x370] sm:$0xff]
    %v1919 = vld [vmem:[#allocation9 + $0x378] sm:$0xff]
    %v1920 = vld [vmem:[#allocation9 + $0x380] sm:$0xff]
    %v1921 = vld [vmem:[#allocation9 + $0x388] sm:$0xff]
    %v1922 = vld [vmem:[#allocation9 + $0x390] sm:$0xff]
    %v1923 = vld [vmem:[#allocation9 + $0x398] sm:$0xff]
    %v1924 = vld [vmem:[#allocation9 + $0x3a0] sm:$0xff]
    %v1925 = vld [vmem:[#allocation9 + $0x3a8] sm:$0xff]
    %v1926 = vld [vmem:[#allocation9 + $0x3b0] sm:$0xff]
    %v1927 = vld [vmem:[#allocation9 + $0x3b8] sm:$0xff]
    %v1928 = vld [vmem:[#allocation9 + $0x3c0] sm:$0xff]
    %v1929 = vld [vmem:[#allocation9 + $0x3c8] sm:$0xff]
    %v1930 = vld [vmem:[#allocation9 + $0x3d0] sm:$0xff]
    %v1931 = vld [vmem:[#allocation9 + $0x3d8] sm:$0xff]
    %v1932 = vld [vmem:[#allocation9 + $0x3e0] sm:$0xff]
    %v1933 = vld [vmem:[#allocation9 + $0x3e8] sm:$0xff]
    %v1934 = vld [vmem:[#allocation9 + $0x3f0] sm:$0xff]
    %v1935 = vld [vmem:[#allocation9 + $0x3f8] sm:$0xff]
    %1936 = vmatprep.subr.mxu0 %v1809
    %1937 = vmatpush1.msra.mxu0 %v1808
    %1938 = vmatprep.subr.mxu0 %v1813
    %1939 = vmatpush1.msra.mxu0 %v1812
    %1940 = vmatprep.subr.mxu0 %v1817
    %1941 = vmatpush1.msra.mxu0 %v1816
    %1942 = vmatprep.subr.mxu0 %v1821
    %1943 = vmatpush1.msra.mxu0 %v1820
    %1944 = vmatprep.subr.mxu0 %v1825
    %1945 = vmatpush1.msra.mxu0 %v1824
    %1946 = vmatprep.subr.mxu0 %v1829
    %1947 = vmatpush1.msra.mxu0 %v1828
    %1948 = vmatprep.subr.mxu0 %v1833
    %1949 = vmatpush1.msra.mxu0 %v1832
    %1950 = vmatprep.subr.mxu0 %v1837
    %1951 = vmatpush1.msra.mxu0 %v1836
    %1952 = vmatprep.subr.mxu0 %v1841
    %1953 = vmatpush1.msra.mxu0 %v1840
    %1954 = vmatprep.subr.mxu0 %v1845
    %1955 = vmatpush1.msra.mxu0 %v1844
    %1956 = vmatprep.subr.mxu0 %v1849
    %1957 = vmatpush1.msra.mxu0 %v1848
    %1958 = vmatprep.subr.mxu0 %v1853
    %1959 = vmatpush1.msra.mxu0 %v1852
    %1960 = vmatprep.subr.mxu0 %v1857
    %1961 = vmatpush1.msra.mxu0 %v1856
    %1962 = vmatprep.subr.mxu0 %v1861
    %1963 = vmatpush1.msra.mxu0 %v1860
    %1964 = vmatprep.subr.mxu0 %v1865
    %1965 = vmatpush1.msra.mxu0 %v1864
    %1966 = vmatprep.subr.mxu0 %v1869
    %1967 = vmatpush1.msra.mxu0 %v1868
    %1968 = vmatprep.subr.mxu0 %v1873
    %1969 = vmatpush1.msra.mxu0 %v1872
    %1970 = vmatprep.subr.mxu0 %v1877
    %1971 = vmatpush1.msra.mxu0 %v1876
    %1972 = vmatprep.subr.mxu0 %v1881
    %1973 = vmatpush1.msra.mxu0 %v1880
    %1974 = vmatprep.subr.mxu0 %v1885
    %1975 = vmatpush1.msra.mxu0 %v1884
    %1976 = vmatprep.subr.mxu0 %v1889
    %1977 = vmatpush1.msra.mxu0 %v1888
    %1978 = vmatprep.subr.mxu0 %v1893
    %1979 = vmatpush1.msra.mxu0 %v1892
    %1980 = vmatprep.subr.mxu0 %v1897
    %1981 = vmatpush1.msra.mxu0 %v1896
    %1982 = vmatprep.subr.mxu0 %v1901
    %1983 = vmatpush1.msra.mxu0 %v1900
    %1984 = vmatprep.subr.mxu0 %v1905
    %1985 = vmatpush1.msra.mxu0 %v1904
    %1986 = vmatprep.subr.mxu0 %v1909
    %1987 = vmatpush1.msra.mxu0 %v1908
    %1988 = vmatprep.subr.mxu0 %v1913
    %1989 = vmatpush1.msra.mxu0 %v1912
    %1990 = vmatprep.subr.mxu0 %v1917
    %1991 = vmatpush1.msra.mxu0 %v1916
    %1992 = vmatprep.subr.mxu0 %v1921
    %1993 = vmatpush1.msra.mxu0 %v1920
    %1994 = vmatprep.subr.mxu0 %v1925
    %1995 = vmatpush1.msra.mxu0 %v1924
    %1996 = vmatprep.subr.mxu0 %v1929
    %1997 = vmatpush1.msra.mxu0 %v1928
    %1998 = vmatprep.subr.mxu0 %v1933
    %1999 = vmatpush1.msra.mxu0 %v1932
    %2000 = vmatprep.mubr.f32.mxu0 %v1571
    %2001 = vmatmul.mubr.f32.gmra.mrb[0].mxu0 %v1807
    %v2002 = vpop.f32.mrb[0].mxu0
    %v2003 = vadd.f32 0.0, %v2002
    %v2004 = vpop.f32.mrb[0].mxu0
    %v2005 = vadd.f32 0.0, %v2004
    %2006 = vdwg.mxu0
    %2007 = vmatprep.subr.mxu0 %v1811
    %2008 = vmatpush1.msra.mxu0 %v1810
    %2009 = vmatprep.subr.mxu0 %v1815
    %2010 = vmatpush1.msra.mxu0 %v1814
    %2011 = vmatprep.subr.mxu0 %v1819
    %2012 = vmatpush1.msra.mxu0 %v1818
    %2013 = vmatprep.subr.mxu0 %v1823
    %2014 = vmatpush1.msra.mxu0 %v1822
    %2015 = vmatprep.subr.mxu0 %v1827
    %2016 = vmatpush1.msra.mxu0 %v1826
    %2017 = vmatprep.subr.mxu0 %v1831
    %2018 = vmatpush1.msra.mxu0 %v1830
    %2019 = vmatprep.subr.mxu0 %v1835
    %2020 = vmatpush1.msra.mxu0 %v1834
    %2021 = vmatprep.subr.mxu0 %v1839
    %2022 = vmatpush1.msra.mxu0 %v1838
    %2023 = vmatprep.subr.mxu0 %v1843
    %2024 = vmatpush1.msra.mxu0 %v1842
    %2025 = vmatprep.subr.mxu0 %v1847
    %2026 = vmatpush1.msra.mxu0 %v1846
    %2027 = vmatprep.subr.mxu0 %v1851
    %2028 = vmatpush1.msra.mxu0 %v1850
    %2029 = vmatprep.subr.mxu0 %v1855
    %2030 = vmatpush1.msra.mxu0 %v1854
    %2031 = vmatprep.subr.mxu0 %v1859
    %2032 = vmatpush1.msra.mxu0 %v1858
    %2033 = vmatprep.subr.mxu0 %v1863
    %2034 = vmatpush1.msra.mxu0 %v1862
    %2035 = vmatprep.subr.mxu0 %v1867
    %2036 = vmatpush1.msra.mxu0 %v1866
    %2037 = vmatprep.subr.mxu0 %v1871
    %2038 = vmatpush1.msra.mxu0 %v1870
    %2039 = vmatprep.subr.mxu0 %v1875
    %2040 = vmatpush1.msra.mxu0 %v1874
    %2041 = vmatprep.subr.mxu0 %v1879
    %2042 = vmatpush1.msra.mxu0 %v1878
    %2043 = vmatprep.subr.mxu0 %v1883
    %2044 = vmatpush1.msra.mxu0 %v1882
    %2045 = vmatprep.subr.mxu0 %v1887
    %2046 = vmatpush1.msra.mxu0 %v1886
    %2047 = vmatprep.subr.mxu0 %v1891
    %2048 = vmatpush1.msra.mxu0 %v1890
    %2049 = vmatprep.subr.mxu0 %v1895
    %2050 = vmatpush1.msra.mxu0 %v1894
    %2051 = vmatprep.subr.mxu0 %v1899
    %2052 = vmatpush1.msra.mxu0 %v1898
    %2053 = vmatprep.subr.mxu0 %v1903
    %2054 = vmatpush1.msra.mxu0 %v1902
    %2055 = vmatprep.subr.mxu0 %v1907
    %2056 = vmatpush1.msra.mxu0 %v1906
    %2057 = vmatprep.subr.mxu0 %v1911
    %2058 = vmatpush1.msra.mxu0 %v1910
    %2059 = vmatprep.subr.mxu0 %v1915
    %2060 = vmatpush1.msra.mxu0 %v1914
    %2061 = vmatprep.subr.mxu0 %v1919
    %2062 = vmatpush1.msra.mxu0 %v1918
    %2063 = vmatprep.subr.mxu0 %v1923
    %2064 = vmatpush1.msra.mxu0 %v1922
    %2065 = vmatprep.subr.mxu0 %v1927
    %2066 = vmatpush1.msra.mxu0 %v1926
    %2067 = vmatprep.subr.mxu0 %v1931
    %2068 = vmatpush1.msra.mxu0 %v1930
    %2069 = vmatprep.subr.mxu0 %v1935
    %2070 = vmatpush1.msra.mxu0 %v1934
    %2071 = vmatprep.mubr.f32.mxu0 %v1571
    %2072 = vmatmul.mubr.f32.gmra.mrb[0].mxu0 %v1807
    %v2073 = vpop.f32.mrb[0].mxu0
    %v2074 = vadd.f32 0.0, %v2073
    %v2075 = vpop.f32.mrb[0].mxu0
    %v2076 = vadd.f32 0.0, %v2075
    %2077 = vdwg.mxu0
    %v2078 = vadd.f32 %v500, %v2003
    %v2079 = vadd.f32 %v504, %v2005
    %v2080 = vadd.f32 %v508, %v2074
    %v2081 = vadd.f32 %v512, %v2076
    %v2082 = vmul.f32 %v2078, 0.5
    %v2083 = vtanh.pop %v2082
    %v2084 = vmul.f32 %v2083, 0.5
    %v2085 = vadd.f32 %v2084, 0.5
    %v2086 = vmul.f32 %v2079, 0.5
    %v2087 = vtanh.pop %v2086
    %v2088 = vmul.f32 %v2087, 0.5
    %v2089 = vadd.f32 %v2088, 0.5
    %v2090 = vtanh.pop %v2080
    %v2091 = vmul.f32 %v2081, 0.5
    %v2092 = vtanh.pop %v2091
    %v2093 = vmul.f32 %v2092, 0.5
    %v2094 = vadd.f32 %v2093, 0.5
    %v2095 = vmul.f32 %v2089, %v1569
    %v2096 = vmul.f32 %v2085, %v2090
    %v2097 = vadd.f32 %v2095, %v2096
    %v2098 = vtanh.pop %v2097
    %v2099 = vmul.f32 %v2094, %v2098
    %2100 = vst [vmem:[#allocation3 + $0x2] sm:$0x1] %v2099
    %s2101 = smul.u32 3, 4
    %s2102 = smul.addr %s2101, 8
    %s2103 = scalar_lea.vmem [#allocation2], %s2102
    %v2104 = vld [vmem:[%s2103] sm:$0xff]
    %v2105 = vld [vmem:[%s2103 + $0x8] sm:$0xff]
    %v2106 = vld [vmem:[%s2103 + $0x10] sm:$0xff]
    %v2107 = vld [vmem:[%s2103 + $0x18] sm:$0xff]
    %v2108 = vld [vmem:[#allocation7] sm:$0xff]
    %v2109 = vld [vmem:[#allocation7 + $0x8] sm:$0xff]
    %v2110 = vld [vmem:[#allocation7 + $0x10] sm:$0xff]
    %v2111 = vld [vmem:[#allocation7 + $0x18] sm:$0xff]
    %v2112 = vld [vmem:[#allocation7 + $0x20] sm:$0xff]
    %v2113 = vld [vmem:[#allocation7 + $0x28] sm:$0xff]
    %v2114 = vld [vmem:[#allocation7 + $0x30] sm:$0xff]
    %v2115 = vld [vmem:[#allocation7 + $0x38] sm:$0xff]
    %v2116 = vld [vmem:[#allocation7 + $0x40] sm:$0xff]
    %v2117 = vld [vmem:[#allocation7 + $0x48] sm:$0xff]
    %v2118 = vld [vmem:[#allocation7 + $0x50] sm:$0xff]
    %v2119 = vld [vmem:[#allocation7 + $0x58] sm:$0xff]
    %v2120 = vld [vmem:[#allocation7 + $0x60] sm:$0xff]
    %v2121 = vld [vmem:[#allocation7 + $0x68] sm:$0xff]
    %v2122 = vld [vmem:[#allocation7 + $0x70] sm:$0xff]
    %v2123 = vld [vmem:[#allocation7 + $0x78] sm:$0xff]
    %v2124 = vld [vmem:[#allocation7 + $0x80] sm:$0xff]
    %v2125 = vld [vmem:[#allocation7 + $0x88] sm:$0xff]
    %v2126 = vld [vmem:[#allocation7 + $0x90] sm:$0xff]
    %v2127 = vld [vmem:[#allocation7 + $0x98] sm:$0xff]
    %v2128 = vld [vmem:[#allocation7 + $0xa0] sm:$0xff]
    %v2129 = vld [vmem:[#allocation7 + $0xa8] sm:$0xff]
    %v2130 = vld [vmem:[#allocation7 + $0xb0] sm:$0xff]
    %v2131 = vld [vmem:[#allocation7 + $0xb8] sm:$0xff]
    %v2132 = vld [vmem:[#allocation7 + $0xc0] sm:$0xff]
    %v2133 = vld [vmem:[#allocation7 + $0xc8] sm:$0xff]
    %v2134 = vld [vmem:[#allocation7 + $0xd0] sm:$0xff]
    %v2135 = vld [vmem:[#allocation7 + $0xd8] sm:$0xff]
    %v2136 = vld [vmem:[#allocation7 + $0xe0] sm:$0xff]
    %v2137 = vld [vmem:[#allocation7 + $0xe8] sm:$0xff]
    %v2138 = vld [vmem:[#allocation7 + $0xf0] sm:$0xff]
    %v2139 = vld [vmem:[#allocation7 + $0xf8] sm:$0xff]
    %v2140 = vld [vmem:[#allocation7 + $0x100] sm:$0xff]
    %v2141 = vld [vmem:[#allocation7 + $0x108] sm:$0xff]
    %v2142 = vld [vmem:[#allocation7 + $0x110] sm:$0xff]
    %v2143 = vld [vmem:[#allocation7 + $0x118] sm:$0xff]
    %v2144 = vld [vmem:[#allocation7 + $0x120] sm:$0xff]
    %v2145 = vld [vmem:[#allocation7 + $0x128] sm:$0xff]
    %v2146 = vld [vmem:[#allocation7 + $0x130] sm:$0xff]
    %v2147 = vld [vmem:[#allocation7 + $0x138] sm:$0xff]
    %v2148 = vld [vmem:[#allocation7 + $0x140] sm:$0xff]
    %v2149 = vld [vmem:[#allocation7 + $0x148] sm:$0xff]
    %v2150 = vld [vmem:[#allocation7 + $0x150] sm:$0xff]
    %v2151 = vld [vmem:[#allocation7 + $0x158] sm:$0xff]
    %v2152 = vld [vmem:[#allocation7 + $0x160] sm:$0xff]
    %v2153 = vld [vmem:[#allocation7 + $0x168] sm:$0xff]
    %v2154 = vld [vmem:[#allocation7 + $0x170] sm:$0xff]
    %v2155 = vld [vmem:[#allocation7 + $0x178] sm:$0xff]
    %v2156 = vld [vmem:[#allocation7 + $0x180] sm:$0xff]
    %v2157 = vld [vmem:[#allocation7 + $0x188] sm:$0xff]
    %v2158 = vld [vmem:[#allocation7 + $0x190] sm:$0xff]
    %v2159 = vld [vmem:[#allocation7 + $0x198] sm:$0xff]
    %v2160 = vld [vmem:[#allocation7 + $0x1a0] sm:$0xff]
    %v2161 = vld [vmem:[#allocation7 + $0x1a8] sm:$0xff]
    %v2162 = vld [vmem:[#allocation7 + $0x1b0] sm:$0xff]
    %v2163 = vld [vmem:[#allocation7 + $0x1b8] sm:$0xff]
    %v2164 = vld [vmem:[#allocation7 + $0x1c0] sm:$0xff]
    %v2165 = vld [vmem:[#allocation7 + $0x1c8] sm:$0xff]
    %v2166 = vld [vmem:[#allocation7 + $0x1d0] sm:$0xff]
    %v2167 = vld [vmem:[#allocation7 + $0x1d8] sm:$0xff]
    %v2168 = vld [vmem:[#allocation7 + $0x1e0] sm:$0xff]
    %v2169 = vld [vmem:[#allocation7 + $0x1e8] sm:$0xff]
    %v2170 = vld [vmem:[#allocation7 + $0x1f0] sm:$0xff]
    %v2171 = vld [vmem:[#allocation7 + $0x1f8] sm:$0xff]
    %2172 = vmatprep.subr.mxu0 %v2109
    %2173 = vmatpush1.msra.mxu0 %v2108
    %2174 = vmatprep.subr.mxu0 %v2113
    %2175 = vmatpush1.msra.mxu0 %v2112
    %2176 = vmatprep.subr.mxu0 %v2117
    %2177 = vmatpush1.msra.mxu0 %v2116
    %2178 = vmatprep.subr.mxu0 %v2121
    %2179 = vmatpush1.msra.mxu0 %v2120
    %2180 = vmatprep.subr.mxu0 %v2125
    %2181 = vmatpush1.msra.mxu0 %v2124
    %2182 = vmatprep.subr.mxu0 %v2129
    %2183 = vmatpush1.msra.mxu0 %v2128
    %2184 = vmatprep.subr.mxu0 %v2133
    %2185 = vmatpush1.msra.mxu0 %v2132
    %2186 = vmatprep.subr.mxu0 %v2137
    %2187 = vmatpush1.msra.mxu0 %v2136
    %2188 = vmatprep.subr.mxu0 %v2141
    %2189 = vmatpush1.msra.mxu0 %v2140
    %2190 = vmatprep.subr.mxu0 %v2145
    %2191 = vmatpush1.msra.mxu0 %v2144
    %2192 = vmatprep.subr.mxu0 %v2149
    %2193 = vmatpush1.msra.mxu0 %v2148
    %2194 = vmatprep.subr.mxu0 %v2153
    %2195 = vmatpush1.msra.mxu0 %v2152
    %2196 = vmatprep.subr.mxu0 %v2157
    %2197 = vmatpush1.msra.mxu0 %v2156
    %2198 = vmatprep.subr.mxu0 %v2161
    %2199 = vmatpush1.msra.mxu0 %v2160
    %2200 = vmatprep.subr.mxu0 %v2165
    %2201 = vmatpush1.msra.mxu0 %v2164
    %2202 = vmatprep.subr.mxu0 %v2169
    %2203 = vmatpush1.msra.mxu0 %v2168
    %2204 = vmatprep.subr.mxu0 0.0
    %2205 = vmatpush1.msra.mxu0 0.0
    %2206 = vmatprep.subr.mxu0 0.0
    %2207 = vmatpush1.msra.mxu0 0.0
    %2208 = vmatprep.subr.mxu0 0.0
    %2209 = vmatpush1.msra.mxu0 0.0
    %2210 = vmatprep.subr.mxu0 0.0
    %2211 = vmatpush1.msra.mxu0 0.0
    %2212 = vmatprep.subr.mxu0 0.0
    %2213 = vmatpush1.msra.mxu0 0.0
    %2214 = vmatprep.subr.mxu0 0.0
    %2215 = vmatpush1.msra.mxu0 0.0
    %2216 = vmatprep.subr.mxu0 0.0
    %2217 = vmatpush1.msra.mxu0 0.0
    %2218 = vmatprep.subr.mxu0 0.0
    %2219 = vmatpush1.msra.mxu0 0.0
    %2220 = vmatprep.subr.mxu0 0.0
    %2221 = vmatpush1.msra.mxu0 0.0
    %2222 = vmatprep.subr.mxu0 0.0
    %2223 = vmatpush1.msra.mxu0 0.0
    %2224 = vmatprep.subr.mxu0 0.0
    %2225 = vmatpush1.msra.mxu0 0.0
    %2226 = vmatprep.subr.mxu0 0.0
    %2227 = vmatpush1.msra.mxu0 0.0
    %2228 = vmatprep.subr.mxu0 0.0
    %2229 = vmatpush1.msra.mxu0 0.0
    %2230 = vmatprep.subr.mxu0 0.0
    %2231 = vmatpush1.msra.mxu0 0.0
    %2232 = vmatprep.subr.mxu0 0.0
    %2233 = vmatpush1.msra.mxu0 0.0
    %2234 = vmatprep.subr.mxu0 0.0
    %2235 = vmatpush1.msra.mxu0 0.0
    %2236 = vmatprep.mubr.f32.mxu0 0.0
    %2237 = vmatmul.mubr.f32.gmra.mrb[0].mxu0 %v1807
    %v2238 = vpop.f32.mrb[0].mxu0
    %v2239 = vadd.f32 0.0, %v2238
    %v2240 = vpop.f32.mrb[0].mxu0
    %v2241 = vadd.f32 0.0, %v2240
    %2242 = vdwg.mxu0
    %2243 = vmatprep.subr.mxu0 %v2111
    %2244 = vmatpush1.msra.mxu0 %v2110
    %2245 = vmatprep.subr.mxu0 %v2115
    %2246 = vmatpush1.msra.mxu0 %v2114
    %2247 = vmatprep.subr.mxu0 %v2119
    %2248 = vmatpush1.msra.mxu0 %v2118
    %2249 = vmatprep.subr.mxu0 %v2123
    %2250 = vmatpush1.msra.mxu0 %v2122
    %2251 = vmatprep.subr.mxu0 %v2127
    %2252 = vmatpush1.msra.mxu0 %v2126
    %2253 = vmatprep.subr.mxu0 %v2131
    %2254 = vmatpush1.msra.mxu0 %v2130
    %2255 = vmatprep.subr.mxu0 %v2135
    %2256 = vmatpush1.msra.mxu0 %v2134
    %2257 = vmatprep.subr.mxu0 %v2139
    %2258 = vmatpush1.msra.mxu0 %v2138
    %2259 = vmatprep.subr.mxu0 %v2143
    %2260 = vmatpush1.msra.mxu0 %v2142
    %2261 = vmatprep.subr.mxu0 %v2147
    %2262 = vmatpush1.msra.mxu0 %v2146
    %2263 = vmatprep.subr.mxu0 %v2151
    %2264 = vmatpush1.msra.mxu0 %v2150
    %2265 = vmatprep.subr.mxu0 %v2155
    %2266 = vmatpush1.msra.mxu0 %v2154
    %2267 = vmatprep.subr.mxu0 %v2159
    %2268 = vmatpush1.msra.mxu0 %v2158
    %2269 = vmatprep.subr.mxu0 %v2163
    %2270 = vmatpush1.msra.mxu0 %v2162
    %2271 = vmatprep.subr.mxu0 %v2167
    %2272 = vmatpush1.msra.mxu0 %v2166
    %2273 = vmatprep.subr.mxu0 %v2171
    %2274 = vmatpush1.msra.mxu0 %v2170
    %2275 = vmatprep.subr.mxu0 0.0
    %2276 = vmatpush1.msra.mxu0 0.0
    %2277 = vmatprep.subr.mxu0 0.0
    %2278 = vmatpush1.msra.mxu0 0.0
    %2279 = vmatprep.subr.mxu0 0.0
    %2280 = vmatpush1.msra.mxu0 0.0
    %2281 = vmatprep.subr.mxu0 0.0
    %2282 = vmatpush1.msra.mxu0 0.0
    %2283 = vmatprep.subr.mxu0 0.0
    %2284 = vmatpush1.msra.mxu0 0.0
    %2285 = vmatprep.subr.mxu0 0.0
    %2286 = vmatpush1.msra.mxu0 0.0
    %2287 = vmatprep.subr.mxu0 0.0
    %2288 = vmatpush1.msra.mxu0 0.0
    %2289 = vmatprep.subr.mxu0 0.0
    %2290 = vmatpush1.msra.mxu0 0.0
    %2291 = vmatprep.subr.mxu0 0.0
    %2292 = vmatpush1.msra.mxu0 0.0
    %2293 = vmatprep.subr.mxu0 0.0
    %2294 = vmatpush1.msra.mxu0 0.0
    %2295 = vmatprep.subr.mxu0 0.0
    %2296 = vmatpush1.msra.mxu0 0.0
    %2297 = vmatprep.subr.mxu0 0.0
    %2298 = vmatpush1.msra.mxu0 0.0
    %2299 = vmatprep.subr.mxu0 0.0
    %2300 = vmatpush1.msra.mxu0 0.0
    %2301 = vmatprep.subr.mxu0 0.0
    %2302 = vmatpush1.msra.mxu0 0.0
    %2303 = vmatprep.subr.mxu0 0.0
    %2304 = vmatpush1.msra.mxu0 0.0
    %2305 = vmatprep.subr.mxu0 0.0
    %2306 = vmatpush1.msra.mxu0 0.0
    %2307 = vmatprep.mubr.f32.mxu0 0.0
    %2308 = vmatmul.mubr.f32.gmra.mrb[0].mxu0 %v1807
    %v2309 = vpop.f32.mrb[0].mxu0
    %v2310 = vadd.f32 0.0, %v2309
    %v2311 = vpop.f32.mrb[0].mxu0
    %v2312 = vadd.f32 0.0, %v2311
    %2313 = vdwg.mxu0
    %v2314 = vadd.f32 %v2104, %v2239
    %v2315 = vadd.f32 %v2105, %v2241
    %v2316 = vadd.f32 %v2106, %v2310
    %v2317 = vadd.f32 %v2107, %v2312
    %v2318 = vmul.f32 %v2314, 0.5
    %v2319 = vtanh.pop %v2318
    %v2320 = vmul.f32 %v2319, 0.5
    %v2321 = vadd.f32 %v2320, 0.5
    %v2322 = vmul.f32 %v2315, 0.5
    %v2323 = vtanh.pop %v2322
    %v2324 = vmul.f32 %v2323, 0.5
    %v2325 = vadd.f32 %v2324, 0.5
    %v2326 = vtanh.pop %v2316
    %v2327 = vmul.f32 %v2317, 0.5
    %v2328 = vtanh.pop %v2327
    %v2329 = vmul.f32 %v2328, 0.5
    %v2330 = vadd.f32 %v2329, 0.5
    %v2331 = vmul.f32 %v2325, %v1805
    %v2332 = vmul.f32 %v2321, %v2326
    %v2333 = vadd.f32 %v2331, %v2332
    %v2334 = vtanh.pop %v2333
    %v2335 = vmul.f32 %v2330, %v2334
    %v2336 = vld [vmem:[#allocation9] sm:$0xff]
    %v2337 = vld [vmem:[#allocation9 + $0x8] sm:$0xff]
    %v2338 = vld [vmem:[#allocation9 + $0x10] sm:$0xff]
    %v2339 = vld [vmem:[#allocation9 + $0x18] sm:$0xff]
    %v2340 = vld [vmem:[#allocation9 + $0x20] sm:$0xff]
    %v2341 = vld [vmem:[#allocation9 + $0x28] sm:$0xff]
    %v2342 = vld [vmem:[#allocation9 + $0x30] sm:$0xff]
    %v2343 = vld [vmem:[#allocation9 + $0x38] sm:$0xff]
    %v2344 = vld [vmem:[#allocation9 + $0x40] sm:$0xff]
    %v2345 = vld [vmem:[#allocation9 + $0x48] sm:$0xff]
    %v2346 = vld [vmem:[#allocation9 + $0x50] sm:$0xff]
    %v2347 = vld [vmem:[#allocation9 + $0x58] sm:$0xff]
    %v2348 = vld [vmem:[#allocation9 + $0x60] sm:$0xff]
    %v2349 = vld [vmem:[#allocation9 + $0x68] sm:$0xff]
    %v2350 = vld [vmem:[#allocation9 + $0x70] sm:$0xff]
    %v2351 = vld [vmem:[#allocation9 + $0x78] sm:$0xff]
    %v2352 = vld [vmem:[#allocation9 + $0x80] sm:$0xff]
    %v2353 = vld [vmem:[#allocation9 + $0x88] sm:$0xff]
    %v2354 = vld [vmem:[#allocation9 + $0x90] sm:$0xff]
    %v2355 = vld [vmem:[#allocation9 + $0x98] sm:$0xff]
    %v2356 = vld [vmem:[#allocation9 + $0xa0] sm:$0xff]
    %v2357 = vld [vmem:[#allocation9 + $0xa8] sm:$0xff]
    %v2358 = vld [vmem:[#allocation9 + $0xb0] sm:$0xff]
    %v2359 = vld [vmem:[#allocation9 + $0xb8] sm:$0xff]
    %v2360 = vld [vmem:[#allocation9 + $0xc0] sm:$0xff]
    %v2361 = vld [vmem:[#allocation9 + $0xc8] sm:$0xff]
    %v2362 = vld [vmem:[#allocation9 + $0xd0] sm:$0xff]
    %v2363 = vld [vmem:[#allocation9 + $0xd8] sm:$0xff]
    %v2364 = vld [vmem:[#allocation9 + $0xe0] sm:$0xff]
    %v2365 = vld [vmem:[#allocation9 + $0xe8] sm:$0xff]
    %v2366 = vld [vmem:[#allocation9 + $0xf0] sm:$0xff]
    %v2367 = vld [vmem:[#allocation9 + $0xf8] sm:$0xff]
    %v2368 = vld [vmem:[#allocation9 + $0x100] sm:$0xff]
    %v2369 = vld [vmem:[#allocation9 + $0x108] sm:$0xff]
    %v2370 = vld [vmem:[#allocation9 + $0x110] sm:$0xff]
    %v2371 = vld [vmem:[#allocation9 + $0x118] sm:$0xff]
    %v2372 = vld [vmem:[#allocation9 + $0x120] sm:$0xff]
    %v2373 = vld [vmem:[#allocation9 + $0x128] sm:$0xff]
    %v2374 = vld [vmem:[#allocation9 + $0x130] sm:$0xff]
    %v2375 = vld [vmem:[#allocation9 + $0x138] sm:$0xff]
    %v2376 = vld [vmem:[#allocation9 + $0x140] sm:$0xff]
    %v2377 = vld [vmem:[#allocation9 + $0x148] sm:$0xff]
    %v2378 = vld [vmem:[#allocation9 + $0x150] sm:$0xff]
    %v2379 = vld [vmem:[#allocation9 + $0x158] sm:$0xff]
    %v2380 = vld [vmem:[#allocation9 + $0x160] sm:$0xff]
    %v2381 = vld [vmem:[#allocation9 + $0x168] sm:$0xff]
    %v2382 = vld [vmem:[#allocation9 + $0x170] sm:$0xff]
    %v2383 = vld [vmem:[#allocation9 + $0x178] sm:$0xff]
    %v2384 = vld [vmem:[#allocation9 + $0x180] sm:$0xff]
    %v2385 = vld [vmem:[#allocation9 + $0x188] sm:$0xff]
    %v2386 = vld [vmem:[#allocation9 + $0x190] sm:$0xff]
    %v2387 = vld [vmem:[#allocation9 + $0x198] sm:$0xff]
    %v2388 = vld [vmem:[#allocation9 + $0x1a0] sm:$0xff]
    %v2389 = vld [vmem:[#allocation9 + $0x1a8] sm:$0xff]
    %v2390 = vld [vmem:[#allocation9 + $0x1b0] sm:$0xff]
    %v2391 = vld [vmem:[#allocation9 + $0x1b8] sm:$0xff]
    %v2392 = vld [vmem:[#allocation9 + $0x1c0] sm:$0xff]
    %v2393 = vld [vmem:[#allocation9 + $0x1c8] sm:$0xff]
    %v2394 = vld [vmem:[#allocation9 + $0x1d0] sm:$0xff]
    %v2395 = vld [vmem:[#allocation9 + $0x1d8] sm:$0xff]
    %v2396 = vld [vmem:[#allocation9 + $0x1e0] sm:$0xff]
    %v2397 = vld [vmem:[#allocation9 + $0x1e8] sm:$0xff]
    %v2398 = vld [vmem:[#allocation9 + $0x1f0] sm:$0xff]
    %v2399 = vld [vmem:[#allocation9 + $0x1f8] sm:$0xff]
    %v2400 = vld [vmem:[#allocation9 + $0x200] sm:$0xff]
    %v2401 = vld [vmem:[#allocation9 + $0x208] sm:$0xff]
    %v2402 = vld [vmem:[#allocation9 + $0x210] sm:$0xff]
    %v2403 = vld [vmem:[#allocation9 + $0x218] sm:$0xff]
    %v2404 = vld [vmem:[#allocation9 + $0x220] sm:$0xff]
    %v2405 = vld [vmem:[#allocation9 + $0x228] sm:$0xff]
    %v2406 = vld [vmem:[#allocation9 + $0x230] sm:$0xff]
    %v2407 = vld [vmem:[#allocation9 + $0x238] sm:$0xff]
    %v2408 = vld [vmem:[#allocation9 + $0x240] sm:$0xff]
    %v2409 = vld [vmem:[#allocation9 + $0x248] sm:$0xff]
    %v2410 = vld [vmem:[#allocation9 + $0x250] sm:$0xff]
    %v2411 = vld [vmem:[#allocation9 + $0x258] sm:$0xff]
    %v2412 = vld [vmem:[#allocation9 + $0x260] sm:$0xff]
    %v2413 = vld [vmem:[#allocation9 + $0x268] sm:$0xff]
    %v2414 = vld [vmem:[#allocation9 + $0x270] sm:$0xff]
    %v2415 = vld [vmem:[#allocation9 + $0x278] sm:$0xff]
    %v2416 = vld [vmem:[#allocation9 + $0x280] sm:$0xff]
    %v2417 = vld [vmem:[#allocation9 + $0x288] sm:$0xff]
    %v2418 = vld [vmem:[#allocation9 + $0x290] sm:$0xff]
    %v2419 = vld [vmem:[#allocation9 + $0x298] sm:$0xff]
    %v2420 = vld [vmem:[#allocation9 + $0x2a0] sm:$0xff]
    %v2421 = vld [vmem:[#allocation9 + $0x2a8] sm:$0xff]
    %v2422 = vld [vmem:[#allocation9 + $0x2b0] sm:$0xff]
    %v2423 = vld [vmem:[#allocation9 + $0x2b8] sm:$0xff]
    %v2424 = vld [vmem:[#allocation9 + $0x2c0] sm:$0xff]
    %v2425 = vld [vmem:[#allocation9 + $0x2c8] sm:$0xff]
    %v2426 = vld [vmem:[#allocation9 + $0x2d0] sm:$0xff]
    %v2427 = vld [vmem:[#allocation9 + $0x2d8] sm:$0xff]
    %v2428 = vld [vmem:[#allocation9 + $0x2e0] sm:$0xff]
    %v2429 = vld [vmem:[#allocation9 + $0x2e8] sm:$0xff]
    %v2430 = vld [vmem:[#allocation9 + $0x2f0] sm:$0xff]
    %v2431 = vld [vmem:[#allocation9 + $0x2f8] sm:$0xff]
    %v2432 = vld [vmem:[#allocation9 + $0x300] sm:$0xff]
    %v2433 = vld [vmem:[#allocation9 + $0x308] sm:$0xff]
    %v2434 = vld [vmem:[#allocation9 + $0x310] sm:$0xff]
    %v2435 = vld [vmem:[#allocation9 + $0x318] sm:$0xff]
    %v2436 = vld [vmem:[#allocation9 + $0x320] sm:$0xff]
    %v2437 = vld [vmem:[#allocation9 + $0x328] sm:$0xff]
    %v2438 = vld [vmem:[#allocation9 + $0x330] sm:$0xff]
    %v2439 = vld [vmem:[#allocation9 + $0x338] sm:$0xff]
    %v2440 = vld [vmem:[#allocation9 + $0x340] sm:$0xff]
    %v2441 = vld [vmem:[#allocation9 + $0x348] sm:$0xff]
    %v2442 = vld [vmem:[#allocation9 + $0x350] sm:$0xff]
    %v2443 = vld [vmem:[#allocation9 + $0x358] sm:$0xff]
    %v2444 = vld [vmem:[#allocation9 + $0x360] sm:$0xff]
    %v2445 = vld [vmem:[#allocation9 + $0x368] sm:$0xff]
    %v2446 = vld [vmem:[#allocation9 + $0x370] sm:$0xff]
    %v2447 = vld [vmem:[#allocation9 + $0x378] sm:$0xff]
    %v2448 = vld [vmem:[#allocation9 + $0x380] sm:$0xff]
    %v2449 = vld [vmem:[#allocation9 + $0x388] sm:$0xff]
    %v2450 = vld [vmem:[#allocation9 + $0x390] sm:$0xff]
    %v2451 = vld [vmem:[#allocation9 + $0x398] sm:$0xff]
    %v2452 = vld [vmem:[#allocation9 + $0x3a0] sm:$0xff]
    %v2453 = vld [vmem:[#allocation9 + $0x3a8] sm:$0xff]
    %v2454 = vld [vmem:[#allocation9 + $0x3b0] sm:$0xff]
    %v2455 = vld [vmem:[#allocation9 + $0x3b8] sm:$0xff]
    %v2456 = vld [vmem:[#allocation9 + $0x3c0] sm:$0xff]
    %v2457 = vld [vmem:[#allocation9 + $0x3c8] sm:$0xff]
    %v2458 = vld [vmem:[#allocation9 + $0x3d0] sm:$0xff]
    %v2459 = vld [vmem:[#allocation9 + $0x3d8] sm:$0xff]
    %v2460 = vld [vmem:[#allocation9 + $0x3e0] sm:$0xff]
    %v2461 = vld [vmem:[#allocation9 + $0x3e8] sm:$0xff]
    %v2462 = vld [vmem:[#allocation9 + $0x3f0] sm:$0xff]
    %v2463 = vld [vmem:[#allocation9 + $0x3f8] sm:$0xff]
    %2464 = vmatprep.subr.mxu0 %v2337
    %2465 = vmatpush1.msra.mxu0 %v2336
    %2466 = vmatprep.subr.mxu0 %v2341
    %2467 = vmatpush1.msra.mxu0 %v2340
    %2468 = vmatprep.subr.mxu0 %v2345
    %2469 = vmatpush1.msra.mxu0 %v2344
    %2470 = vmatprep.subr.mxu0 %v2349
    %2471 = vmatpush1.msra.mxu0 %v2348
    %2472 = vmatprep.subr.mxu0 %v2353
    %2473 = vmatpush1.msra.mxu0 %v2352
    %2474 = vmatprep.subr.mxu0 %v2357
    %2475 = vmatpush1.msra.mxu0 %v2356
    %2476 = vmatprep.subr.mxu0 %v2361
    %2477 = vmatpush1.msra.mxu0 %v2360
    %2478 = vmatprep.subr.mxu0 %v2365
    %2479 = vmatpush1.msra.mxu0 %v2364
    %2480 = vmatprep.subr.mxu0 %v2369
    %2481 = vmatpush1.msra.mxu0 %v2368
    %2482 = vmatprep.subr.mxu0 %v2373
    %2483 = vmatpush1.msra.mxu0 %v2372
    %2484 = vmatprep.subr.mxu0 %v2377
    %2485 = vmatpush1.msra.mxu0 %v2376
    %2486 = vmatprep.subr.mxu0 %v2381
    %2487 = vmatpush1.msra.mxu0 %v2380
    %2488 = vmatprep.subr.mxu0 %v2385
    %2489 = vmatpush1.msra.mxu0 %v2384
    %2490 = vmatprep.subr.mxu0 %v2389
    %2491 = vmatpush1.msra.mxu0 %v2388
    %2492 = vmatprep.subr.mxu0 %v2393
    %2493 = vmatpush1.msra.mxu0 %v2392
    %2494 = vmatprep.subr.mxu0 %v2397
    %2495 = vmatpush1.msra.mxu0 %v2396
    %2496 = vmatprep.subr.mxu0 %v2401
    %2497 = vmatpush1.msra.mxu0 %v2400
    %2498 = vmatprep.subr.mxu0 %v2405
    %2499 = vmatpush1.msra.mxu0 %v2404
    %2500 = vmatprep.subr.mxu0 %v2409
    %2501 = vmatpush1.msra.mxu0 %v2408
    %2502 = vmatprep.subr.mxu0 %v2413
    %2503 = vmatpush1.msra.mxu0 %v2412
    %2504 = vmatprep.subr.mxu0 %v2417
    %2505 = vmatpush1.msra.mxu0 %v2416
    %2506 = vmatprep.subr.mxu0 %v2421
    %2507 = vmatpush1.msra.mxu0 %v2420
    %2508 = vmatprep.subr.mxu0 %v2425
    %2509 = vmatpush1.msra.mxu0 %v2424
    %2510 = vmatprep.subr.mxu0 %v2429
    %2511 = vmatpush1.msra.mxu0 %v2428
    %2512 = vmatprep.subr.mxu0 %v2433
    %2513 = vmatpush1.msra.mxu0 %v2432
    %2514 = vmatprep.subr.mxu0 %v2437
    %2515 = vmatpush1.msra.mxu0 %v2436
    %2516 = vmatprep.subr.mxu0 %v2441
    %2517 = vmatpush1.msra.mxu0 %v2440
    %2518 = vmatprep.subr.mxu0 %v2445
    %2519 = vmatpush1.msra.mxu0 %v2444
    %2520 = vmatprep.subr.mxu0 %v2449
    %2521 = vmatpush1.msra.mxu0 %v2448
    %2522 = vmatprep.subr.mxu0 %v2453
    %2523 = vmatpush1.msra.mxu0 %v2452
    %2524 = vmatprep.subr.mxu0 %v2457
    %2525 = vmatpush1.msra.mxu0 %v2456
    %2526 = vmatprep.subr.mxu0 %v2461
    %2527 = vmatpush1.msra.mxu0 %v2460
    %2528 = vmatprep.mubr.f32.mxu0 %v2099
    %2529 = vmatmul.mubr.f32.gmra.mrb[0].mxu0 %v2335
    %v2530 = vpop.f32.mrb[0].mxu0
    %v2531 = vadd.f32 0.0, %v2530
    %v2532 = vpop.f32.mrb[0].mxu0
    %v2533 = vadd.f32 0.0, %v2532
    %2534 = vdwg.mxu0
    %2535 = vmatprep.subr.mxu0 %v2339
    %2536 = vmatpush1.msra.mxu0 %v2338
    %2537 = vmatprep.subr.mxu0 %v2343
    %2538 = vmatpush1.msra.mxu0 %v2342
    %2539 = vmatprep.subr.mxu0 %v2347
    %2540 = vmatpush1.msra.mxu0 %v2346
    %2541 = vmatprep.subr.mxu0 %v2351
    %2542 = vmatpush1.msra.mxu0 %v2350
    %2543 = vmatprep.subr.mxu0 %v2355
    %2544 = vmatpush1.msra.mxu0 %v2354
    %2545 = vmatprep.subr.mxu0 %v2359
    %2546 = vmatpush1.msra.mxu0 %v2358
    %2547 = vmatprep.subr.mxu0 %v2363
    %2548 = vmatpush1.msra.mxu0 %v2362
    %2549 = vmatprep.subr.mxu0 %v2367
    %2550 = vmatpush1.msra.mxu0 %v2366
    %2551 = vmatprep.subr.mxu0 %v2371
    %2552 = vmatpush1.msra.mxu0 %v2370
    %2553 = vmatprep.subr.mxu0 %v2375
    %2554 = vmatpush1.msra.mxu0 %v2374
    %2555 = vmatprep.subr.mxu0 %v2379
    %2556 = vmatpush1.msra.mxu0 %v2378
    %2557 = vmatprep.subr.mxu0 %v2383
    %2558 = vmatpush1.msra.mxu0 %v2382
    %2559 = vmatprep.subr.mxu0 %v2387
    %2560 = vmatpush1.msra.mxu0 %v2386
    %2561 = vmatprep.subr.mxu0 %v2391
    %2562 = vmatpush1.msra.mxu0 %v2390
    %2563 = vmatprep.subr.mxu0 %v2395
    %2564 = vmatpush1.msra.mxu0 %v2394
    %2565 = vmatprep.subr.mxu0 %v2399
    %2566 = vmatpush1.msra.mxu0 %v2398
    %2567 = vmatprep.subr.mxu0 %v2403
    %2568 = vmatpush1.msra.mxu0 %v2402
    %2569 = vmatprep.subr.mxu0 %v2407
    %2570 = vmatpush1.msra.mxu0 %v2406
    %2571 = vmatprep.subr.mxu0 %v2411
    %2572 = vmatpush1.msra.mxu0 %v2410
    %2573 = vmatprep.subr.mxu0 %v2415
    %2574 = vmatpush1.msra.mxu0 %v2414
    %2575 = vmatprep.subr.mxu0 %v2419
    %2576 = vmatpush1.msra.mxu0 %v2418
    %2577 = vmatprep.subr.mxu0 %v2423
    %2578 = vmatpush1.msra.mxu0 %v2422
    %2579 = vmatprep.subr.mxu0 %v2427
    %2580 = vmatpush1.msra.mxu0 %v2426
    %2581 = vmatprep.subr.mxu0 %v2431
    %2582 = vmatpush1.msra.mxu0 %v2430
    %2583 = vmatprep.subr.mxu0 %v2435
    %2584 = vmatpush1.msra.mxu0 %v2434
    %2585 = vmatprep.subr.mxu0 %v2439
    %2586 = vmatpush1.msra.mxu0 %v2438
    %2587 = vmatprep.subr.mxu0 %v2443
    %2588 = vmatpush1.msra.mxu0 %v2442
    %2589 = vmatprep.subr.mxu0 %v2447
    %2590 = vmatpush1.msra.mxu0 %v2446
    %2591 = vmatprep.subr.mxu0 %v2451
    %2592 = vmatpush1.msra.mxu0 %v2450
    %2593 = vmatprep.subr.mxu0 %v2455
    %2594 = vmatpush1.msra.mxu0 %v2454
    %2595 = vmatprep.subr.mxu0 %v2459
    %2596 = vmatpush1.msra.mxu0 %v2458
    %2597 = vmatprep.subr.mxu0 %v2463
    %2598 = vmatpush1.msra.mxu0 %v2462
    %2599 = vmatprep.mubr.f32.mxu0 %v2099
    %2600 = vmatmul.mubr.f32.gmra.mrb[0].mxu0 %v2335
    %v2601 = vpop.f32.mrb[0].mxu0
    %v2602 = vadd.f32 0.0, %v2601
    %v2603 = vpop.f32.mrb[0].mxu0
    %v2604 = vadd.f32 0.0, %v2603
    %2605 = vdwg.mxu0
    %v2606 = vadd.f32 %v500, %v2531
    %v2607 = vadd.f32 %v504, %v2533
    %v2608 = vadd.f32 %v508, %v2602
    %v2609 = vadd.f32 %v512, %v2604
    %v2610 = vmul.f32 %v2606, 0.5
    %v2611 = vtanh.pop %v2610
    %v2612 = vmul.f32 %v2611, 0.5
    %v2613 = vadd.f32 %v2612, 0.5
    %v2614 = vmul.f32 %v2607, 0.5
    %v2615 = vtanh.pop %v2614
    %v2616 = vmul.f32 %v2615, 0.5
    %v2617 = vadd.f32 %v2616, 0.5
    %v2618 = vtanh.pop %v2608
    %v2619 = vmul.f32 %v2609, 0.5
    %v2620 = vtanh.pop %v2619
    %v2621 = vmul.f32 %v2620, 0.5
    %v2622 = vadd.f32 %v2621, 0.5
    %v2623 = vmul.f32 %v2617, %v2097
    %v2624 = vmul.f32 %v2613, %v2618
    %v2625 = vadd.f32 %v2623, %v2624
    %v2626 = vtanh.pop %v2625
    %v2627 = vmul.f32 %v2622, %v2626
    %2628 = vst [vmem:[#allocation3 + $0x3] sm:$0x1] %v2627
    %s2629 = smul.u32 4, 4
    %s2630 = smul.addr %s2629, 8
    %s2631 = scalar_lea.vmem [#allocation2], %s2630
    %v2632 = vld [vmem:[%s2631] sm:$0xff]
    %v2633 = vld [vmem:[%s2631 + $0x8] sm:$0xff]
    %v2634 = vld [vmem:[%s2631 + $0x10] sm:$0xff]
    %v2635 = vld [vmem:[%s2631 + $0x18] sm:$0xff]
    %v2636 = vld [vmem:[#allocation7] sm:$0xff]
    %v2637 = vld [vmem:[#allocation7 + $0x8] sm:$0xff]
    %v2638 = vld [vmem:[#allocation7 + $0x10] sm:$0xff]
    %v2639 = vld [vmem:[#allocation7 + $0x18] sm:$0xff]
    %v2640 = vld [vmem:[#allocation7 + $0x20] sm:$0xff]
    %v2641 = vld [vmem:[#allocation7 + $0x28] sm:$0xff]
    %v2642 = vld [vmem:[#allocation7 + $0x30] sm:$0xff]
    %v2643 = vld [vmem:[#allocation7 + $0x38] sm:$0xff]
    %v2644 = vld [vmem:[#allocation7 + $0x40] sm:$0xff]
    %v2645 = vld [vmem:[#allocation7 + $0x48] sm:$0xff]
    %v2646 = vld [vmem:[#allocation7 + $0x50] sm:$0xff]
    %v2647 = vld [vmem:[#allocation7 + $0x58] sm:$0xff]
    %v2648 = vld [vmem:[#allocation7 + $0x60] sm:$0xff]
    %v2649 = vld [vmem:[#allocation7 + $0x68] sm:$0xff]
    %v2650 = vld [vmem:[#allocation7 + $0x70] sm:$0xff]
    %v2651 = vld [vmem:[#allocation7 + $0x78] sm:$0xff]
    %v2652 = vld [vmem:[#allocation7 + $0x80] sm:$0xff]
    %v2653 = vld [vmem:[#allocation7 + $0x88] sm:$0xff]
    %v2654 = vld [vmem:[#allocation7 + $0x90] sm:$0xff]
    %v2655 = vld [vmem:[#allocation7 + $0x98] sm:$0xff]
    %v2656 = vld [vmem:[#allocation7 + $0xa0] sm:$0xff]
    %v2657 = vld [vmem:[#allocation7 + $0xa8] sm:$0xff]
    %v2658 = vld [vmem:[#allocation7 + $0xb0] sm:$0xff]
    %v2659 = vld [vmem:[#allocation7 + $0xb8] sm:$0xff]
    %v2660 = vld [vmem:[#allocation7 + $0xc0] sm:$0xff]
    %v2661 = vld [vmem:[#allocation7 + $0xc8] sm:$0xff]
    %v2662 = vld [vmem:[#allocation7 + $0xd0] sm:$0xff]
    %v2663 = vld [vmem:[#allocation7 + $0xd8] sm:$0xff]
    %v2664 = vld [vmem:[#allocation7 + $0xe0] sm:$0xff]
    %v2665 = vld [vmem:[#allocation7 + $0xe8] sm:$0xff]
    %v2666 = vld [vmem:[#allocation7 + $0xf0] sm:$0xff]
    %v2667 = vld [vmem:[#allocation7 + $0xf8] sm:$0xff]
    %v2668 = vld [vmem:[#allocation7 + $0x100] sm:$0xff]
    %v2669 = vld [vmem:[#allocation7 + $0x108] sm:$0xff]
    %v2670 = vld [vmem:[#allocation7 + $0x110] sm:$0xff]
    %v2671 = vld [vmem:[#allocation7 + $0x118] sm:$0xff]
    %v2672 = vld [vmem:[#allocation7 + $0x120] sm:$0xff]
    %v2673 = vld [vmem:[#allocation7 + $0x128] sm:$0xff]
    %v2674 = vld [vmem:[#allocation7 + $0x130] sm:$0xff]
    %v2675 = vld [vmem:[#allocation7 + $0x138] sm:$0xff]
    %v2676 = vld [vmem:[#allocation7 + $0x140] sm:$0xff]
    %v2677 = vld [vmem:[#allocation7 + $0x148] sm:$0xff]
    %v2678 = vld [vmem:[#allocation7 + $0x150] sm:$0xff]
    %v2679 = vld [vmem:[#allocation7 + $0x158] sm:$0xff]
    %v2680 = vld [vmem:[#allocation7 + $0x160] sm:$0xff]
    %v2681 = vld [vmem:[#allocation7 + $0x168] sm:$0xff]
    %v2682 = vld [vmem:[#allocation7 + $0x170] sm:$0xff]
    %v2683 = vld [vmem:[#allocation7 + $0x178] sm:$0xff]
    %v2684 = vld [vmem:[#allocation7 + $0x180] sm:$0xff]
    %v2685 = vld [vmem:[#allocation7 + $0x188] sm:$0xff]
    %v2686 = vld [vmem:[#allocation7 + $0x190] sm:$0xff]
    %v2687 = vld [vmem:[#allocation7 + $0x198] sm:$0xff]
    %v2688 = vld [vmem:[#allocation7 + $0x1a0] sm:$0xff]
    %v2689 = vld [vmem:[#allocation7 + $0x1a8] sm:$0xff]
    %v2690 = vld [vmem:[#allocation7 + $0x1b0] sm:$0xff]
    %v2691 = vld [vmem:[#allocation7 + $0x1b8] sm:$0xff]
    %v2692 = vld [vmem:[#allocation7 + $0x1c0] sm:$0xff]
    %v2693 = vld [vmem:[#allocation7 + $0x1c8] sm:$0xff]
    %v2694 = vld [vmem:[#allocation7 + $0x1d0] sm:$0xff]
    %v2695 = vld [vmem:[#allocation7 + $0x1d8] sm:$0xff]
    %v2696 = vld [vmem:[#allocation7 + $0x1e0] sm:$0xff]
    %v2697 = vld [vmem:[#allocation7 + $0x1e8] sm:$0xff]
    %v2698 = vld [vmem:[#allocation7 + $0x1f0] sm:$0xff]
    %v2699 = vld [vmem:[#allocation7 + $0x1f8] sm:$0xff]
    %2700 = vmatprep.subr.mxu0 %v2637
    %2701 = vmatpush1.msra.mxu0 %v2636
    %2702 = vmatprep.subr.mxu0 %v2641
    %2703 = vmatpush1.msra.mxu0 %v2640
    %2704 = vmatprep.subr.mxu0 %v2645
    %2705 = vmatpush1.msra.mxu0 %v2644
    %2706 = vmatprep.subr.mxu0 %v2649
    %2707 = vmatpush1.msra.mxu0 %v2648
    %2708 = vmatprep.subr.mxu0 %v2653
    %2709 = vmatpush1.msra.mxu0 %v2652
    %2710 = vmatprep.subr.mxu0 %v2657
    %2711 = vmatpush1.msra.mxu0 %v2656
    %2712 = vmatprep.subr.mxu0 %v2661
    %2713 = vmatpush1.msra.mxu0 %v2660
    %2714 = vmatprep.subr.mxu0 %v2665
    %2715 = vmatpush1.msra.mxu0 %v2664
    %2716 = vmatprep.subr.mxu0 %v2669
    %2717 = vmatpush1.msra.mxu0 %v2668
    %2718 = vmatprep.subr.mxu0 %v2673
    %2719 = vmatpush1.msra.mxu0 %v2672
    %2720 = vmatprep.subr.mxu0 %v2677
    %2721 = vmatpush1.msra.mxu0 %v2676
    %2722 = vmatprep.subr.mxu0 %v2681
    %2723 = vmatpush1.msra.mxu0 %v2680
    %2724 = vmatprep.subr.mxu0 %v2685
    %2725 = vmatpush1.msra.mxu0 %v2684
    %2726 = vmatprep.subr.mxu0 %v2689
    %2727 = vmatpush1.msra.mxu0 %v2688
    %2728 = vmatprep.subr.mxu0 %v2693
    %2729 = vmatpush1.msra.mxu0 %v2692
    %2730 = vmatprep.subr.mxu0 %v2697
    %2731 = vmatpush1.msra.mxu0 %v2696
    %2732 = vmatprep.subr.mxu0 0.0
    %2733 = vmatpush1.msra.mxu0 0.0
    %2734 = vmatprep.subr.mxu0 0.0
    %2735 = vmatpush1.msra.mxu0 0.0
    %2736 = vmatprep.subr.mxu0 0.0
    %2737 = vmatpush1.msra.mxu0 0.0
    %2738 = vmatprep.subr.mxu0 0.0
    %2739 = vmatpush1.msra.mxu0 0.0
    %2740 = vmatprep.subr.mxu0 0.0
    %2741 = vmatpush1.msra.mxu0 0.0
    %2742 = vmatprep.subr.mxu0 0.0
    %2743 = vmatpush1.msra.mxu0 0.0
    %2744 = vmatprep.subr.mxu0 0.0
    %2745 = vmatpush1.msra.mxu0 0.0
    %2746 = vmatprep.subr.mxu0 0.0
    %2747 = vmatpush1.msra.mxu0 0.0
    %2748 = vmatprep.subr.mxu0 0.0
    %2749 = vmatpush1.msra.mxu0 0.0
    %2750 = vmatprep.subr.mxu0 0.0
    %2751 = vmatpush1.msra.mxu0 0.0
    %2752 = vmatprep.subr.mxu0 0.0
    %2753 = vmatpush1.msra.mxu0 0.0
    %2754 = vmatprep.subr.mxu0 0.0
    %2755 = vmatpush1.msra.mxu0 0.0
    %2756 = vmatprep.subr.mxu0 0.0
    %2757 = vmatpush1.msra.mxu0 0.0
    %2758 = vmatprep.subr.mxu0 0.0
    %2759 = vmatpush1.msra.mxu0 0.0
    %2760 = vmatprep.subr.mxu0 0.0
    %2761 = vmatpush1.msra.mxu0 0.0
    %2762 = vmatprep.subr.mxu0 0.0
    %2763 = vmatpush1.msra.mxu0 0.0
    %2764 = vmatprep.mubr.f32.mxu0 0.0
    %2765 = vmatmul.mubr.f32.gmra.mrb[0].mxu0 %v2335
    %v2766 = vpop.f32.mrb[0].mxu0
    %v2767 = vadd.f32 0.0, %v2766
    %v2768 = vpop.f32.mrb[0].mxu0
    %v2769 = vadd.f32 0.0, %v2768
    %2770 = vdwg.mxu0
    %2771 = vmatprep.subr.mxu0 %v2639
    %2772 = vmatpush1.msra.mxu0 %v2638
    %2773 = vmatprep.subr.mxu0 %v2643
    %2774 = vmatpush1.msra.mxu0 %v2642
    %2775 = vmatprep.subr.mxu0 %v2647
    %2776 = vmatpush1.msra.mxu0 %v2646
    %2777 = vmatprep.subr.mxu0 %v2651
    %2778 = vmatpush1.msra.mxu0 %v2650
    %2779 = vmatprep.subr.mxu0 %v2655
    %2780 = vmatpush1.msra.mxu0 %v2654
    %2781 = vmatprep.subr.mxu0 %v2659
    %2782 = vmatpush1.msra.mxu0 %v2658
    %2783 = vmatprep.subr.mxu0 %v2663
    %2784 = vmatpush1.msra.mxu0 %v2662
    %2785 = vmatprep.subr.mxu0 %v2667
    %2786 = vmatpush1.msra.mxu0 %v2666
    %2787 = vmatprep.subr.mxu0 %v2671
    %2788 = vmatpush1.msra.mxu0 %v2670
    %2789 = vmatprep.subr.mxu0 %v2675
    %2790 = vmatpush1.msra.mxu0 %v2674
    %2791 = vmatprep.subr.mxu0 %v2679
    %2792 = vmatpush1.msra.mxu0 %v2678
    %2793 = vmatprep.subr.mxu0 %v2683
    %2794 = vmatpush1.msra.mxu0 %v2682
    %2795 = vmatprep.subr.mxu0 %v2687
    %2796 = vmatpush1.msra.mxu0 %v2686
    %2797 = vmatprep.subr.mxu0 %v2691
    %2798 = vmatpush1.msra.mxu0 %v2690
    %2799 = vmatprep.subr.mxu0 %v2695
    %2800 = vmatpush1.msra.mxu0 %v2694
    %2801 = vmatprep.subr.mxu0 %v2699
    %2802 = vmatpush1.msra.mxu0 %v2698
    %2803 = vmatprep.subr.mxu0 0.0
    %2804 = vmatpush1.msra.mxu0 0.0
    %2805 = vmatprep.subr.mxu0 0.0
    %2806 = vmatpush1.msra.mxu0 0.0
    %2807 = vmatprep.subr.mxu0 0.0
    %2808 = vmatpush1.msra.mxu0 0.0
    %2809 = vmatprep.subr.mxu0 0.0
    %2810 = vmatpush1.msra.mxu0 0.0
    %2811 = vmatprep.subr.mxu0 0.0
    %2812 = vmatpush1.msra.mxu0 0.0
    %2813 = vmatprep.subr.mxu0 0.0
    %2814 = vmatpush1.msra.mxu0 0.0
    %2815 = vmatprep.subr.mxu0 0.0
    %2816 = vmatpush1.msra.mxu0 0.0
    %2817 = vmatprep.subr.mxu0 0.0
    %2818 = vmatpush1.msra.mxu0 0.0
    %2819 = vmatprep.subr.mxu0 0.0
    %2820 = vmatpush1.msra.mxu0 0.0
    %2821 = vmatprep.subr.mxu0 0.0
    %2822 = vmatpush1.msra.mxu0 0.0
    %2823 = vmatprep.subr.mxu0 0.0
    %2824 = vmatpush1.msra.mxu0 0.0
    %2825 = vmatprep.subr.mxu0 0.0
    %2826 = vmatpush1.msra.mxu0 0.0
    %2827 = vmatprep.subr.mxu0 0.0
    %2828 = vmatpush1.msra.mxu0 0.0
    %2829 = vmatprep.subr.mxu0 0.0
    %2830 = vmatpush1.msra.mxu0 0.0
    %2831 = vmatprep.subr.mxu0 0.0
    %2832 = vmatpush1.msra.mxu0 0.0
    %2833 = vmatprep.subr.mxu0 0.0
    %2834 = vmatpush1.msra.mxu0 0.0
    %2835 = vmatprep.mubr.f32.mxu0 0.0
    %2836 = vmatmul.mubr.f32.gmra.mrb[0].mxu0 %v2335
    %v2837 = vpop.f32.mrb[0].mxu0
    %v2838 = vadd.f32 0.0, %v2837
    %v2839 = vpop.f32.mrb[0].mxu0
    %v2840 = vadd.f32 0.0, %v2839
    %2841 = vdwg.mxu0
    %v2842 = vadd.f32 %v2632, %v2767
    %v2843 = vadd.f32 %v2633, %v2769
    %v2844 = vadd.f32 %v2634, %v2838
    %v2845 = vadd.f32 %v2635, %v2840
    %v2846 = vmul.f32 %v2842, 0.5
    %v2847 = vtanh.pop %v2846
    %v2848 = vmul.f32 %v2847, 0.5
    %v2849 = vadd.f32 %v2848, 0.5
    %v2850 = vmul.f32 %v2843, 0.5
    %v2851 = vtanh.pop %v2850
    %v2852 = vmul.f32 %v2851, 0.5
    %v2853 = vadd.f32 %v2852, 0.5
    %v2854 = vtanh.pop %v2844
    %v2855 = vmul.f32 %v2845, 0.5
    %v2856 = vtanh.pop %v2855
    %v2857 = vmul.f32 %v2856, 0.5
    %v2858 = vadd.f32 %v2857, 0.5
    %v2859 = vmul.f32 %v2853, %v2333
    %v2860 = vmul.f32 %v2849, %v2854
    %v2861 = vadd.f32 %v2859, %v2860
    %v2862 = vtanh.pop %v2861
    %v2863 = vmul.f32 %v2858, %v2862
    %v2864 = vld [vmem:[#allocation9] sm:$0xff]
    %v2865 = vld [vmem:[#allocation9 + $0x8] sm:$0xff]
    %v2866 = vld [vmem:[#allocation9 + $0x10] sm:$0xff]
    %v2867 = vld [vmem:[#allocation9 + $0x18] sm:$0xff]
    %v2868 = vld [vmem:[#allocation9 + $0x20] sm:$0xff]
    %v2869 = vld [vmem:[#allocation9 + $0x28] sm:$0xff]
    %v2870 = vld [vmem:[#allocation9 + $0x30] sm:$0xff]
    %v2871 = vld [vmem:[#allocation9 + $0x38] sm:$0xff]
    %v2872 = vld [vmem:[#allocation9 + $0x40] sm:$0xff]
    %v2873 = vld [vmem:[#allocation9 + $0x48] sm:$0xff]
    %v2874 = vld [vmem:[#allocation9 + $0x50] sm:$0xff]
    %v2875 = vld [vmem:[#allocation9 + $0x58] sm:$0xff]
    %v2876 = vld [vmem:[#allocation9 + $0x60] sm:$0xff]
    %v2877 = vld [vmem:[#allocation9 + $0x68] sm:$0xff]
    %v2878 = vld [vmem:[#allocation9 + $0x70] sm:$0xff]
    %v2879 = vld [vmem:[#allocation9 + $0x78] sm:$0xff]
    %v2880 = vld [vmem:[#allocation9 + $0x80] sm:$0xff]
    %v2881 = vld [vmem:[#allocation9 + $0x88] sm:$0xff]
    %v2882 = vld [vmem:[#allocation9 + $0x90] sm:$0xff]
    %v2883 = vld [vmem:[#allocation9 + $0x98] sm:$0xff]
    %v2884 = vld [vmem:[#allocation9 + $0xa0] sm:$0xff]
    %v2885 = vld [vmem:[#allocation9 + $0xa8] sm:$0xff]
    %v2886 = vld [vmem:[#allocation9 + $0xb0] sm:$0xff]
    %v2887 = vld [vmem:[#allocation9 + $0xb8] sm:$0xff]
    %v2888 = vld [vmem:[#allocation9 + $0xc0] sm:$0xff]
    %v2889 = vld [vmem:[#allocation9 + $0xc8] sm:$0xff]
    %v2890 = vld [vmem:[#allocation9 + $0xd0] sm:$0xff]
    %v2891 = vld [vmem:[#allocation9 + $0xd8] sm:$0xff]
    %v2892 = vld [vmem:[#allocation9 + $0xe0] sm:$0xff]
    %v2893 = vld [vmem:[#allocation9 + $0xe8] sm:$0xff]
    %v2894 = vld [vmem:[#allocation9 + $0xf0] sm:$0xff]
    %v2895 = vld [vmem:[#allocation9 + $0xf8] sm:$0xff]
    %v2896 = vld [vmem:[#allocation9 + $0x100] sm:$0xff]
    %v2897 = vld [vmem:[#allocation9 + $0x108] sm:$0xff]
    %v2898 = vld [vmem:[#allocation9 + $0x110] sm:$0xff]
    %v2899 = vld [vmem:[#allocation9 + $0x118] sm:$0xff]
    %v2900 = vld [vmem:[#allocation9 + $0x120] sm:$0xff]
    %v2901 = vld [vmem:[#allocation9 + $0x128] sm:$0xff]
    %v2902 = vld [vmem:[#allocation9 + $0x130] sm:$0xff]
    %v2903 = vld [vmem:[#allocation9 + $0x138] sm:$0xff]
    %v2904 = vld [vmem:[#allocation9 + $0x140] sm:$0xff]
    %v2905 = vld [vmem:[#allocation9 + $0x148] sm:$0xff]
    %v2906 = vld [vmem:[#allocation9 + $0x150] sm:$0xff]
    %v2907 = vld [vmem:[#allocation9 + $0x158] sm:$0xff]
    %v2908 = vld [vmem:[#allocation9 + $0x160] sm:$0xff]
    %v2909 = vld [vmem:[#allocation9 + $0x168] sm:$0xff]
    %v2910 = vld [vmem:[#allocation9 + $0x170] sm:$0xff]
    %v2911 = vld [vmem:[#allocation9 + $0x178] sm:$0xff]
    %v2912 = vld [vmem:[#allocation9 + $0x180] sm:$0xff]
    %v2913 = vld [vmem:[#allocation9 + $0x188] sm:$0xff]
    %v2914 = vld [vmem:[#allocation9 + $0x190] sm:$0xff]
    %v2915 = vld [vmem:[#allocation9 + $0x198] sm:$0xff]
    %v2916 = vld [vmem:[#allocation9 + $0x1a0] sm:$0xff]
    %v2917 = vld [vmem:[#allocation9 + $0x1a8] sm:$0xff]
    %v2918 = vld [vmem:[#allocation9 + $0x1b0] sm:$0xff]
    %v2919 = vld [vmem:[#allocation9 + $0x1b8] sm:$0xff]
    %v2920 = vld [vmem:[#allocation9 + $0x1c0] sm:$0xff]
    %v2921 = vld [vmem:[#allocation9 + $0x1c8] sm:$0xff]
    %v2922 = vld [vmem:[#allocation9 + $0x1d0] sm:$0xff]
    %v2923 = vld [vmem:[#allocation9 + $0x1d8] sm:$0xff]
    %v2924 = vld [vmem:[#allocation9 + $0x1e0] sm:$0xff]
    %v2925 = vld [vmem:[#allocation9 + $0x1e8] sm:$0xff]
    %v2926 = vld [vmem:[#allocation9 + $0x1f0] sm:$0xff]
    %v2927 = vld [vmem:[#allocation9 + $0x1f8] sm:$0xff]
    %v2928 = vld [vmem:[#allocation9 + $0x200] sm:$0xff]
    %v2929 = vld [vmem:[#allocation9 + $0x208] sm:$0xff]
    %v2930 = vld [vmem:[#allocation9 + $0x210] sm:$0xff]
    %v2931 = vld [vmem:[#allocation9 + $0x218] sm:$0xff]
    %v2932 = vld [vmem:[#allocation9 + $0x220] sm:$0xff]
    %v2933 = vld [vmem:[#allocation9 + $0x228] sm:$0xff]
    %v2934 = vld [vmem:[#allocation9 + $0x230] sm:$0xff]
    %v2935 = vld [vmem:[#allocation9 + $0x238] sm:$0xff]
    %v2936 = vld [vmem:[#allocation9 + $0x240] sm:$0xff]
    %v2937 = vld [vmem:[#allocation9 + $0x248] sm:$0xff]
    %v2938 = vld [vmem:[#allocation9 + $0x250] sm:$0xff]
    %v2939 = vld [vmem:[#allocation9 + $0x258] sm:$0xff]
    %v2940 = vld [vmem:[#allocation9 + $0x260] sm:$0xff]
    %v2941 = vld [vmem:[#allocation9 + $0x268] sm:$0xff]
    %v2942 = vld [vmem:[#allocation9 + $0x270] sm:$0xff]
    %v2943 = vld [vmem:[#allocation9 + $0x278] sm:$0xff]
    %v2944 = vld [vmem:[#allocation9 + $0x280] sm:$0xff]
    %v2945 = vld [vmem:[#allocation9 + $0x288] sm:$0xff]
    %v2946 = vld [vmem:[#allocation9 + $0x290] sm:$0xff]
    %v2947 = vld [vmem:[#allocation9 + $0x298] sm:$0xff]
    %v2948 = vld [vmem:[#allocation9 + $0x2a0] sm:$0xff]
    %v2949 = vld [vmem:[#allocation9 + $0x2a8] sm:$0xff]
    %v2950 = vld [vmem:[#allocation9 + $0x2b0] sm:$0xff]
    %v2951 = vld [vmem:[#allocation9 + $0x2b8] sm:$0xff]
    %v2952 = vld [vmem:[#allocation9 + $0x2c0] sm:$0xff]
    %v2953 = vld [vmem:[#allocation9 + $0x2c8] sm:$0xff]
    %v2954 = vld [vmem:[#allocation9 + $0x2d0] sm:$0xff]
    %v2955 = vld [vmem:[#allocation9 + $0x2d8] sm:$0xff]
    %v2956 = vld [vmem:[#allocation9 + $0x2e0] sm:$0xff]
    %v2957 = vld [vmem:[#allocation9 + $0x2e8] sm:$0xff]
    %v2958 = vld [vmem:[#allocation9 + $0x2f0] sm:$0xff]
    %v2959 = vld [vmem:[#allocation9 + $0x2f8] sm:$0xff]
    %v2960 = vld [vmem:[#allocation9 + $0x300] sm:$0xff]
    %v2961 = vld [vmem:[#allocation9 + $0x308] sm:$0xff]
    %v2962 = vld [vmem:[#allocation9 + $0x310] sm:$0xff]
    %v2963 = vld [vmem:[#allocation9 + $0x318] sm:$0xff]
    %v2964 = vld [vmem:[#allocation9 + $0x320] sm:$0xff]
    %v2965 = vld [vmem:[#allocation9 + $0x328] sm:$0xff]
    %v2966 = vld [vmem:[#allocation9 + $0x330] sm:$0xff]
    %v2967 = vld [vmem:[#allocation9 + $0x338] sm:$0xff]
    %v2968 = vld [vmem:[#allocation9 + $0x340] sm:$0xff]
    %v2969 = vld [vmem:[#allocation9 + $0x348] sm:$0xff]
    %v2970 = vld [vmem:[#allocation9 + $0x350] sm:$0xff]
    %v2971 = vld [vmem:[#allocation9 + $0x358] sm:$0xff]
    %v2972 = vld [vmem:[#allocation9 + $0x360] sm:$0xff]
    %v2973 = vld [vmem:[#allocation9 + $0x368] sm:$0xff]
    %v2974 = vld [vmem:[#allocation9 + $0x370] sm:$0xff]
    %v2975 = vld [vmem:[#allocation9 + $0x378] sm:$0xff]
    %v2976 = vld [vmem:[#allocation9 + $0x380] sm:$0xff]
    %v2977 = vld [vmem:[#allocation9 + $0x388] sm:$0xff]
    %v2978 = vld [vmem:[#allocation9 + $0x390] sm:$0xff]
    %v2979 = vld [vmem:[#allocation9 + $0x398] sm:$0xff]
    %v2980 = vld [vmem:[#allocation9 + $0x3a0] sm:$0xff]
    %v2981 = vld [vmem:[#allocation9 + $0x3a8] sm:$0xff]
    %v2982 = vld [vmem:[#allocation9 + $0x3b0] sm:$0xff]
    %v2983 = vld [vmem:[#allocation9 + $0x3b8] sm:$0xff]
    %v2984 = vld [vmem:[#allocation9 + $0x3c0] sm:$0xff]
    %v2985 = vld [vmem:[#allocation9 + $0x3c8] sm:$0xff]
    %v2986 = vld [vmem:[#allocation9 + $0x3d0] sm:$0xff]
    %v2987 = vld [vmem:[#allocation9 + $0x3d8] sm:$0xff]
    %v2988 = vld [vmem:[#allocation9 + $0x3e0] sm:$0xff]
    %v2989 = vld [vmem:[#allocation9 + $0x3e8] sm:$0xff]
    %v2990 = vld [vmem:[#allocation9 + $0x3f0] sm:$0xff]
    %v2991 = vld [vmem:[#allocation9 + $0x3f8] sm:$0xff]
    %2992 = vmatprep.subr.mxu0 %v2865
    %2993 = vmatpush1.msra.mxu0 %v2864
    %2994 = vmatprep.subr.mxu0 %v2869
    %2995 = vmatpush1.msra.mxu0 %v2868
    %2996 = vmatprep.subr.mxu0 %v2873
    %2997 = vmatpush1.msra.mxu0 %v2872
    %2998 = vmatprep.subr.mxu0 %v2877
    %2999 = vmatpush1.msra.mxu0 %v2876
    %3000 = vmatprep.subr.mxu0 %v2881
    %3001 = vmatpush1.msra.mxu0 %v2880
    %3002 = vmatprep.subr.mxu0 %v2885
    %3003 = vmatpush1.msra.mxu0 %v2884
    %3004 = vmatprep.subr.mxu0 %v2889
    %3005 = vmatpush1.msra.mxu0 %v2888
    %3006 = vmatprep.subr.mxu0 %v2893
    %3007 = vmatpush1.msra.mxu0 %v2892
    %3008 = vmatprep.subr.mxu0 %v2897
    %3009 = vmatpush1.msra.mxu0 %v2896
    %3010 = vmatprep.subr.mxu0 %v2901
    %3011 = vmatpush1.msra.mxu0 %v2900
    %3012 = vmatprep.subr.mxu0 %v2905
    %3013 = vmatpush1.msra.mxu0 %v2904
    %3014 = vmatprep.subr.mxu0 %v2909
    %3015 = vmatpush1.msra.mxu0 %v2908
    %3016 = vmatprep.subr.mxu0 %v2913
    %3017 = vmatpush1.msra.mxu0 %v2912
    %3018 = vmatprep.subr.mxu0 %v2917
    %3019 = vmatpush1.msra.mxu0 %v2916
    %3020 = vmatprep.subr.mxu0 %v2921
    %3021 = vmatpush1.msra.mxu0 %v2920
    %3022 = vmatprep.subr.mxu0 %v2925
    %3023 = vmatpush1.msra.mxu0 %v2924
    %3024 = vmatprep.subr.mxu0 %v2929
    %3025 = vmatpush1.msra.mxu0 %v2928
    %3026 = vmatprep.subr.mxu0 %v2933
    %3027 = vmatpush1.msra.mxu0 %v2932
    %3028 = vmatprep.subr.mxu0 %v2937
    %3029 = vmatpush1.msra.mxu0 %v2936
    %3030 = vmatprep.subr.mxu0 %v2941
    %3031 = vmatpush1.msra.mxu0 %v2940
    %3032 = vmatprep.subr.mxu0 %v2945
    %3033 = vmatpush1.msra.mxu0 %v2944
    %3034 = vmatprep.subr.mxu0 %v2949
    %3035 = vmatpush1.msra.mxu0 %v2948
    %3036 = vmatprep.subr.mxu0 %v2953
    %3037 = vmatpush1.msra.mxu0 %v2952
    %3038 = vmatprep.subr.mxu0 %v2957
    %3039 = vmatpush1.msra.mxu0 %v2956
    %3040 = vmatprep.subr.mxu0 %v2961
    %3041 = vmatpush1.msra.mxu0 %v2960
    %3042 = vmatprep.subr.mxu0 %v2965
    %3043 = vmatpush1.msra.mxu0 %v2964
    %3044 = vmatprep.subr.mxu0 %v2969
    %3045 = vmatpush1.msra.mxu0 %v2968
    %3046 = vmatprep.subr.mxu0 %v2973
    %3047 = vmatpush1.msra.mxu0 %v2972
    %3048 = vmatprep.subr.mxu0 %v2977
    %3049 = vmatpush1.msra.mxu0 %v2976
    %3050 = vmatprep.subr.mxu0 %v2981
    %3051 = vmatpush1.msra.mxu0 %v2980
    %3052 = vmatprep.subr.mxu0 %v2985
    %3053 = vmatpush1.msra.mxu0 %v2984
    %3054 = vmatprep.subr.mxu0 %v2989
    %3055 = vmatpush1.msra.mxu0 %v2988
    %3056 = vmatprep.mubr.f32.mxu0 %v2627
    %3057 = vmatmul.mubr.f32.gmra.mrb[0].mxu0 %v2863
    %v3058 = vpop.f32.mrb[0].mxu0
    %v3059 = vadd.f32 0.0, %v3058
    %v3060 = vpop.f32.mrb[0].mxu0
    %v3061 = vadd.f32 0.0, %v3060
    %3062 = vdwg.mxu0
    %3063 = vmatprep.subr.mxu0 %v2867
    %3064 = vmatpush1.msra.mxu0 %v2866
    %3065 = vmatprep.subr.mxu0 %v2871
    %3066 = vmatpush1.msra.mxu0 %v2870
    %3067 = vmatprep.subr.mxu0 %v2875
    %3068 = vmatpush1.msra.mxu0 %v2874
    %3069 = vmatprep.subr.mxu0 %v2879
    %3070 = vmatpush1.msra.mxu0 %v2878
    %3071 = vmatprep.subr.mxu0 %v2883
    %3072 = vmatpush1.msra.mxu0 %v2882
    %3073 = vmatprep.subr.mxu0 %v2887
    %3074 = vmatpush1.msra.mxu0 %v2886
    %3075 = vmatprep.subr.mxu0 %v2891
    %3076 = vmatpush1.msra.mxu0 %v2890
    %3077 = vmatprep.subr.mxu0 %v2895
    %3078 = vmatpush1.msra.mxu0 %v2894
    %3079 = vmatprep.subr.mxu0 %v2899
    %3080 = vmatpush1.msra.mxu0 %v2898
    %3081 = vmatprep.subr.mxu0 %v2903
    %3082 = vmatpush1.msra.mxu0 %v2902
    %3083 = vmatprep.subr.mxu0 %v2907
    %3084 = vmatpush1.msra.mxu0 %v2906
    %3085 = vmatprep.subr.mxu0 %v2911
    %3086 = vmatpush1.msra.mxu0 %v2910
    %3087 = vmatprep.subr.mxu0 %v2915
    %3088 = vmatpush1.msra.mxu0 %v2914
    %3089 = vmatprep.subr.mxu0 %v2919
    %3090 = vmatpush1.msra.mxu0 %v2918
    %3091 = vmatprep.subr.mxu0 %v2923
    %3092 = vmatpush1.msra.mxu0 %v2922
    %3093 = vmatprep.subr.mxu0 %v2927
    %3094 = vmatpush1.msra.mxu0 %v2926
    %3095 = vmatprep.subr.mxu0 %v2931
    %3096 = vmatpush1.msra.mxu0 %v2930
    %3097 = vmatprep.subr.mxu0 %v2935
    %3098 = vmatpush1.msra.mxu0 %v2934
    %3099 = vmatprep.subr.mxu0 %v2939
    %3100 = vmatpush1.msra.mxu0 %v2938
    %3101 = vmatprep.subr.mxu0 %v2943
    %3102 = vmatpush1.msra.mxu0 %v2942
    %3103 = vmatprep.subr.mxu0 %v2947
    %3104 = vmatpush1.msra.mxu0 %v2946
    %3105 = vmatprep.subr.mxu0 %v2951
    %3106 = vmatpush1.msra.mxu0 %v2950
    %3107 = vmatprep.subr.mxu0 %v2955
    %3108 = vmatpush1.msra.mxu0 %v2954
    %3109 = vmatprep.subr.mxu0 %v2959
    %3110 = vmatpush1.msra.mxu0 %v2958
    %3111 = vmatprep.subr.mxu0 %v2963
    %3112 = vmatpush1.msra.mxu0 %v2962
    %3113 = vmatprep.subr.mxu0 %v2967
    %3114 = vmatpush1.msra.mxu0 %v2966
    %3115 = vmatprep.subr.mxu0 %v2971
    %3116 = vmatpush1.msra.mxu0 %v2970
    %3117 = vmatprep.subr.mxu0 %v2975
    %3118 = vmatpush1.msra.mxu0 %v2974
    %3119 = vmatprep.subr.mxu0 %v2979
    %3120 = vmatpush1.msra.mxu0 %v2978
    %3121 = vmatprep.subr.mxu0 %v2983
    %3122 = vmatpush1.msra.mxu0 %v2982
    %3123 = vmatprep.subr.mxu0 %v2987
    %3124 = vmatpush1.msra.mxu0 %v2986
    %3125 = vmatprep.subr.mxu0 %v2991
    %3126 = vmatpush1.msra.mxu0 %v2990
    %3127 = vmatprep.mubr.f32.mxu0 %v2627
    %3128 = vmatmul.mubr.f32.gmra.mrb[0].mxu0 %v2863
    %v3129 = vpop.f32.mrb[0].mxu0
    %v3130 = vadd.f32 0.0, %v3129
    %v3131 = vpop.f32.mrb[0].mxu0
    %v3132 = vadd.f32 0.0, %v3131
    %3133 = vdwg.mxu0
    %v3134 = vadd.f32 %v500, %v3059
    %v3135 = vadd.f32 %v504, %v3061
    %v3136 = vadd.f32 %v508, %v3130
    %v3137 = vadd.f32 %v512, %v3132
    %v3138 = vmul.f32 %v3134, 0.5
    %v3139 = vtanh.pop %v3138
    %v3140 = vmul.f32 %v3139, 0.5
    %v3141 = vadd.f32 %v3140, 0.5
    %v3142 = vmul.f32 %v3135, 0.5
    %v3143 = vtanh.pop %v3142
    %v3144 = vmul.f32 %v3143, 0.5
    %v3145 = vadd.f32 %v3144, 0.5
    %v3146 = vtanh.pop %v3136
    %v3147 = vmul.f32 %v3137, 0.5
    %v3148 = vtanh.pop %v3147
    %v3149 = vmul.f32 %v3148, 0.5
    %v3150 = vadd.f32 %v3149, 0.5
    %v3151 = vmul.f32 %v3145, %v2625
    %v3152 = vmul.f32 %v3141, %v3146
    %v3153 = vadd.f32 %v3151, %v3152
    %v3154 = vtanh.pop %v3153
    %v3155 = vmul.f32 %v3150, %v3154
    %3156 = vst [vmem:[#allocation3 + $0x4] sm:$0x1] %v3155
    %s3157 = smul.u32 5, 4
    %s3158 = smul.addr %s3157, 8
    %s3159 = scalar_lea.vmem [#allocation2], %s3158
    %v3160 = vld [vmem:[%s3159] sm:$0xff]
    %v3161 = vld [vmem:[%s3159 + $0x8] sm:$0xff]
    %v3162 = vld [vmem:[%s3159 + $0x10] sm:$0xff]
    %v3163 = vld [vmem:[%s3159 + $0x18] sm:$0xff]
    %v3164 = vld [vmem:[#allocation7] sm:$0xff]
    %v3165 = vld [vmem:[#allocation7 + $0x8] sm:$0xff]
    %v3166 = vld [vmem:[#allocation7 + $0x10] sm:$0xff]
    %v3167 = vld [vmem:[#allocation7 + $0x18] sm:$0xff]
    %v3168 = vld [vmem:[#allocation7 + $0x20] sm:$0xff]
    %v3169 = vld [vmem:[#allocation7 + $0x28] sm:$0xff]
    %v3170 = vld [vmem:[#allocation7 + $0x30] sm:$0xff]
    %v3171 = vld [vmem:[#allocation7 + $0x38] sm:$0xff]
    %v3172 = vld [vmem:[#allocation7 + $0x40] sm:$0xff]
    %v3173 = vld [vmem:[#allocation7 + $0x48] sm:$0xff]
    %v3174 = vld [vmem:[#allocation7 + $0x50] sm:$0xff]
    %v3175 = vld [vmem:[#allocation7 + $0x58] sm:$0xff]
    %v3176 = vld [vmem:[#allocation7 + $0x60] sm:$0xff]
    %v3177 = vld [vmem:[#allocation7 + $0x68] sm:$0xff]
    %v3178 = vld [vmem:[#allocation7 + $0x70] sm:$0xff]
    %v3179 = vld [vmem:[#allocation7 + $0x78] sm:$0xff]
    %v3180 = vld [vmem:[#allocation7 + $0x80] sm:$0xff]
    %v3181 = vld [vmem:[#allocation7 + $0x88] sm:$0xff]
    %v3182 = vld [vmem:[#allocation7 + $0x90] sm:$0xff]
    %v3183 = vld [vmem:[#allocation7 + $0x98] sm:$0xff]
    %v3184 = vld [vmem:[#allocation7 + $0xa0] sm:$0xff]
    %v3185 = vld [vmem:[#allocation7 + $0xa8] sm:$0xff]
    %v3186 = vld [vmem:[#allocation7 + $0xb0] sm:$0xff]
    %v3187 = vld [vmem:[#allocation7 + $0xb8] sm:$0xff]
    %v3188 = vld [vmem:[#allocation7 + $0xc0] sm:$0xff]
    %v3189 = vld [vmem:[#allocation7 + $0xc8] sm:$0xff]
    %v3190 = vld [vmem:[#allocation7 + $0xd0] sm:$0xff]
    %v3191 = vld [vmem:[#allocation7 + $0xd8] sm:$0xff]
    %v3192 = vld [vmem:[#allocation7 + $0xe0] sm:$0xff]
    %v3193 = vld [vmem:[#allocation7 + $0xe8] sm:$0xff]
    %v3194 = vld [vmem:[#allocation7 + $0xf0] sm:$0xff]
    %v3195 = vld [vmem:[#allocation7 + $0xf8] sm:$0xff]
    %v3196 = vld [vmem:[#allocation7 + $0x100] sm:$0xff]
    %v3197 = vld [vmem:[#allocation7 + $0x108] sm:$0xff]
    %v3198 = vld [vmem:[#allocation7 + $0x110] sm:$0xff]
    %v3199 = vld [vmem:[#allocation7 + $0x118] sm:$0xff]
    %v3200 = vld [vmem:[#allocation7 + $0x120] sm:$0xff]
    %v3201 = vld [vmem:[#allocation7 + $0x128] sm:$0xff]
    %v3202 = vld [vmem:[#allocation7 + $0x130] sm:$0xff]
    %v3203 = vld [vmem:[#allocation7 + $0x138] sm:$0xff]
    %v3204 = vld [vmem:[#allocation7 + $0x140] sm:$0xff]
    %v3205 = vld [vmem:[#allocation7 + $0x148] sm:$0xff]
    %v3206 = vld [vmem:[#allocation7 + $0x150] sm:$0xff]
    %v3207 = vld [vmem:[#allocation7 + $0x158] sm:$0xff]
    %v3208 = vld [vmem:[#allocation7 + $0x160] sm:$0xff]
    %v3209 = vld [vmem:[#allocation7 + $0x168] sm:$0xff]
    %v3210 = vld [vmem:[#allocation7 + $0x170] sm:$0xff]
    %v3211 = vld [vmem:[#allocation7 + $0x178] sm:$0xff]
    %v3212 = vld [vmem:[#allocation7 + $0x180] sm:$0xff]
    %v3213 = vld [vmem:[#allocation7 + $0x188] sm:$0xff]
    %v3214 = vld [vmem:[#allocation7 + $0x190] sm:$0xff]
    %v3215 = vld [vmem:[#allocation7 + $0x198] sm:$0xff]
    %v3216 = vld [vmem:[#allocation7 + $0x1a0] sm:$0xff]
    %v3217 = vld [vmem:[#allocation7 + $0x1a8] sm:$0xff]
    %v3218 = vld [vmem:[#allocation7 + $0x1b0] sm:$0xff]
    %v3219 = vld [vmem:[#allocation7 + $0x1b8] sm:$0xff]
    %v3220 = vld [vmem:[#allocation7 + $0x1c0] sm:$0xff]
    %v3221 = vld [vmem:[#allocation7 + $0x1c8] sm:$0xff]
    %v3222 = vld [vmem:[#allocation7 + $0x1d0] sm:$0xff]
    %v3223 = vld [vmem:[#allocation7 + $0x1d8] sm:$0xff]
    %v3224 = vld [vmem:[#allocation7 + $0x1e0] sm:$0xff]
    %v3225 = vld [vmem:[#allocation7 + $0x1e8] sm:$0xff]
    %v3226 = vld [vmem:[#allocation7 + $0x1f0] sm:$0xff]
    %v3227 = vld [vmem:[#allocation7 + $0x1f8] sm:$0xff]
    %3228 = vmatprep.subr.mxu0 %v3165
    %3229 = vmatpush1.msra.mxu0 %v3164
    %3230 = vmatprep.subr.mxu0 %v3169
    %3231 = vmatpush1.msra.mxu0 %v3168
    %3232 = vmatprep.subr.mxu0 %v3173
    %3233 = vmatpush1.msra.mxu0 %v3172
    %3234 = vmatprep.subr.mxu0 %v3177
    %3235 = vmatpush1.msra.mxu0 %v3176
    %3236 = vmatprep.subr.mxu0 %v3181
    %3237 = vmatpush1.msra.mxu0 %v3180
    %3238 = vmatprep.subr.mxu0 %v3185
    %3239 = vmatpush1.msra.mxu0 %v3184
    %3240 = vmatprep.subr.mxu0 %v3189
    %3241 = vmatpush1.msra.mxu0 %v3188
    %3242 = vmatprep.subr.mxu0 %v3193
    %3243 = vmatpush1.msra.mxu0 %v3192
    %3244 = vmatprep.subr.mxu0 %v3197
    %3245 = vmatpush1.msra.mxu0 %v3196
    %3246 = vmatprep.subr.mxu0 %v3201
    %3247 = vmatpush1.msra.mxu0 %v3200
    %3248 = vmatprep.subr.mxu0 %v3205
    %3249 = vmatpush1.msra.mxu0 %v3204
    %3250 = vmatprep.subr.mxu0 %v3209
    %3251 = vmatpush1.msra.mxu0 %v3208
    %3252 = vmatprep.subr.mxu0 %v3213
    %3253 = vmatpush1.msra.mxu0 %v3212
    %3254 = vmatprep.subr.mxu0 %v3217
    %3255 = vmatpush1.msra.mxu0 %v3216
    %3256 = vmatprep.subr.mxu0 %v3221
    %3257 = vmatpush1.msra.mxu0 %v3220
    %3258 = vmatprep.subr.mxu0 %v3225
    %3259 = vmatpush1.msra.mxu0 %v3224
    %3260 = vmatprep.subr.mxu0 0.0
    %3261 = vmatpush1.msra.mxu0 0.0
    %3262 = vmatprep.subr.mxu0 0.0
    %3263 = vmatpush1.msra.mxu0 0.0
    %3264 = vmatprep.subr.mxu0 0.0
    %3265 = vmatpush1.msra.mxu0 0.0
    %3266 = vmatprep.subr.mxu0 0.0
    %3267 = vmatpush1.msra.mxu0 0.0
    %3268 = vmatprep.subr.mxu0 0.0
    %3269 = vmatpush1.msra.mxu0 0.0
    %3270 = vmatprep.subr.mxu0 0.0
    %3271 = vmatpush1.msra.mxu0 0.0
    %3272 = vmatprep.subr.mxu0 0.0
    %3273 = vmatpush1.msra.mxu0 0.0
    %3274 = vmatprep.subr.mxu0 0.0
    %3275 = vmatpush1.msra.mxu0 0.0
    %3276 = vmatprep.subr.mxu0 0.0
    %3277 = vmatpush1.msra.mxu0 0.0
    %3278 = vmatprep.subr.mxu0 0.0
    %3279 = vmatpush1.msra.mxu0 0.0
    %3280 = vmatprep.subr.mxu0 0.0
    %3281 = vmatpush1.msra.mxu0 0.0
    %3282 = vmatprep.subr.mxu0 0.0
    %3283 = vmatpush1.msra.mxu0 0.0
    %3284 = vmatprep.subr.mxu0 0.0
    %3285 = vmatpush1.msra.mxu0 0.0
    %3286 = vmatprep.subr.mxu0 0.0
    %3287 = vmatpush1.msra.mxu0 0.0
    %3288 = vmatprep.subr.mxu0 0.0
    %3289 = vmatpush1.msra.mxu0 0.0
    %3290 = vmatprep.subr.mxu0 0.0
    %3291 = vmatpush1.msra.mxu0 0.0
    %3292 = vmatprep.mubr.f32.mxu0 0.0
    %3293 = vmatmul.mubr.f32.gmra.mrb[0].mxu0 %v2863
    %v3294 = vpop.f32.mrb[0].mxu0
    %v3295 = vadd.f32 0.0, %v3294
    %v3296 = vpop.f32.mrb[0].mxu0
    %v3297 = vadd.f32 0.0, %v3296
    %3298 = vdwg.mxu0
    %3299 = vmatprep.subr.mxu0 %v3167
    %3300 = vmatpush1.msra.mxu0 %v3166
    %3301 = vmatprep.subr.mxu0 %v3171
    %3302 = vmatpush1.msra.mxu0 %v3170
    %3303 = vmatprep.subr.mxu0 %v3175
    %3304 = vmatpush1.msra.mxu0 %v3174
    %3305 = vmatprep.subr.mxu0 %v3179
    %3306 = vmatpush1.msra.mxu0 %v3178
    %3307 = vmatprep.subr.mxu0 %v3183
    %3308 = vmatpush1.msra.mxu0 %v3182
    %3309 = vmatprep.subr.mxu0 %v3187
    %3310 = vmatpush1.msra.mxu0 %v3186
    %3311 = vmatprep.subr.mxu0 %v3191
    %3312 = vmatpush1.msra.mxu0 %v3190
    %3313 = vmatprep.subr.mxu0 %v3195
    %3314 = vmatpush1.msra.mxu0 %v3194
    %3315 = vmatprep.subr.mxu0 %v3199
    %3316 = vmatpush1.msra.mxu0 %v3198
    %3317 = vmatprep.subr.mxu0 %v3203
    %3318 = vmatpush1.msra.mxu0 %v3202
    %3319 = vmatprep.subr.mxu0 %v3207
    %3320 = vmatpush1.msra.mxu0 %v3206
    %3321 = vmatprep.subr.mxu0 %v3211
    %3322 = vmatpush1.msra.mxu0 %v3210
    %3323 = vmatprep.subr.mxu0 %v3215
    %3324 = vmatpush1.msra.mxu0 %v3214
    %3325 = vmatprep.subr.mxu0 %v3219
    %3326 = vmatpush1.msra.mxu0 %v3218
    %3327 = vmatprep.subr.mxu0 %v3223
    %3328 = vmatpush1.msra.mxu0 %v3222
    %3329 = vmatprep.subr.mxu0 %v3227
    %3330 = vmatpush1.msra.mxu0 %v3226
    %3331 = vmatprep.subr.mxu0 0.0
    %3332 = vmatpush1.msra.mxu0 0.0
    %3333 = vmatprep.subr.mxu0 0.0
    %3334 = vmatpush1.msra.mxu0 0.0
    %3335 = vmatprep.subr.mxu0 0.0
    %3336 = vmatpush1.msra.mxu0 0.0
    %3337 = vmatprep.subr.mxu0 0.0
    %3338 = vmatpush1.msra.mxu0 0.0
    %3339 = vmatprep.subr.mxu0 0.0
    %3340 = vmatpush1.msra.mxu0 0.0
    %3341 = vmatprep.subr.mxu0 0.0
    %3342 = vmatpush1.msra.mxu0 0.0
    %3343 = vmatprep.subr.mxu0 0.0
    %3344 = vmatpush1.msra.mxu0 0.0
    %3345 = vmatprep.subr.mxu0 0.0
    %3346 = vmatpush1.msra.mxu0 0.0
    %3347 = vmatprep.subr.mxu0 0.0
    %3348 = vmatpush1.msra.mxu0 0.0
    %3349 = vmatprep.subr.mxu0 0.0
    %3350 = vmatpush1.msra.mxu0 0.0
    %3351 = vmatprep.subr.mxu0 0.0
    %3352 = vmatpush1.msra.mxu0 0.0
    %3353 = vmatprep.subr.mxu0 0.0
    %3354 = vmatpush1.msra.mxu0 0.0
    %3355 = vmatprep.subr.mxu0 0.0
    %3356 = vmatpush1.msra.mxu0 0.0
    %3357 = vmatprep.subr.mxu0 0.0
    %3358 = vmatpush1.msra.mxu0 0.0
    %3359 = vmatprep.subr.mxu0 0.0
    %3360 = vmatpush1.msra.mxu0 0.0
    %3361 = vmatprep.subr.mxu0 0.0
    %3362 = vmatpush1.msra.mxu0 0.0
    %3363 = vmatprep.mubr.f32.mxu0 0.0
    %3364 = vmatmul.mubr.f32.gmra.mrb[0].mxu0 %v2863
    %v3365 = vpop.f32.mrb[0].mxu0
    %v3366 = vadd.f32 0.0, %v3365
    %v3367 = vpop.f32.mrb[0].mxu0
    %v3368 = vadd.f32 0.0, %v3367
    %3369 = vdwg.mxu0
    %v3370 = vadd.f32 %v3160, %v3295
    %v3371 = vadd.f32 %v3161, %v3297
    %v3372 = vadd.f32 %v3162, %v3366
    %v3373 = vadd.f32 %v3163, %v3368
    %v3374 = vmul.f32 %v3370, 0.5
    %v3375 = vtanh.pop %v3374
    %v3376 = vmul.f32 %v3375, 0.5
    %v3377 = vadd.f32 %v3376, 0.5
    %v3378 = vmul.f32 %v3371, 0.5
    %v3379 = vtanh.pop %v3378
    %v3380 = vmul.f32 %v3379, 0.5
    %v3381 = vadd.f32 %v3380, 0.5
    %v3382 = vtanh.pop %v3372
    %v3383 = vmul.f32 %v3373, 0.5
    %v3384 = vtanh.pop %v3383
    %v3385 = vmul.f32 %v3384, 0.5
    %v3386 = vadd.f32 %v3385, 0.5
    %v3387 = vmul.f32 %v3381, %v2861
    %v3388 = vmul.f32 %v3377, %v3382
    %v3389 = vadd.f32 %v3387, %v3388
    %v3390 = vtanh.pop %v3389
    %v3391 = vmul.f32 %v3386, %v3390
    %v3392 = vld [vmem:[#allocation9] sm:$0xff]
    %v3393 = vld [vmem:[#allocation9 + $0x8] sm:$0xff]
    %v3394 = vld [vmem:[#allocation9 + $0x10] sm:$0xff]
    %v3395 = vld [vmem:[#allocation9 + $0x18] sm:$0xff]
    %v3396 = vld [vmem:[#allocation9 + $0x20] sm:$0xff]
    %v3397 = vld [vmem:[#allocation9 + $0x28] sm:$0xff]
    %v3398 = vld [vmem:[#allocation9 + $0x30] sm:$0xff]
    %v3399 = vld [vmem:[#allocation9 + $0x38] sm:$0xff]
    %v3400 = vld [vmem:[#allocation9 + $0x40] sm:$0xff]
    %v3401 = vld [vmem:[#allocation9 + $0x48] sm:$0xff]
    %v3402 = vld [vmem:[#allocation9 + $0x50] sm:$0xff]
    %v3403 = vld [vmem:[#allocation9 + $0x58] sm:$0xff]
    %v3404 = vld [vmem:[#allocation9 + $0x60] sm:$0xff]
    %v3405 = vld [vmem:[#allocation9 + $0x68] sm:$0xff]
    %v3406 = vld [vmem:[#allocation9 + $0x70] sm:$0xff]
    %v3407 = vld [vmem:[#allocation9 + $0x78] sm:$0xff]
    %v3408 = vld [vmem:[#allocation9 + $0x80] sm:$0xff]
    %v3409 = vld [vmem:[#allocation9 + $0x88] sm:$0xff]
    %v3410 = vld [vmem:[#allocation9 + $0x90] sm:$0xff]
    %v3411 = vld [vmem:[#allocation9 + $0x98] sm:$0xff]
    %v3412 = vld [vmem:[#allocation9 + $0xa0] sm:$0xff]
    %v3413 = vld [vmem:[#allocation9 + $0xa8] sm:$0xff]
    %v3414 = vld [vmem:[#allocation9 + $0xb0] sm:$0xff]
    %v3415 = vld [vmem:[#allocation9 + $0xb8] sm:$0xff]
    %v3416 = vld [vmem:[#allocation9 + $0xc0] sm:$0xff]
    %v3417 = vld [vmem:[#allocation9 + $0xc8] sm:$0xff]
    %v3418 = vld [vmem:[#allocation9 + $0xd0] sm:$0xff]
    %v3419 = vld [vmem:[#allocation9 + $0xd8] sm:$0xff]
    %v3420 = vld [vmem:[#allocation9 + $0xe0] sm:$0xff]
    %v3421 = vld [vmem:[#allocation9 + $0xe8] sm:$0xff]
    %v3422 = vld [vmem:[#allocation9 + $0xf0] sm:$0xff]
    %v3423 = vld [vmem:[#allocation9 + $0xf8] sm:$0xff]
    %v3424 = vld [vmem:[#allocation9 + $0x100] sm:$0xff]
    %v3425 = vld [vmem:[#allocation9 + $0x108] sm:$0xff]
    %v3426 = vld [vmem:[#allocation9 + $0x110] sm:$0xff]
    %v3427 = vld [vmem:[#allocation9 + $0x118] sm:$0xff]
    %v3428 = vld [vmem:[#allocation9 + $0x120] sm:$0xff]
    %v3429 = vld [vmem:[#allocation9 + $0x128] sm:$0xff]
    %v3430 = vld [vmem:[#allocation9 + $0x130] sm:$0xff]
    %v3431 = vld [vmem:[#allocation9 + $0x138] sm:$0xff]
    %v3432 = vld [vmem:[#allocation9 + $0x140] sm:$0xff]
    %v3433 = vld [vmem:[#allocation9 + $0x148] sm:$0xff]
    %v3434 = vld [vmem:[#allocation9 + $0x150] sm:$0xff]
    %v3435 = vld [vmem:[#allocation9 + $0x158] sm:$0xff]
    %v3436 = vld [vmem:[#allocation9 + $0x160] sm:$0xff]
    %v3437 = vld [vmem:[#allocation9 + $0x168] sm:$0xff]
    %v3438 = vld [vmem:[#allocation9 + $0x170] sm:$0xff]
    %v3439 = vld [vmem:[#allocation9 + $0x178] sm:$0xff]
    %v3440 = vld [vmem:[#allocation9 + $0x180] sm:$0xff]
    %v3441 = vld [vmem:[#allocation9 + $0x188] sm:$0xff]
    %v3442 = vld [vmem:[#allocation9 + $0x190] sm:$0xff]
    %v3443 = vld [vmem:[#allocation9 + $0x198] sm:$0xff]
    %v3444 = vld [vmem:[#allocation9 + $0x1a0] sm:$0xff]
    %v3445 = vld [vmem:[#allocation9 + $0x1a8] sm:$0xff]
    %v3446 = vld [vmem:[#allocation9 + $0x1b0] sm:$0xff]
    %v3447 = vld [vmem:[#allocation9 + $0x1b8] sm:$0xff]
    %v3448 = vld [vmem:[#allocation9 + $0x1c0] sm:$0xff]
    %v3449 = vld [vmem:[#allocation9 + $0x1c8] sm:$0xff]
    %v3450 = vld [vmem:[#allocation9 + $0x1d0] sm:$0xff]
    %v3451 = vld [vmem:[#allocation9 + $0x1d8] sm:$0xff]
    %v3452 = vld [vmem:[#allocation9 + $0x1e0] sm:$0xff]
    %v3453 = vld [vmem:[#allocation9 + $0x1e8] sm:$0xff]
    %v3454 = vld [vmem:[#allocation9 + $0x1f0] sm:$0xff]
    %v3455 = vld [vmem:[#allocation9 + $0x1f8] sm:$0xff]
    %v3456 = vld [vmem:[#allocation9 + $0x200] sm:$0xff]
    %v3457 = vld [vmem:[#allocation9 + $0x208] sm:$0xff]
    %v3458 = vld [vmem:[#allocation9 + $0x210] sm:$0xff]
    %v3459 = vld [vmem:[#allocation9 + $0x218] sm:$0xff]
    %v3460 = vld [vmem:[#allocation9 + $0x220] sm:$0xff]
    %v3461 = vld [vmem:[#allocation9 + $0x228] sm:$0xff]
    %v3462 = vld [vmem:[#allocation9 + $0x230] sm:$0xff]
    %v3463 = vld [vmem:[#allocation9 + $0x238] sm:$0xff]
    %v3464 = vld [vmem:[#allocation9 + $0x240] sm:$0xff]
    %v3465 = vld [vmem:[#allocation9 + $0x248] sm:$0xff]
    %v3466 = vld [vmem:[#allocation9 + $0x250] sm:$0xff]
    %v3467 = vld [vmem:[#allocation9 + $0x258] sm:$0xff]
    %v3468 = vld [vmem:[#allocation9 + $0x260] sm:$0xff]
    %v3469 = vld [vmem:[#allocation9 + $0x268] sm:$0xff]
    %v3470 = vld [vmem:[#allocation9 + $0x270] sm:$0xff]
    %v3471 = vld [vmem:[#allocation9 + $0x278] sm:$0xff]
    %v3472 = vld [vmem:[#allocation9 + $0x280] sm:$0xff]
    %v3473 = vld [vmem:[#allocation9 + $0x288] sm:$0xff]
    %v3474 = vld [vmem:[#allocation9 + $0x290] sm:$0xff]
    %v3475 = vld [vmem:[#allocation9 + $0x298] sm:$0xff]
    %v3476 = vld [vmem:[#allocation9 + $0x2a0] sm:$0xff]
    %v3477 = vld [vmem:[#allocation9 + $0x2a8] sm:$0xff]
    %v3478 = vld [vmem:[#allocation9 + $0x2b0] sm:$0xff]
    %v3479 = vld [vmem:[#allocation9 + $0x2b8] sm:$0xff]
    %v3480 = vld [vmem:[#allocation9 + $0x2c0] sm:$0xff]
    %v3481 = vld [vmem:[#allocation9 + $0x2c8] sm:$0xff]
    %v3482 = vld [vmem:[#allocation9 + $0x2d0] sm:$0xff]
    %v3483 = vld [vmem:[#allocation9 + $0x2d8] sm:$0xff]
    %v3484 = vld [vmem:[#allocation9 + $0x2e0] sm:$0xff]
    %v3485 = vld [vmem:[#allocation9 + $0x2e8] sm:$0xff]
    %v3486 = vld [vmem:[#allocation9 + $0x2f0] sm:$0xff]
    %v3487 = vld [vmem:[#allocation9 + $0x2f8] sm:$0xff]
    %v3488 = vld [vmem:[#allocation9 + $0x300] sm:$0xff]
    %v3489 = vld [vmem:[#allocation9 + $0x308] sm:$0xff]
    %v3490 = vld [vmem:[#allocation9 + $0x310] sm:$0xff]
    %v3491 = vld [vmem:[#allocation9 + $0x318] sm:$0xff]
    %v3492 = vld [vmem:[#allocation9 + $0x320] sm:$0xff]
    %v3493 = vld [vmem:[#allocation9 + $0x328] sm:$0xff]
    %v3494 = vld [vmem:[#allocation9 + $0x330] sm:$0xff]
    %v3495 = vld [vmem:[#allocation9 + $0x338] sm:$0xff]
    %v3496 = vld [vmem:[#allocation9 + $0x340] sm:$0xff]
    %v3497 = vld [vmem:[#allocation9 + $0x348] sm:$0xff]
    %v3498 = vld [vmem:[#allocation9 + $0x350] sm:$0xff]
    %v3499 = vld [vmem:[#allocation9 + $0x358] sm:$0xff]
    %v3500 = vld [vmem:[#allocation9 + $0x360] sm:$0xff]
    %v3501 = vld [vmem:[#allocation9 + $0x368] sm:$0xff]
    %v3502 = vld [vmem:[#allocation9 + $0x370] sm:$0xff]
    %v3503 = vld [vmem:[#allocation9 + $0x378] sm:$0xff]
    %v3504 = vld [vmem:[#allocation9 + $0x380] sm:$0xff]
    %v3505 = vld [vmem:[#allocation9 + $0x388] sm:$0xff]
    %v3506 = vld [vmem:[#allocation9 + $0x390] sm:$0xff]
    %v3507 = vld [vmem:[#allocation9 + $0x398] sm:$0xff]
    %v3508 = vld [vmem:[#allocation9 + $0x3a0] sm:$0xff]
    %v3509 = vld [vmem:[#allocation9 + $0x3a8] sm:$0xff]
    %v3510 = vld [vmem:[#allocation9 + $0x3b0] sm:$0xff]
    %v3511 = vld [vmem:[#allocation9 + $0x3b8] sm:$0xff]
    %v3512 = vld [vmem:[#allocation9 + $0x3c0] sm:$0xff]
    %v3513 = vld [vmem:[#allocation9 + $0x3c8] sm:$0xff]
    %v3514 = vld [vmem:[#allocation9 + $0x3d0] sm:$0xff]
    %v3515 = vld [vmem:[#allocation9 + $0x3d8] sm:$0xff]
    %v3516 = vld [vmem:[#allocation9 + $0x3e0] sm:$0xff]
    %v3517 = vld [vmem:[#allocation9 + $0x3e8] sm:$0xff]
    %v3518 = vld [vmem:[#allocation9 + $0x3f0] sm:$0xff]
    %v3519 = vld [vmem:[#allocation9 + $0x3f8] sm:$0xff]
    %3520 = vmatprep.subr.mxu0 %v3393
    %3521 = vmatpush1.msra.mxu0 %v3392
    %3522 = vmatprep.subr.mxu0 %v3397
    %3523 = vmatpush1.msra.mxu0 %v3396
    %3524 = vmatprep.subr.mxu0 %v3401
    %3525 = vmatpush1.msra.mxu0 %v3400
    %3526 = vmatprep.subr.mxu0 %v3405
    %3527 = vmatpush1.msra.mxu0 %v3404
    %3528 = vmatprep.subr.mxu0 %v3409
    %3529 = vmatpush1.msra.mxu0 %v3408
    %3530 = vmatprep.subr.mxu0 %v3413
    %3531 = vmatpush1.msra.mxu0 %v3412
    %3532 = vmatprep.subr.mxu0 %v3417
    %3533 = vmatpush1.msra.mxu0 %v3416
    %3534 = vmatprep.subr.mxu0 %v3421
    %3535 = vmatpush1.msra.mxu0 %v3420
    %3536 = vmatprep.subr.mxu0 %v3425
    %3537 = vmatpush1.msra.mxu0 %v3424
    %3538 = vmatprep.subr.mxu0 %v3429
    %3539 = vmatpush1.msra.mxu0 %v3428
    %3540 = vmatprep.subr.mxu0 %v3433
    %3541 = vmatpush1.msra.mxu0 %v3432
    %3542 = vmatprep.subr.mxu0 %v3437
    %3543 = vmatpush1.msra.mxu0 %v3436
    %3544 = vmatprep.subr.mxu0 %v3441
    %3545 = vmatpush1.msra.mxu0 %v3440
    %3546 = vmatprep.subr.mxu0 %v3445
    %3547 = vmatpush1.msra.mxu0 %v3444
    %3548 = vmatprep.subr.mxu0 %v3449
    %3549 = vmatpush1.msra.mxu0 %v3448
    %3550 = vmatprep.subr.mxu0 %v3453
    %3551 = vmatpush1.msra.mxu0 %v3452
    %3552 = vmatprep.subr.mxu0 %v3457
    %3553 = vmatpush1.msra.mxu0 %v3456
    %3554 = vmatprep.subr.mxu0 %v3461
    %3555 = vmatpush1.msra.mxu0 %v3460
    %3556 = vmatprep.subr.mxu0 %v3465
    %3557 = vmatpush1.msra.mxu0 %v3464
    %3558 = vmatprep.subr.mxu0 %v3469
    %3559 = vmatpush1.msra.mxu0 %v3468
    %3560 = vmatprep.subr.mxu0 %v3473
    %3561 = vmatpush1.msra.mxu0 %v3472
    %3562 = vmatprep.subr.mxu0 %v3477
    %3563 = vmatpush1.msra.mxu0 %v3476
    %3564 = vmatprep.subr.mxu0 %v3481
    %3565 = vmatpush1.msra.mxu0 %v3480
    %3566 = vmatprep.subr.mxu0 %v3485
    %3567 = vmatpush1.msra.mxu0 %v3484
    %3568 = vmatprep.subr.mxu0 %v3489
    %3569 = vmatpush1.msra.mxu0 %v3488
    %3570 = vmatprep.subr.mxu0 %v3493
    %3571 = vmatpush1.msra.mxu0 %v3492
    %3572 = vmatprep.subr.mxu0 %v3497
    %3573 = vmatpush1.msra.mxu0 %v3496
    %3574 = vmatprep.subr.mxu0 %v3501
    %3575 = vmatpush1.msra.mxu0 %v3500
    %3576 = vmatprep.subr.mxu0 %v3505
    %3577 = vmatpush1.msra.mxu0 %v3504
    %3578 = vmatprep.subr.mxu0 %v3509
    %3579 = vmatpush1.msra.mxu0 %v3508
    %3580 = vmatprep.subr.mxu0 %v3513
    %3581 = vmatpush1.msra.mxu0 %v3512
    %3582 = vmatprep.subr.mxu0 %v3517
    %3583 = vmatpush1.msra.mxu0 %v3516
    %3584 = vmatprep.mubr.f32.mxu0 %v3155
    %3585 = vmatmul.mubr.f32.gmra.mrb[0].mxu0 %v3391
    %v3586 = vpop.f32.mrb[0].mxu0
    %v3587 = vadd.f32 0.0, %v3586
    %v3588 = vpop.f32.mrb[0].mxu0
    %v3589 = vadd.f32 0.0, %v3588
    %3590 = vdwg.mxu0
    %3591 = vmatprep.subr.mxu0 %v3395
    %3592 = vmatpush1.msra.mxu0 %v3394
    %3593 = vmatprep.subr.mxu0 %v3399
    %3594 = vmatpush1.msra.mxu0 %v3398
    %3595 = vmatprep.subr.mxu0 %v3403
    %3596 = vmatpush1.msra.mxu0 %v3402
    %3597 = vmatprep.subr.mxu0 %v3407
    %3598 = vmatpush1.msra.mxu0 %v3406
    %3599 = vmatprep.subr.mxu0 %v3411
    %3600 = vmatpush1.msra.mxu0 %v3410
    %3601 = vmatprep.subr.mxu0 %v3415
    %3602 = vmatpush1.msra.mxu0 %v3414
    %3603 = vmatprep.subr.mxu0 %v3419
    %3604 = vmatpush1.msra.mxu0 %v3418
    %3605 = vmatprep.subr.mxu0 %v3423
    %3606 = vmatpush1.msra.mxu0 %v3422
    %3607 = vmatprep.subr.mxu0 %v3427
    %3608 = vmatpush1.msra.mxu0 %v3426
    %3609 = vmatprep.subr.mxu0 %v3431
    %3610 = vmatpush1.msra.mxu0 %v3430
    %3611 = vmatprep.subr.mxu0 %v3435
    %3612 = vmatpush1.msra.mxu0 %v3434
    %3613 = vmatprep.subr.mxu0 %v3439
    %3614 = vmatpush1.msra.mxu0 %v3438
    %3615 = vmatprep.subr.mxu0 %v3443
    %3616 = vmatpush1.msra.mxu0 %v3442
    %3617 = vmatprep.subr.mxu0 %v3447
    %3618 = vmatpush1.msra.mxu0 %v3446
    %3619 = vmatprep.subr.mxu0 %v3451
    %3620 = vmatpush1.msra.mxu0 %v3450
    %3621 = vmatprep.subr.mxu0 %v3455
    %3622 = vmatpush1.msra.mxu0 %v3454
    %3623 = vmatprep.subr.mxu0 %v3459
    %3624 = vmatpush1.msra.mxu0 %v3458
    %3625 = vmatprep.subr.mxu0 %v3463
    %3626 = vmatpush1.msra.mxu0 %v3462
    %3627 = vmatprep.subr.mxu0 %v3467
    %3628 = vmatpush1.msra.mxu0 %v3466
    %3629 = vmatprep.subr.mxu0 %v3471
    %3630 = vmatpush1.msra.mxu0 %v3470
    %3631 = vmatprep.subr.mxu0 %v3475
    %3632 = vmatpush1.msra.mxu0 %v3474
    %3633 = vmatprep.subr.mxu0 %v3479
    %3634 = vmatpush1.msra.mxu0 %v3478
    %3635 = vmatprep.subr.mxu0 %v3483
    %3636 = vmatpush1.msra.mxu0 %v3482
    %3637 = vmatprep.subr.mxu0 %v3487
    %3638 = vmatpush1.msra.mxu0 %v3486
    %3639 = vmatprep.subr.mxu0 %v3491
    %3640 = vmatpush1.msra.mxu0 %v3490
    %3641 = vmatprep.subr.mxu0 %v3495
    %3642 = vmatpush1.msra.mxu0 %v3494
    %3643 = vmatprep.subr.mxu0 %v3499
    %3644 = vmatpush1.msra.mxu0 %v3498
    %3645 = vmatprep.subr.mxu0 %v3503
    %3646 = vmatpush1.msra.mxu0 %v3502
    %3647 = vmatprep.subr.mxu0 %v3507
    %3648 = vmatpush1.msra.mxu0 %v3506
    %3649 = vmatprep.subr.mxu0 %v3511
    %3650 = vmatpush1.msra.mxu0 %v3510
    %3651 = vmatprep.subr.mxu0 %v3515
    %3652 = vmatpush1.msra.mxu0 %v3514
    %3653 = vmatprep.subr.mxu0 %v3519
    %3654 = vmatpush1.msra.mxu0 %v3518
    %3655 = vmatprep.mubr.f32.mxu0 %v3155
    %3656 = vmatmul.mubr.f32.gmra.mrb[0].mxu0 %v3391
    %v3657 = vpop.f32.mrb[0].mxu0
    %v3658 = vadd.f32 0.0, %v3657
    %v3659 = vpop.f32.mrb[0].mxu0
    %v3660 = vadd.f32 0.0, %v3659
    %3661 = vdwg.mxu0
    %v3662 = vadd.f32 %v500, %v3587
    %v3663 = vadd.f32 %v504, %v3589
    %v3664 = vadd.f32 %v508, %v3658
    %v3665 = vadd.f32 %v512, %v3660
    %v3666 = vmul.f32 %v3662, 0.5
    %v3667 = vtanh.pop %v3666
    %v3668 = vmul.f32 %v3667, 0.5
    %v3669 = vadd.f32 %v3668, 0.5
    %v3670 = vmul.f32 %v3663, 0.5
    %v3671 = vtanh.pop %v3670
    %v3672 = vmul.f32 %v3671, 0.5
    %v3673 = vadd.f32 %v3672, 0.5
    %v3674 = vtanh.pop %v3664
    %v3675 = vmul.f32 %v3665, 0.5
    %v3676 = vtanh.pop %v3675
    %v3677 = vmul.f32 %v3676, 0.5
    %v3678 = vadd.f32 %v3677, 0.5
    %v3679 = vmul.f32 %v3673, %v3153
    %v3680 = vmul.f32 %v3669, %v3674
    %v3681 = vadd.f32 %v3679, %v3680
    %v3682 = vtanh.pop %v3681
    %v3683 = vmul.f32 %v3678, %v3682
    %3684 = vst [vmem:[#allocation3 + $0x5] sm:$0x1] %v3683
    %s3685 = smul.u32 6, 4
    %s3686 = smul.addr %s3685, 8
    %s3687 = scalar_lea.vmem [#allocation2], %s3686
    %v3688 = vld [vmem:[%s3687] sm:$0xff]
    %v3689 = vld [vmem:[%s3687 + $0x8] sm:$0xff]
    %v3690 = vld [vmem:[%s3687 + $0x10] sm:$0xff]
    %v3691 = vld [vmem:[%s3687 + $0x18] sm:$0xff]
    %v3692 = vld [vmem:[#allocation7] sm:$0xff]
    %v3693 = vld [vmem:[#allocation7 + $0x8] sm:$0xff]
    %v3694 = vld [vmem:[#allocation7 + $0x10] sm:$0xff]
    %v3695 = vld [vmem:[#allocation7 + $0x18] sm:$0xff]
    %v3696 = vld [vmem:[#allocation7 + $0x20] sm:$0xff]
    %v3697 = vld [vmem:[#allocation7 + $0x28] sm:$0xff]
    %v3698 = vld [vmem:[#allocation7 + $0x30] sm:$0xff]
    %v3699 = vld [vmem:[#allocation7 + $0x38] sm:$0xff]
    %v3700 = vld [vmem:[#allocation7 + $0x40] sm:$0xff]
    %v3701 = vld [vmem:[#allocation7 + $0x48] sm:$0xff]
    %v3702 = vld [vmem:[#allocation7 + $0x50] sm:$0xff]
    %v3703 = vld [vmem:[#allocation7 + $0x58] sm:$0xff]
    %v3704 = vld [vmem:[#allocation7 + $0x60] sm:$0xff]
    %v3705 = vld [vmem:[#allocation7 + $0x68] sm:$0xff]
    %v3706 = vld [vmem:[#allocation7 + $0x70] sm:$0xff]
    %v3707 = vld [vmem:[#allocation7 + $0x78] sm:$0xff]
    %v3708 = vld [vmem:[#allocation7 + $0x80] sm:$0xff]
    %v3709 = vld [vmem:[#allocation7 + $0x88] sm:$0xff]
    %v3710 = vld [vmem:[#allocation7 + $0x90] sm:$0xff]
    %v3711 = vld [vmem:[#allocation7 + $0x98] sm:$0xff]
    %v3712 = vld [vmem:[#allocation7 + $0xa0] sm:$0xff]
    %v3713 = vld [vmem:[#allocation7 + $0xa8] sm:$0xff]
    %v3714 = vld [vmem:[#allocation7 + $0xb0] sm:$0xff]
    %v3715 = vld [vmem:[#allocation7 + $0xb8] sm:$0xff]
    %v3716 = vld [vmem:[#allocation7 + $0xc0] sm:$0xff]
    %v3717 = vld [vmem:[#allocation7 + $0xc8] sm:$0xff]
    %v3718 = vld [vmem:[#allocation7 + $0xd0] sm:$0xff]
    %v3719 = vld [vmem:[#allocation7 + $0xd8] sm:$0xff]
    %v3720 = vld [vmem:[#allocation7 + $0xe0] sm:$0xff]
    %v3721 = vld [vmem:[#allocation7 + $0xe8] sm:$0xff]
    %v3722 = vld [vmem:[#allocation7 + $0xf0] sm:$0xff]
    %v3723 = vld [vmem:[#allocation7 + $0xf8] sm:$0xff]
    %v3724 = vld [vmem:[#allocation7 + $0x100] sm:$0xff]
    %v3725 = vld [vmem:[#allocation7 + $0x108] sm:$0xff]
    %v3726 = vld [vmem:[#allocation7 + $0x110] sm:$0xff]
    %v3727 = vld [vmem:[#allocation7 + $0x118] sm:$0xff]
    %v3728 = vld [vmem:[#allocation7 + $0x120] sm:$0xff]
    %v3729 = vld [vmem:[#allocation7 + $0x128] sm:$0xff]
    %v3730 = vld [vmem:[#allocation7 + $0x130] sm:$0xff]
    %v3731 = vld [vmem:[#allocation7 + $0x138] sm:$0xff]
    %v3732 = vld [vmem:[#allocation7 + $0x140] sm:$0xff]
    %v3733 = vld [vmem:[#allocation7 + $0x148] sm:$0xff]
    %v3734 = vld [vmem:[#allocation7 + $0x150] sm:$0xff]
    %v3735 = vld [vmem:[#allocation7 + $0x158] sm:$0xff]
    %v3736 = vld [vmem:[#allocation7 + $0x160] sm:$0xff]
    %v3737 = vld [vmem:[#allocation7 + $0x168] sm:$0xff]
    %v3738 = vld [vmem:[#allocation7 + $0x170] sm:$0xff]
    %v3739 = vld [vmem:[#allocation7 + $0x178] sm:$0xff]
    %v3740 = vld [vmem:[#allocation7 + $0x180] sm:$0xff]
    %v3741 = vld [vmem:[#allocation7 + $0x188] sm:$0xff]
    %v3742 = vld [vmem:[#allocation7 + $0x190] sm:$0xff]
    %v3743 = vld [vmem:[#allocation7 + $0x198] sm:$0xff]
    %v3744 = vld [vmem:[#allocation7 + $0x1a0] sm:$0xff]
    %v3745 = vld [vmem:[#allocation7 + $0x1a8] sm:$0xff]
    %v3746 = vld [vmem:[#allocation7 + $0x1b0] sm:$0xff]
    %v3747 = vld [vmem:[#allocation7 + $0x1b8] sm:$0xff]
    %v3748 = vld [vmem:[#allocation7 + $0x1c0] sm:$0xff]
    %v3749 = vld [vmem:[#allocation7 + $0x1c8] sm:$0xff]
    %v3750 = vld [vmem:[#allocation7 + $0x1d0] sm:$0xff]
    %v3751 = vld [vmem:[#allocation7 + $0x1d8] sm:$0xff]
    %v3752 = vld [vmem:[#allocation7 + $0x1e0] sm:$0xff]
    %v3753 = vld [vmem:[#allocation7 + $0x1e8] sm:$0xff]
    %v3754 = vld [vmem:[#allocation7 + $0x1f0] sm:$0xff]
    %v3755 = vld [vmem:[#allocation7 + $0x1f8] sm:$0xff]
    %3756 = vmatprep.subr.mxu0 %v3693
    %3757 = vmatpush1.msra.mxu0 %v3692
    %3758 = vmatprep.subr.mxu0 %v3697
    %3759 = vmatpush1.msra.mxu0 %v3696
    %3760 = vmatprep.subr.mxu0 %v3701
    %3761 = vmatpush1.msra.mxu0 %v3700
    %3762 = vmatprep.subr.mxu0 %v3705
    %3763 = vmatpush1.msra.mxu0 %v3704
    %3764 = vmatprep.subr.mxu0 %v3709
    %3765 = vmatpush1.msra.mxu0 %v3708
    %3766 = vmatprep.subr.mxu0 %v3713
    %3767 = vmatpush1.msra.mxu0 %v3712
    %3768 = vmatprep.subr.mxu0 %v3717
    %3769 = vmatpush1.msra.mxu0 %v3716
    %3770 = vmatprep.subr.mxu0 %v3721
    %3771 = vmatpush1.msra.mxu0 %v3720
    %3772 = vmatprep.subr.mxu0 %v3725
    %3773 = vmatpush1.msra.mxu0 %v3724
    %3774 = vmatprep.subr.mxu0 %v3729
    %3775 = vmatpush1.msra.mxu0 %v3728
    %3776 = vmatprep.subr.mxu0 %v3733
    %3777 = vmatpush1.msra.mxu0 %v3732
    %3778 = vmatprep.subr.mxu0 %v3737
    %3779 = vmatpush1.msra.mxu0 %v3736
    %3780 = vmatprep.subr.mxu0 %v3741
    %3781 = vmatpush1.msra.mxu0 %v3740
    %3782 = vmatprep.subr.mxu0 %v3745
    %3783 = vmatpush1.msra.mxu0 %v3744
    %3784 = vmatprep.subr.mxu0 %v3749
    %3785 = vmatpush1.msra.mxu0 %v3748
    %3786 = vmatprep.subr.mxu0 %v3753
    %3787 = vmatpush1.msra.mxu0 %v3752
    %3788 = vmatprep.subr.mxu0 0.0
    %3789 = vmatpush1.msra.mxu0 0.0
    %3790 = vmatprep.subr.mxu0 0.0
    %3791 = vmatpush1.msra.mxu0 0.0
    %3792 = vmatprep.subr.mxu0 0.0
    %3793 = vmatpush1.msra.mxu0 0.0
    %3794 = vmatprep.subr.mxu0 0.0
    %3795 = vmatpush1.msra.mxu0 0.0
    %3796 = vmatprep.subr.mxu0 0.0
    %3797 = vmatpush1.msra.mxu0 0.0
    %3798 = vmatprep.subr.mxu0 0.0
    %3799 = vmatpush1.msra.mxu0 0.0
    %3800 = vmatprep.subr.mxu0 0.0
    %3801 = vmatpush1.msra.mxu0 0.0
    %3802 = vmatprep.subr.mxu0 0.0
    %3803 = vmatpush1.msra.mxu0 0.0
    %3804 = vmatprep.subr.mxu0 0.0
    %3805 = vmatpush1.msra.mxu0 0.0
    %3806 = vmatprep.subr.mxu0 0.0
    %3807 = vmatpush1.msra.mxu0 0.0
    %3808 = vmatprep.subr.mxu0 0.0
    %3809 = vmatpush1.msra.mxu0 0.0
    %3810 = vmatprep.subr.mxu0 0.0
    %3811 = vmatpush1.msra.mxu0 0.0
    %3812 = vmatprep.subr.mxu0 0.0
    %3813 = vmatpush1.msra.mxu0 0.0
    %3814 = vmatprep.subr.mxu0 0.0
    %3815 = vmatpush1.msra.mxu0 0.0
    %3816 = vmatprep.subr.mxu0 0.0
    %3817 = vmatpush1.msra.mxu0 0.0
    %3818 = vmatprep.subr.mxu0 0.0
    %3819 = vmatpush1.msra.mxu0 0.0
    %3820 = vmatprep.mubr.f32.mxu0 0.0
    %3821 = vmatmul.mubr.f32.gmra.mrb[0].mxu0 %v3391
    %v3822 = vpop.f32.mrb[0].mxu0
    %v3823 = vadd.f32 0.0, %v3822
    %v3824 = vpop.f32.mrb[0].mxu0
    %v3825 = vadd.f32 0.0, %v3824
    %3826 = vdwg.mxu0
    %3827 = vmatprep.subr.mxu0 %v3695
    %3828 = vmatpush1.msra.mxu0 %v3694
    %3829 = vmatprep.subr.mxu0 %v3699
    %3830 = vmatpush1.msra.mxu0 %v3698
    %3831 = vmatprep.subr.mxu0 %v3703
    %3832 = vmatpush1.msra.mxu0 %v3702
    %3833 = vmatprep.subr.mxu0 %v3707
    %3834 = vmatpush1.msra.mxu0 %v3706
    %3835 = vmatprep.subr.mxu0 %v3711
    %3836 = vmatpush1.msra.mxu0 %v3710
    %3837 = vmatprep.subr.mxu0 %v3715
    %3838 = vmatpush1.msra.mxu0 %v3714
    %3839 = vmatprep.subr.mxu0 %v3719
    %3840 = vmatpush1.msra.mxu0 %v3718
    %3841 = vmatprep.subr.mxu0 %v3723
    %3842 = vmatpush1.msra.mxu0 %v3722
    %3843 = vmatprep.subr.mxu0 %v3727
    %3844 = vmatpush1.msra.mxu0 %v3726
    %3845 = vmatprep.subr.mxu0 %v3731
    %3846 = vmatpush1.msra.mxu0 %v3730
    %3847 = vmatprep.subr.mxu0 %v3735
    %3848 = vmatpush1.msra.mxu0 %v3734
    %3849 = vmatprep.subr.mxu0 %v3739
    %3850 = vmatpush1.msra.mxu0 %v3738
    %3851 = vmatprep.subr.mxu0 %v3743
    %3852 = vmatpush1.msra.mxu0 %v3742
    %3853 = vmatprep.subr.mxu0 %v3747
    %3854 = vmatpush1.msra.mxu0 %v3746
    %3855 = vmatprep.subr.mxu0 %v3751
    %3856 = vmatpush1.msra.mxu0 %v3750
    %3857 = vmatprep.subr.mxu0 %v3755
    %3858 = vmatpush1.msra.mxu0 %v3754
    %3859 = vmatprep.subr.mxu0 0.0
    %3860 = vmatpush1.msra.mxu0 0.0
    %3861 = vmatprep.subr.mxu0 0.0
    %3862 = vmatpush1.msra.mxu0 0.0
    %3863 = vmatprep.subr.mxu0 0.0
    %3864 = vmatpush1.msra.mxu0 0.0
    %3865 = vmatprep.subr.mxu0 0.0
    %3866 = vmatpush1.msra.mxu0 0.0
    %3867 = vmatprep.subr.mxu0 0.0
    %3868 = vmatpush1.msra.mxu0 0.0
    %3869 = vmatprep.subr.mxu0 0.0
    %3870 = vmatpush1.msra.mxu0 0.0
    %3871 = vmatprep.subr.mxu0 0.0
    %3872 = vmatpush1.msra.mxu0 0.0
    %3873 = vmatprep.subr.mxu0 0.0
    %3874 = vmatpush1.msra.mxu0 0.0
    %3875 = vmatprep.subr.mxu0 0.0
    %3876 = vmatpush1.msra.mxu0 0.0
    %3877 = vmatprep.subr.mxu0 0.0
    %3878 = vmatpush1.msra.mxu0 0.0
    %3879 = vmatprep.subr.mxu0 0.0
    %3880 = vmatpush1.msra.mxu0 0.0
    %3881 = vmatprep.subr.mxu0 0.0
    %3882 = vmatpush1.msra.mxu0 0.0
    %3883 = vmatprep.subr.mxu0 0.0
    %3884 = vmatpush1.msra.mxu0 0.0
    %3885 = vmatprep.subr.mxu0 0.0
    %3886 = vmatpush1.msra.mxu0 0.0
    %3887 = vmatprep.subr.mxu0 0.0
    %3888 = vmatpush1.msra.mxu0 0.0
    %3889 = vmatprep.subr.mxu0 0.0
    %3890 = vmatpush1.msra.mxu0 0.0
    %3891 = vmatprep.mubr.f32.mxu0 0.0
    %3892 = vmatmul.mubr.f32.gmra.mrb[0].mxu0 %v3391
    %v3893 = vpop.f32.mrb[0].mxu0
    %v3894 = vadd.f32 0.0, %v3893
    %v3895 = vpop.f32.mrb[0].mxu0
    %v3896 = vadd.f32 0.0, %v3895
    %3897 = vdwg.mxu0
    %v3898 = vadd.f32 %v3688, %v3823
    %v3899 = vadd.f32 %v3689, %v3825
    %v3900 = vadd.f32 %v3690, %v3894
    %v3901 = vadd.f32 %v3691, %v3896
    %v3902 = vmul.f32 %v3898, 0.5
    %v3903 = vtanh.pop %v3902
    %v3904 = vmul.f32 %v3903, 0.5
    %v3905 = vadd.f32 %v3904, 0.5
    %v3906 = vmul.f32 %v3899, 0.5
    %v3907 = vtanh.pop %v3906
    %v3908 = vmul.f32 %v3907, 0.5
    %v3909 = vadd.f32 %v3908, 0.5
    %v3910 = vtanh.pop %v3900
    %v3911 = vmul.f32 %v3901, 0.5
    %v3912 = vtanh.pop %v3911
    %v3913 = vmul.f32 %v3912, 0.5
    %v3914 = vadd.f32 %v3913, 0.5
    %v3915 = vmul.f32 %v3909, %v3389
    %v3916 = vmul.f32 %v3905, %v3910
    %v3917 = vadd.f32 %v3915, %v3916
    %v3918 = vtanh.pop %v3917
    %v3919 = vmul.f32 %v3914, %v3918
    %v3920 = vld [vmem:[#allocation9] sm:$0xff]
    %v3921 = vld [vmem:[#allocation9 + $0x8] sm:$0xff]
    %v3922 = vld [vmem:[#allocation9 + $0x10] sm:$0xff]
    %v3923 = vld [vmem:[#allocation9 + $0x18] sm:$0xff]
    %v3924 = vld [vmem:[#allocation9 + $0x20] sm:$0xff]
    %v3925 = vld [vmem:[#allocation9 + $0x28] sm:$0xff]
    %v3926 = vld [vmem:[#allocation9 + $0x30] sm:$0xff]
    %v3927 = vld [vmem:[#allocation9 + $0x38] sm:$0xff]
    %v3928 = vld [vmem:[#allocation9 + $0x40] sm:$0xff]
    %v3929 = vld [vmem:[#allocation9 + $0x48] sm:$0xff]
    %v3930 = vld [vmem:[#allocation9 + $0x50] sm:$0xff]
    %v3931 = vld [vmem:[#allocation9 + $0x58] sm:$0xff]
    %v3932 = vld [vmem:[#allocation9 + $0x60] sm:$0xff]
    %v3933 = vld [vmem:[#allocation9 + $0x68] sm:$0xff]
    %v3934 = vld [vmem:[#allocation9 + $0x70] sm:$0xff]
    %v3935 = vld [vmem:[#allocation9 + $0x78] sm:$0xff]
    %v3936 = vld [vmem:[#allocation9 + $0x80] sm:$0xff]
    %v3937 = vld [vmem:[#allocation9 + $0x88] sm:$0xff]
    %v3938 = vld [vmem:[#allocation9 + $0x90] sm:$0xff]
    %v3939 = vld [vmem:[#allocation9 + $0x98] sm:$0xff]
    %v3940 = vld [vmem:[#allocation9 + $0xa0] sm:$0xff]
    %v3941 = vld [vmem:[#allocation9 + $0xa8] sm:$0xff]
    %v3942 = vld [vmem:[#allocation9 + $0xb0] sm:$0xff]
    %v3943 = vld [vmem:[#allocation9 + $0xb8] sm:$0xff]
    %v3944 = vld [vmem:[#allocation9 + $0xc0] sm:$0xff]
    %v3945 = vld [vmem:[#allocation9 + $0xc8] sm:$0xff]
    %v3946 = vld [vmem:[#allocation9 + $0xd0] sm:$0xff]
    %v3947 = vld [vmem:[#allocation9 + $0xd8] sm:$0xff]
    %v3948 = vld [vmem:[#allocation9 + $0xe0] sm:$0xff]
    %v3949 = vld [vmem:[#allocation9 + $0xe8] sm:$0xff]
    %v3950 = vld [vmem:[#allocation9 + $0xf0] sm:$0xff]
    %v3951 = vld [vmem:[#allocation9 + $0xf8] sm:$0xff]
    %v3952 = vld [vmem:[#allocation9 + $0x100] sm:$0xff]
    %v3953 = vld [vmem:[#allocation9 + $0x108] sm:$0xff]
    %v3954 = vld [vmem:[#allocation9 + $0x110] sm:$0xff]
    %v3955 = vld [vmem:[#allocation9 + $0x118] sm:$0xff]
    %v3956 = vld [vmem:[#allocation9 + $0x120] sm:$0xff]
    %v3957 = vld [vmem:[#allocation9 + $0x128] sm:$0xff]
    %v3958 = vld [vmem:[#allocation9 + $0x130] sm:$0xff]
    %v3959 = vld [vmem:[#allocation9 + $0x138] sm:$0xff]
    %v3960 = vld [vmem:[#allocation9 + $0x140] sm:$0xff]
    %v3961 = vld [vmem:[#allocation9 + $0x148] sm:$0xff]
    %v3962 = vld [vmem:[#allocation9 + $0x150] sm:$0xff]
    %v3963 = vld [vmem:[#allocation9 + $0x158] sm:$0xff]
    %v3964 = vld [vmem:[#allocation9 + $0x160] sm:$0xff]
    %v3965 = vld [vmem:[#allocation9 + $0x168] sm:$0xff]
    %v3966 = vld [vmem:[#allocation9 + $0x170] sm:$0xff]
    %v3967 = vld [vmem:[#allocation9 + $0x178] sm:$0xff]
    %v3968 = vld [vmem:[#allocation9 + $0x180] sm:$0xff]
    %v3969 = vld [vmem:[#allocation9 + $0x188] sm:$0xff]
    %v3970 = vld [vmem:[#allocation9 + $0x190] sm:$0xff]
    %v3971 = vld [vmem:[#allocation9 + $0x198] sm:$0xff]
    %v3972 = vld [vmem:[#allocation9 + $0x1a0] sm:$0xff]
    %v3973 = vld [vmem:[#allocation9 + $0x1a8] sm:$0xff]
    %v3974 = vld [vmem:[#allocation9 + $0x1b0] sm:$0xff]
    %v3975 = vld [vmem:[#allocation9 + $0x1b8] sm:$0xff]
    %v3976 = vld [vmem:[#allocation9 + $0x1c0] sm:$0xff]
    %v3977 = vld [vmem:[#allocation9 + $0x1c8] sm:$0xff]
    %v3978 = vld [vmem:[#allocation9 + $0x1d0] sm:$0xff]
    %v3979 = vld [vmem:[#allocation9 + $0x1d8] sm:$0xff]
    %v3980 = vld [vmem:[#allocation9 + $0x1e0] sm:$0xff]
    %v3981 = vld [vmem:[#allocation9 + $0x1e8] sm:$0xff]
    %v3982 = vld [vmem:[#allocation9 + $0x1f0] sm:$0xff]
    %v3983 = vld [vmem:[#allocation9 + $0x1f8] sm:$0xff]
    %v3984 = vld [vmem:[#allocation9 + $0x200] sm:$0xff]
    %v3985 = vld [vmem:[#allocation9 + $0x208] sm:$0xff]
    %v3986 = vld [vmem:[#allocation9 + $0x210] sm:$0xff]
    %v3987 = vld [vmem:[#allocation9 + $0x218] sm:$0xff]
    %v3988 = vld [vmem:[#allocation9 + $0x220] sm:$0xff]
    %v3989 = vld [vmem:[#allocation9 + $0x228] sm:$0xff]
    %v3990 = vld [vmem:[#allocation9 + $0x230] sm:$0xff]
    %v3991 = vld [vmem:[#allocation9 + $0x238] sm:$0xff]
    %v3992 = vld [vmem:[#allocation9 + $0x240] sm:$0xff]
    %v3993 = vld [vmem:[#allocation9 + $0x248] sm:$0xff]
    %v3994 = vld [vmem:[#allocation9 + $0x250] sm:$0xff]
    %v3995 = vld [vmem:[#allocation9 + $0x258] sm:$0xff]
    %v3996 = vld [vmem:[#allocation9 + $0x260] sm:$0xff]
    %v3997 = vld [vmem:[#allocation9 + $0x268] sm:$0xff]
    %v3998 = vld [vmem:[#allocation9 + $0x270] sm:$0xff]
    %v3999 = vld [vmem:[#allocation9 + $0x278] sm:$0xff]
    %v4000 = vld [vmem:[#allocation9 + $0x280] sm:$0xff]
    %v4001 = vld [vmem:[#allocation9 + $0x288] sm:$0xff]
    %v4002 = vld [vmem:[#allocation9 + $0x290] sm:$0xff]
    %v4003 = vld [vmem:[#allocation9 + $0x298] sm:$0xff]
    %v4004 = vld [vmem:[#allocation9 + $0x2a0] sm:$0xff]
    %v4005 = vld [vmem:[#allocation9 + $0x2a8] sm:$0xff]
    %v4006 = vld [vmem:[#allocation9 + $0x2b0] sm:$0xff]
    %v4007 = vld [vmem:[#allocation9 + $0x2b8] sm:$0xff]
    %v4008 = vld [vmem:[#allocation9 + $0x2c0] sm:$0xff]
    %v4009 = vld [vmem:[#allocation9 + $0x2c8] sm:$0xff]
    %v4010 = vld [vmem:[#allocation9 + $0x2d0] sm:$0xff]
    %v4011 = vld [vmem:[#allocation9 + $0x2d8] sm:$0xff]
    %v4012 = vld [vmem:[#allocation9 + $0x2e0] sm:$0xff]
    %v4013 = vld [vmem:[#allocation9 + $0x2e8] sm:$0xff]
    %v4014 = vld [vmem:[#allocation9 + $0x2f0] sm:$0xff]
    %v4015 = vld [vmem:[#allocation9 + $0x2f8] sm:$0xff]
    %v4016 = vld [vmem:[#allocation9 + $0x300] sm:$0xff]
    %v4017 = vld [vmem:[#allocation9 + $0x308] sm:$0xff]
    %v4018 = vld [vmem:[#allocation9 + $0x310] sm:$0xff]
    %v4019 = vld [vmem:[#allocation9 + $0x318] sm:$0xff]
    %v4020 = vld [vmem:[#allocation9 + $0x320] sm:$0xff]
    %v4021 = vld [vmem:[#allocation9 + $0x328] sm:$0xff]
    %v4022 = vld [vmem:[#allocation9 + $0x330] sm:$0xff]
    %v4023 = vld [vmem:[#allocation9 + $0x338] sm:$0xff]
    %v4024 = vld [vmem:[#allocation9 + $0x340] sm:$0xff]
    %v4025 = vld [vmem:[#allocation9 + $0x348] sm:$0xff]
    %v4026 = vld [vmem:[#allocation9 + $0x350] sm:$0xff]
    %v4027 = vld [vmem:[#allocation9 + $0x358] sm:$0xff]
    %v4028 = vld [vmem:[#allocation9 + $0x360] sm:$0xff]
    %v4029 = vld [vmem:[#allocation9 + $0x368] sm:$0xff]
    %v4030 = vld [vmem:[#allocation9 + $0x370] sm:$0xff]
    %v4031 = vld [vmem:[#allocation9 + $0x378] sm:$0xff]
    %v4032 = vld [vmem:[#allocation9 + $0x380] sm:$0xff]
    %v4033 = vld [vmem:[#allocation9 + $0x388] sm:$0xff]
    %v4034 = vld [vmem:[#allocation9 + $0x390] sm:$0xff]
    %v4035 = vld [vmem:[#allocation9 + $0x398] sm:$0xff]
    %v4036 = vld [vmem:[#allocation9 + $0x3a0] sm:$0xff]
    %v4037 = vld [vmem:[#allocation9 + $0x3a8] sm:$0xff]
    %v4038 = vld [vmem:[#allocation9 + $0x3b0] sm:$0xff]
    %v4039 = vld [vmem:[#allocation9 + $0x3b8] sm:$0xff]
    %v4040 = vld [vmem:[#allocation9 + $0x3c0] sm:$0xff]
    %v4041 = vld [vmem:[#allocation9 + $0x3c8] sm:$0xff]
    %v4042 = vld [vmem:[#allocation9 + $0x3d0] sm:$0xff]
    %v4043 = vld [vmem:[#allocation9 + $0x3d8] sm:$0xff]
    %v4044 = vld [vmem:[#allocation9 + $0x3e0] sm:$0xff]
    %v4045 = vld [vmem:[#allocation9 + $0x3e8] sm:$0xff]
    %v4046 = vld [vmem:[#allocation9 + $0x3f0] sm:$0xff]
    %v4047 = vld [vmem:[#allocation9 + $0x3f8] sm:$0xff]
    %4048 = vmatprep.subr.mxu0 %v3921
    %4049 = vmatpush1.msra.mxu0 %v3920
    %4050 = vmatprep.subr.mxu0 %v3925
    %4051 = vmatpush1.msra.mxu0 %v3924
    %4052 = vmatprep.subr.mxu0 %v3929
    %4053 = vmatpush1.msra.mxu0 %v3928
    %4054 = vmatprep.subr.mxu0 %v3933
    %4055 = vmatpush1.msra.mxu0 %v3932
    %4056 = vmatprep.subr.mxu0 %v3937
    %4057 = vmatpush1.msra.mxu0 %v3936
    %4058 = vmatprep.subr.mxu0 %v3941
    %4059 = vmatpush1.msra.mxu0 %v3940
    %4060 = vmatprep.subr.mxu0 %v3945
    %4061 = vmatpush1.msra.mxu0 %v3944
    %4062 = vmatprep.subr.mxu0 %v3949
    %4063 = vmatpush1.msra.mxu0 %v3948
    %4064 = vmatprep.subr.mxu0 %v3953
    %4065 = vmatpush1.msra.mxu0 %v3952
    %4066 = vmatprep.subr.mxu0 %v3957
    %4067 = vmatpush1.msra.mxu0 %v3956
    %4068 = vmatprep.subr.mxu0 %v3961
    %4069 = vmatpush1.msra.mxu0 %v3960
    %4070 = vmatprep.subr.mxu0 %v3965
    %4071 = vmatpush1.msra.mxu0 %v3964
    %4072 = vmatprep.subr.mxu0 %v3969
    %4073 = vmatpush1.msra.mxu0 %v3968
    %4074 = vmatprep.subr.mxu0 %v3973
    %4075 = vmatpush1.msra.mxu0 %v3972
    %4076 = vmatprep.subr.mxu0 %v3977
    %4077 = vmatpush1.msra.mxu0 %v3976
    %4078 = vmatprep.subr.mxu0 %v3981
    %4079 = vmatpush1.msra.mxu0 %v3980
    %4080 = vmatprep.subr.mxu0 %v3985
    %4081 = vmatpush1.msra.mxu0 %v3984
    %4082 = vmatprep.subr.mxu0 %v3989
    %4083 = vmatpush1.msra.mxu0 %v3988
    %4084 = vmatprep.subr.mxu0 %v3993
    %4085 = vmatpush1.msra.mxu0 %v3992
    %4086 = vmatprep.subr.mxu0 %v3997
    %4087 = vmatpush1.msra.mxu0 %v3996
    %4088 = vmatprep.subr.mxu0 %v4001
    %4089 = vmatpush1.msra.mxu0 %v4000
    %4090 = vmatprep.subr.mxu0 %v4005
    %4091 = vmatpush1.msra.mxu0 %v4004
    %4092 = vmatprep.subr.mxu0 %v4009
    %4093 = vmatpush1.msra.mxu0 %v4008
    %4094 = vmatprep.subr.mxu0 %v4013
    %4095 = vmatpush1.msra.mxu0 %v4012
    %4096 = vmatprep.subr.mxu0 %v4017
    %4097 = vmatpush1.msra.mxu0 %v4016
    %4098 = vmatprep.subr.mxu0 %v4021
    %4099 = vmatpush1.msra.mxu0 %v4020
    %4100 = vmatprep.subr.mxu0 %v4025
    %4101 = vmatpush1.msra.mxu0 %v4024
    %4102 = vmatprep.subr.mxu0 %v4029
    %4103 = vmatpush1.msra.mxu0 %v4028
    %4104 = vmatprep.subr.mxu0 %v4033
    %4105 = vmatpush1.msra.mxu0 %v4032
    %4106 = vmatprep.subr.mxu0 %v4037
    %4107 = vmatpush1.msra.mxu0 %v4036
    %4108 = vmatprep.subr.mxu0 %v4041
    %4109 = vmatpush1.msra.mxu0 %v4040
    %4110 = vmatprep.subr.mxu0 %v4045
    %4111 = vmatpush1.msra.mxu0 %v4044
    %4112 = vmatprep.mubr.f32.mxu0 %v3683
    %4113 = vmatmul.mubr.f32.gmra.mrb[0].mxu0 %v3919
    %v4114 = vpop.f32.mrb[0].mxu0
    %v4115 = vadd.f32 0.0, %v4114
    %v4116 = vpop.f32.mrb[0].mxu0
    %v4117 = vadd.f32 0.0, %v4116
    %4118 = vdwg.mxu0
    %4119 = vmatprep.subr.mxu0 %v3923
    %4120 = vmatpush1.msra.mxu0 %v3922
    %4121 = vmatprep.subr.mxu0 %v3927
    %4122 = vmatpush1.msra.mxu0 %v3926
    %4123 = vmatprep.subr.mxu0 %v3931
    %4124 = vmatpush1.msra.mxu0 %v3930
    %4125 = vmatprep.subr.mxu0 %v3935
    %4126 = vmatpush1.msra.mxu0 %v3934
    %4127 = vmatprep.subr.mxu0 %v3939
    %4128 = vmatpush1.msra.mxu0 %v3938
    %4129 = vmatprep.subr.mxu0 %v3943
    %4130 = vmatpush1.msra.mxu0 %v3942
    %4131 = vmatprep.subr.mxu0 %v3947
    %4132 = vmatpush1.msra.mxu0 %v3946
    %4133 = vmatprep.subr.mxu0 %v3951
    %4134 = vmatpush1.msra.mxu0 %v3950
    %4135 = vmatprep.subr.mxu0 %v3955
    %4136 = vmatpush1.msra.mxu0 %v3954
    %4137 = vmatprep.subr.mxu0 %v3959
    %4138 = vmatpush1.msra.mxu0 %v3958
    %4139 = vmatprep.subr.mxu0 %v3963
    %4140 = vmatpush1.msra.mxu0 %v3962
    %4141 = vmatprep.subr.mxu0 %v3967
    %4142 = vmatpush1.msra.mxu0 %v3966
    %4143 = vmatprep.subr.mxu0 %v3971
    %4144 = vmatpush1.msra.mxu0 %v3970
    %4145 = vmatprep.subr.mxu0 %v3975
    %4146 = vmatpush1.msra.mxu0 %v3974
    %4147 = vmatprep.subr.mxu0 %v3979
    %4148 = vmatpush1.msra.mxu0 %v3978
    %4149 = vmatprep.subr.mxu0 %v3983
    %4150 = vmatpush1.msra.mxu0 %v3982
    %4151 = vmatprep.subr.mxu0 %v3987
    %4152 = vmatpush1.msra.mxu0 %v3986
    %4153 = vmatprep.subr.mxu0 %v3991
    %4154 = vmatpush1.msra.mxu0 %v3990
    %4155 = vmatprep.subr.mxu0 %v3995
    %4156 = vmatpush1.msra.mxu0 %v3994
    %4157 = vmatprep.subr.mxu0 %v3999
    %4158 = vmatpush1.msra.mxu0 %v3998
    %4159 = vmatprep.subr.mxu0 %v4003
    %4160 = vmatpush1.msra.mxu0 %v4002
    %4161 = vmatprep.subr.mxu0 %v4007
    %4162 = vmatpush1.msra.mxu0 %v4006
    %4163 = vmatprep.subr.mxu0 %v4011
    %4164 = vmatpush1.msra.mxu0 %v4010
    %4165 = vmatprep.subr.mxu0 %v4015
    %4166 = vmatpush1.msra.mxu0 %v4014
    %4167 = vmatprep.subr.mxu0 %v4019
    %4168 = vmatpush1.msra.mxu0 %v4018
    %4169 = vmatprep.subr.mxu0 %v4023
    %4170 = vmatpush1.msra.mxu0 %v4022
    %4171 = vmatprep.subr.mxu0 %v4027
    %4172 = vmatpush1.msra.mxu0 %v4026
    %4173 = vmatprep.subr.mxu0 %v4031
    %4174 = vmatpush1.msra.mxu0 %v4030
    %4175 = vmatprep.subr.mxu0 %v4035
    %4176 = vmatpush1.msra.mxu0 %v4034
    %4177 = vmatprep.subr.mxu0 %v4039
    %4178 = vmatpush1.msra.mxu0 %v4038
    %4179 = vmatprep.subr.mxu0 %v4043
    %4180 = vmatpush1.msra.mxu0 %v4042
    %4181 = vmatprep.subr.mxu0 %v4047
    %4182 = vmatpush1.msra.mxu0 %v4046
    %4183 = vmatprep.mubr.f32.mxu0 %v3683
    %4184 = vmatmul.mubr.f32.gmra.mrb[0].mxu0 %v3919
    %v4185 = vpop.f32.mrb[0].mxu0
    %v4186 = vadd.f32 0.0, %v4185
    %v4187 = vpop.f32.mrb[0].mxu0
    %v4188 = vadd.f32 0.0, %v4187
    %4189 = vdwg.mxu0
    %v4190 = vadd.f32 %v500, %v4115
    %v4191 = vadd.f32 %v504, %v4117
    %v4192 = vadd.f32 %v508, %v4186
    %v4193 = vadd.f32 %v512, %v4188
    %v4194 = vmul.f32 %v4190, 0.5
    %v4195 = vtanh.pop %v4194
    %v4196 = vmul.f32 %v4195, 0.5
    %v4197 = vadd.f32 %v4196, 0.5
    %v4198 = vmul.f32 %v4191, 0.5
    %v4199 = vtanh.pop %v4198
    %v4200 = vmul.f32 %v4199, 0.5
    %v4201 = vadd.f32 %v4200, 0.5
    %v4202 = vtanh.pop %v4192
    %v4203 = vmul.f32 %v4193, 0.5
    %v4204 = vtanh.pop %v4203
    %v4205 = vmul.f32 %v4204, 0.5
    %v4206 = vadd.f32 %v4205, 0.5
    %v4207 = vmul.f32 %v4201, %v3681
    %v4208 = vmul.f32 %v4197, %v4202
    %v4209 = vadd.f32 %v4207, %v4208
    %v4210 = vtanh.pop %v4209
    %v4211 = vmul.f32 %v4206, %v4210
    %4212 = vst [vmem:[#allocation3 + $0x6] sm:$0x1] %v4211
    %s4213 = smul.u32 7, 4
    %s4214 = smul.addr %s4213, 8
    %s4215 = scalar_lea.vmem [#allocation2], %s4214
    %v4216 = vld [vmem:[%s4215] sm:$0xff]
    %v4217 = vld [vmem:[%s4215 + $0x8] sm:$0xff]
    %v4218 = vld [vmem:[%s4215 + $0x10] sm:$0xff]
    %v4219 = vld [vmem:[%s4215 + $0x18] sm:$0xff]
    %v4220 = vld [vmem:[#allocation7] sm:$0xff]
    %v4221 = vld [vmem:[#allocation7 + $0x8] sm:$0xff]
    %v4222 = vld [vmem:[#allocation7 + $0x10] sm:$0xff]
    %v4223 = vld [vmem:[#allocation7 + $0x18] sm:$0xff]
    %v4224 = vld [vmem:[#allocation7 + $0x20] sm:$0xff]
    %v4225 = vld [vmem:[#allocation7 + $0x28] sm:$0xff]
    %v4226 = vld [vmem:[#allocation7 + $0x30] sm:$0xff]
    %v4227 = vld [vmem:[#allocation7 + $0x38] sm:$0xff]
    %v4228 = vld [vmem:[#allocation7 + $0x40] sm:$0xff]
    %v4229 = vld [vmem:[#allocation7 + $0x48] sm:$0xff]
    %v4230 = vld [vmem:[#allocation7 + $0x50] sm:$0xff]
    %v4231 = vld [vmem:[#allocation7 + $0x58] sm:$0xff]
    %v4232 = vld [vmem:[#allocation7 + $0x60] sm:$0xff]
    %v4233 = vld [vmem:[#allocation7 + $0x68] sm:$0xff]
    %v4234 = vld [vmem:[#allocation7 + $0x70] sm:$0xff]
    %v4235 = vld [vmem:[#allocation7 + $0x78] sm:$0xff]
    %v4236 = vld [vmem:[#allocation7 + $0x80] sm:$0xff]
    %v4237 = vld [vmem:[#allocation7 + $0x88] sm:$0xff]
    %v4238 = vld [vmem:[#allocation7 + $0x90] sm:$0xff]
    %v4239 = vld [vmem:[#allocation7 + $0x98] sm:$0xff]
    %v4240 = vld [vmem:[#allocation7 + $0xa0] sm:$0xff]
    %v4241 = vld [vmem:[#allocation7 + $0xa8] sm:$0xff]
    %v4242 = vld [vmem:[#allocation7 + $0xb0] sm:$0xff]
    %v4243 = vld [vmem:[#allocation7 + $0xb8] sm:$0xff]
    %v4244 = vld [vmem:[#allocation7 + $0xc0] sm:$0xff]
    %v4245 = vld [vmem:[#allocation7 + $0xc8] sm:$0xff]
    %v4246 = vld [vmem:[#allocation7 + $0xd0] sm:$0xff]
    %v4247 = vld [vmem:[#allocation7 + $0xd8] sm:$0xff]
    %v4248 = vld [vmem:[#allocation7 + $0xe0] sm:$0xff]
    %v4249 = vld [vmem:[#allocation7 + $0xe8] sm:$0xff]
    %v4250 = vld [vmem:[#allocation7 + $0xf0] sm:$0xff]
    %v4251 = vld [vmem:[#allocation7 + $0xf8] sm:$0xff]
    %v4252 = vld [vmem:[#allocation7 + $0x100] sm:$0xff]
    %v4253 = vld [vmem:[#allocation7 + $0x108] sm:$0xff]
    %v4254 = vld [vmem:[#allocation7 + $0x110] sm:$0xff]
    %v4255 = vld [vmem:[#allocation7 + $0x118] sm:$0xff]
    %v4256 = vld [vmem:[#allocation7 + $0x120] sm:$0xff]
    %v4257 = vld [vmem:[#allocation7 + $0x128] sm:$0xff]
    %v4258 = vld [vmem:[#allocation7 + $0x130] sm:$0xff]
    %v4259 = vld [vmem:[#allocation7 + $0x138] sm:$0xff]
    %v4260 = vld [vmem:[#allocation7 + $0x140] sm:$0xff]
    %v4261 = vld [vmem:[#allocation7 + $0x148] sm:$0xff]
    %v4262 = vld [vmem:[#allocation7 + $0x150] sm:$0xff]
    %v4263 = vld [vmem:[#allocation7 + $0x158] sm:$0xff]
    %v4264 = vld [vmem:[#allocation7 + $0x160] sm:$0xff]
    %v4265 = vld [vmem:[#allocation7 + $0x168] sm:$0xff]
    %v4266 = vld [vmem:[#allocation7 + $0x170] sm:$0xff]
    %v4267 = vld [vmem:[#allocation7 + $0x178] sm:$0xff]
    %v4268 = vld [vmem:[#allocation7 + $0x180] sm:$0xff]
    %v4269 = vld [vmem:[#allocation7 + $0x188] sm:$0xff]
    %v4270 = vld [vmem:[#allocation7 + $0x190] sm:$0xff]
    %v4271 = vld [vmem:[#allocation7 + $0x198] sm:$0xff]
    %v4272 = vld [vmem:[#allocation7 + $0x1a0] sm:$0xff]
    %v4273 = vld [vmem:[#allocation7 + $0x1a8] sm:$0xff]
    %v4274 = vld [vmem:[#allocation7 + $0x1b0] sm:$0xff]
    %v4275 = vld [vmem:[#allocation7 + $0x1b8] sm:$0xff]
    %v4276 = vld [vmem:[#allocation7 + $0x1c0] sm:$0xff]
    %v4277 = vld [vmem:[#allocation7 + $0x1c8] sm:$0xff]
    %v4278 = vld [vmem:[#allocation7 + $0x1d0] sm:$0xff]
    %v4279 = vld [vmem:[#allocation7 + $0x1d8] sm:$0xff]
    %v4280 = vld [vmem:[#allocation7 + $0x1e0] sm:$0xff]
    %v4281 = vld [vmem:[#allocation7 + $0x1e8] sm:$0xff]
    %v4282 = vld [vmem:[#allocation7 + $0x1f0] sm:$0xff]
    %v4283 = vld [vmem:[#allocation7 + $0x1f8] sm:$0xff]
    %4284 = vmatprep.subr.mxu0 %v4221
    %4285 = vmatpush1.msra.mxu0 %v4220
    %4286 = vmatprep.subr.mxu0 %v4225
    %4287 = vmatpush1.msra.mxu0 %v4224
    %4288 = vmatprep.subr.mxu0 %v4229
    %4289 = vmatpush1.msra.mxu0 %v4228
    %4290 = vmatprep.subr.mxu0 %v4233
    %4291 = vmatpush1.msra.mxu0 %v4232
    %4292 = vmatprep.subr.mxu0 %v4237
    %4293 = vmatpush1.msra.mxu0 %v4236
    %4294 = vmatprep.subr.mxu0 %v4241
    %4295 = vmatpush1.msra.mxu0 %v4240
    %4296 = vmatprep.subr.mxu0 %v4245
    %4297 = vmatpush1.msra.mxu0 %v4244
    %4298 = vmatprep.subr.mxu0 %v4249
    %4299 = vmatpush1.msra.mxu0 %v4248
    %4300 = vmatprep.subr.mxu0 %v4253
    %4301 = vmatpush1.msra.mxu0 %v4252
    %4302 = vmatprep.subr.mxu0 %v4257
    %4303 = vmatpush1.msra.mxu0 %v4256
    %4304 = vmatprep.subr.mxu0 %v4261
    %4305 = vmatpush1.msra.mxu0 %v4260
    %4306 = vmatprep.subr.mxu0 %v4265
    %4307 = vmatpush1.msra.mxu0 %v4264
    %4308 = vmatprep.subr.mxu0 %v4269
    %4309 = vmatpush1.msra.mxu0 %v4268
    %4310 = vmatprep.subr.mxu0 %v4273
    %4311 = vmatpush1.msra.mxu0 %v4272
    %4312 = vmatprep.subr.mxu0 %v4277
    %4313 = vmatpush1.msra.mxu0 %v4276
    %4314 = vmatprep.subr.mxu0 %v4281
    %4315 = vmatpush1.msra.mxu0 %v4280
    %4316 = vmatprep.subr.mxu0 0.0
    %4317 = vmatpush1.msra.mxu0 0.0
    %4318 = vmatprep.subr.mxu0 0.0
    %4319 = vmatpush1.msra.mxu0 0.0
    %4320 = vmatprep.subr.mxu0 0.0
    %4321 = vmatpush1.msra.mxu0 0.0
    %4322 = vmatprep.subr.mxu0 0.0
    %4323 = vmatpush1.msra.mxu0 0.0
    %4324 = vmatprep.subr.mxu0 0.0
    %4325 = vmatpush1.msra.mxu0 0.0
    %4326 = vmatprep.subr.mxu0 0.0
    %4327 = vmatpush1.msra.mxu0 0.0
    %4328 = vmatprep.subr.mxu0 0.0
    %4329 = vmatpush1.msra.mxu0 0.0
    %4330 = vmatprep.subr.mxu0 0.0
    %4331 = vmatpush1.msra.mxu0 0.0
    %4332 = vmatprep.subr.mxu0 0.0
    %4333 = vmatpush1.msra.mxu0 0.0
    %4334 = vmatprep.subr.mxu0 0.0
    %4335 = vmatpush1.msra.mxu0 0.0
    %4336 = vmatprep.subr.mxu0 0.0
    %4337 = vmatpush1.msra.mxu0 0.0
    %4338 = vmatprep.subr.mxu0 0.0
    %4339 = vmatpush1.msra.mxu0 0.0
    %4340 = vmatprep.subr.mxu0 0.0
    %4341 = vmatpush1.msra.mxu0 0.0
    %4342 = vmatprep.subr.mxu0 0.0
    %4343 = vmatpush1.msra.mxu0 0.0
    %4344 = vmatprep.subr.mxu0 0.0
    %4345 = vmatpush1.msra.mxu0 0.0
    %4346 = vmatprep.subr.mxu0 0.0
    %4347 = vmatpush1.msra.mxu0 0.0
    %4348 = vmatprep.mubr.f32.mxu0 0.0
    %4349 = vmatmul.mubr.f32.gmra.mrb[0].mxu0 %v3919
    %v4350 = vpop.f32.mrb[0].mxu0
    %v4351 = vadd.f32 0.0, %v4350
    %v4352 = vpop.f32.mrb[0].mxu0
    %v4353 = vadd.f32 0.0, %v4352
    %4354 = vdwg.mxu0
    %4355 = vmatprep.subr.mxu0 %v4223
    %4356 = vmatpush1.msra.mxu0 %v4222
    %4357 = vmatprep.subr.mxu0 %v4227
    %4358 = vmatpush1.msra.mxu0 %v4226
    %4359 = vmatprep.subr.mxu0 %v4231
    %4360 = vmatpush1.msra.mxu0 %v4230
    %4361 = vmatprep.subr.mxu0 %v4235
    %4362 = vmatpush1.msra.mxu0 %v4234
    %4363 = vmatprep.subr.mxu0 %v4239
    %4364 = vmatpush1.msra.mxu0 %v4238
    %4365 = vmatprep.subr.mxu0 %v4243
    %4366 = vmatpush1.msra.mxu0 %v4242
    %4367 = vmatprep.subr.mxu0 %v4247
    %4368 = vmatpush1.msra.mxu0 %v4246
    %4369 = vmatprep.subr.mxu0 %v4251
    %4370 = vmatpush1.msra.mxu0 %v4250
    %4371 = vmatprep.subr.mxu0 %v4255
    %4372 = vmatpush1.msra.mxu0 %v4254
    %4373 = vmatprep.subr.mxu0 %v4259
    %4374 = vmatpush1.msra.mxu0 %v4258
    %4375 = vmatprep.subr.mxu0 %v4263
    %4376 = vmatpush1.msra.mxu0 %v4262
    %4377 = vmatprep.subr.mxu0 %v4267
    %4378 = vmatpush1.msra.mxu0 %v4266
    %4379 = vmatprep.subr.mxu0 %v4271
    %4380 = vmatpush1.msra.mxu0 %v4270
    %4381 = vmatprep.subr.mxu0 %v4275
    %4382 = vmatpush1.msra.mxu0 %v4274
    %4383 = vmatprep.subr.mxu0 %v4279
    %4384 = vmatpush1.msra.mxu0 %v4278
    %4385 = vmatprep.subr.mxu0 %v4283
    %4386 = vmatpush1.msra.mxu0 %v4282
    %4387 = vmatprep.subr.mxu0 0.0
    %4388 = vmatpush1.msra.mxu0 0.0
    %4389 = vmatprep.subr.mxu0 0.0
    %4390 = vmatpush1.msra.mxu0 0.0
    %4391 = vmatprep.subr.mxu0 0.0
    %4392 = vmatpush1.msra.mxu0 0.0
    %4393 = vmatprep.subr.mxu0 0.0
    %4394 = vmatpush1.msra.mxu0 0.0
    %4395 = vmatprep.subr.mxu0 0.0
    %4396 = vmatpush1.msra.mxu0 0.0
    %4397 = vmatprep.subr.mxu0 0.0
    %4398 = vmatpush1.msra.mxu0 0.0
    %4399 = vmatprep.subr.mxu0 0.0
    %4400 = vmatpush1.msra.mxu0 0.0
    %4401 = vmatprep.subr.mxu0 0.0
    %4402 = vmatpush1.msra.mxu0 0.0
    %4403 = vmatprep.subr.mxu0 0.0
    %4404 = vmatpush1.msra.mxu0 0.0
    %4405 = vmatprep.subr.mxu0 0.0
    %4406 = vmatpush1.msra.mxu0 0.0
    %4407 = vmatprep.subr.mxu0 0.0
    %4408 = vmatpush1.msra.mxu0 0.0
    %4409 = vmatprep.subr.mxu0 0.0
    %4410 = vmatpush1.msra.mxu0 0.0
    %4411 = vmatprep.subr.mxu0 0.0
    %4412 = vmatpush1.msra.mxu0 0.0
    %4413 = vmatprep.subr.mxu0 0.0
    %4414 = vmatpush1.msra.mxu0 0.0
    %4415 = vmatprep.subr.mxu0 0.0
    %4416 = vmatpush1.msra.mxu0 0.0
    %4417 = vmatprep.subr.mxu0 0.0
    %4418 = vmatpush1.msra.mxu0 0.0
    %4419 = vmatprep.mubr.f32.mxu0 0.0
    %4420 = vmatmul.mubr.f32.gmra.mrb[0].mxu0 %v3919
    %v4421 = vpop.f32.mrb[0].mxu0
    %v4422 = vadd.f32 0.0, %v4421
    %v4423 = vpop.f32.mrb[0].mxu0
    %v4424 = vadd.f32 0.0, %v4423
    %4425 = vdwg.mxu0
    %v4426 = vadd.f32 %v4216, %v4351
    %v4427 = vadd.f32 %v4217, %v4353
    %v4428 = vadd.f32 %v4218, %v4422
    %v4429 = vadd.f32 %v4219, %v4424
    %v4430 = vmul.f32 %v4426, 0.5
    %v4431 = vtanh.pop %v4430
    %v4432 = vmul.f32 %v4431, 0.5
    %v4433 = vadd.f32 %v4432, 0.5
    %v4434 = vmul.f32 %v4427, 0.5
    %v4435 = vtanh.pop %v4434
    %v4436 = vmul.f32 %v4435, 0.5
    %v4437 = vadd.f32 %v4436, 0.5
    %v4438 = vtanh.pop %v4428
    %v4439 = vmul.f32 %v4429, 0.5
    %v4440 = vtanh.pop %v4439
    %v4441 = vmul.f32 %v4440, 0.5
    %v4442 = vadd.f32 %v4441, 0.5
    %v4443 = vmul.f32 %v4437, %v3917
    %v4444 = vmul.f32 %v4433, %v4438
    %v4445 = vadd.f32 %v4443, %v4444
    %v4446 = vtanh.pop %v4445
    %v4447 = vmul.f32 %v4442, %v4446
    %v4448 = vld [vmem:[#allocation9] sm:$0xff]
    %v4449 = vld [vmem:[#allocation9 + $0x8] sm:$0xff]
    %v4450 = vld [vmem:[#allocation9 + $0x10] sm:$0xff]
    %v4451 = vld [vmem:[#allocation9 + $0x18] sm:$0xff]
    %v4452 = vld [vmem:[#allocation9 + $0x20] sm:$0xff]
    %v4453 = vld [vmem:[#allocation9 + $0x28] sm:$0xff]
    %v4454 = vld [vmem:[#allocation9 + $0x30] sm:$0xff]
    %v4455 = vld [vmem:[#allocation9 + $0x38] sm:$0xff]
    %v4456 = vld [vmem:[#allocation9 + $0x40] sm:$0xff]
    %v4457 = vld [vmem:[#allocation9 + $0x48] sm:$0xff]
    %v4458 = vld [vmem:[#allocation9 + $0x50] sm:$0xff]
    %v4459 = vld [vmem:[#allocation9 + $0x58] sm:$0xff]
    %v4460 = vld [vmem:[#allocation9 + $0x60] sm:$0xff]
    %v4461 = vld [vmem:[#allocation9 + $0x68] sm:$0xff]
    %v4462 = vld [vmem:[#allocation9 + $0x70] sm:$0xff]
    %v4463 = vld [vmem:[#allocation9 + $0x78] sm:$0xff]
    %v4464 = vld [vmem:[#allocation9 + $0x80] sm:$0xff]
    %v4465 = vld [vmem:[#allocation9 + $0x88] sm:$0xff]
    %v4466 = vld [vmem:[#allocation9 + $0x90] sm:$0xff]
    %v4467 = vld [vmem:[#allocation9 + $0x98] sm:$0xff]
    %v4468 = vld [vmem:[#allocation9 + $0xa0] sm:$0xff]
    %v4469 = vld [vmem:[#allocation9 + $0xa8] sm:$0xff]
    %v4470 = vld [vmem:[#allocation9 + $0xb0] sm:$0xff]
    %v4471 = vld [vmem:[#allocation9 + $0xb8] sm:$0xff]
    %v4472 = vld [vmem:[#allocation9 + $0xc0] sm:$0xff]
    %v4473 = vld [vmem:[#allocation9 + $0xc8] sm:$0xff]
    %v4474 = vld [vmem:[#allocation9 + $0xd0] sm:$0xff]
    %v4475 = vld [vmem:[#allocation9 + $0xd8] sm:$0xff]
    %v4476 = vld [vmem:[#allocation9 + $0xe0] sm:$0xff]
    %v4477 = vld [vmem:[#allocation9 + $0xe8] sm:$0xff]
    %v4478 = vld [vmem:[#allocation9 + $0xf0] sm:$0xff]
    %v4479 = vld [vmem:[#allocation9 + $0xf8] sm:$0xff]
    %v4480 = vld [vmem:[#allocation9 + $0x100] sm:$0xff]
    %v4481 = vld [vmem:[#allocation9 + $0x108] sm:$0xff]
    %v4482 = vld [vmem:[#allocation9 + $0x110] sm:$0xff]
    %v4483 = vld [vmem:[#allocation9 + $0x118] sm:$0xff]
    %v4484 = vld [vmem:[#allocation9 + $0x120] sm:$0xff]
    %v4485 = vld [vmem:[#allocation9 + $0x128] sm:$0xff]
    %v4486 = vld [vmem:[#allocation9 + $0x130] sm:$0xff]
    %v4487 = vld [vmem:[#allocation9 + $0x138] sm:$0xff]
    %v4488 = vld [vmem:[#allocation9 + $0x140] sm:$0xff]
    %v4489 = vld [vmem:[#allocation9 + $0x148] sm:$0xff]
    %v4490 = vld [vmem:[#allocation9 + $0x150] sm:$0xff]
    %v4491 = vld [vmem:[#allocation9 + $0x158] sm:$0xff]
    %v4492 = vld [vmem:[#allocation9 + $0x160] sm:$0xff]
    %v4493 = vld [vmem:[#allocation9 + $0x168] sm:$0xff]
    %v4494 = vld [vmem:[#allocation9 + $0x170] sm:$0xff]
    %v4495 = vld [vmem:[#allocation9 + $0x178] sm:$0xff]
    %v4496 = vld [vmem:[#allocation9 + $0x180] sm:$0xff]
    %v4497 = vld [vmem:[#allocation9 + $0x188] sm:$0xff]
    %v4498 = vld [vmem:[#allocation9 + $0x190] sm:$0xff]
    %v4499 = vld [vmem:[#allocation9 + $0x198] sm:$0xff]
    %v4500 = vld [vmem:[#allocation9 + $0x1a0] sm:$0xff]
    %v4501 = vld [vmem:[#allocation9 + $0x1a8] sm:$0xff]
    %v4502 = vld [vmem:[#allocation9 + $0x1b0] sm:$0xff]
    %v4503 = vld [vmem:[#allocation9 + $0x1b8] sm:$0xff]
    %v4504 = vld [vmem:[#allocation9 + $0x1c0] sm:$0xff]
    %v4505 = vld [vmem:[#allocation9 + $0x1c8] sm:$0xff]
    %v4506 = vld [vmem:[#allocation9 + $0x1d0] sm:$0xff]
    %v4507 = vld [vmem:[#allocation9 + $0x1d8] sm:$0xff]
    %v4508 = vld [vmem:[#allocation9 + $0x1e0] sm:$0xff]
    %v4509 = vld [vmem:[#allocation9 + $0x1e8] sm:$0xff]
    %v4510 = vld [vmem:[#allocation9 + $0x1f0] sm:$0xff]
    %v4511 = vld [vmem:[#allocation9 + $0x1f8] sm:$0xff]
    %v4512 = vld [vmem:[#allocation9 + $0x200] sm:$0xff]
    %v4513 = vld [vmem:[#allocation9 + $0x208] sm:$0xff]
    %v4514 = vld [vmem:[#allocation9 + $0x210] sm:$0xff]
    %v4515 = vld [vmem:[#allocation9 + $0x218] sm:$0xff]
    %v4516 = vld [vmem:[#allocation9 + $0x220] sm:$0xff]
    %v4517 = vld [vmem:[#allocation9 + $0x228] sm:$0xff]
    %v4518 = vld [vmem:[#allocation9 + $0x230] sm:$0xff]
    %v4519 = vld [vmem:[#allocation9 + $0x238] sm:$0xff]
    %v4520 = vld [vmem:[#allocation9 + $0x240] sm:$0xff]
    %v4521 = vld [vmem:[#allocation9 + $0x248] sm:$0xff]
    %v4522 = vld [vmem:[#allocation9 + $0x250] sm:$0xff]
    %v4523 = vld [vmem:[#allocation9 + $0x258] sm:$0xff]
    %v4524 = vld [vmem:[#allocation9 + $0x260] sm:$0xff]
    %v4525 = vld [vmem:[#allocation9 + $0x268] sm:$0xff]
    %v4526 = vld [vmem:[#allocation9 + $0x270] sm:$0xff]
    %v4527 = vld [vmem:[#allocation9 + $0x278] sm:$0xff]
    %v4528 = vld [vmem:[#allocation9 + $0x280] sm:$0xff]
    %v4529 = vld [vmem:[#allocation9 + $0x288] sm:$0xff]
    %v4530 = vld [vmem:[#allocation9 + $0x290] sm:$0xff]
    %v4531 = vld [vmem:[#allocation9 + $0x298] sm:$0xff]
    %v4532 = vld [vmem:[#allocation9 + $0x2a0] sm:$0xff]
    %v4533 = vld [vmem:[#allocation9 + $0x2a8] sm:$0xff]
    %v4534 = vld [vmem:[#allocation9 + $0x2b0] sm:$0xff]
    %v4535 = vld [vmem:[#allocation9 + $0x2b8] sm:$0xff]
    %v4536 = vld [vmem:[#allocation9 + $0x2c0] sm:$0xff]
    %v4537 = vld [vmem:[#allocation9 + $0x2c8] sm:$0xff]
    %v4538 = vld [vmem:[#allocation9 + $0x2d0] sm:$0xff]
    %v4539 = vld [vmem:[#allocation9 + $0x2d8] sm:$0xff]
    %v4540 = vld [vmem:[#allocation9 + $0x2e0] sm:$0xff]
    %v4541 = vld [vmem:[#allocation9 + $0x2e8] sm:$0xff]
    %v4542 = vld [vmem:[#allocation9 + $0x2f0] sm:$0xff]
    %v4543 = vld [vmem:[#allocation9 + $0x2f8] sm:$0xff]
    %v4544 = vld [vmem:[#allocation9 + $0x300] sm:$0xff]
    %v4545 = vld [vmem:[#allocation9 + $0x308] sm:$0xff]
    %v4546 = vld [vmem:[#allocation9 + $0x310] sm:$0xff]
    %v4547 = vld [vmem:[#allocation9 + $0x318] sm:$0xff]
    %v4548 = vld [vmem:[#allocation9 + $0x320] sm:$0xff]
    %v4549 = vld [vmem:[#allocation9 + $0x328] sm:$0xff]
    %v4550 = vld [vmem:[#allocation9 + $0x330] sm:$0xff]
    %v4551 = vld [vmem:[#allocation9 + $0x338] sm:$0xff]
    %v4552 = vld [vmem:[#allocation9 + $0x340] sm:$0xff]
    %v4553 = vld [vmem:[#allocation9 + $0x348] sm:$0xff]
    %v4554 = vld [vmem:[#allocation9 + $0x350] sm:$0xff]
    %v4555 = vld [vmem:[#allocation9 + $0x358] sm:$0xff]
    %v4556 = vld [vmem:[#allocation9 + $0x360] sm:$0xff]
    %v4557 = vld [vmem:[#allocation9 + $0x368] sm:$0xff]
    %v4558 = vld [vmem:[#allocation9 + $0x370] sm:$0xff]
    %v4559 = vld [vmem:[#allocation9 + $0x378] sm:$0xff]
    %v4560 = vld [vmem:[#allocation9 + $0x380] sm:$0xff]
    %v4561 = vld [vmem:[#allocation9 + $0x388] sm:$0xff]
    %v4562 = vld [vmem:[#allocation9 + $0x390] sm:$0xff]
    %v4563 = vld [vmem:[#allocation9 + $0x398] sm:$0xff]
    %v4564 = vld [vmem:[#allocation9 + $0x3a0] sm:$0xff]
    %v4565 = vld [vmem:[#allocation9 + $0x3a8] sm:$0xff]
    %v4566 = vld [vmem:[#allocation9 + $0x3b0] sm:$0xff]
    %v4567 = vld [vmem:[#allocation9 + $0x3b8] sm:$0xff]
    %v4568 = vld [vmem:[#allocation9 + $0x3c0] sm:$0xff]
    %v4569 = vld [vmem:[#allocation9 + $0x3c8] sm:$0xff]
    %v4570 = vld [vmem:[#allocation9 + $0x3d0] sm:$0xff]
    %v4571 = vld [vmem:[#allocation9 + $0x3d8] sm:$0xff]
    %v4572 = vld [vmem:[#allocation9 + $0x3e0] sm:$0xff]
    %v4573 = vld [vmem:[#allocation9 + $0x3e8] sm:$0xff]
    %v4574 = vld [vmem:[#allocation9 + $0x3f0] sm:$0xff]
    %v4575 = vld [vmem:[#allocation9 + $0x3f8] sm:$0xff]
    %4576 = vmatprep.subr.mxu0 %v4449
    %4577 = vmatpush1.msra.mxu0 %v4448
    %4578 = vmatprep.subr.mxu0 %v4453
    %4579 = vmatpush1.msra.mxu0 %v4452
    %4580 = vmatprep.subr.mxu0 %v4457
    %4581 = vmatpush1.msra.mxu0 %v4456
    %4582 = vmatprep.subr.mxu0 %v4461
    %4583 = vmatpush1.msra.mxu0 %v4460
    %4584 = vmatprep.subr.mxu0 %v4465
    %4585 = vmatpush1.msra.mxu0 %v4464
    %4586 = vmatprep.subr.mxu0 %v4469
    %4587 = vmatpush1.msra.mxu0 %v4468
    %4588 = vmatprep.subr.mxu0 %v4473
    %4589 = vmatpush1.msra.mxu0 %v4472
    %4590 = vmatprep.subr.mxu0 %v4477
    %4591 = vmatpush1.msra.mxu0 %v4476
    %4592 = vmatprep.subr.mxu0 %v4481
    %4593 = vmatpush1.msra.mxu0 %v4480
    %4594 = vmatprep.subr.mxu0 %v4485
    %4595 = vmatpush1.msra.mxu0 %v4484
    %4596 = vmatprep.subr.mxu0 %v4489
    %4597 = vmatpush1.msra.mxu0 %v4488
    %4598 = vmatprep.subr.mxu0 %v4493
    %4599 = vmatpush1.msra.mxu0 %v4492
    %4600 = vmatprep.subr.mxu0 %v4497
    %4601 = vmatpush1.msra.mxu0 %v4496
    %4602 = vmatprep.subr.mxu0 %v4501
    %4603 = vmatpush1.msra.mxu0 %v4500
    %4604 = vmatprep.subr.mxu0 %v4505
    %4605 = vmatpush1.msra.mxu0 %v4504
    %4606 = vmatprep.subr.mxu0 %v4509
    %4607 = vmatpush1.msra.mxu0 %v4508
    %4608 = vmatprep.subr.mxu0 %v4513
    %4609 = vmatpush1.msra.mxu0 %v4512
    %4610 = vmatprep.subr.mxu0 %v4517
    %4611 = vmatpush1.msra.mxu0 %v4516
    %4612 = vmatprep.subr.mxu0 %v4521
    %4613 = vmatpush1.msra.mxu0 %v4520
    %4614 = vmatprep.subr.mxu0 %v4525
    %4615 = vmatpush1.msra.mxu0 %v4524
    %4616 = vmatprep.subr.mxu0 %v4529
    %4617 = vmatpush1.msra.mxu0 %v4528
    %4618 = vmatprep.subr.mxu0 %v4533
    %4619 = vmatpush1.msra.mxu0 %v4532
    %4620 = vmatprep.subr.mxu0 %v4537
    %4621 = vmatpush1.msra.mxu0 %v4536
    %4622 = vmatprep.subr.mxu0 %v4541
    %4623 = vmatpush1.msra.mxu0 %v4540
    %4624 = vmatprep.subr.mxu0 %v4545
    %4625 = vmatpush1.msra.mxu0 %v4544
    %4626 = vmatprep.subr.mxu0 %v4549
    %4627 = vmatpush1.msra.mxu0 %v4548
    %4628 = vmatprep.subr.mxu0 %v4553
    %4629 = vmatpush1.msra.mxu0 %v4552
    %4630 = vmatprep.subr.mxu0 %v4557
    %4631 = vmatpush1.msra.mxu0 %v4556
    %4632 = vmatprep.subr.mxu0 %v4561
    %4633 = vmatpush1.msra.mxu0 %v4560
    %4634 = vmatprep.subr.mxu0 %v4565
    %4635 = vmatpush1.msra.mxu0 %v4564
    %4636 = vmatprep.subr.mxu0 %v4569
    %4637 = vmatpush1.msra.mxu0 %v4568
    %4638 = vmatprep.subr.mxu0 %v4573
    %4639 = vmatpush1.msra.mxu0 %v4572
    %4640 = vmatprep.mubr.f32.mxu0 %v4211
    %4641 = vmatmul.mubr.f32.gmra.mrb[0].mxu0 %v4447
    %v4642 = vpop.f32.mrb[0].mxu0
    %v4643 = vadd.f32 0.0, %v4642
    %v4644 = vpop.f32.mrb[0].mxu0
    %v4645 = vadd.f32 0.0, %v4644
    %4646 = vdwg.mxu0
    %4647 = vmatprep.subr.mxu0 %v4451
    %4648 = vmatpush1.msra.mxu0 %v4450
    %4649 = vmatprep.subr.mxu0 %v4455
    %4650 = vmatpush1.msra.mxu0 %v4454
    %4651 = vmatprep.subr.mxu0 %v4459
    %4652 = vmatpush1.msra.mxu0 %v4458
    %4653 = vmatprep.subr.mxu0 %v4463
    %4654 = vmatpush1.msra.mxu0 %v4462
    %4655 = vmatprep.subr.mxu0 %v4467
    %4656 = vmatpush1.msra.mxu0 %v4466
    %4657 = vmatprep.subr.mxu0 %v4471
    %4658 = vmatpush1.msra.mxu0 %v4470
    %4659 = vmatprep.subr.mxu0 %v4475
    %4660 = vmatpush1.msra.mxu0 %v4474
    %4661 = vmatprep.subr.mxu0 %v4479
    %4662 = vmatpush1.msra.mxu0 %v4478
    %4663 = vmatprep.subr.mxu0 %v4483
    %4664 = vmatpush1.msra.mxu0 %v4482
    %4665 = vmatprep.subr.mxu0 %v4487
    %4666 = vmatpush1.msra.mxu0 %v4486
    %4667 = vmatprep.subr.mxu0 %v4491
    %4668 = vmatpush1.msra.mxu0 %v4490
    %4669 = vmatprep.subr.mxu0 %v4495
    %4670 = vmatpush1.msra.mxu0 %v4494
    %4671 = vmatprep.subr.mxu0 %v4499
    %4672 = vmatpush1.msra.mxu0 %v4498
    %4673 = vmatprep.subr.mxu0 %v4503
    %4674 = vmatpush1.msra.mxu0 %v4502
    %4675 = vmatprep.subr.mxu0 %v4507
    %4676 = vmatpush1.msra.mxu0 %v4506
    %4677 = vmatprep.subr.mxu0 %v4511
    %4678 = vmatpush1.msra.mxu0 %v4510
    %4679 = vmatprep.subr.mxu0 %v4515
    %4680 = vmatpush1.msra.mxu0 %v4514
    %4681 = vmatprep.subr.mxu0 %v4519
    %4682 = vmatpush1.msra.mxu0 %v4518
    %4683 = vmatprep.subr.mxu0 %v4523
    %4684 = vmatpush1.msra.mxu0 %v4522
    %4685 = vmatprep.subr.mxu0 %v4527
    %4686 = vmatpush1.msra.mxu0 %v4526
    %4687 = vmatprep.subr.mxu0 %v4531
    %4688 = vmatpush1.msra.mxu0 %v4530
    %4689 = vmatprep.subr.mxu0 %v4535
    %4690 = vmatpush1.msra.mxu0 %v4534
    %4691 = vmatprep.subr.mxu0 %v4539
    %4692 = vmatpush1.msra.mxu0 %v4538
    %4693 = vmatprep.subr.mxu0 %v4543
    %4694 = vmatpush1.msra.mxu0 %v4542
    %4695 = vmatprep.subr.mxu0 %v4547
    %4696 = vmatpush1.msra.mxu0 %v4546
    %4697 = vmatprep.subr.mxu0 %v4551
    %4698 = vmatpush1.msra.mxu0 %v4550
    %4699 = vmatprep.subr.mxu0 %v4555
    %4700 = vmatpush1.msra.mxu0 %v4554
    %4701 = vmatprep.subr.mxu0 %v4559
    %4702 = vmatpush1.msra.mxu0 %v4558
    %4703 = vmatprep.subr.mxu0 %v4563
    %4704 = vmatpush1.msra.mxu0 %v4562
    %4705 = vmatprep.subr.mxu0 %v4567
    %4706 = vmatpush1.msra.mxu0 %v4566
    %4707 = vmatprep.subr.mxu0 %v4571
    %4708 = vmatpush1.msra.mxu0 %v4570
    %4709 = vmatprep.subr.mxu0 %v4575
    %4710 = vmatpush1.msra.mxu0 %v4574
    %4711 = vmatprep.mubr.f32.mxu0 %v4211
    %4712 = vmatmul.mubr.f32.gmra.mrb[0].mxu0 %v4447
    %v4713 = vpop.f32.mrb[0].mxu0
    %v4714 = vadd.f32 0.0, %v4713
    %v4715 = vpop.f32.mrb[0].mxu0
    %v4716 = vadd.f32 0.0, %v4715
    %4717 = vdwg.mxu0
    %v4718 = vadd.f32 %v500, %v4643
    %v4719 = vadd.f32 %v504, %v4645
    %v4720 = vadd.f32 %v508, %v4714
    %v4721 = vadd.f32 %v512, %v4716
    %v4722 = vmul.f32 %v4718, 0.5
    %v4723 = vtanh.pop %v4722
    %v4724 = vmul.f32 %v4723, 0.5
    %v4725 = vadd.f32 %v4724, 0.5
    %v4726 = vmul.f32 %v4719, 0.5
    %v4727 = vtanh.pop %v4726
    %v4728 = vmul.f32 %v4727, 0.5
    %v4729 = vadd.f32 %v4728, 0.5
    %v4730 = vtanh.pop %v4720
    %v4731 = vmul.f32 %v4721, 0.5
    %v4732 = vtanh.pop %v4731
    %v4733 = vmul.f32 %v4732, 0.5
    %v4734 = vadd.f32 %v4733, 0.5
    %v4735 = vmul.f32 %v4729, %v4209
    %v4736 = vmul.f32 %v4725, %v4730
    %v4737 = vadd.f32 %v4735, %v4736
    %v4738 = vtanh.pop %v4737
    %v4739 = vmul.f32 %v4734, %v4738
    %4740 = vst [vmem:[#allocation3 + $0x7] sm:$0x1] %v4739
    %v4741 = vld [vmem:[#allocation3] sm:$0xff]
    %v4742 = vld [vmem:[%s6] sm:$0xff]
    %v4743 = vld [vmem:[%s6 + $0x8] sm:$0xff]
    %v4744 = vld [vmem:[%s6 + $0x10] sm:$0xff]
    %v4745 = vld [vmem:[%s6 + $0x18] sm:$0xff]
    %v4746 = vld [vmem:[%s6 + $0x20] sm:$0xff]
    %v4747 = vld [vmem:[%s6 + $0x28] sm:$0xff]
    %v4748 = vld [vmem:[%s6 + $0x30] sm:$0xff]
    %v4749 = vld [vmem:[%s6 + $0x38] sm:$0xff]
    %v4750 = vld [vmem:[%s6 + $0x40] sm:$0xff]
    %v4751 = vld [vmem:[%s6 + $0x48] sm:$0xff]
    %v4752 = vld [vmem:[%s6 + $0x50] sm:$0xff]
    %v4753 = vld [vmem:[%s6 + $0x58] sm:$0xff]
    %v4754 = vld [vmem:[%s6 + $0x60] sm:$0xff]
    %v4755 = vld [vmem:[%s6 + $0x68] sm:$0xff]
    %v4756 = vld [vmem:[%s6 + $0x70] sm:$0xff]
    %v4757 = vld [vmem:[%s6 + $0x78] sm:$0xff]
    %v4758 = vld [vmem:[%s7] sm:$0x1]
    %v4760 = vlaneseq
    %v4761 = vshrl.u32 %v4760, 7
    %v4762 = vsub.s32 0, %v4761
    %v4763 = vrot.slane %v4758, %v4762
    %4765 = vmatprep.subr.mxu0 0.0
    %4766 = vmatpush1.msra.mxu0 %v4742
    %4767 = vmatprep.subr.mxu0 0.0
    %4768 = vmatpush1.msra.mxu0 %v4743
    %4769 = vmatprep.subr.mxu0 0.0
    %4770 = vmatpush1.msra.mxu0 %v4744
    %4771 = vmatprep.subr.mxu0 0.0
    %4772 = vmatpush1.msra.mxu0 %v4745
    %4773 = vmatprep.subr.mxu0 0.0
    %4774 = vmatpush1.msra.mxu0 %v4746
    %4775 = vmatprep.subr.mxu0 0.0
    %4776 = vmatpush1.msra.mxu0 %v4747
    %4777 = vmatprep.subr.mxu0 0.0
    %4778 = vmatpush1.msra.mxu0 %v4748
    %4779 = vmatprep.subr.mxu0 0.0
    %4780 = vmatpush1.msra.mxu0 %v4749
    %4781 = vmatprep.subr.mxu0 0.0
    %4782 = vmatpush1.msra.mxu0 %v4750
    %4783 = vmatprep.subr.mxu0 0.0
    %4784 = vmatpush1.msra.mxu0 %v4751
    %4785 = vmatprep.subr.mxu0 0.0
    %4786 = vmatpush1.msra.mxu0 %v4752
    %4787 = vmatprep.subr.mxu0 0.0
    %4788 = vmatpush1.msra.mxu0 %v4753
    %4789 = vmatprep.subr.mxu0 0.0
    %4790 = vmatpush1.msra.mxu0 %v4754
    %4791 = vmatprep.subr.mxu0 0.0
    %4792 = vmatpush1.msra.mxu0 %v4755
    %4793 = vmatprep.subr.mxu0 0.0
    %4794 = vmatpush1.msra.mxu0 %v4756
    %4795 = vmatprep.subr.mxu0 0.0
    %4796 = vmatpush1.msra.mxu0 %v4757
    %4797 = vmatprep.subr.mxu0 0.0
    %4798 = vmatpush1.msra.mxu0 0.0
    %4799 = vmatprep.subr.mxu0 0.0
    %4800 = vmatpush1.msra.mxu0 0.0
    %4801 = vmatprep.subr.mxu0 0.0
    %4802 = vmatpush1.msra.mxu0 0.0
    %4803 = vmatprep.subr.mxu0 0.0
    %4804 = vmatpush1.msra.mxu0 0.0
    %4805 = vmatprep.subr.mxu0 0.0
    %4806 = vmatpush1.msra.mxu0 0.0
    %4807 = vmatprep.subr.mxu0 0.0
    %4808 = vmatpush1.msra.mxu0 0.0
    %4809 = vmatprep.subr.mxu0 0.0
    %4810 = vmatpush1.msra.mxu0 0.0
    %4811 = vmatprep.subr.mxu0 0.0
    %4812 = vmatpush1.msra.mxu0 0.0
    %4813 = vmatprep.subr.mxu0 0.0
    %4814 = vmatpush1.msra.mxu0 0.0
    %4815 = vmatprep.subr.mxu0 0.0
    %4816 = vmatpush1.msra.mxu0 0.0
    %4817 = vmatprep.subr.mxu0 0.0
    %4818 = vmatpush1.msra.mxu0 0.0
    %4819 = vmatprep.subr.mxu0 0.0
    %4820 = vmatpush1.msra.mxu0 0.0
    %4821 = vmatprep.subr.mxu0 0.0
    %4822 = vmatpush1.msra.mxu0 0.0
    %4823 = vmatprep.subr.mxu0 0.0
    %4824 = vmatpush1.msra.mxu0 0.0
    %4825 = vmatprep.subr.mxu0 0.0
    %4826 = vmatpush1.msra.mxu0 0.0
    %4827 = vmatprep.subr.mxu0 0.0
    %4828 = vmatpush1.msra.mxu0 0.0
    %4829 = vmatprep.mubr.f32.mxu0 0.0
    %4830 = vmatmul.mubr.f32.gmra.mrb[0].mxu0 %v4741
    %v4831 = vpop.f32.mrb[0].mxu0
    %v4832 = vadd.f32 %v4763, %v4831
    %v4833 = vpop.f32.mrb[0].mxu0
    %4834 = vdwg.mxu0
    %4835 = vst [vmem:[#allocation10] sm:$0xff] %v4832
    // Predicated region
    $region46: #{lstm_model_forward.1} parent=1 // pred_check
      _
    $region47: #{lstm_model_forward.1} parent=1 // pred_check_branch
      %4837 = sbr.rel (0) target = $region49
    $region48: #{lstm_model_forward.1} parent=1 // pred_region
      %s4839 = ssub.s32 128, 128
      %4840 = vsyncadd [#allocation6], %s4839
      %s4842 = sshll.u32 [#allocation10], 4
      %s4843 = int_to_ptr.vmem [resolvable:$true] %s4842
      %4845 = dma.vmem_to_hbm [thread:$0]  %s4843, 128, %s8, [#allocation6]
    $region49: #{lstm_model_forward.1} parent=1 // pred_fallthru
      _
    // Predicated region
    $region50: #{lstm_model_forward.1} parent=1 // pred_check
      _
    $region51: #{lstm_model_forward.1} parent=1 // pred_check_branch
      %4847 = sbr.rel (0) target = $region53
    $region52: #{lstm_model_forward.1} parent=1 // pred_region
      %4848 = dma.done [#allocation6], 128
    $region53: #{lstm_model_forward.1} parent=1 // pred_fallthru
      _
    %4849 = vsyncpa [#allocation5], 1
    %4850 = vsyncpa [#allocation8], 1
    %4851 = vsyncpa [#allocation6], 1

</llo_original>
